<compile_context>
chip_gen: v7x
topology: tpu7x:2x2x1
jax: 0.10.0
libtpu: 0.0.40
codegen_flags: <defaults>
</compile_context>

<pallas_src>
import functools

import jax
import jax.numpy as jnp
from jax import lax
from jax.experimental import pallas as pl
from jax.experimental.pallas import tpu as pltpu

# ----------------------------- model config ---------------------------------
D = 128            # hidden size
H = 4              # heads
DH = D // H        # head dim
FF = 256           # mlp hidden
V = 256            # byte-level vocab
LAYERS = 2
MAX_NEW = 40       # matches params={'max_new_tokens': 40}
SEQ = 64           # max sequence length (prompt_len + MAX_NEW <= SEQ)
NEG_INF = -1e30


# ----------------------------- helpers ---------------------------------------
def _layernorm(x, g, b):
    mu = jnp.mean(x, axis=-1, keepdims=True)
    var = jnp.mean((x - mu) ** 2, axis=-1, keepdims=True)
    return (x - mu) * lax.rsqrt(var + 1e-5) * g + b


def _greedy_token(logits, vocab_ids):
    # logits: (1, V) f32 -> (1, 1) int32, first index on ties.
    mx = jnp.max(logits, axis=-1, keepdims=True)
    cand = jnp.where(logits == mx, vocab_ids, jnp.int32(V))
    return jnp.min(cand, axis=-1, keepdims=True)


# ----------------------------- fused generate kernel -------------------------
def _generate_kernel(toks_ref, tok_emb_ref, pos_emb_ref,
                     ln1_g_ref, ln1_b_ref, w_qkv_ref, w_o_ref,
                     ln2_g_ref, ln2_b_ref, w_ff1_ref, w_ff2_ref,
                     lnf_g_ref, lnf_b_ref, w_head_ref,
                     out_ref, k_cache_ref, v_cache_ref, *, prompt_len, pp):
    scale = 1.0 / (DH ** 0.5)
    # hoisted iotas (JAX does not CSE broadcasts -> build once, reuse).
    vocab_ids = lax.broadcasted_iota(jnp.int32, (1, V), 1)     # (1, V)
    seq_rows = lax.broadcasted_iota(jnp.int32, (SEQ, 1), 0)    # (SEQ, 1)
    kv_cols = lax.broadcasted_iota(jnp.int32, (1, SEQ), 1)     # (1, SEQ)

    # seed token buffer with the (zero-padded) prompt; zero KV caches once.
    out_ref[...] = toks_ref[...]
    k_cache_ref[...] = jnp.zeros_like(k_cache_ref)
    v_cache_ref[...] = jnp.zeros_like(v_cache_ref)

    def head_logits(x_row):                                    # (1, D) -> (1, V)
        xf = _layernorm(x_row, lnf_g_ref[...], lnf_b_ref[...])
        return jnp.dot(xf.astype(jnp.bfloat16), w_head_ref[...],
                       preferred_element_type=jnp.float32)

    def mlp(x, l):
        h2 = _layernorm(x, ln2_g_ref[l], ln2_b_ref[l])
        ff = jax.nn.gelu(
            jnp.dot(h2.astype(jnp.bfloat16), w_ff1_ref[l],
                    preferred_element_type=jnp.float32),
            approximate=True)
        return x + jnp.dot(ff.astype(jnp.bfloat16), w_ff2_ref[l],
                           preferred_element_type=jnp.float32)

    # ------------------- batched prefill over the padded prompt --------------
    prompt_toks = toks_ref[0:pp, :]                                   # (PP, 1)
    onehot_p = (vocab_ids == prompt_toks).astype(jnp.bfloat16)        # (PP, V)
    x = jnp.dot(onehot_p, tok_emb_ref[...], preferred_element_type=jnp.float32)
    x = x + pos_emb_ref[0:pp, :]                                      # (PP, D)

    row_p = lax.broadcasted_iota(jnp.int32, (pp, pp), 0)
    col_p = lax.broadcasted_iota(jnp.int32, (pp, pp), 1)
    causal = col_p <= row_p                                           # (PP, PP)

    for l in range(LAYERS):                                           # static
        h = _layernorm(x, ln1_g_ref[l], ln1_b_ref[l])
        qkv = jnp.dot(h.astype(jnp.bfloat16), w_qkv_ref[l],
                      preferred_element_type=jnp.float32)             # (PP, 3D)
        q16 = (qkv[:, :D] * scale).astype(jnp.bfloat16)
        k16 = qkv[:, D:2 * D].astype(jnp.bfloat16)
        v16 = qkv[:, 2 * D:].astype(jnp.bfloat16)
        # fill cache rows [0, PP) in one static aligned store.
        k_cache_ref[l, 0:pp, :] = k16
        v_cache_ref[l, 0:pp, :] = v16

        delta = jnp.zeros((pp, D), jnp.float32)
        for hh in range(H):                                           # static
            sl = slice(hh * DH, (hh + 1) * DH)
            s = lax.dot_general(q16[:, sl], k16[:, sl],
                                (((1,), (1,)), ((), ())),
                                preferred_element_type=jnp.float32)   # (PP, PP)
            s = jnp.where(causal, s, NEG_INF)
            m = jnp.max(s, axis=-1, keepdims=True)
            p = jnp.where(causal, jnp.exp(s - m), 0.0)
            p = p / jnp.sum(p, axis=-1, keepdims=True)                # exact
            o = jnp.dot(p.astype(jnp.bfloat16), v16[:, sl],
                        preferred_element_type=jnp.float32)           # (PP, DH)
            delta = delta + jnp.dot(o.astype(jnp.bfloat16),
                                    w_o_ref[l, sl, :],
                                    preferred_element_type=jnp.float32)
        x = x + delta
        x = mlp(x, l)

    # first generated token from the LAST valid prompt row only.
    logits = head_logits(x[prompt_len - 1:prompt_len, :])
    cur = _greedy_token(logits, vocab_ids)                            # (1,1) i32
    out_ref[...] = jnp.where(seq_rows == prompt_len, cur, out_ref[...])

    # ------------------- serial decode: MAX_NEW - 1 more tokens --------------
    def step(t, cur):
        onehot = (vocab_ids == cur).astype(jnp.bfloat16)              # (1, V)
        x = jnp.dot(onehot, tok_emb_ref[...],
                    preferred_element_type=jnp.float32)
        x = x + pos_emb_ref[pl.ds(t, 1), :]                           # (1, D)

        kv_mask = kv_cols <= t                                        # (1, SEQ)
        write_row = seq_rows == t                                     # (SEQ, 1)

        for l in range(LAYERS):                                       # static
            h = _layernorm(x, ln1_g_ref[l], ln1_b_ref[l])
            qkv = jnp.dot(h.astype(jnp.bfloat16), w_qkv_ref[l],
                          preferred_element_type=jnp.float32)         # (1, 3D)
            q16 = (qkv[:, :D] * scale).astype(jnp.bfloat16)
            k_new = qkv[:, D:2 * D].astype(jnp.bfloat16)
            v_new = qkv[:, 2 * D:].astype(jnp.bfloat16)
            # append this token's K/V via masked full-tile update (no dynamic
            # stores on the packed bf16 cache); reuse the merged value below.
            kc = jnp.where(write_row, k_new, k_cache_ref[l])          # (SEQ, D)
            vc = jnp.where(write_row, v_new, v_cache_ref[l])
            k_cache_ref[l] = kc
            v_cache_ref[l] = vc

            # stacked per-head scores -> one softmax across 4 sublanes.
            s = jnp.concatenate(
                [lax.dot_general(q16[:, hh * DH:(hh + 1) * DH],
                                 kc[:, hh * DH:(hh + 1) * DH],
                                 (((1,), (1,)), ((), ())),
                                 preferred_element_type=jnp.float32)
                 for hh in range(H)], axis=0)                         # (H, SEQ)
            s = jnp.where(kv_mask, s, NEG_INF)
            m = jnp.max(s, axis=-1, keepdims=True)
            p = jnp.where(kv_mask, jnp.exp(s - m), 0.0)
            p = p / jnp.sum(p, axis=-1, keepdims=True)                # exact
            p16 = p.astype(jnp.bfloat16)

            # fold heads into the residual through per-head w_o row blocks
            # (no lane concatenation at offsets 32/64/96).
            delta = jnp.zeros((1, D), jnp.float32)
            for hh in range(H):
                sl = slice(hh * DH, (hh + 1) * DH)
                o = jnp.dot(p16[hh:hh + 1, :], vc[:, sl],
                            preferred_element_type=jnp.float32)       # (1, DH)
                delta = delta + jnp.dot(o.astype(jnp.bfloat16),
                                        w_o_ref[l, sl, :],
                                        preferred_element_type=jnp.float32)
            x = x + delta
            x = mlp(x, l)

        nxt = _greedy_token(head_logits(x), vocab_ids)                # (1,1) i32
        out_ref[...] = jnp.where(seq_rows == t + 1, nxt, out_ref[...])
        return nxt

    _ = lax.fori_loop(prompt_len, prompt_len + MAX_NEW - 1, step, cur)


# ----------------------------- wrapper ----------------------------------------
@functools.partial(jax.jit, static_argnames=("prompt_len",))
def generate(tokens, params, prompt_len):
    pp = max(8, ((prompt_len + 7) // 8) * 8)   # padded prefill length (static)
    vmem_spec = pl.BlockSpec(memory_space=pltpu.MemorySpace.VMEM)
    out = pl.pallas_call(
        functools.partial(_generate_kernel, prompt_len=prompt_len, pp=pp),
        out_shape=jax.ShapeDtypeStruct((SEQ, 1), jnp.int32),
        in_specs=[vmem_spec] * 14,            # whole arrays resident in VMEM
        out_specs=vmem_spec,
        scratch_shapes=[
            pltpu.VMEM((LAYERS, SEQ, D), jnp.bfloat16),   # K cache (bf16)
            pltpu.VMEM((LAYERS, SEQ, D), jnp.bfloat16),   # V cache (bf16)
        ],
        compiler_params=pltpu.CompilerParams(
            vmem_limit_bytes=32 * 1024 * 1024,
        ),
    )(tokens, params["tok_emb"], params["pos_emb"],
      params["ln1_g"], params["ln1_b"], params["w_qkv"], params["w_o"],
      params["ln2_g"], params["ln2_b"], params["w_ff1"], params["w_ff2"],
      params["lnf_g"], params["lnf_b"], params["w_head"])
    return out[:, 0]


# ----------------------------- tokenizer (glue) -------------------------------
# TODO(synk): real HF tokenizer / .decode have no Pallas equivalent (string ops);
# a deterministic byte-level tokenizer is used instead.
def encode(prompt):
    return list(prompt.encode("utf-8"))


def decode(token_ids):
    return bytes(int(t) % 256 for t in token_ids).decode("latin-1")


# ----------------------------- params init ------------------------------------
def init_params(key):
    def nrm(k, shape, dtype=jnp.bfloat16, scale=0.02):
        return (scale * jax.random.normal(k, shape, dtype=jnp.float32)).astype(dtype)

    keys = jax.random.split(key, 8)
    return {
        "tok_emb": nrm(keys[0], (V, D)),
        "pos_emb": nrm(keys[1], (SEQ, D), dtype=jnp.float32),
        "ln1_g": jnp.ones((LAYERS, 1, D), jnp.float32),
        "ln1_b": jnp.zeros((LAYERS, 1, D), jnp.float32),
        "w_qkv": nrm(keys[2], (LAYERS, D, 3 * D)),
        "w_o": nrm(keys[3], (LAYERS, D, D)),
        "ln2_g": jnp.ones((LAYERS, 1, D), jnp.float32),
        "ln2_b": jnp.zeros((LAYERS, 1, D), jnp.float32),
        "w_ff1": nrm(keys[4], (LAYERS, D, FF)),
        "w_ff2": nrm(keys[5], (LAYERS, FF, D)),
        "lnf_g": jnp.ones((1, D), jnp.float32),
        "lnf_b": jnp.zeros((1, D), jnp.float32),
        "w_head": nrm(keys[6], (D, V)),
    }


# ----------------------------- main -------------------------------------------
if __name__ == "__main__":
    key = jax.random.PRNGKey(0)
    params = init_params(key)

    prompt = "Hello TPU"
    prompt_ids = encode(prompt)
    prompt_len = len(prompt_ids)
    assert 1 <= prompt_len and prompt_len + MAX_NEW <= SEQ

    tokens = jnp.zeros((SEQ, 1), jnp.int32)
    tokens = tokens.at[:prompt_len, 0].set(jnp.asarray(prompt_ids, jnp.int32))

    out_tokens = generate(tokens, params, prompt_len)
    out_tokens = jax.block_until_ready(out_tokens)

    sequences = decode(out_tokens[: prompt_len + MAX_NEW].tolist())
    assert isinstance(sequences, str) and len(sequences) == prompt_len + MAX_NEW
    print("KERNEL_OK")
</pallas_src>

<mosaic_0001>
module attributes {stable_mosaic.version = 11 : i64} {
  func.func @_generate_kernel(%arg0: memref<64x1xi32, #tpu.memory_space<vmem>>, %arg1: memref<256x128xbf16, #tpu.memory_space<vmem>>, %arg2: memref<64x128xf32, #tpu.memory_space<vmem>>, %arg3: memref<2x1x128xf32, #tpu.memory_space<vmem>>, %arg4: memref<2x1x128xf32, #tpu.memory_space<vmem>>, %arg5: memref<2x128x384xbf16, #tpu.memory_space<vmem>>, %arg6: memref<2x128x128xbf16, #tpu.memory_space<vmem>>, %arg7: memref<2x1x128xf32, #tpu.memory_space<vmem>>, %arg8: memref<2x1x128xf32, #tpu.memory_space<vmem>>, %arg9: memref<2x128x256xbf16, #tpu.memory_space<vmem>>, %arg10: memref<2x256x128xbf16, #tpu.memory_space<vmem>>, %arg11: memref<1x128xf32, #tpu.memory_space<vmem>>, %arg12: memref<1x128xf32, #tpu.memory_space<vmem>>, %arg13: memref<128x256xbf16, #tpu.memory_space<vmem>>, %arg14: memref<64x1xi32, #tpu.memory_space<vmem>>, %arg15: memref<2x64x128xbf16, #tpu.memory_space<vmem>>, %arg16: memref<2x64x128xbf16, #tpu.memory_space<vmem>>) attributes {dimension_semantics = [], scalar_prefetch = 0 : i64, scratch_operands = 2 : i64, tpu.core_type = #tpu.core_type<tc>} {
    %0 = tpu.iota {dimensions = array<i32: 1>} : vector<1x256xi32>
    %1 = tpu.iota {dimensions = array<i32: 0>} : vector<64x1xi32>
    %2 = tpu.iota {dimensions = array<i32: 1>} : vector<1x64xi32>
    %c0 = arith.constant 0 : index
    %c0_0 = arith.constant 0 : index
    %3 = vector.load %arg0[%c0, %c0_0] : memref<64x1xi32, #tpu.memory_space<vmem>>, vector<64x1xi32>
    %c0_1 = arith.constant 0 : index
    %c0_2 = arith.constant 0 : index
    %4 = vector.load %arg14[%c0_1, %c0_2] : memref<64x1xi32, #tpu.memory_space<vmem>>, vector<64x1xi32>
    tpu.vector_store %arg14[%c0_1, %c0_2], %3 {strides = array<i32>} : memref<64x1xi32, #tpu.memory_space<vmem>>, vector<64x1xi32>,
    %cst = arith.constant 0.000000e+00 : bf16
    %5 = vector.broadcast %cst : bf16 to vector<2x64x128xbf16>
    %c0_3 = arith.constant 0 : index
    %c0_4 = arith.constant 0 : index
    %c0_5 = arith.constant 0 : index
    %6 = vector.load %arg15[%c0_3, %c0_4, %c0_5] : memref<2x64x128xbf16, #tpu.memory_space<vmem>>, vector<2x64x128xbf16>
    tpu.vector_store %arg15[%c0_3, %c0_4, %c0_5], %5 {strides = array<i32>} : memref<2x64x128xbf16, #tpu.memory_space<vmem>>, vector<2x64x128xbf16>,
    %cst_6 = arith.constant 0.000000e+00 : bf16
    %7 = vector.broadcast %cst_6 : bf16 to vector<2x64x128xbf16>
    %c0_7 = arith.constant 0 : index
    %c0_8 = arith.constant 0 : index
    %c0_9 = arith.constant 0 : index
    %8 = vector.load %arg16[%c0_7, %c0_8, %c0_9] : memref<2x64x128xbf16, #tpu.memory_space<vmem>>, vector<2x64x128xbf16>
    tpu.vector_store %arg16[%c0_7, %c0_8, %c0_9], %7 {strides = array<i32>} : memref<2x64x128xbf16, #tpu.memory_space<vmem>>, vector<2x64x128xbf16>,
    %c0_10 = arith.constant 0 : index
    %c0_11 = arith.constant 0 : index
    %9 = vector.load %arg0[%c0_10, %c0_11] : memref<64x1xi32, #tpu.memory_space<vmem>>, vector<16x1xi32>
    %10 = vector.broadcast %0 : vector<1x256xi32> to vector<16x256xi32>
    %11 = vector.broadcast %9 : vector<16x1xi32> to vector<16x256xi32>
    %12 = arith.cmpi eq, %10, %11 : vector<16x256xi32>
    %13 = arith.extui %12 : vector<16x256xi1> to vector<16x256xi32>
    %14 = arith.sitofp %13 : vector<16x256xi32> to vector<16x256xf32>
    %15 = arith.truncf %14 : vector<16x256xf32> to vector<16x256xbf16>
    %c0_12 = arith.constant 0 : index
    %c0_13 = arith.constant 0 : index
    %16 = vector.load %arg1[%c0_12, %c0_13] : memref<256x128xbf16, #tpu.memory_space<vmem>>, vector<256x128xbf16>
    %cst_14 = arith.constant dense<0.000000e+00> : vector<16x128xf32>
    %17 = tpu.matmul %15, %16, %cst_14 {dimension_numbers = #tpu.dot_dimension_numbers<[1], [0], [0], [1], [0, 0, 1, 1], [], []>} : vector<16x256xbf16>, vector<256x128xbf16>, vector<16x128xf32> -> vector<16x128xf32>
    %c0_15 = arith.constant 0 : index
    %c0_16 = arith.constant 0 : index
    %18 = vector.load %arg2[%c0_15, %c0_16] : memref<64x128xf32, #tpu.memory_space<vmem>>, vector<16x128xf32>
    %19 = arith.addf %17, %18 : vector<16x128xf32>
    %20 = tpu.iota {dimensions = array<i32: 0>} : vector<16x16xi32>
    %21 = tpu.iota {dimensions = array<i32: 1>} : vector<16x16xi32>
    %22 = arith.cmpi sle, %21, %20 : vector<16x16xi32>
    %c0_17 = arith.constant 0 : index
    %c0_18 = arith.constant 0 : index
    %c0_19 = arith.constant 0 : index
    %23 = vector.load %arg3[%c0_17, %c0_18, %c0_19] : memref<2x1x128xf32, #tpu.memory_space<vmem>>, vector<1x1x128xf32>
    %24 = vector.shape_cast %23 : vector<1x1x128xf32> to vector<1x128xf32>
    %c0_20 = arith.constant 0 : index
    %c0_21 = arith.constant 0 : index
    %c0_22 = arith.constant 0 : index
    %25 = vector.load %arg4[%c0_20, %c0_21, %c0_22] : memref<2x1x128xf32, #tpu.memory_space<vmem>>, vector<1x1x128xf32>
    %26 = vector.shape_cast %25 : vector<1x1x128xf32> to vector<1x128xf32>
    %cst_23 = arith.constant dense<0.000000e+00> : vector<16xf32>
    %27 = vector.multi_reduction <add>, %19, %cst_23 [1] : vector<16x128xf32> to vector<16xf32>
    %28 = vector.shape_cast %27 : vector<16xf32> to vector<16x1xf32>
    %cst_24 = arith.constant 1.280000e+02 : f32
    %29 = vector.broadcast %cst_24 : f32 to vector<16x1xf32>
    %30 = arith.divf %28, %29 : vector<16x1xf32>
    %31 = vector.broadcast %30 : vector<16x1xf32> to vector<16x128xf32>
    %32 = arith.subf %19, %31 : vector<16x128xf32>
    %33 = arith.mulf %32, %32 : vector<16x128xf32>
    %cst_25 = arith.constant dense<0.000000e+00> : vector<16xf32>
    %34 = vector.multi_reduction <add>, %33, %cst_25 [1] : vector<16x128xf32> to vector<16xf32>
    %35 = vector.shape_cast %34 : vector<16xf32> to vector<16x1xf32>
    %cst_26 = arith.constant 1.280000e+02 : f32
    %36 = vector.broadcast %cst_26 : f32 to vector<16x1xf32>
    %37 = arith.divf %35, %36 : vector<16x1xf32>
    %38 = vector.broadcast %30 : vector<16x1xf32> to vector<16x128xf32>
    %39 = arith.subf %19, %38 : vector<16x128xf32>
    %cst_27 = arith.constant 9.99999974E-6 : f32
    %40 = vector.broadcast %cst_27 : f32 to vector<16x1xf32>
    %41 = arith.addf %37, %40 : vector<16x1xf32>
    %42 = math.rsqrt %41 : vector<16x1xf32>
    %43 = vector.broadcast %42 : vector<16x1xf32> to vector<16x128xf32>
    %44 = arith.mulf %39, %43 : vector<16x128xf32>
    %45 = vector.broadcast %24 : vector<1x128xf32> to vector<16x128xf32>
    %46 = arith.mulf %44, %45 : vector<16x128xf32>
    %47 = vector.broadcast %26 : vector<1x128xf32> to vector<16x128xf32>
    %48 = arith.addf %46, %47 : vector<16x128xf32>
    %49 = arith.truncf %48 : vector<16x128xf32> to vector<16x128xbf16>
    %c0_28 = arith.constant 0 : index
    %c0_29 = arith.constant 0 : index
    %c0_30 = arith.constant 0 : index
    %50 = vector.load %arg5[%c0_28, %c0_29, %c0_30] : memref<2x128x384xbf16, #tpu.memory_space<vmem>>, vector<1x128x384xbf16>
    %51 = vector.shape_cast %50 : vector<1x128x384xbf16> to vector<128x384xbf16>
    %cst_31 = arith.constant dense<0.000000e+00> : vector<16x384xf32>
    %52 = tpu.matmul %49, %51, %cst_31 {dimension_numbers = #tpu.dot_dimension_numbers<[1], [0], [0], [1], [0, 0, 1, 1], [], []>} : vector<16x128xbf16>, vector<128x384xbf16>, vector<16x384xf32> -> vector<16x384xf32>
    %53 = vector.extract_strided_slice %52 {offsets = [0, 0], sizes = [16, 128], strides = [1, 1]} : vector<16x384xf32> to vector<16x128xf32>
    %cst_32 = arith.constant 0.176776692 : f32
    %54 = vector.broadcast %cst_32 : f32 to vector<16x128xf32>
    %55 = arith.mulf %53, %54 : vector<16x128xf32>
    %56 = arith.truncf %55 : vector<16x128xf32> to vector<16x128xbf16>
    %57 = vector.extract_strided_slice %52 {offsets = [0, 128], sizes = [16, 128], strides = [1, 1]} : vector<16x384xf32> to vector<16x128xf32>
    %58 = arith.truncf %57 : vector<16x128xf32> to vector<16x128xbf16>
    %59 = vector.extract_strided_slice %52 {offsets = [0, 256], sizes = [16, 128], strides = [1, 1]} : vector<16x384xf32> to vector<16x128xf32>
    %60 = arith.truncf %59 : vector<16x128xf32> to vector<16x128xbf16>
    %c0_33 = arith.constant 0 : index
    %c0_34 = arith.constant 0 : index
    %c0_35 = arith.constant 0 : index
    %61 = vector.load %arg15[%c0_33, %c0_34, %c0_35] : memref<2x64x128xbf16, #tpu.memory_space<vmem>>, vector<1x16x128xbf16>
    %62 = vector.shape_cast %61 : vector<1x16x128xbf16> to vector<16x128xbf16>
    %63 = vector.shape_cast %58 : vector<16x128xbf16> to vector<1x16x128xbf16>
    tpu.vector_store %arg15[%c0_33, %c0_34, %c0_35], %63 {strides = array<i32>} : memref<2x64x128xbf16, #tpu.memory_space<vmem>>, vector<1x16x128xbf16>,
    %c0_36 = arith.constant 0 : index
    %c0_37 = arith.constant 0 : index
    %c0_38 = arith.constant 0 : index
    %64 = vector.load %arg16[%c0_36, %c0_37, %c0_38] : memref<2x64x128xbf16, #tpu.memory_space<vmem>>, vector<1x16x128xbf16>
    %65 = vector.shape_cast %64 : vector<1x16x128xbf16> to vector<16x128xbf16>
    %66 = vector.shape_cast %60 : vector<16x128xbf16> to vector<1x16x128xbf16>
    tpu.vector_store %arg16[%c0_36, %c0_37, %c0_38], %66 {strides = array<i32>} : memref<2x64x128xbf16, #tpu.memory_space<vmem>>, vector<1x16x128xbf16>,
    %cst_39 = arith.constant 0.000000e+00 : f32
    %67 = vector.broadcast %cst_39 : f32 to vector<16x128xf32>
    %68 = vector.extract_strided_slice %56 {offsets = [0, 0], sizes = [16, 32], strides = [1, 1]} : vector<16x128xbf16> to vector<16x32xbf16>
    %69 = vector.extract_strided_slice %58 {offsets = [0, 0], sizes = [16, 32], strides = [1, 1]} : vector<16x128xbf16> to vector<16x32xbf16>
    %cst_40 = arith.constant dense<0.000000e+00> : vector<16x16xf32>
    %70 = tpu.matmul %68, %69, %cst_40 {dimension_numbers = #tpu.dot_dimension_numbers<[1], [1], [0], [0], [0, 0, 1, 0], [], []>} : vector<16x32xbf16>, vector<16x32xbf16>, vector<16x16xf32> -> vector<16x16xf32>
    %cst_41 = arith.constant -1.000000e+30 : f32
    %71 = vector.broadcast %cst_41 : f32 to vector<16x16xf32>
    %72 = arith.select %22, %70, %71 : vector<16x16xi1>, vector<16x16xf32>
    %cst_42 = arith.constant dense<0xFF800000> : vector<16xf32>
    %73 = vector.multi_reduction <maximumf>, %72, %cst_42 [1] : vector<16x16xf32> to vector<16xf32>
    %74 = vector.shape_cast %73 : vector<16xf32> to vector<16x1xf32>
    %75 = vector.broadcast %74 : vector<16x1xf32> to vector<16x16xf32>
    %76 = arith.subf %72, %75 : vector<16x16xf32>
    %77 = math.exp %76 : vector<16x16xf32>
    %cst_43 = arith.constant 0.000000e+00 : f32
    %78 = vector.broadcast %cst_43 : f32 to vector<16x16xf32>
    %79 = arith.select %22, %77, %78 : vector<16x16xi1>, vector<16x16xf32>
    %cst_44 = arith.constant dense<0.000000e+00> : vector<16xf32>
    %80 = vector.multi_reduction <add>, %79, %cst_44 [1] : vector<16x16xf32> to vector<16xf32>
    %81 = vector.shape_cast %80 : vector<16xf32> to vector<16x1xf32>
    %82 = vector.broadcast %81 : vector<16x1xf32> to vector<16x16xf32>
    %83 = arith.divf %79, %82 : vector<16x16xf32>
    %84 = arith.truncf %83 : vector<16x16xf32> to vector<16x16xbf16>
    %85 = vector.extract_strided_slice %60 {offsets = [0, 0], sizes = [16, 32], strides = [1, 1]} : vector<16x128xbf16> to vector<16x32xbf16>
    %cst_45 = arith.constant dense<0.000000e+00> : vector<16x32xf32>
    %86 = tpu.matmul %84, %85, %cst_45 {dimension_numbers = #tpu.dot_dimension_numbers<[1], [0], [0], [1], [0, 0, 1, 1], [], []>} : vector<16x16xbf16>, vector<16x32xbf16>, vector<16x32xf32> -> vector<16x32xf32>
    %87 = arith.truncf %86 : vector<16x32xf32> to vector<16x32xbf16>
    %c0_46 = arith.constant 0 : index
    %c0_47 = arith.constant 0 : index
    %c0_48 = arith.constant 0 : index
    %88 = vector.load %arg6[%c0_46, %c0_47, %c0_48] : memref<2x128x128xbf16, #tpu.memory_space<vmem>>, vector<1x32x128xbf16>
    %89 = vector.shape_cast %88 : vector<1x32x128xbf16> to vector<32x128xbf16>
    %cst_49 = arith.constant dense<0.000000e+00> : vector<16x128xf32>
    %90 = tpu.matmul %87, %89, %cst_49 {dimension_numbers = #tpu.dot_dimension_numbers<[1], [0], [0], [1], [0, 0, 1, 1], [], []>} : vector<16x32xbf16>, vector<32x128xbf16>, vector<16x128xf32> -> vector<16x128xf32>
    %91 = arith.addf %67, %90 : vector<16x128xf32>
    %92 = vector.extract_strided_slice %56 {offsets = [0, 32], sizes = [16, 32], strides = [1, 1]} : vector<16x128xbf16> to vector<16x32xbf16>
    %93 = vector.extract_strided_slice %58 {offsets = [0, 32], sizes = [16, 32], strides = [1, 1]} : vector<16x128xbf16> to vector<16x32xbf16>
    %cst_50 = arith.constant dense<0.000000e+00> : vector<16x16xf32>
    %94 = tpu.matmul %92, %93, %cst_50 {dimension_numbers = #tpu.dot_dimension_numbers<[1], [1], [0], [0], [0, 0, 1, 0], [], []>} : vector<16x32xbf16>, vector<16x32xbf16>, vector<16x16xf32> -> vector<16x16xf32>
    %cst_51 = arith.constant -1.000000e+30 : f32
    %95 = vector.broadcast %cst_51 : f32 to vector<16x16xf32>
    %96 = arith.select %22, %94, %95 : vector<16x16xi1>, vector<16x16xf32>
    %cst_52 = arith.constant dense<0xFF800000> : vector<16xf32>
    %97 = vector.multi_reduction <maximumf>, %96, %cst_52 [1] : vector<16x16xf32> to vector<16xf32>
    %98 = vector.shape_cast %97 : vector<16xf32> to vector<16x1xf32>
    %99 = vector.broadcast %98 : vector<16x1xf32> to vector<16x16xf32>
    %100 = arith.subf %96, %99 : vector<16x16xf32>
    %101 = math.exp %100 : vector<16x16xf32>
    %cst_53 = arith.constant 0.000000e+00 : f32
    %102 = vector.broadcast %cst_53 : f32 to vector<16x16xf32>
    %103 = arith.select %22, %101, %102 : vector<16x16xi1>, vector<16x16xf32>
    %cst_54 = arith.constant dense<0.000000e+00> : vector<16xf32>
    %104 = vector.multi_reduction <add>, %103, %cst_54 [1] : vector<16x16xf32> to vector<16xf32>
    %105 = vector.shape_cast %104 : vector<16xf32> to vector<16x1xf32>
    %106 = vector.broadcast %105 : vector<16x1xf32> to vector<16x16xf32>
    %107 = arith.divf %103, %106 : vector<16x16xf32>
    %108 = arith.truncf %107 : vector<16x16xf32> to vector<16x16xbf16>
    %109 = vector.extract_strided_slice %60 {offsets = [0, 32], sizes = [16, 32], strides = [1, 1]} : vector<16x128xbf16> to vector<16x32xbf16>
    %cst_55 = arith.constant dense<0.000000e+00> : vector<16x32xf32>
    %110 = tpu.matmul %108, %109, %cst_55 {dimension_numbers = #tpu.dot_dimension_numbers<[1], [0], [0], [1], [0, 0, 1, 1], [], []>} : vector<16x16xbf16>, vector<16x32xbf16>, vector<16x32xf32> -> vector<16x32xf32>
    %111 = arith.truncf %110 : vector<16x32xf32> to vector<16x32xbf16>
    %c0_56 = arith.constant 0 : index
    %c32 = arith.constant 32 : index
    %c0_57 = arith.constant 0 : index
    %112 = vector.load %arg6[%c0_56, %c32, %c0_57] : memref<2x128x128xbf16, #tpu.memory_space<vmem>>, vector<1x32x128xbf16>
    %113 = vector.shape_cast %112 : vector<1x32x128xbf16> to vector<32x128xbf16>
    %cst_58 = arith.constant dense<0.000000e+00> : vector<16x128xf32>
    %114 = tpu.matmul %111, %113, %cst_58 {dimension_numbers = #tpu.dot_dimension_numbers<[1], [0], [0], [1], [0, 0, 1, 1], [], []>} : vector<16x32xbf16>, vector<32x128xbf16>, vector<16x128xf32> -> vector<16x128xf32>
    %115 = arith.addf %91, %114 : vector<16x128xf32>
    %116 = vector.extract_strided_slice %56 {offsets = [0, 64], sizes = [16, 32], strides = [1, 1]} : vector<16x128xbf16> to vector<16x32xbf16>
    %117 = vector.extract_strided_slice %58 {offsets = [0, 64], sizes = [16, 32], strides = [1, 1]} : vector<16x128xbf16> to vector<16x32xbf16>
    %cst_59 = arith.constant dense<0.000000e+00> : vector<16x16xf32>
    %118 = tpu.matmul %116, %117, %cst_59 {dimension_numbers = #tpu.dot_dimension_numbers<[1], [1], [0], [0], [0, 0, 1, 0], [], []>} : vector<16x32xbf16>, vector<16x32xbf16>, vector<16x16xf32> -> vector<16x16xf32>
    %cst_60 = arith.constant -1.000000e+30 : f32
    %119 = vector.broadcast %cst_60 : f32 to vector<16x16xf32>
    %120 = arith.select %22, %118, %119 : vector<16x16xi1>, vector<16x16xf32>
    %cst_61 = arith.constant dense<0xFF800000> : vector<16xf32>
    %121 = vector.multi_reduction <maximumf>, %120, %cst_61 [1] : vector<16x16xf32> to vector<16xf32>
    %122 = vector.shape_cast %121 : vector<16xf32> to vector<16x1xf32>
    %123 = vector.broadcast %122 : vector<16x1xf32> to vector<16x16xf32>
    %124 = arith.subf %120, %123 : vector<16x16xf32>
    %125 = math.exp %124 : vector<16x16xf32>
    %cst_62 = arith.constant 0.000000e+00 : f32
    %126 = vector.broadcast %cst_62 : f32 to vector<16x16xf32>
    %127 = arith.select %22, %125, %126 : vector<16x16xi1>, vector<16x16xf32>
    %cst_63 = arith.constant dense<0.000000e+00> : vector<16xf32>
    %128 = vector.multi_reduction <add>, %127, %cst_63 [1] : vector<16x16xf32> to vector<16xf32>
    %129 = vector.shape_cast %128 : vector<16xf32> to vector<16x1xf32>
    %130 = vector.broadcast %129 : vector<16x1xf32> to vector<16x16xf32>
    %131 = arith.divf %127, %130 : vector<16x16xf32>
    %132 = arith.truncf %131 : vector<16x16xf32> to vector<16x16xbf16>
    %133 = vector.extract_strided_slice %60 {offsets = [0, 64], sizes = [16, 32], strides = [1, 1]} : vector<16x128xbf16> to vector<16x32xbf16>
    %cst_64 = arith.constant dense<0.000000e+00> : vector<16x32xf32>
    %134 = tpu.matmul %132, %133, %cst_64 {dimension_numbers = #tpu.dot_dimension_numbers<[1], [0], [0], [1], [0, 0, 1, 1], [], []>} : vector<16x16xbf16>, vector<16x32xbf16>, vector<16x32xf32> -> vector<16x32xf32>
    %135 = arith.truncf %134 : vector<16x32xf32> to vector<16x32xbf16>
    %c0_65 = arith.constant 0 : index
    %c64 = arith.constant 64 : index
    %c0_66 = arith.constant 0 : index
    %136 = vector.load %arg6[%c0_65, %c64, %c0_66] : memref<2x128x128xbf16, #tpu.memory_space<vmem>>, vector<1x32x128xbf16>
    %137 = vector.shape_cast %136 : vector<1x32x128xbf16> to vector<32x128xbf16>
    %cst_67 = arith.constant dense<0.000000e+00> : vector<16x128xf32>
    %138 = tpu.matmul %135, %137, %cst_67 {dimension_numbers = #tpu.dot_dimension_numbers<[1], [0], [0], [1], [0, 0, 1, 1], [], []>} : vector<16x32xbf16>, vector<32x128xbf16>, vector<16x128xf32> -> vector<16x128xf32>
    %139 = arith.addf %115, %138 : vector<16x128xf32>
    %140 = vector.extract_strided_slice %56 {offsets = [0, 96], sizes = [16, 32], strides = [1, 1]} : vector<16x128xbf16> to vector<16x32xbf16>
    %141 = vector.extract_strided_slice %58 {offsets = [0, 96], sizes = [16, 32], strides = [1, 1]} : vector<16x128xbf16> to vector<16x32xbf16>
    %cst_68 = arith.constant dense<0.000000e+00> : vector<16x16xf32>
    %142 = tpu.matmul %140, %141, %cst_68 {dimension_numbers = #tpu.dot_dimension_numbers<[1], [1], [0], [0], [0, 0, 1, 0], [], []>} : vector<16x32xbf16>, vector<16x32xbf16>, vector<16x16xf32> -> vector<16x16xf32>
    %cst_69 = arith.constant -1.000000e+30 : f32
    %143 = vector.broadcast %cst_69 : f32 to vector<16x16xf32>
    %144 = arith.select %22, %142, %143 : vector<16x16xi1>, vector<16x16xf32>
    %cst_70 = arith.constant dense<0xFF800000> : vector<16xf32>
    %145 = vector.multi_reduction <maximumf>, %144, %cst_70 [1] : vector<16x16xf32> to vector<16xf32>
    %146 = vector.shape_cast %145 : vector<16xf32> to vector<16x1xf32>
    %147 = vector.broadcast %146 : vector<16x1xf32> to vector<16x16xf32>
    %148 = arith.subf %144, %147 : vector<16x16xf32>
    %149 = math.exp %148 : vector<16x16xf32>
    %cst_71 = arith.constant 0.000000e+00 : f32
    %150 = vector.broadcast %cst_71 : f32 to vector<16x16xf32>
    %151 = arith.select %22, %149, %150 : vector<16x16xi1>, vector<16x16xf32>
    %cst_72 = arith.constant dense<0.000000e+00> : vector<16xf32>
    %152 = vector.multi_reduction <add>, %151, %cst_72 [1] : vector<16x16xf32> to vector<16xf32>
    %153 = vector.shape_cast %152 : vector<16xf32> to vector<16x1xf32>
    %154 = vector.broadcast %153 : vector<16x1xf32> to vector<16x16xf32>
    %155 = arith.divf %151, %154 : vector<16x16xf32>
    %156 = arith.truncf %155 : vector<16x16xf32> to vector<16x16xbf16>
    %157 = vector.extract_strided_slice %60 {offsets = [0, 96], sizes = [16, 32], strides = [1, 1]} : vector<16x128xbf16> to vector<16x32xbf16>
    %cst_73 = arith.constant dense<0.000000e+00> : vector<16x32xf32>
    %158 = tpu.matmul %156, %157, %cst_73 {dimension_numbers = #tpu.dot_dimension_numbers<[1], [0], [0], [1], [0, 0, 1, 1], [], []>} : vector<16x16xbf16>, vector<16x32xbf16>, vector<16x32xf32> -> vector<16x32xf32>
    %159 = arith.truncf %158 : vector<16x32xf32> to vector<16x32xbf16>
    %c0_74 = arith.constant 0 : index
    %c96 = arith.constant 96 : index
    %c0_75 = arith.constant 0 : index
    %160 = vector.load %arg6[%c0_74, %c96, %c0_75] : memref<2x128x128xbf16, #tpu.memory_space<vmem>>, vector<1x32x128xbf16>
    %161 = vector.shape_cast %160 : vector<1x32x128xbf16> to vector<32x128xbf16>
    %cst_76 = arith.constant dense<0.000000e+00> : vector<16x128xf32>
    %162 = tpu.matmul %159, %161, %cst_76 {dimension_numbers = #tpu.dot_dimension_numbers<[1], [0], [0], [1], [0, 0, 1, 1], [], []>} : vector<16x32xbf16>, vector<32x128xbf16>, vector<16x128xf32> -> vector<16x128xf32>
    %163 = arith.addf %139, %162 : vector<16x128xf32>
    %164 = arith.addf %19, %163 : vector<16x128xf32>
    %c0_77 = arith.constant 0 : index
    %c0_78 = arith.constant 0 : index
    %c0_79 = arith.constant 0 : index
    %165 = vector.load %arg7[%c0_77, %c0_78, %c0_79] : memref<2x1x128xf32, #tpu.memory_space<vmem>>, vector<1x1x128xf32>
    %166 = vector.shape_cast %165 : vector<1x1x128xf32> to vector<1x128xf32>
    %c0_80 = arith.constant 0 : index
    %c0_81 = arith.constant 0 : index
    %c0_82 = arith.constant 0 : index
    %167 = vector.load %arg8[%c0_80, %c0_81, %c0_82] : memref<2x1x128xf32, #tpu.memory_space<vmem>>, vector<1x1x128xf32>
    %168 = vector.shape_cast %167 : vector<1x1x128xf32> to vector<1x128xf32>
    %cst_83 = arith.constant dense<0.000000e+00> : vector<16xf32>
    %169 = vector.multi_reduction <add>, %164, %cst_83 [1] : vector<16x128xf32> to vector<16xf32>
    %170 = vector.shape_cast %169 : vector<16xf32> to vector<16x1xf32>
    %cst_84 = arith.constant 1.280000e+02 : f32
    %171 = vector.broadcast %cst_84 : f32 to vector<16x1xf32>
    %172 = arith.divf %170, %171 : vector<16x1xf32>
    %173 = vector.broadcast %172 : vector<16x1xf32> to vector<16x128xf32>
    %174 = arith.subf %164, %173 : vector<16x128xf32>
    %175 = arith.mulf %174, %174 : vector<16x128xf32>
    %cst_85 = arith.constant dense<0.000000e+00> : vector<16xf32>
    %176 = vector.multi_reduction <add>, %175, %cst_85 [1] : vector<16x128xf32> to vector<16xf32>
    %177 = vector.shape_cast %176 : vector<16xf32> to vector<16x1xf32>
    %cst_86 = arith.constant 1.280000e+02 : f32
    %178 = vector.broadcast %cst_86 : f32 to vector<16x1xf32>
    %179 = arith.divf %177, %178 : vector<16x1xf32>
    %180 = vector.broadcast %172 : vector<16x1xf32> to vector<16x128xf32>
    %181 = arith.subf %164, %180 : vector<16x128xf32>
    %cst_87 = arith.constant 9.99999974E-6 : f32
    %182 = vector.broadcast %cst_87 : f32 to vector<16x1xf32>
    %183 = arith.addf %179, %182 : vector<16x1xf32>
    %184 = math.rsqrt %183 : vector<16x1xf32>
    %185 = vector.broadcast %184 : vector<16x1xf32> to vector<16x128xf32>
    %186 = arith.mulf %181, %185 : vector<16x128xf32>
    %187 = vector.broadcast %166 : vector<1x128xf32> to vector<16x128xf32>
    %188 = arith.mulf %186, %187 : vector<16x128xf32>
    %189 = vector.broadcast %168 : vector<1x128xf32> to vector<16x128xf32>
    %190 = arith.addf %188, %189 : vector<16x128xf32>
    %191 = arith.truncf %190 : vector<16x128xf32> to vector<16x128xbf16>
    %c0_88 = arith.constant 0 : index
    %c0_89 = arith.constant 0 : index
    %c0_90 = arith.constant 0 : index
    %192 = vector.load %arg9[%c0_88, %c0_89, %c0_90] : memref<2x128x256xbf16, #tpu.memory_space<vmem>>, vector<1x128x256xbf16>
    %193 = vector.shape_cast %192 : vector<1x128x256xbf16> to vector<128x256xbf16>
    %cst_91 = arith.constant dense<0.000000e+00> : vector<16x256xf32>
    %194 = tpu.matmul %191, %193, %cst_91 {dimension_numbers = #tpu.dot_dimension_numbers<[1], [0], [0], [1], [0, 0, 1, 1], [], []>} : vector<16x128xbf16>, vector<128x256xbf16>, vector<16x256xf32> -> vector<16x256xf32>
    %195 = arith.mulf %194, %194 : vector<16x256xf32>
    %196 = arith.mulf %194, %195 : vector<16x256xf32>
    %cst_92 = arith.constant 4.471500e-02 : f32
    %197 = vector.broadcast %cst_92 : f32 to vector<16x256xf32>
    %198 = arith.mulf %197, %196 : vector<16x256xf32>
    %199 = arith.addf %194, %198 : vector<16x256xf32>
    %cst_93 = arith.constant 0.797884583 : f32
    %200 = vector.broadcast %cst_93 : f32 to vector<16x256xf32>
    %201 = arith.mulf %200, %199 : vector<16x256xf32>
    %202 = math.tanh %201 : vector<16x256xf32>
    %cst_94 = arith.constant 1.000000e+00 : f32
    %203 = vector.broadcast %cst_94 : f32 to vector<16x256xf32>
    %204 = arith.addf %203, %202 : vector<16x256xf32>
    %cst_95 = arith.constant 5.000000e-01 : f32
    %205 = vector.broadcast %cst_95 : f32 to vector<16x256xf32>
    %206 = arith.mulf %205, %204 : vector<16x256xf32>
    %207 = arith.mulf %194, %206 : vector<16x256xf32>
    %208 = arith.truncf %207 : vector<16x256xf32> to vector<16x256xbf16>
    %c0_96 = arith.constant 0 : index
    %c0_97 = arith.constant 0 : index
    %c0_98 = arith.constant 0 : index
    %209 = vector.load %arg10[%c0_96, %c0_97, %c0_98] : memref<2x256x128xbf16, #tpu.memory_space<vmem>>, vector<1x256x128xbf16>
    %210 = vector.shape_cast %209 : vector<1x256x128xbf16> to vector<256x128xbf16>
    %cst_99 = arith.constant dense<0.000000e+00> : vector<16x128xf32>
    %211 = tpu.matmul %208, %210, %cst_99 {dimension_numbers = #tpu.dot_dimension_numbers<[1], [0], [0], [1], [0, 0, 1, 1], [], []>} : vector<16x256xbf16>, vector<256x128xbf16>, vector<16x128xf32> -> vector<16x128xf32>
    %212 = arith.addf %164, %211 : vector<16x128xf32>
    %c1 = arith.constant 1 : index
    %c0_100 = arith.constant 0 : index
    %c0_101 = arith.constant 0 : index
    %213 = vector.load %arg3[%c1, %c0_100, %c0_101] : memref<2x1x128xf32, #tpu.memory_space<vmem>>, vector<1x1x128xf32>
    %214 = vector.shape_cast %213 : vector<1x1x128xf32> to vector<1x128xf32>
    %c1_102 = arith.constant 1 : index
    %c0_103 = arith.constant 0 : index
    %c0_104 = arith.constant 0 : index
    %215 = vector.load %arg4[%c1_102, %c0_103, %c0_104] : memref<2x1x128xf32, #tpu.memory_space<vmem>>, vector<1x1x128xf32>
    %216 = vector.shape_cast %215 : vector<1x1x128xf32> to vector<1x128xf32>
    %cst_105 = arith.constant dense<0.000000e+00> : vector<16xf32>
    %217 = vector.multi_reduction <add>, %212, %cst_105 [1] : vector<16x128xf32> to vector<16xf32>
    %218 = vector.shape_cast %217 : vector<16xf32> to vector<16x1xf32>
    %cst_106 = arith.constant 1.280000e+02 : f32
    %219 = vector.broadcast %cst_106 : f32 to vector<16x1xf32>
    %220 = arith.divf %218, %219 : vector<16x1xf32>
    %221 = vector.broadcast %220 : vector<16x1xf32> to vector<16x128xf32>
    %222 = arith.subf %212, %221 : vector<16x128xf32>
    %223 = arith.mulf %222, %222 : vector<16x128xf32>
    %cst_107 = arith.constant dense<0.000000e+00> : vector<16xf32>
    %224 = vector.multi_reduction <add>, %223, %cst_107 [1] : vector<16x128xf32> to vector<16xf32>
    %225 = vector.shape_cast %224 : vector<16xf32> to vector<16x1xf32>
    %cst_108 = arith.constant 1.280000e+02 : f32
    %226 = vector.broadcast %cst_108 : f32 to vector<16x1xf32>
    %227 = arith.divf %225, %226 : vector<16x1xf32>
    %228 = vector.broadcast %220 : vector<16x1xf32> to vector<16x128xf32>
    %229 = arith.subf %212, %228 : vector<16x128xf32>
    %cst_109 = arith.constant 9.99999974E-6 : f32
    %230 = vector.broadcast %cst_109 : f32 to vector<16x1xf32>
    %231 = arith.addf %227, %230 : vector<16x1xf32>
    %232 = math.rsqrt %231 : vector<16x1xf32>
    %233 = vector.broadcast %232 : vector<16x1xf32> to vector<16x128xf32>
    %234 = arith.mulf %229, %233 : vector<16x128xf32>
    %235 = vector.broadcast %214 : vector<1x128xf32> to vector<16x128xf32>
    %236 = arith.mulf %234, %235 : vector<16x128xf32>
    %237 = vector.broadcast %216 : vector<1x128xf32> to vector<16x128xf32>
    %238 = arith.addf %236, %237 : vector<16x128xf32>
    %239 = arith.truncf %238 : vector<16x128xf32> to vector<16x128xbf16>
    %c1_110 = arith.constant 1 : index
    %c0_111 = arith.constant 0 : index
    %c0_112 = arith.constant 0 : index
    %240 = vector.load %arg5[%c1_110, %c0_111, %c0_112] : memref<2x128x384xbf16, #tpu.memory_space<vmem>>, vector<1x128x384xbf16>
    %241 = vector.shape_cast %240 : vector<1x128x384xbf16> to vector<128x384xbf16>
    %cst_113 = arith.constant dense<0.000000e+00> : vector<16x384xf32>
    %242 = tpu.matmul %239, %241, %cst_113 {dimension_numbers = #tpu.dot_dimension_numbers<[1], [0], [0], [1], [0, 0, 1, 1], [], []>} : vector<16x128xbf16>, vector<128x384xbf16>, vector<16x384xf32> -> vector<16x384xf32>
    %243 = vector.extract_strided_slice %242 {offsets = [0, 0], sizes = [16, 128], strides = [1, 1]} : vector<16x384xf32> to vector<16x128xf32>
    %cst_114 = arith.constant 0.176776692 : f32
    %244 = vector.broadcast %cst_114 : f32 to vector<16x128xf32>
    %245 = arith.mulf %243, %244 : vector<16x128xf32>
    %246 = arith.truncf %245 : vector<16x128xf32> to vector<16x128xbf16>
    %247 = vector.extract_strided_slice %242 {offsets = [0, 128], sizes = [16, 128], strides = [1, 1]} : vector<16x384xf32> to vector<16x128xf32>
    %248 = arith.truncf %247 : vector<16x128xf32> to vector<16x128xbf16>
    %249 = vector.extract_strided_slice %242 {offsets = [0, 256], sizes = [16, 128], strides = [1, 1]} : vector<16x384xf32> to vector<16x128xf32>
    %250 = arith.truncf %249 : vector<16x128xf32> to vector<16x128xbf16>
    %c1_115 = arith.constant 1 : index
    %c0_116 = arith.constant 0 : index
    %c0_117 = arith.constant 0 : index
    %251 = vector.load %arg15[%c1_115, %c0_116, %c0_117] : memref<2x64x128xbf16, #tpu.memory_space<vmem>>, vector<1x16x128xbf16>
    %252 = vector.shape_cast %251 : vector<1x16x128xbf16> to vector<16x128xbf16>
    %253 = vector.shape_cast %248 : vector<16x128xbf16> to vector<1x16x128xbf16>
    tpu.vector_store %arg15[%c1_115, %c0_116, %c0_117], %253 {strides = array<i32>} : memref<2x64x128xbf16, #tpu.memory_space<vmem>>, vector<1x16x128xbf16>,
    %c1_118 = arith.constant 1 : index
    %c0_119 = arith.constant 0 : index
    %c0_120 = arith.constant 0 : index
    %254 = vector.load %arg16[%c1_118, %c0_119, %c0_120] : memref<2x64x128xbf16, #tpu.memory_space<vmem>>, vector<1x16x128xbf16>
    %255 = vector.shape_cast %254 : vector<1x16x128xbf16> to vector<16x128xbf16>
    %256 = vector.shape_cast %250 : vector<16x128xbf16> to vector<1x16x128xbf16>
    tpu.vector_store %arg16[%c1_118, %c0_119, %c0_120], %256 {strides = array<i32>} : memref<2x64x128xbf16, #tpu.memory_space<vmem>>, vector<1x16x128xbf16>,
    %cst_121 = arith.constant 0.000000e+00 : f32
    %257 = vector.broadcast %cst_121 : f32 to vector<16x128xf32>
    %258 = vector.extract_strided_slice %246 {offsets = [0, 0], sizes = [16, 32], strides = [1, 1]} : vector<16x128xbf16> to vector<16x32xbf16>
    %259 = vector.extract_strided_slice %248 {offsets = [0, 0], sizes = [16, 32], strides = [1, 1]} : vector<16x128xbf16> to vector<16x32xbf16>
    %cst_122 = arith.constant dense<0.000000e+00> : vector<16x16xf32>
    %260 = tpu.matmul %258, %259, %cst_122 {dimension_numbers = #tpu.dot_dimension_numbers<[1], [1], [0], [0], [0, 0, 1, 0], [], []>} : vector<16x32xbf16>, vector<16x32xbf16>, vector<16x16xf32> -> vector<16x16xf32>
    %cst_123 = arith.constant -1.000000e+30 : f32
    %261 = vector.broadcast %cst_123 : f32 to vector<16x16xf32>
    %262 = arith.select %22, %260, %261 : vector<16x16xi1>, vector<16x16xf32>
    %cst_124 = arith.constant dense<0xFF800000> : vector<16xf32>
    %263 = vector.multi_reduction <maximumf>, %262, %cst_124 [1] : vector<16x16xf32> to vector<16xf32>
    %264 = vector.shape_cast %263 : vector<16xf32> to vector<16x1xf32>
    %265 = vector.broadcast %264 : vector<16x1xf32> to vector<16x16xf32>
    %266 = arith.subf %262, %265 : vector<16x16xf32>
    %267 = math.exp %266 : vector<16x16xf32>
    %cst_125 = arith.constant 0.000000e+00 : f32
    %268 = vector.broadcast %cst_125 : f32 to vector<16x16xf32>
    %269 = arith.select %22, %267, %268 : vector<16x16xi1>, vector<16x16xf32>
    %cst_126 = arith.constant dense<0.000000e+00> : vector<16xf32>
    %270 = vector.multi_reduction <add>, %269, %cst_126 [1] : vector<16x16xf32> to vector<16xf32>
    %271 = vector.shape_cast %270 : vector<16xf32> to vector<16x1xf32>
    %272 = vector.broadcast %271 : vector<16x1xf32> to vector<16x16xf32>
    %273 = arith.divf %269, %272 : vector<16x16xf32>
    %274 = arith.truncf %273 : vector<16x16xf32> to vector<16x16xbf16>
    %275 = vector.extract_strided_slice %250 {offsets = [0, 0], sizes = [16, 32], strides = [1, 1]} : vector<16x128xbf16> to vector<16x32xbf16>
    %cst_127 = arith.constant dense<0.000000e+00> : vector<16x32xf32>
    %276 = tpu.matmul %274, %275, %cst_127 {dimension_numbers = #tpu.dot_dimension_numbers<[1], [0], [0], [1], [0, 0, 1, 1], [], []>} : vector<16x16xbf16>, vector<16x32xbf16>, vector<16x32xf32> -> vector<16x32xf32>
    %277 = arith.truncf %276 : vector<16x32xf32> to vector<16x32xbf16>
    %c1_128 = arith.constant 1 : index
    %c0_129 = arith.constant 0 : index
    %c0_130 = arith.constant 0 : index
    %278 = vector.load %arg6[%c1_128, %c0_129, %c0_130] : memref<2x128x128xbf16, #tpu.memory_space<vmem>>, vector<1x32x128xbf16>
    %279 = vector.shape_cast %278 : vector<1x32x128xbf16> to vector<32x128xbf16>
    %cst_131 = arith.constant dense<0.000000e+00> : vector<16x128xf32>
    %280 = tpu.matmul %277, %279, %cst_131 {dimension_numbers = #tpu.dot_dimension_numbers<[1], [0], [0], [1], [0, 0, 1, 1], [], []>} : vector<16x32xbf16>, vector<32x128xbf16>, vector<16x128xf32> -> vector<16x128xf32>
    %281 = arith.addf %257, %280 : vector<16x128xf32>
    %282 = vector.extract_strided_slice %246 {offsets = [0, 32], sizes = [16, 32], strides = [1, 1]} : vector<16x128xbf16> to vector<16x32xbf16>
    %283 = vector.extract_strided_slice %248 {offsets = [0, 32], sizes = [16, 32], strides = [1, 1]} : vector<16x128xbf16> to vector<16x32xbf16>
    %cst_132 = arith.constant dense<0.000000e+00> : vector<16x16xf32>
    %284 = tpu.matmul %282, %283, %cst_132 {dimension_numbers = #tpu.dot_dimension_numbers<[1], [1], [0], [0], [0, 0, 1, 0], [], []>} : vector<16x32xbf16>, vector<16x32xbf16>, vector<16x16xf32> -> vector<16x16xf32>
    %cst_133 = arith.constant -1.000000e+30 : f32
    %285 = vector.broadcast %cst_133 : f32 to vector<16x16xf32>
    %286 = arith.select %22, %284, %285 : vector<16x16xi1>, vector<16x16xf32>
    %cst_134 = arith.constant dense<0xFF800000> : vector<16xf32>
    %287 = vector.multi_reduction <maximumf>, %286, %cst_134 [1] : vector<16x16xf32> to vector<16xf32>
    %288 = vector.shape_cast %287 : vector<16xf32> to vector<16x1xf32>
    %289 = vector.broadcast %288 : vector<16x1xf32> to vector<16x16xf32>
    %290 = arith.subf %286, %289 : vector<16x16xf32>
    %291 = math.exp %290 : vector<16x16xf32>
    %cst_135 = arith.constant 0.000000e+00 : f32
    %292 = vector.broadcast %cst_135 : f32 to vector<16x16xf32>
    %293 = arith.select %22, %291, %292 : vector<16x16xi1>, vector<16x16xf32>
    %cst_136 = arith.constant dense<0.000000e+00> : vector<16xf32>
    %294 = vector.multi_reduction <add>, %293, %cst_136 [1] : vector<16x16xf32> to vector<16xf32>
    %295 = vector.shape_cast %294 : vector<16xf32> to vector<16x1xf32>
    %296 = vector.broadcast %295 : vector<16x1xf32> to vector<16x16xf32>
    %297 = arith.divf %293, %296 : vector<16x16xf32>
    %298 = arith.truncf %297 : vector<16x16xf32> to vector<16x16xbf16>
    %299 = vector.extract_strided_slice %250 {offsets = [0, 32], sizes = [16, 32], strides = [1, 1]} : vector<16x128xbf16> to vector<16x32xbf16>
    %cst_137 = arith.constant dense<0.000000e+00> : vector<16x32xf32>
    %300 = tpu.matmul %298, %299, %cst_137 {dimension_numbers = #tpu.dot_dimension_numbers<[1], [0], [0], [1], [0, 0, 1, 1], [], []>} : vector<16x16xbf16>, vector<16x32xbf16>, vector<16x32xf32> -> vector<16x32xf32>
    %301 = arith.truncf %300 : vector<16x32xf32> to vector<16x32xbf16>
    %c1_138 = arith.constant 1 : index
    %c32_139 = arith.constant 32 : index
    %c0_140 = arith.constant 0 : index
    %302 = vector.load %arg6[%c1_138, %c32_139, %c0_140] : memref<2x128x128xbf16, #tpu.memory_space<vmem>>, vector<1x32x128xbf16>
    %303 = vector.shape_cast %302 : vector<1x32x128xbf16> to vector<32x128xbf16>
    %cst_141 = arith.constant dense<0.000000e+00> : vector<16x128xf32>
    %304 = tpu.matmul %301, %303, %cst_141 {dimension_numbers = #tpu.dot_dimension_numbers<[1], [0], [0], [1], [0, 0, 1, 1], [], []>} : vector<16x32xbf16>, vector<32x128xbf16>, vector<16x128xf32> -> vector<16x128xf32>
    %305 = arith.addf %281, %304 : vector<16x128xf32>
    %306 = vector.extract_strided_slice %246 {offsets = [0, 64], sizes = [16, 32], strides = [1, 1]} : vector<16x128xbf16> to vector<16x32xbf16>
    %307 = vector.extract_strided_slice %248 {offsets = [0, 64], sizes = [16, 32], strides = [1, 1]} : vector<16x128xbf16> to vector<16x32xbf16>
    %cst_142 = arith.constant dense<0.000000e+00> : vector<16x16xf32>
    %308 = tpu.matmul %306, %307, %cst_142 {dimension_numbers = #tpu.dot_dimension_numbers<[1], [1], [0], [0], [0, 0, 1, 0], [], []>} : vector<16x32xbf16>, vector<16x32xbf16>, vector<16x16xf32> -> vector<16x16xf32>
    %cst_143 = arith.constant -1.000000e+30 : f32
    %309 = vector.broadcast %cst_143 : f32 to vector<16x16xf32>
    %310 = arith.select %22, %308, %309 : vector<16x16xi1>, vector<16x16xf32>
    %cst_144 = arith.constant dense<0xFF800000> : vector<16xf32>
    %311 = vector.multi_reduction <maximumf>, %310, %cst_144 [1] : vector<16x16xf32> to vector<16xf32>
    %312 = vector.shape_cast %311 : vector<16xf32> to vector<16x1xf32>
    %313 = vector.broadcast %312 : vector<16x1xf32> to vector<16x16xf32>
    %314 = arith.subf %310, %313 : vector<16x16xf32>
    %315 = math.exp %314 : vector<16x16xf32>
    %cst_145 = arith.constant 0.000000e+00 : f32
    %316 = vector.broadcast %cst_145 : f32 to vector<16x16xf32>
    %317 = arith.select %22, %315, %316 : vector<16x16xi1>, vector<16x16xf32>
    %cst_146 = arith.constant dense<0.000000e+00> : vector<16xf32>
    %318 = vector.multi_reduction <add>, %317, %cst_146 [1] : vector<16x16xf32> to vector<16xf32>
    %319 = vector.shape_cast %318 : vector<16xf32> to vector<16x1xf32>
    %320 = vector.broadcast %319 : vector<16x1xf32> to vector<16x16xf32>
    %321 = arith.divf %317, %320 : vector<16x16xf32>
    %322 = arith.truncf %321 : vector<16x16xf32> to vector<16x16xbf16>
    %323 = vector.extract_strided_slice %250 {offsets = [0, 64], sizes = [16, 32], strides = [1, 1]} : vector<16x128xbf16> to vector<16x32xbf16>
    %cst_147 = arith.constant dense<0.000000e+00> : vector<16x32xf32>
    %324 = tpu.matmul %322, %323, %cst_147 {dimension_numbers = #tpu.dot_dimension_numbers<[1], [0], [0], [1], [0, 0, 1, 1], [], []>} : vector<16x16xbf16>, vector<16x32xbf16>, vector<16x32xf32> -> vector<16x32xf32>
    %325 = arith.truncf %324 : vector<16x32xf32> to vector<16x32xbf16>
    %c1_148 = arith.constant 1 : index
    %c64_149 = arith.constant 64 : index
    %c0_150 = arith.constant 0 : index
    %326 = vector.load %arg6[%c1_148, %c64_149, %c0_150] : memref<2x128x128xbf16, #tpu.memory_space<vmem>>, vector<1x32x128xbf16>
    %327 = vector.shape_cast %326 : vector<1x32x128xbf16> to vector<32x128xbf16>
    %cst_151 = arith.constant dense<0.000000e+00> : vector<16x128xf32>
    %328 = tpu.matmul %325, %327, %cst_151 {dimension_numbers = #tpu.dot_dimension_numbers<[1], [0], [0], [1], [0, 0, 1, 1], [], []>} : vector<16x32xbf16>, vector<32x128xbf16>, vector<16x128xf32> -> vector<16x128xf32>
    %329 = arith.addf %305, %328 : vector<16x128xf32>
    %330 = vector.extract_strided_slice %246 {offsets = [0, 96], sizes = [16, 32], strides = [1, 1]} : vector<16x128xbf16> to vector<16x32xbf16>
    %331 = vector.extract_strided_slice %248 {offsets = [0, 96], sizes = [16, 32], strides = [1, 1]} : vector<16x128xbf16> to vector<16x32xbf16>
    %cst_152 = arith.constant dense<0.000000e+00> : vector<16x16xf32>
    %332 = tpu.matmul %330, %331, %cst_152 {dimension_numbers = #tpu.dot_dimension_numbers<[1], [1], [0], [0], [0, 0, 1, 0], [], []>} : vector<16x32xbf16>, vector<16x32xbf16>, vector<16x16xf32> -> vector<16x16xf32>
    %cst_153 = arith.constant -1.000000e+30 : f32
    %333 = vector.broadcast %cst_153 : f32 to vector<16x16xf32>
    %334 = arith.select %22, %332, %333 : vector<16x16xi1>, vector<16x16xf32>
    %cst_154 = arith.constant dense<0xFF800000> : vector<16xf32>
    %335 = vector.multi_reduction <maximumf>, %334, %cst_154 [1] : vector<16x16xf32> to vector<16xf32>
    %336 = vector.shape_cast %335 : vector<16xf32> to vector<16x1xf32>
    %337 = vector.broadcast %336 : vector<16x1xf32> to vector<16x16xf32>
    %338 = arith.subf %334, %337 : vector<16x16xf32>
    %339 = math.exp %338 : vector<16x16xf32>
    %cst_155 = arith.constant 0.000000e+00 : f32
    %340 = vector.broadcast %cst_155 : f32 to vector<16x16xf32>
    %341 = arith.select %22, %339, %340 : vector<16x16xi1>, vector<16x16xf32>
    %cst_156 = arith.constant dense<0.000000e+00> : vector<16xf32>
    %342 = vector.multi_reduction <add>, %341, %cst_156 [1] : vector<16x16xf32> to vector<16xf32>
    %343 = vector.shape_cast %342 : vector<16xf32> to vector<16x1xf32>
    %344 = vector.broadcast %343 : vector<16x1xf32> to vector<16x16xf32>
    %345 = arith.divf %341, %344 : vector<16x16xf32>
    %346 = arith.truncf %345 : vector<16x16xf32> to vector<16x16xbf16>
    %347 = vector.extract_strided_slice %250 {offsets = [0, 96], sizes = [16, 32], strides = [1, 1]} : vector<16x128xbf16> to vector<16x32xbf16>
    %cst_157 = arith.constant dense<0.000000e+00> : vector<16x32xf32>
    %348 = tpu.matmul %346, %347, %cst_157 {dimension_numbers = #tpu.dot_dimension_numbers<[1], [0], [0], [1], [0, 0, 1, 1], [], []>} : vector<16x16xbf16>, vector<16x32xbf16>, vector<16x32xf32> -> vector<16x32xf32>
    %349 = arith.truncf %348 : vector<16x32xf32> to vector<16x32xbf16>
    %c1_158 = arith.constant 1 : index
    %c96_159 = arith.constant 96 : index
    %c0_160 = arith.constant 0 : index
    %350 = vector.load %arg6[%c1_158, %c96_159, %c0_160] : memref<2x128x128xbf16, #tpu.memory_space<vmem>>, vector<1x32x128xbf16>
    %351 = vector.shape_cast %350 : vector<1x32x128xbf16> to vector<32x128xbf16>
    %cst_161 = arith.constant dense<0.000000e+00> : vector<16x128xf32>
    %352 = tpu.matmul %349, %351, %cst_161 {dimension_numbers = #tpu.dot_dimension_numbers<[1], [0], [0], [1], [0, 0, 1, 1], [], []>} : vector<16x32xbf16>, vector<32x128xbf16>, vector<16x128xf32> -> vector<16x128xf32>
    %353 = arith.addf %329, %352 : vector<16x128xf32>
    %354 = arith.addf %212, %353 : vector<16x128xf32>
    %c1_162 = arith.constant 1 : index
    %c0_163 = arith.constant 0 : index
    %c0_164 = arith.constant 0 : index
    %355 = vector.load %arg7[%c1_162, %c0_163, %c0_164] : memref<2x1x128xf32, #tpu.memory_space<vmem>>, vector<1x1x128xf32>
    %356 = vector.shape_cast %355 : vector<1x1x128xf32> to vector<1x128xf32>
    %c1_165 = arith.constant 1 : index
    %c0_166 = arith.constant 0 : index
    %c0_167 = arith.constant 0 : index
    %357 = vector.load %arg8[%c1_165, %c0_166, %c0_167] : memref<2x1x128xf32, #tpu.memory_space<vmem>>, vector<1x1x128xf32>
    %358 = vector.shape_cast %357 : vector<1x1x128xf32> to vector<1x128xf32>
    %cst_168 = arith.constant dense<0.000000e+00> : vector<16xf32>
    %359 = vector.multi_reduction <add>, %354, %cst_168 [1] : vector<16x128xf32> to vector<16xf32>
    %360 = vector.shape_cast %359 : vector<16xf32> to vector<16x1xf32>
    %cst_169 = arith.constant 1.280000e+02 : f32
    %361 = vector.broadcast %cst_169 : f32 to vector<16x1xf32>
    %362 = arith.divf %360, %361 : vector<16x1xf32>
    %363 = vector.broadcast %362 : vector<16x1xf32> to vector<16x128xf32>
    %364 = arith.subf %354, %363 : vector<16x128xf32>
    %365 = arith.mulf %364, %364 : vector<16x128xf32>
    %cst_170 = arith.constant dense<0.000000e+00> : vector<16xf32>
    %366 = vector.multi_reduction <add>, %365, %cst_170 [1] : vector<16x128xf32> to vector<16xf32>
    %367 = vector.shape_cast %366 : vector<16xf32> to vector<16x1xf32>
    %cst_171 = arith.constant 1.280000e+02 : f32
    %368 = vector.broadcast %cst_171 : f32 to vector<16x1xf32>
    %369 = arith.divf %367, %368 : vector<16x1xf32>
    %370 = vector.broadcast %362 : vector<16x1xf32> to vector<16x128xf32>
    %371 = arith.subf %354, %370 : vector<16x128xf32>
    %cst_172 = arith.constant 9.99999974E-6 : f32
    %372 = vector.broadcast %cst_172 : f32 to vector<16x1xf32>
    %373 = arith.addf %369, %372 : vector<16x1xf32>
    %374 = math.rsqrt %373 : vector<16x1xf32>
    %375 = vector.broadcast %374 : vector<16x1xf32> to vector<16x128xf32>
    %376 = arith.mulf %371, %375 : vector<16x128xf32>
    %377 = vector.broadcast %356 : vector<1x128xf32> to vector<16x128xf32>
    %378 = arith.mulf %376, %377 : vector<16x128xf32>
    %379 = vector.broadcast %358 : vector<1x128xf32> to vector<16x128xf32>
    %380 = arith.addf %378, %379 : vector<16x128xf32>
    %381 = arith.truncf %380 : vector<16x128xf32> to vector<16x128xbf16>
    %c1_173 = arith.constant 1 : index
    %c0_174 = arith.constant 0 : index
    %c0_175 = arith.constant 0 : index
    %382 = vector.load %arg9[%c1_173, %c0_174, %c0_175] : memref<2x128x256xbf16, #tpu.memory_space<vmem>>, vector<1x128x256xbf16>
    %383 = vector.shape_cast %382 : vector<1x128x256xbf16> to vector<128x256xbf16>
    %cst_176 = arith.constant dense<0.000000e+00> : vector<16x256xf32>
    %384 = tpu.matmul %381, %383, %cst_176 {dimension_numbers = #tpu.dot_dimension_numbers<[1], [0], [0], [1], [0, 0, 1, 1], [], []>} : vector<16x128xbf16>, vector<128x256xbf16>, vector<16x256xf32> -> vector<16x256xf32>
    %385 = arith.mulf %384, %384 : vector<16x256xf32>
    %386 = arith.mulf %384, %385 : vector<16x256xf32>
    %cst_177 = arith.constant 4.471500e-02 : f32
    %387 = vector.broadcast %cst_177 : f32 to vector<16x256xf32>
    %388 = arith.mulf %387, %386 : vector<16x256xf32>
    %389 = arith.addf %384, %388 : vector<16x256xf32>
    %cst_178 = arith.constant 0.797884583 : f32
    %390 = vector.broadcast %cst_178 : f32 to vector<16x256xf32>
    %391 = arith.mulf %390, %389 : vector<16x256xf32>
    %392 = math.tanh %391 : vector<16x256xf32>
    %cst_179 = arith.constant 1.000000e+00 : f32
    %393 = vector.broadcast %cst_179 : f32 to vector<16x256xf32>
    %394 = arith.addf %393, %392 : vector<16x256xf32>
    %cst_180 = arith.constant 5.000000e-01 : f32
    %395 = vector.broadcast %cst_180 : f32 to vector<16x256xf32>
    %396 = arith.mulf %395, %394 : vector<16x256xf32>
    %397 = arith.mulf %384, %396 : vector<16x256xf32>
    %398 = arith.truncf %397 : vector<16x256xf32> to vector<16x256xbf16>
    %c1_181 = arith.constant 1 : index
    %c0_182 = arith.constant 0 : index
    %c0_183 = arith.constant 0 : index
    %399 = vector.load %arg10[%c1_181, %c0_182, %c0_183] : memref<2x256x128xbf16, #tpu.memory_space<vmem>>, vector<1x256x128xbf16>
    %400 = vector.shape_cast %399 : vector<1x256x128xbf16> to vector<256x128xbf16>
    %cst_184 = arith.constant dense<0.000000e+00> : vector<16x128xf32>
    %401 = tpu.matmul %398, %400, %cst_184 {dimension_numbers = #tpu.dot_dimension_numbers<[1], [0], [0], [1], [0, 0, 1, 1], [], []>} : vector<16x256xbf16>, vector<256x128xbf16>, vector<16x128xf32> -> vector<16x128xf32>
    %402 = arith.addf %354, %401 : vector<16x128xf32>
    %403 = vector.extract_strided_slice %402 {offsets = [8, 0], sizes = [1, 128], strides = [1, 1]} : vector<16x128xf32> to vector<1x128xf32>
    %c0_185 = arith.constant 0 : index
    %c0_186 = arith.constant 0 : index
    %404 = vector.load %arg11[%c0_185, %c0_186] : memref<1x128xf32, #tpu.memory_space<vmem>>, vector<1x128xf32>
    %c0_187 = arith.constant 0 : index
    %c0_188 = arith.constant 0 : index
    %405 = vector.load %arg12[%c0_187, %c0_188] : memref<1x128xf32, #tpu.memory_space<vmem>>, vector<1x128xf32>
    %cst_189 = arith.constant dense<0.000000e+00> : vector<1xf32>
    %406 = vector.multi_reduction <add>, %403, %cst_189 [1] : vector<1x128xf32> to vector<1xf32>
    %407 = vector.shape_cast %406 : vector<1xf32> to vector<1x1xf32>
    %cst_190 = arith.constant 1.280000e+02 : f32
    %408 = vector.broadcast %cst_190 : f32 to vector<1x1xf32>
    %409 = arith.divf %407, %408 : vector<1x1xf32>
    %410 = vector.broadcast %409 : vector<1x1xf32> to vector<1x128xf32>
    %411 = arith.subf %403, %410 : vector<1x128xf32>
    %412 = arith.mulf %411, %411 : vector<1x128xf32>
    %cst_191 = arith.constant dense<0.000000e+00> : vector<1xf32>
    %413 = vector.multi_reduction <add>, %412, %cst_191 [1] : vector<1x128xf32> to vector<1xf32>
    %414 = vector.shape_cast %413 : vector<1xf32> to vector<1x1xf32>
    %cst_192 = arith.constant 1.280000e+02 : f32
    %415 = vector.broadcast %cst_192 : f32 to vector<1x1xf32>
    %416 = arith.divf %414, %415 : vector<1x1xf32>
    %417 = vector.broadcast %409 : vector<1x1xf32> to vector<1x128xf32>
    %418 = arith.subf %403, %417 : vector<1x128xf32>
    %cst_193 = arith.constant 9.99999974E-6 : f32
    %419 = vector.broadcast %cst_193 : f32 to vector<1x1xf32>
    %420 = arith.addf %416, %419 : vector<1x1xf32>
    %421 = math.rsqrt %420 : vector<1x1xf32>
    %422 = vector.broadcast %421 : vector<1x1xf32> to vector<1x128xf32>
    %423 = arith.mulf %418, %422 : vector<1x128xf32>
    %424 = arith.mulf %423, %404 : vector<1x128xf32>
    %425 = arith.addf %424, %405 : vector<1x128xf32>
    %426 = arith.truncf %425 : vector<1x128xf32> to vector<1x128xbf16>
    %c0_194 = arith.constant 0 : index
    %c0_195 = arith.constant 0 : index
    %427 = vector.load %arg13[%c0_194, %c0_195] : memref<128x256xbf16, #tpu.memory_space<vmem>>, vector<128x256xbf16>
    %cst_196 = arith.constant dense<0.000000e+00> : vector<1x256xf32>
    %428 = tpu.matmul %426, %427, %cst_196 {dimension_numbers = #tpu.dot_dimension_numbers<[1], [0], [0], [1], [0, 0, 1, 1], [], []>} : vector<1x128xbf16>, vector<128x256xbf16>, vector<1x256xf32> -> vector<1x256xf32>
    %cst_197 = arith.constant dense<0xFF800000> : vector<1xf32>
    %429 = vector.multi_reduction <maximumf>, %428, %cst_197 [1] : vector<1x256xf32> to vector<1xf32>
    %430 = vector.shape_cast %429 : vector<1xf32> to vector<1x1xf32>
    %431 = vector.broadcast %430 : vector<1x1xf32> to vector<1x256xf32>
    %432 = arith.cmpf oeq, %428, %431 : vector<1x256xf32>
    %c256_i32 = arith.constant 256 : i32
    %433 = vector.broadcast %c256_i32 : i32 to vector<1x256xi32>
    %434 = arith.select %432, %0, %433 : vector<1x256xi1>, vector<1x256xi32>
    %cst_198 = arith.constant dense<2147483647> : vector<1xi32>
    %435 = vector.multi_reduction <minsi>, %434, %cst_198 [1] : vector<1x256xi32> to vector<1xi32>
    %436 = vector.shape_cast %435 : vector<1xi32> to vector<1x1xi32>
    %c9_i32 = arith.constant 9 : i32
    %437 = vector.broadcast %c9_i32 : i32 to vector<64x1xi32>
    %438 = arith.cmpi eq, %1, %437 : vector<64x1xi32>
    %c0_199 = arith.constant 0 : index
    %c0_200 = arith.constant 0 : index
    %439 = vector.load %arg14[%c0_199, %c0_200] : memref<64x1xi32, #tpu.memory_space<vmem>>, vector<64x1xi32>
    %440 = vector.shape_cast %436 : vector<1x1xi32> to vector<1x1xi32>
    %441 = vector.broadcast %440 : vector<1x1xi32> to vector<64x1xi32>
    %442 = arith.select %438, %441, %439 : vector<64x1xi1>, vector<64x1xi32>
    %c0_201 = arith.constant 0 : index
    %c0_202 = arith.constant 0 : index
    %443 = vector.load %arg14[%c0_201, %c0_202] : memref<64x1xi32, #tpu.memory_space<vmem>>, vector<64x1xi32>
    tpu.vector_store %arg14[%c0_201, %c0_202], %442 {strides = array<i32>} : memref<64x1xi32, #tpu.memory_space<vmem>>, vector<64x1xi32>,
    %c9_i32_203 = arith.constant 9 : i32
    %c39_i32 = arith.constant 39 : i32
    %444 = arith.addi %c9_i32_203, %c39_i32 : i32
    %c1_i32 = arith.constant 1 : i32
    %445 = scf.for %arg17 = %c9_i32_203 to %444 step %c1_i32 iter_args(%arg18 = %436) -> (vector<1x1xi32>)  : i32 {
      %446 = vector.broadcast %arg18 : vector<1x1xi32> to vector<1x256xi32>
      %447 = arith.cmpi eq, %0, %446 : vector<1x256xi32>
      %448 = arith.extui %447 : vector<1x256xi1> to vector<1x256xi32>
      %449 = arith.sitofp %448 : vector<1x256xi32> to vector<1x256xf32>
      %450 = arith.truncf %449 : vector<1x256xf32> to vector<1x256xbf16>
      %c0_205 = arith.constant 0 : index
      %c0_206 = arith.constant 0 : index
      %451 = vector.load %arg1[%c0_205, %c0_206] : memref<256x128xbf16, #tpu.memory_space<vmem>>, vector<256x128xbf16>
      %cst_207 = arith.constant dense<0.000000e+00> : vector<1x128xf32>
      %452 = tpu.matmul %450, %451, %cst_207 {dimension_numbers = #tpu.dot_dimension_numbers<[1], [0], [0], [1], [0, 0, 1, 1], [], []>} : vector<1x256xbf16>, vector<256x128xbf16>, vector<1x128xf32> -> vector<1x128xf32>
      %453 = arith.index_cast %arg17 : i32 to index
      %c0_208 = arith.constant 0 : index
      %454 = vector.load %arg2[%453, %c0_208] : memref<64x128xf32, #tpu.memory_space<vmem>>, vector<1x128xf32>
      %455 = arith.addf %452, %454 : vector<1x128xf32>
      %456 = vector.broadcast %arg17 : i32 to vector<1x64xi32>
      %457 = arith.cmpi sle, %2, %456 : vector<1x64xi32>
      %458 = vector.broadcast %arg17 : i32 to vector<64x1xi32>
      %459 = arith.cmpi eq, %1, %458 : vector<64x1xi32>
      %c0_209 = arith.constant 0 : index
      %c0_210 = arith.constant 0 : index
      %c0_211 = arith.constant 0 : index
      %460 = vector.load %arg3[%c0_209, %c0_210, %c0_211] : memref<2x1x128xf32, #tpu.memory_space<vmem>>, vector<1x1x128xf32>
      %461 = vector.shape_cast %460 : vector<1x1x128xf32> to vector<1x128xf32>
      %c0_212 = arith.constant 0 : index
      %c0_213 = arith.constant 0 : index
      %c0_214 = arith.constant 0 : index
      %462 = vector.load %arg4[%c0_212, %c0_213, %c0_214] : memref<2x1x128xf32, #tpu.memory_space<vmem>>, vector<1x1x128xf32>
      %463 = vector.shape_cast %462 : vector<1x1x128xf32> to vector<1x128xf32>
      %cst_215 = arith.constant dense<0.000000e+00> : vector<1xf32>
      %464 = vector.multi_reduction <add>, %455, %cst_215 [1] : vector<1x128xf32> to vector<1xf32>
      %465 = vector.shape_cast %464 : vector<1xf32> to vector<1x1xf32>
      %cst_216 = arith.constant 1.280000e+02 : f32
      %466 = vector.broadcast %cst_216 : f32 to vector<1x1xf32>
      %467 = arith.divf %465, %466 : vector<1x1xf32>
      %468 = vector.broadcast %467 : vector<1x1xf32> to vector<1x128xf32>
      %469 = arith.subf %455, %468 : vector<1x128xf32>
      %470 = arith.mulf %469, %469 : vector<1x128xf32>
      %cst_217 = arith.constant dense<0.000000e+00> : vector<1xf32>
      %471 = vector.multi_reduction <add>, %470, %cst_217 [1] : vector<1x128xf32> to vector<1xf32>
      %472 = vector.shape_cast %471 : vector<1xf32> to vector<1x1xf32>
      %cst_218 = arith.constant 1.280000e+02 : f32
      %473 = vector.broadcast %cst_218 : f32 to vector<1x1xf32>
      %474 = arith.divf %472, %473 : vector<1x1xf32>
      %475 = vector.broadcast %467 : vector<1x1xf32> to vector<1x128xf32>
      %476 = arith.subf %455, %475 : vector<1x128xf32>
      %cst_219 = arith.constant 9.99999974E-6 : f32
      %477 = vector.broadcast %cst_219 : f32 to vector<1x1xf32>
      %478 = arith.addf %474, %477 : vector<1x1xf32>
      %479 = math.rsqrt %478 : vector<1x1xf32>
      %480 = vector.broadcast %479 : vector<1x1xf32> to vector<1x128xf32>
      %481 = arith.mulf %476, %480 : vector<1x128xf32>
      %482 = arith.mulf %481, %461 : vector<1x128xf32>
      %483 = arith.addf %482, %463 : vector<1x128xf32>
      %484 = arith.truncf %483 : vector<1x128xf32> to vector<1x128xbf16>
      %c0_220 = arith.constant 0 : index
      %c0_221 = arith.constant 0 : index
      %c0_222 = arith.constant 0 : index
      %485 = vector.load %arg5[%c0_220, %c0_221, %c0_222] : memref<2x128x384xbf16, #tpu.memory_space<vmem>>, vector<1x128x384xbf16>
      %486 = vector.shape_cast %485 : vector<1x128x384xbf16> to vector<128x384xbf16>
      %cst_223 = arith.constant dense<0.000000e+00> : vector<1x384xf32>
      %487 = tpu.matmul %484, %486, %cst_223 {dimension_numbers = #tpu.dot_dimension_numbers<[1], [0], [0], [1], [0, 0, 1, 1], [], []>} : vector<1x128xbf16>, vector<128x384xbf16>, vector<1x384xf32> -> vector<1x384xf32>
      %488 = vector.extract_strided_slice %487 {offsets = [0, 0], sizes = [1, 128], strides = [1, 1]} : vector<1x384xf32> to vector<1x128xf32>
      %cst_224 = arith.constant 0.176776692 : f32
      %489 = vector.broadcast %cst_224 : f32 to vector<1x128xf32>
      %490 = arith.mulf %488, %489 : vector<1x128xf32>
      %491 = arith.truncf %490 : vector<1x128xf32> to vector<1x128xbf16>
      %492 = vector.extract_strided_slice %487 {offsets = [0, 128], sizes = [1, 128], strides = [1, 1]} : vector<1x384xf32> to vector<1x128xf32>
      %493 = arith.truncf %492 : vector<1x128xf32> to vector<1x128xbf16>
      %494 = vector.extract_strided_slice %487 {offsets = [0, 256], sizes = [1, 128], strides = [1, 1]} : vector<1x384xf32> to vector<1x128xf32>
      %495 = arith.truncf %494 : vector<1x128xf32> to vector<1x128xbf16>
      %c0_225 = arith.constant 0 : index
      %c0_226 = arith.constant 0 : index
      %c0_227 = arith.constant 0 : index
      %496 = vector.load %arg15[%c0_225, %c0_226, %c0_227] : memref<2x64x128xbf16, #tpu.memory_space<vmem>>, vector<1x64x128xbf16>
      %497 = vector.shape_cast %496 : vector<1x64x128xbf16> to vector<64x128xbf16>
      %498 = vector.shape_cast %459 : vector<64x1xi1> to vector<64x1xi1>
      %499 = vector.broadcast %498 : vector<64x1xi1> to vector<64x128xi1>
      %500 = vector.shape_cast %493 : vector<1x128xbf16> to vector<1x128xbf16>
      %501 = vector.broadcast %500 : vector<1x128xbf16> to vector<64x128xbf16>
      %502 = arith.select %499, %501, %497 : vector<64x128xi1>, vector<64x128xbf16>
      %c0_228 = arith.constant 0 : index
      %c0_229 = arith.constant 0 : index
      %c0_230 = arith.constant 0 : index
      %503 = vector.load %arg16[%c0_228, %c0_229, %c0_230] : memref<2x64x128xbf16, #tpu.memory_space<vmem>>, vector<1x64x128xbf16>
      %504 = vector.shape_cast %503 : vector<1x64x128xbf16> to vector<64x128xbf16>
      %505 = vector.shape_cast %459 : vector<64x1xi1> to vector<64x1xi1>
      %506 = vector.broadcast %505 : vector<64x1xi1> to vector<64x128xi1>
      %507 = vector.shape_cast %495 : vector<1x128xbf16> to vector<1x128xbf16>
      %508 = vector.broadcast %507 : vector<1x128xbf16> to vector<64x128xbf16>
      %509 = arith.select %506, %508, %504 : vector<64x128xi1>, vector<64x128xbf16>
      %c0_231 = arith.constant 0 : index
      %c0_232 = arith.constant 0 : index
      %c0_233 = arith.constant 0 : index
      %510 = vector.load %arg15[%c0_231, %c0_232, %c0_233] : memref<2x64x128xbf16, #tpu.memory_space<vmem>>, vector<1x64x128xbf16>
      %511 = vector.shape_cast %510 : vector<1x64x128xbf16> to vector<64x128xbf16>
      %512 = vector.shape_cast %502 : vector<64x128xbf16> to vector<1x64x128xbf16>
      tpu.vector_store %arg15[%c0_231, %c0_232, %c0_233], %512 {strides = array<i32>} : memref<2x64x128xbf16, #tpu.memory_space<vmem>>, vector<1x64x128xbf16>,
      %c0_234 = arith.constant 0 : index
      %c0_235 = arith.constant 0 : index
      %c0_236 = arith.constant 0 : index
      %513 = vector.load %arg16[%c0_234, %c0_235, %c0_236] : memref<2x64x128xbf16, #tpu.memory_space<vmem>>, vector<1x64x128xbf16>
      %514 = vector.shape_cast %513 : vector<1x64x128xbf16> to vector<64x128xbf16>
      %515 = vector.shape_cast %509 : vector<64x128xbf16> to vector<1x64x128xbf16>
      tpu.vector_store %arg16[%c0_234, %c0_235, %c0_236], %515 {strides = array<i32>} : memref<2x64x128xbf16, #tpu.memory_space<vmem>>, vector<1x64x128xbf16>,
      %516 = vector.extract_strided_slice %491 {offsets = [0, 0], sizes = [1, 32], strides = [1, 1]} : vector<1x128xbf16> to vector<1x32xbf16>
      %517 = vector.extract_strided_slice %502 {offsets = [0, 0], sizes = [64, 32], strides = [1, 1]} : vector<64x128xbf16> to vector<64x32xbf16>
      %cst_237 = arith.constant dense<0.000000e+00> : vector<1x64xf32>
      %518 = tpu.matmul %516, %517, %cst_237 {dimension_numbers = #tpu.dot_dimension_numbers<[1], [1], [0], [0], [0, 0, 1, 0], [], []>} : vector<1x32xbf16>, vector<64x32xbf16>, vector<1x64xf32> -> vector<1x64xf32>
      %519 = vector.extract_strided_slice %491 {offsets = [0, 32], sizes = [1, 32], strides = [1, 1]} : vector<1x128xbf16> to vector<1x32xbf16>
      %520 = vector.extract_strided_slice %502 {offsets = [0, 32], sizes = [64, 32], strides = [1, 1]} : vector<64x128xbf16> to vector<64x32xbf16>
      %cst_238 = arith.constant dense<0.000000e+00> : vector<1x64xf32>
      %521 = tpu.matmul %519, %520, %cst_238 {dimension_numbers = #tpu.dot_dimension_numbers<[1], [1], [0], [0], [0, 0, 1, 0], [], []>} : vector<1x32xbf16>, vector<64x32xbf16>, vector<1x64xf32> -> vector<1x64xf32>
      %522 = vector.extract_strided_slice %491 {offsets = [0, 64], sizes = [1, 32], strides = [1, 1]} : vector<1x128xbf16> to vector<1x32xbf16>
      %523 = vector.extract_strided_slice %502 {offsets = [0, 64], sizes = [64, 32], strides = [1, 1]} : vector<64x128xbf16> to vector<64x32xbf16>
      %cst_239 = arith.constant dense<0.000000e+00> : vector<1x64xf32>
      %524 = tpu.matmul %522, %523, %cst_239 {dimension_numbers = #tpu.dot_dimension_numbers<[1], [1], [0], [0], [0, 0, 1, 0], [], []>} : vector<1x32xbf16>, vector<64x32xbf16>, vector<1x64xf32> -> vector<1x64xf32>
      %525 = vector.extract_strided_slice %491 {offsets = [0, 96], sizes = [1, 32], strides = [1, 1]} : vector<1x128xbf16> to vector<1x32xbf16>
      %526 = vector.extract_strided_slice %502 {offsets = [0, 96], sizes = [64, 32], strides = [1, 1]} : vector<64x128xbf16> to vector<64x32xbf16>
      %cst_240 = arith.constant dense<0.000000e+00> : vector<1x64xf32>
      %527 = tpu.matmul %525, %526, %cst_240 {dimension_numbers = #tpu.dot_dimension_numbers<[1], [1], [0], [0], [0, 0, 1, 0], [], []>} : vector<1x32xbf16>, vector<64x32xbf16>, vector<1x64xf32> -> vector<1x64xf32>
      %528 = tpu.concatenate %518, %521, %524, %527 in 0 : vector<1x64xf32>, vector<1x64xf32>, vector<1x64xf32>, vector<1x64xf32> -> vector<4x64xf32>
      %cst_241 = arith.constant -1.000000e+30 : f32
      %529 = vector.shape_cast %457 : vector<1x64xi1> to vector<1x64xi1>
      %530 = vector.broadcast %529 : vector<1x64xi1> to vector<4x64xi1>
      %531 = vector.broadcast %cst_241 : f32 to vector<4x64xf32>
      %532 = arith.select %530, %528, %531 : vector<4x64xi1>, vector<4x64xf32>
      %cst_242 = arith.constant dense<0xFF800000> : vector<4xf32>
      %533 = vector.multi_reduction <maximumf>, %532, %cst_242 [1] : vector<4x64xf32> to vector<4xf32>
      %534 = vector.shape_cast %533 : vector<4xf32> to vector<4x1xf32>
      %535 = vector.broadcast %534 : vector<4x1xf32> to vector<4x64xf32>
      %536 = arith.subf %532, %535 : vector<4x64xf32>
      %537 = math.exp %536 : vector<4x64xf32>
      %cst_243 = arith.constant 0.000000e+00 : f32
      %538 = vector.shape_cast %457 : vector<1x64xi1> to vector<1x64xi1>
      %539 = vector.broadcast %538 : vector<1x64xi1> to vector<4x64xi1>
      %540 = vector.broadcast %cst_243 : f32 to vector<4x64xf32>
      %541 = arith.select %539, %537, %540 : vector<4x64xi1>, vector<4x64xf32>
      %cst_244 = arith.constant dense<0.000000e+00> : vector<4xf32>
      %542 = vector.multi_reduction <add>, %541, %cst_244 [1] : vector<4x64xf32> to vector<4xf32>
      %543 = vector.shape_cast %542 : vector<4xf32> to vector<4x1xf32>
      %544 = vector.broadcast %543 : vector<4x1xf32> to vector<4x64xf32>
      %545 = arith.divf %541, %544 : vector<4x64xf32>
      %546 = arith.truncf %545 : vector<4x64xf32> to vector<4x64xbf16>
      %cst_245 = arith.constant 0.000000e+00 : f32
      %547 = vector.broadcast %cst_245 : f32 to vector<1x128xf32>
      %548 = vector.extract_strided_slice %546 {offsets = [0, 0], sizes = [1, 64], strides = [1, 1]} : vector<4x64xbf16> to vector<1x64xbf16>
      %549 = vector.extract_strided_slice %509 {offsets = [0, 0], sizes = [64, 32], strides = [1, 1]} : vector<64x128xbf16> to vector<64x32xbf16>
      %cst_246 = arith.constant dense<0.000000e+00> : vector<1x32xf32>
      %550 = tpu.matmul %548, %549, %cst_246 {dimension_numbers = #tpu.dot_dimension_numbers<[1], [0], [0], [1], [0, 0, 1, 1], [], []>} : vector<1x64xbf16>, vector<64x32xbf16>, vector<1x32xf32> -> vector<1x32xf32>
      %551 = arith.truncf %550 : vector<1x32xf32> to vector<1x32xbf16>
      %c0_247 = arith.constant 0 : index
      %c0_248 = arith.constant 0 : index
      %c0_249 = arith.constant 0 : index
      %552 = vector.load %arg6[%c0_247, %c0_248, %c0_249] : memref<2x128x128xbf16, #tpu.memory_space<vmem>>, vector<1x32x128xbf16>
      %553 = vector.shape_cast %552 : vector<1x32x128xbf16> to vector<32x128xbf16>
      %cst_250 = arith.constant dense<0.000000e+00> : vector<1x128xf32>
      %554 = tpu.matmul %551, %553, %cst_250 {dimension_numbers = #tpu.dot_dimension_numbers<[1], [0], [0], [1], [0, 0, 1, 1], [], []>} : vector<1x32xbf16>, vector<32x128xbf16>, vector<1x128xf32> -> vector<1x128xf32>
      %555 = arith.addf %547, %554 : vector<1x128xf32>
      %556 = vector.extract_strided_slice %546 {offsets = [1, 0], sizes = [1, 64], strides = [1, 1]} : vector<4x64xbf16> to vector<1x64xbf16>
      %557 = vector.extract_strided_slice %509 {offsets = [0, 32], sizes = [64, 32], strides = [1, 1]} : vector<64x128xbf16> to vector<64x32xbf16>
      %cst_251 = arith.constant dense<0.000000e+00> : vector<1x32xf32>
      %558 = tpu.matmul %556, %557, %cst_251 {dimension_numbers = #tpu.dot_dimension_numbers<[1], [0], [0], [1], [0, 0, 1, 1], [], []>} : vector<1x64xbf16>, vector<64x32xbf16>, vector<1x32xf32> -> vector<1x32xf32>
      %559 = arith.truncf %558 : vector<1x32xf32> to vector<1x32xbf16>
      %c0_252 = arith.constant 0 : index
      %c32_253 = arith.constant 32 : index
      %c0_254 = arith.constant 0 : index
      %560 = vector.load %arg6[%c0_252, %c32_253, %c0_254] : memref<2x128x128xbf16, #tpu.memory_space<vmem>>, vector<1x32x128xbf16>
      %561 = vector.shape_cast %560 : vector<1x32x128xbf16> to vector<32x128xbf16>
      %cst_255 = arith.constant dense<0.000000e+00> : vector<1x128xf32>
      %562 = tpu.matmul %559, %561, %cst_255 {dimension_numbers = #tpu.dot_dimension_numbers<[1], [0], [0], [1], [0, 0, 1, 1], [], []>} : vector<1x32xbf16>, vector<32x128xbf16>, vector<1x128xf32> -> vector<1x128xf32>
      %563 = arith.addf %555, %562 : vector<1x128xf32>
      %564 = vector.extract_strided_slice %546 {offsets = [2, 0], sizes = [1, 64], strides = [1, 1]} : vector<4x64xbf16> to vector<1x64xbf16>
      %565 = vector.extract_strided_slice %509 {offsets = [0, 64], sizes = [64, 32], strides = [1, 1]} : vector<64x128xbf16> to vector<64x32xbf16>
      %cst_256 = arith.constant dense<0.000000e+00> : vector<1x32xf32>
      %566 = tpu.matmul %564, %565, %cst_256 {dimension_numbers = #tpu.dot_dimension_numbers<[1], [0], [0], [1], [0, 0, 1, 1], [], []>} : vector<1x64xbf16>, vector<64x32xbf16>, vector<1x32xf32> -> vector<1x32xf32>
      %567 = arith.truncf %566 : vector<1x32xf32> to vector<1x32xbf16>
      %c0_257 = arith.constant 0 : index
      %c64_258 = arith.constant 64 : index
      %c0_259 = arith.constant 0 : index
      %568 = vector.load %arg6[%c0_257, %c64_258, %c0_259] : memref<2x128x128xbf16, #tpu.memory_space<vmem>>, vector<1x32x128xbf16>
      %569 = vector.shape_cast %568 : vector<1x32x128xbf16> to vector<32x128xbf16>
      %cst_260 = arith.constant dense<0.000000e+00> : vector<1x128xf32>
      %570 = tpu.matmul %567, %569, %cst_260 {dimension_numbers = #tpu.dot_dimension_numbers<[1], [0], [0], [1], [0, 0, 1, 1], [], []>} : vector<1x32xbf16>, vector<32x128xbf16>, vector<1x128xf32> -> vector<1x128xf32>
      %571 = arith.addf %563, %570 : vector<1x128xf32>
      %572 = vector.extract_strided_slice %546 {offsets = [3, 0], sizes = [1, 64], strides = [1, 1]} : vector<4x64xbf16> to vector<1x64xbf16>
      %573 = vector.extract_strided_slice %509 {offsets = [0, 96], sizes = [64, 32], strides = [1, 1]} : vector<64x128xbf16> to vector<64x32xbf16>
      %cst_261 = arith.constant dense<0.000000e+00> : vector<1x32xf32>
      %574 = tpu.matmul %572, %573, %cst_261 {dimension_numbers = #tpu.dot_dimension_numbers<[1], [0], [0], [1], [0, 0, 1, 1], [], []>} : vector<1x64xbf16>, vector<64x32xbf16>, vector<1x32xf32> -> vector<1x32xf32>
      %575 = arith.truncf %574 : vector<1x32xf32> to vector<1x32xbf16>
      %c0_262 = arith.constant 0 : index
      %c96_263 = arith.constant 96 : index
      %c0_264 = arith.constant 0 : index
      %576 = vector.load %arg6[%c0_262, %c96_263, %c0_264] : memref<2x128x128xbf16, #tpu.memory_space<vmem>>, vector<1x32x128xbf16>
      %577 = vector.shape_cast %576 : vector<1x32x128xbf16> to vector<32x128xbf16>
      %cst_265 = arith.constant dense<0.000000e+00> : vector<1x128xf32>
      %578 = tpu.matmul %575, %577, %cst_265 {dimension_numbers = #tpu.dot_dimension_numbers<[1], [0], [0], [1], [0, 0, 1, 1], [], []>} : vector<1x32xbf16>, vector<32x128xbf16>, vector<1x128xf32> -> vector<1x128xf32>
      %579 = arith.addf %571, %578 : vector<1x128xf32>
      %580 = arith.addf %455, %579 : vector<1x128xf32>
      %c0_266 = arith.constant 0 : index
      %c0_267 = arith.constant 0 : index
      %c0_268 = arith.constant 0 : index
      %581 = vector.load %arg7[%c0_266, %c0_267, %c0_268] : memref<2x1x128xf32, #tpu.memory_space<vmem>>, vector<1x1x128xf32>
      %582 = vector.shape_cast %581 : vector<1x1x128xf32> to vector<1x128xf32>
      %c0_269 = arith.constant 0 : index
      %c0_270 = arith.constant 0 : index
      %c0_271 = arith.constant 0 : index
      %583 = vector.load %arg8[%c0_269, %c0_270, %c0_271] : memref<2x1x128xf32, #tpu.memory_space<vmem>>, vector<1x1x128xf32>
      %584 = vector.shape_cast %583 : vector<1x1x128xf32> to vector<1x128xf32>
      %cst_272 = arith.constant dense<0.000000e+00> : vector<1xf32>
      %585 = vector.multi_reduction <add>, %580, %cst_272 [1] : vector<1x128xf32> to vector<1xf32>
      %586 = vector.shape_cast %585 : vector<1xf32> to vector<1x1xf32>
      %cst_273 = arith.constant 1.280000e+02 : f32
      %587 = vector.broadcast %cst_273 : f32 to vector<1x1xf32>
      %588 = arith.divf %586, %587 : vector<1x1xf32>
      %589 = vector.broadcast %588 : vector<1x1xf32> to vector<1x128xf32>
      %590 = arith.subf %580, %589 : vector<1x128xf32>
      %591 = arith.mulf %590, %590 : vector<1x128xf32>
      %cst_274 = arith.constant dense<0.000000e+00> : vector<1xf32>
      %592 = vector.multi_reduction <add>, %591, %cst_274 [1] : vector<1x128xf32> to vector<1xf32>
      %593 = vector.shape_cast %592 : vector<1xf32> to vector<1x1xf32>
      %cst_275 = arith.constant 1.280000e+02 : f32
      %594 = vector.broadcast %cst_275 : f32 to vector<1x1xf32>
      %595 = arith.divf %593, %594 : vector<1x1xf32>
      %596 = vector.broadcast %588 : vector<1x1xf32> to vector<1x128xf32>
      %597 = arith.subf %580, %596 : vector<1x128xf32>
      %cst_276 = arith.constant 9.99999974E-6 : f32
      %598 = vector.broadcast %cst_276 : f32 to vector<1x1xf32>
      %599 = arith.addf %595, %598 : vector<1x1xf32>
      %600 = math.rsqrt %599 : vector<1x1xf32>
      %601 = vector.broadcast %600 : vector<1x1xf32> to vector<1x128xf32>
      %602 = arith.mulf %597, %601 : vector<1x128xf32>
      %603 = arith.mulf %602, %582 : vector<1x128xf32>
      %604 = arith.addf %603, %584 : vector<1x128xf32>
      %605 = arith.truncf %604 : vector<1x128xf32> to vector<1x128xbf16>
      %c0_277 = arith.constant 0 : index
      %c0_278 = arith.constant 0 : index
      %c0_279 = arith.constant 0 : index
      %606 = vector.load %arg9[%c0_277, %c0_278, %c0_279] : memref<2x128x256xbf16, #tpu.memory_space<vmem>>, vector<1x128x256xbf16>
      %607 = vector.shape_cast %606 : vector<1x128x256xbf16> to vector<128x256xbf16>
      %cst_280 = arith.constant dense<0.000000e+00> : vector<1x256xf32>
      %608 = tpu.matmul %605, %607, %cst_280 {dimension_numbers = #tpu.dot_dimension_numbers<[1], [0], [0], [1], [0, 0, 1, 1], [], []>} : vector<1x128xbf16>, vector<128x256xbf16>, vector<1x256xf32> -> vector<1x256xf32>
      %609 = arith.mulf %608, %608 : vector<1x256xf32>
      %610 = arith.mulf %608, %609 : vector<1x256xf32>
      %cst_281 = arith.constant 4.471500e-02 : f32
      %611 = vector.broadcast %cst_281 : f32 to vector<1x256xf32>
      %612 = arith.mulf %611, %610 : vector<1x256xf32>
      %613 = arith.addf %608, %612 : vector<1x256xf32>
      %cst_282 = arith.constant 0.797884583 : f32
      %614 = vector.broadcast %cst_282 : f32 to vector<1x256xf32>
      %615 = arith.mulf %614, %613 : vector<1x256xf32>
      %616 = math.tanh %615 : vector<1x256xf32>
      %cst_283 = arith.constant 1.000000e+00 : f32
      %617 = vector.broadcast %cst_283 : f32 to vector<1x256xf32>
      %618 = arith.addf %617, %616 : vector<1x256xf32>
      %cst_284 = arith.constant 5.000000e-01 : f32
      %619 = vector.broadcast %cst_284 : f32 to vector<1x256xf32>
      %620 = arith.mulf %619, %618 : vector<1x256xf32>
      %621 = arith.mulf %608, %620 : vector<1x256xf32>
      %622 = arith.truncf %621 : vector<1x256xf32> to vector<1x256xbf16>
      %c0_285 = arith.constant 0 : index
      %c0_286 = arith.constant 0 : index
      %c0_287 = arith.constant 0 : index
      %623 = vector.load %arg10[%c0_285, %c0_286, %c0_287] : memref<2x256x128xbf16, #tpu.memory_space<vmem>>, vector<1x256x128xbf16>
      %624 = vector.shape_cast %623 : vector<1x256x128xbf16> to vector<256x128xbf16>
      %cst_288 = arith.constant dense<0.000000e+00> : vector<1x128xf32>
      %625 = tpu.matmul %622, %624, %cst_288 {dimension_numbers = #tpu.dot_dimension_numbers<[1], [0], [0], [1], [0, 0, 1, 1], [], []>} : vector<1x256xbf16>, vector<256x128xbf16>, vector<1x128xf32> -> vector<1x128xf32>
      %626 = arith.addf %580, %625 : vector<1x128xf32>
      %c1_289 = arith.constant 1 : index
      %c0_290 = arith.constant 0 : index
      %c0_291 = arith.constant 0 : index
      %627 = vector.load %arg3[%c1_289, %c0_290, %c0_291] : memref<2x1x128xf32, #tpu.memory_space<vmem>>, vector<1x1x128xf32>
      %628 = vector.shape_cast %627 : vector<1x1x128xf32> to vector<1x128xf32>
      %c1_292 = arith.constant 1 : index
      %c0_293 = arith.constant 0 : index
      %c0_294 = arith.constant 0 : index
      %629 = vector.load %arg4[%c1_292, %c0_293, %c0_294] : memref<2x1x128xf32, #tpu.memory_space<vmem>>, vector<1x1x128xf32>
      %630 = vector.shape_cast %629 : vector<1x1x128xf32> to vector<1x128xf32>
      %cst_295 = arith.constant dense<0.000000e+00> : vector<1xf32>
      %631 = vector.multi_reduction <add>, %626, %cst_295 [1] : vector<1x128xf32> to vector<1xf32>
      %632 = vector.shape_cast %631 : vector<1xf32> to vector<1x1xf32>
      %cst_296 = arith.constant 1.280000e+02 : f32
      %633 = vector.broadcast %cst_296 : f32 to vector<1x1xf32>
      %634 = arith.divf %632, %633 : vector<1x1xf32>
      %635 = vector.broadcast %634 : vector<1x1xf32> to vector<1x128xf32>
      %636 = arith.subf %626, %635 : vector<1x128xf32>
      %637 = arith.mulf %636, %636 : vector<1x128xf32>
      %cst_297 = arith.constant dense<0.000000e+00> : vector<1xf32>
      %638 = vector.multi_reduction <add>, %637, %cst_297 [1] : vector<1x128xf32> to vector<1xf32>
      %639 = vector.shape_cast %638 : vector<1xf32> to vector<1x1xf32>
      %cst_298 = arith.constant 1.280000e+02 : f32
      %640 = vector.broadcast %cst_298 : f32 to vector<1x1xf32>
      %641 = arith.divf %639, %640 : vector<1x1xf32>
      %642 = vector.broadcast %634 : vector<1x1xf32> to vector<1x128xf32>
      %643 = arith.subf %626, %642 : vector<1x128xf32>
      %cst_299 = arith.constant 9.99999974E-6 : f32
      %644 = vector.broadcast %cst_299 : f32 to vector<1x1xf32>
      %645 = arith.addf %641, %644 : vector<1x1xf32>
      %646 = math.rsqrt %645 : vector<1x1xf32>
      %647 = vector.broadcast %646 : vector<1x1xf32> to vector<1x128xf32>
      %648 = arith.mulf %643, %647 : vector<1x128xf32>
      %649 = arith.mulf %648, %628 : vector<1x128xf32>
      %650 = arith.addf %649, %630 : vector<1x128xf32>
      %651 = arith.truncf %650 : vector<1x128xf32> to vector<1x128xbf16>
      %c1_300 = arith.constant 1 : index
      %c0_301 = arith.constant 0 : index
      %c0_302 = arith.constant 0 : index
      %652 = vector.load %arg5[%c1_300, %c0_301, %c0_302] : memref<2x128x384xbf16, #tpu.memory_space<vmem>>, vector<1x128x384xbf16>
      %653 = vector.shape_cast %652 : vector<1x128x384xbf16> to vector<128x384xbf16>
      %cst_303 = arith.constant dense<0.000000e+00> : vector<1x384xf32>
      %654 = tpu.matmul %651, %653, %cst_303 {dimension_numbers = #tpu.dot_dimension_numbers<[1], [0], [0], [1], [0, 0, 1, 1], [], []>} : vector<1x128xbf16>, vector<128x384xbf16>, vector<1x384xf32> -> vector<1x384xf32>
      %655 = vector.extract_strided_slice %654 {offsets = [0, 0], sizes = [1, 128], strides = [1, 1]} : vector<1x384xf32> to vector<1x128xf32>
      %cst_304 = arith.constant 0.176776692 : f32
      %656 = vector.broadcast %cst_304 : f32 to vector<1x128xf32>
      %657 = arith.mulf %655, %656 : vector<1x128xf32>
      %658 = arith.truncf %657 : vector<1x128xf32> to vector<1x128xbf16>
      %659 = vector.extract_strided_slice %654 {offsets = [0, 128], sizes = [1, 128], strides = [1, 1]} : vector<1x384xf32> to vector<1x128xf32>
      %660 = arith.truncf %659 : vector<1x128xf32> to vector<1x128xbf16>
      %661 = vector.extract_strided_slice %654 {offsets = [0, 256], sizes = [1, 128], strides = [1, 1]} : vector<1x384xf32> to vector<1x128xf32>
      %662 = arith.truncf %661 : vector<1x128xf32> to vector<1x128xbf16>
      %c1_305 = arith.constant 1 : index
      %c0_306 = arith.constant 0 : index
      %c0_307 = arith.constant 0 : index
      %663 = vector.load %arg15[%c1_305, %c0_306, %c0_307] : memref<2x64x128xbf16, #tpu.memory_space<vmem>>, vector<1x64x128xbf16>
      %664 = vector.shape_cast %663 : vector<1x64x128xbf16> to vector<64x128xbf16>
      %665 = vector.shape_cast %459 : vector<64x1xi1> to vector<64x1xi1>
      %666 = vector.broadcast %665 : vector<64x1xi1> to vector<64x128xi1>
      %667 = vector.shape_cast %660 : vector<1x128xbf16> to vector<1x128xbf16>
      %668 = vector.broadcast %667 : vector<1x128xbf16> to vector<64x128xbf16>
      %669 = arith.select %666, %668, %664 : vector<64x128xi1>, vector<64x128xbf16>
      %c1_308 = arith.constant 1 : index
      %c0_309 = arith.constant 0 : index
      %c0_310 = arith.constant 0 : index
      %670 = vector.load %arg16[%c1_308, %c0_309, %c0_310] : memref<2x64x128xbf16, #tpu.memory_space<vmem>>, vector<1x64x128xbf16>
      %671 = vector.shape_cast %670 : vector<1x64x128xbf16> to vector<64x128xbf16>
      %672 = vector.shape_cast %459 : vector<64x1xi1> to vector<64x1xi1>
      %673 = vector.broadcast %672 : vector<64x1xi1> to vector<64x128xi1>
      %674 = vector.shape_cast %662 : vector<1x128xbf16> to vector<1x128xbf16>
      %675 = vector.broadcast %674 : vector<1x128xbf16> to vector<64x128xbf16>
      %676 = arith.select %673, %675, %671 : vector<64x128xi1>, vector<64x128xbf16>
      %c1_311 = arith.constant 1 : index
      %c0_312 = arith.constant 0 : index
      %c0_313 = arith.constant 0 : index
      %677 = vector.load %arg15[%c1_311, %c0_312, %c0_313] : memref<2x64x128xbf16, #tpu.memory_space<vmem>>, vector<1x64x128xbf16>
      %678 = vector.shape_cast %677 : vector<1x64x128xbf16> to vector<64x128xbf16>
      %679 = vector.shape_cast %669 : vector<64x128xbf16> to vector<1x64x128xbf16>
      tpu.vector_store %arg15[%c1_311, %c0_312, %c0_313], %679 {strides = array<i32>} : memref<2x64x128xbf16, #tpu.memory_space<vmem>>, vector<1x64x128xbf16>,
      %c1_314 = arith.constant 1 : index
      %c0_315 = arith.constant 0 : index
      %c0_316 = arith.constant 0 : index
      %680 = vector.load %arg16[%c1_314, %c0_315, %c0_316] : memref<2x64x128xbf16, #tpu.memory_space<vmem>>, vector<1x64x128xbf16>
      %681 = vector.shape_cast %680 : vector<1x64x128xbf16> to vector<64x128xbf16>
      %682 = vector.shape_cast %676 : vector<64x128xbf16> to vector<1x64x128xbf16>
      tpu.vector_store %arg16[%c1_314, %c0_315, %c0_316], %682 {strides = array<i32>} : memref<2x64x128xbf16, #tpu.memory_space<vmem>>, vector<1x64x128xbf16>,
      %683 = vector.extract_strided_slice %658 {offsets = [0, 0], sizes = [1, 32], strides = [1, 1]} : vector<1x128xbf16> to vector<1x32xbf16>
      %684 = vector.extract_strided_slice %669 {offsets = [0, 0], sizes = [64, 32], strides = [1, 1]} : vector<64x128xbf16> to vector<64x32xbf16>
      %cst_317 = arith.constant dense<0.000000e+00> : vector<1x64xf32>
      %685 = tpu.matmul %683, %684, %cst_317 {dimension_numbers = #tpu.dot_dimension_numbers<[1], [1], [0], [0], [0, 0, 1, 0], [], []>} : vector<1x32xbf16>, vector<64x32xbf16>, vector<1x64xf32> -> vector<1x64xf32>
      %686 = vector.extract_strided_slice %658 {offsets = [0, 32], sizes = [1, 32], strides = [1, 1]} : vector<1x128xbf16> to vector<1x32xbf16>
      %687 = vector.extract_strided_slice %669 {offsets = [0, 32], sizes = [64, 32], strides = [1, 1]} : vector<64x128xbf16> to vector<64x32xbf16>
      %cst_318 = arith.constant dense<0.000000e+00> : vector<1x64xf32>
      %688 = tpu.matmul %686, %687, %cst_318 {dimension_numbers = #tpu.dot_dimension_numbers<[1], [1], [0], [0], [0, 0, 1, 0], [], []>} : vector<1x32xbf16>, vector<64x32xbf16>, vector<1x64xf32> -> vector<1x64xf32>
      %689 = vector.extract_strided_slice %658 {offsets = [0, 64], sizes = [1, 32], strides = [1, 1]} : vector<1x128xbf16> to vector<1x32xbf16>
      %690 = vector.extract_strided_slice %669 {offsets = [0, 64], sizes = [64, 32], strides = [1, 1]} : vector<64x128xbf16> to vector<64x32xbf16>
      %cst_319 = arith.constant dense<0.000000e+00> : vector<1x64xf32>
      %691 = tpu.matmul %689, %690, %cst_319 {dimension_numbers = #tpu.dot_dimension_numbers<[1], [1], [0], [0], [0, 0, 1, 0], [], []>} : vector<1x32xbf16>, vector<64x32xbf16>, vector<1x64xf32> -> vector<1x64xf32>
      %692 = vector.extract_strided_slice %658 {offsets = [0, 96], sizes = [1, 32], strides = [1, 1]} : vector<1x128xbf16> to vector<1x32xbf16>
      %693 = vector.extract_strided_slice %669 {offsets = [0, 96], sizes = [64, 32], strides = [1, 1]} : vector<64x128xbf16> to vector<64x32xbf16>
      %cst_320 = arith.constant dense<0.000000e+00> : vector<1x64xf32>
      %694 = tpu.matmul %692, %693, %cst_320 {dimension_numbers = #tpu.dot_dimension_numbers<[1], [1], [0], [0], [0, 0, 1, 0], [], []>} : vector<1x32xbf16>, vector<64x32xbf16>, vector<1x64xf32> -> vector<1x64xf32>
      %695 = tpu.concatenate %685, %688, %691, %694 in 0 : vector<1x64xf32>, vector<1x64xf32>, vector<1x64xf32>, vector<1x64xf32> -> vector<4x64xf32>
      %cst_321 = arith.constant -1.000000e+30 : f32
      %696 = vector.shape_cast %457 : vector<1x64xi1> to vector<1x64xi1>
      %697 = vector.broadcast %696 : vector<1x64xi1> to vector<4x64xi1>
      %698 = vector.broadcast %cst_321 : f32 to vector<4x64xf32>
      %699 = arith.select %697, %695, %698 : vector<4x64xi1>, vector<4x64xf32>
      %cst_322 = arith.constant dense<0xFF800000> : vector<4xf32>
      %700 = vector.multi_reduction <maximumf>, %699, %cst_322 [1] : vector<4x64xf32> to vector<4xf32>
      %701 = vector.shape_cast %700 : vector<4xf32> to vector<4x1xf32>
      %702 = vector.broadcast %701 : vector<4x1xf32> to vector<4x64xf32>
      %703 = arith.subf %699, %702 : vector<4x64xf32>
      %704 = math.exp %703 : vector<4x64xf32>
      %cst_323 = arith.constant 0.000000e+00 : f32
      %705 = vector.shape_cast %457 : vector<1x64xi1> to vector<1x64xi1>
      %706 = vector.broadcast %705 : vector<1x64xi1> to vector<4x64xi1>
      %707 = vector.broadcast %cst_323 : f32 to vector<4x64xf32>
      %708 = arith.select %706, %704, %707 : vector<4x64xi1>, vector<4x64xf32>
      %cst_324 = arith.constant dense<0.000000e+00> : vector<4xf32>
      %709 = vector.multi_reduction <add>, %708, %cst_324 [1] : vector<4x64xf32> to vector<4xf32>
      %710 = vector.shape_cast %709 : vector<4xf32> to vector<4x1xf32>
      %711 = vector.broadcast %710 : vector<4x1xf32> to vector<4x64xf32>
      %712 = arith.divf %708, %711 : vector<4x64xf32>
      %713 = arith.truncf %712 : vector<4x64xf32> to vector<4x64xbf16>
      %cst_325 = arith.constant 0.000000e+00 : f32
      %714 = vector.broadcast %cst_325 : f32 to vector<1x128xf32>
      %715 = vector.extract_strided_slice %713 {offsets = [0, 0], sizes = [1, 64], strides = [1, 1]} : vector<4x64xbf16> to vector<1x64xbf16>
      %716 = vector.extract_strided_slice %676 {offsets = [0, 0], sizes = [64, 32], strides = [1, 1]} : vector<64x128xbf16> to vector<64x32xbf16>
      %cst_326 = arith.constant dense<0.000000e+00> : vector<1x32xf32>
      %717 = tpu.matmul %715, %716, %cst_326 {dimension_numbers = #tpu.dot_dimension_numbers<[1], [0], [0], [1], [0, 0, 1, 1], [], []>} : vector<1x64xbf16>, vector<64x32xbf16>, vector<1x32xf32> -> vector<1x32xf32>
      %718 = arith.truncf %717 : vector<1x32xf32> to vector<1x32xbf16>
      %c1_327 = arith.constant 1 : index
      %c0_328 = arith.constant 0 : index
      %c0_329 = arith.constant 0 : index
      %719 = vector.load %arg6[%c1_327, %c0_328, %c0_329] : memref<2x128x128xbf16, #tpu.memory_space<vmem>>, vector<1x32x128xbf16>
      %720 = vector.shape_cast %719 : vector<1x32x128xbf16> to vector<32x128xbf16>
      %cst_330 = arith.constant dense<0.000000e+00> : vector<1x128xf32>
      %721 = tpu.matmul %718, %720, %cst_330 {dimension_numbers = #tpu.dot_dimension_numbers<[1], [0], [0], [1], [0, 0, 1, 1], [], []>} : vector<1x32xbf16>, vector<32x128xbf16>, vector<1x128xf32> -> vector<1x128xf32>
      %722 = arith.addf %714, %721 : vector<1x128xf32>
      %723 = vector.extract_strided_slice %713 {offsets = [1, 0], sizes = [1, 64], strides = [1, 1]} : vector<4x64xbf16> to vector<1x64xbf16>
      %724 = vector.extract_strided_slice %676 {offsets = [0, 32], sizes = [64, 32], strides = [1, 1]} : vector<64x128xbf16> to vector<64x32xbf16>
      %cst_331 = arith.constant dense<0.000000e+00> : vector<1x32xf32>
      %725 = tpu.matmul %723, %724, %cst_331 {dimension_numbers = #tpu.dot_dimension_numbers<[1], [0], [0], [1], [0, 0, 1, 1], [], []>} : vector<1x64xbf16>, vector<64x32xbf16>, vector<1x32xf32> -> vector<1x32xf32>
      %726 = arith.truncf %725 : vector<1x32xf32> to vector<1x32xbf16>
      %c1_332 = arith.constant 1 : index
      %c32_333 = arith.constant 32 : index
      %c0_334 = arith.constant 0 : index
      %727 = vector.load %arg6[%c1_332, %c32_333, %c0_334] : memref<2x128x128xbf16, #tpu.memory_space<vmem>>, vector<1x32x128xbf16>
      %728 = vector.shape_cast %727 : vector<1x32x128xbf16> to vector<32x128xbf16>
      %cst_335 = arith.constant dense<0.000000e+00> : vector<1x128xf32>
      %729 = tpu.matmul %726, %728, %cst_335 {dimension_numbers = #tpu.dot_dimension_numbers<[1], [0], [0], [1], [0, 0, 1, 1], [], []>} : vector<1x32xbf16>, vector<32x128xbf16>, vector<1x128xf32> -> vector<1x128xf32>
      %730 = arith.addf %722, %729 : vector<1x128xf32>
      %731 = vector.extract_strided_slice %713 {offsets = [2, 0], sizes = [1, 64], strides = [1, 1]} : vector<4x64xbf16> to vector<1x64xbf16>
      %732 = vector.extract_strided_slice %676 {offsets = [0, 64], sizes = [64, 32], strides = [1, 1]} : vector<64x128xbf16> to vector<64x32xbf16>
      %cst_336 = arith.constant dense<0.000000e+00> : vector<1x32xf32>
      %733 = tpu.matmul %731, %732, %cst_336 {dimension_numbers = #tpu.dot_dimension_numbers<[1], [0], [0], [1], [0, 0, 1, 1], [], []>} : vector<1x64xbf16>, vector<64x32xbf16>, vector<1x32xf32> -> vector<1x32xf32>
      %734 = arith.truncf %733 : vector<1x32xf32> to vector<1x32xbf16>
      %c1_337 = arith.constant 1 : index
      %c64_338 = arith.constant 64 : index
      %c0_339 = arith.constant 0 : index
      %735 = vector.load %arg6[%c1_337, %c64_338, %c0_339] : memref<2x128x128xbf16, #tpu.memory_space<vmem>>, vector<1x32x128xbf16>
      %736 = vector.shape_cast %735 : vector<1x32x128xbf16> to vector<32x128xbf16>
      %cst_340 = arith.constant dense<0.000000e+00> : vector<1x128xf32>
      %737 = tpu.matmul %734, %736, %cst_340 {dimension_numbers = #tpu.dot_dimension_numbers<[1], [0], [0], [1], [0, 0, 1, 1], [], []>} : vector<1x32xbf16>, vector<32x128xbf16>, vector<1x128xf32> -> vector<1x128xf32>
      %738 = arith.addf %730, %737 : vector<1x128xf32>
      %739 = vector.extract_strided_slice %713 {offsets = [3, 0], sizes = [1, 64], strides = [1, 1]} : vector<4x64xbf16> to vector<1x64xbf16>
      %740 = vector.extract_strided_slice %676 {offsets = [0, 96], sizes = [64, 32], strides = [1, 1]} : vector<64x128xbf16> to vector<64x32xbf16>
      %cst_341 = arith.constant dense<0.000000e+00> : vector<1x32xf32>
      %741 = tpu.matmul %739, %740, %cst_341 {dimension_numbers = #tpu.dot_dimension_numbers<[1], [0], [0], [1], [0, 0, 1, 1], [], []>} : vector<1x64xbf16>, vector<64x32xbf16>, vector<1x32xf32> -> vector<1x32xf32>
      %742 = arith.truncf %741 : vector<1x32xf32> to vector<1x32xbf16>
      %c1_342 = arith.constant 1 : index
      %c96_343 = arith.constant 96 : index
      %c0_344 = arith.constant 0 : index
      %743 = vector.load %arg6[%c1_342, %c96_343, %c0_344] : memref<2x128x128xbf16, #tpu.memory_space<vmem>>, vector<1x32x128xbf16>
      %744 = vector.shape_cast %743 : vector<1x32x128xbf16> to vector<32x128xbf16>
      %cst_345 = arith.constant dense<0.000000e+00> : vector<1x128xf32>
      %745 = tpu.matmul %742, %744, %cst_345 {dimension_numbers = #tpu.dot_dimension_numbers<[1], [0], [0], [1], [0, 0, 1, 1], [], []>} : vector<1x32xbf16>, vector<32x128xbf16>, vector<1x128xf32> -> vector<1x128xf32>
      %746 = arith.addf %738, %745 : vector<1x128xf32>
      %747 = arith.addf %626, %746 : vector<1x128xf32>
      %c1_346 = arith.constant 1 : index
      %c0_347 = arith.constant 0 : index
      %c0_348 = arith.constant 0 : index
      %748 = vector.load %arg7[%c1_346, %c0_347, %c0_348] : memref<2x1x128xf32, #tpu.memory_space<vmem>>, vector<1x1x128xf32>
      %749 = vector.shape_cast %748 : vector<1x1x128xf32> to vector<1x128xf32>
      %c1_349 = arith.constant 1 : index
      %c0_350 = arith.constant 0 : index
      %c0_351 = arith.constant 0 : index
      %750 = vector.load %arg8[%c1_349, %c0_350, %c0_351] : memref<2x1x128xf32, #tpu.memory_space<vmem>>, vector<1x1x128xf32>
      %751 = vector.shape_cast %750 : vector<1x1x128xf32> to vector<1x128xf32>
      %cst_352 = arith.constant dense<0.000000e+00> : vector<1xf32>
      %752 = vector.multi_reduction <add>, %747, %cst_352 [1] : vector<1x128xf32> to vector<1xf32>
      %753 = vector.shape_cast %752 : vector<1xf32> to vector<1x1xf32>
      %cst_353 = arith.constant 1.280000e+02 : f32
      %754 = vector.broadcast %cst_353 : f32 to vector<1x1xf32>
      %755 = arith.divf %753, %754 : vector<1x1xf32>
      %756 = vector.broadcast %755 : vector<1x1xf32> to vector<1x128xf32>
      %757 = arith.subf %747, %756 : vector<1x128xf32>
      %758 = arith.mulf %757, %757 : vector<1x128xf32>
      %cst_354 = arith.constant dense<0.000000e+00> : vector<1xf32>
      %759 = vector.multi_reduction <add>, %758, %cst_354 [1] : vector<1x128xf32> to vector<1xf32>
      %760 = vector.shape_cast %759 : vector<1xf32> to vector<1x1xf32>
      %cst_355 = arith.constant 1.280000e+02 : f32
      %761 = vector.broadcast %cst_355 : f32 to vector<1x1xf32>
      %762 = arith.divf %760, %761 : vector<1x1xf32>
      %763 = vector.broadcast %755 : vector<1x1xf32> to vector<1x128xf32>
      %764 = arith.subf %747, %763 : vector<1x128xf32>
      %cst_356 = arith.constant 9.99999974E-6 : f32
      %765 = vector.broadcast %cst_356 : f32 to vector<1x1xf32>
      %766 = arith.addf %762, %765 : vector<1x1xf32>
      %767 = math.rsqrt %766 : vector<1x1xf32>
      %768 = vector.broadcast %767 : vector<1x1xf32> to vector<1x128xf32>
      %769 = arith.mulf %764, %768 : vector<1x128xf32>
      %770 = arith.mulf %769, %749 : vector<1x128xf32>
      %771 = arith.addf %770, %751 : vector<1x128xf32>
      %772 = arith.truncf %771 : vector<1x128xf32> to vector<1x128xbf16>
      %c1_357 = arith.constant 1 : index
      %c0_358 = arith.constant 0 : index
      %c0_359 = arith.constant 0 : index
      %773 = vector.load %arg9[%c1_357, %c0_358, %c0_359] : memref<2x128x256xbf16, #tpu.memory_space<vmem>>, vector<1x128x256xbf16>
      %774 = vector.shape_cast %773 : vector<1x128x256xbf16> to vector<128x256xbf16>
      %cst_360 = arith.constant dense<0.000000e+00> : vector<1x256xf32>
      %775 = tpu.matmul %772, %774, %cst_360 {dimension_numbers = #tpu.dot_dimension_numbers<[1], [0], [0], [1], [0, 0, 1, 1], [], []>} : vector<1x128xbf16>, vector<128x256xbf16>, vector<1x256xf32> -> vector<1x256xf32>
      %776 = arith.mulf %775, %775 : vector<1x256xf32>
      %777 = arith.mulf %775, %776 : vector<1x256xf32>
      %cst_361 = arith.constant 4.471500e-02 : f32
      %778 = vector.broadcast %cst_361 : f32 to vector<1x256xf32>
      %779 = arith.mulf %778, %777 : vector<1x256xf32>
      %780 = arith.addf %775, %779 : vector<1x256xf32>
      %cst_362 = arith.constant 0.797884583 : f32
      %781 = vector.broadcast %cst_362 : f32 to vector<1x256xf32>
      %782 = arith.mulf %781, %780 : vector<1x256xf32>
      %783 = math.tanh %782 : vector<1x256xf32>
      %cst_363 = arith.constant 1.000000e+00 : f32
      %784 = vector.broadcast %cst_363 : f32 to vector<1x256xf32>
      %785 = arith.addf %784, %783 : vector<1x256xf32>
      %cst_364 = arith.constant 5.000000e-01 : f32
      %786 = vector.broadcast %cst_364 : f32 to vector<1x256xf32>
      %787 = arith.mulf %786, %785 : vector<1x256xf32>
      %788 = arith.mulf %775, %787 : vector<1x256xf32>
      %789 = arith.truncf %788 : vector<1x256xf32> to vector<1x256xbf16>
      %c1_365 = arith.constant 1 : index
      %c0_366 = arith.constant 0 : index
      %c0_367 = arith.constant 0 : index
      %790 = vector.load %arg10[%c1_365, %c0_366, %c0_367] : memref<2x256x128xbf16, #tpu.memory_space<vmem>>, vector<1x256x128xbf16>
      %791 = vector.shape_cast %790 : vector<1x256x128xbf16> to vector<256x128xbf16>
      %cst_368 = arith.constant dense<0.000000e+00> : vector<1x128xf32>
      %792 = tpu.matmul %789, %791, %cst_368 {dimension_numbers = #tpu.dot_dimension_numbers<[1], [0], [0], [1], [0, 0, 1, 1], [], []>} : vector<1x256xbf16>, vector<256x128xbf16>, vector<1x128xf32> -> vector<1x128xf32>
      %793 = arith.addf %747, %792 : vector<1x128xf32>
      %c0_369 = arith.constant 0 : index
      %c0_370 = arith.constant 0 : index
      %794 = vector.load %arg11[%c0_369, %c0_370] : memref<1x128xf32, #tpu.memory_space<vmem>>, vector<1x128xf32>
      %c0_371 = arith.constant 0 : index
      %c0_372 = arith.constant 0 : index
      %795 = vector.load %arg12[%c0_371, %c0_372] : memref<1x128xf32, #tpu.memory_space<vmem>>, vector<1x128xf32>
      %cst_373 = arith.constant dense<0.000000e+00> : vector<1xf32>
      %796 = vector.multi_reduction <add>, %793, %cst_373 [1] : vector<1x128xf32> to vector<1xf32>
      %797 = vector.shape_cast %796 : vector<1xf32> to vector<1x1xf32>
      %cst_374 = arith.constant 1.280000e+02 : f32
      %798 = vector.broadcast %cst_374 : f32 to vector<1x1xf32>
      %799 = arith.divf %797, %798 : vector<1x1xf32>
      %800 = vector.broadcast %799 : vector<1x1xf32> to vector<1x128xf32>
      %801 = arith.subf %793, %800 : vector<1x128xf32>
      %802 = arith.mulf %801, %801 : vector<1x128xf32>
      %cst_375 = arith.constant dense<0.000000e+00> : vector<1xf32>
      %803 = vector.multi_reduction <add>, %802, %cst_375 [1] : vector<1x128xf32> to vector<1xf32>
      %804 = vector.shape_cast %803 : vector<1xf32> to vector<1x1xf32>
      %cst_376 = arith.constant 1.280000e+02 : f32
      %805 = vector.broadcast %cst_376 : f32 to vector<1x1xf32>
      %806 = arith.divf %804, %805 : vector<1x1xf32>
      %807 = vector.broadcast %799 : vector<1x1xf32> to vector<1x128xf32>
      %808 = arith.subf %793, %807 : vector<1x128xf32>
      %cst_377 = arith.constant 9.99999974E-6 : f32
      %809 = vector.broadcast %cst_377 : f32 to vector<1x1xf32>
      %810 = arith.addf %806, %809 : vector<1x1xf32>
      %811 = math.rsqrt %810 : vector<1x1xf32>
      %812 = vector.broadcast %811 : vector<1x1xf32> to vector<1x128xf32>
      %813 = arith.mulf %808, %812 : vector<1x128xf32>
      %814 = arith.mulf %813, %794 : vector<1x128xf32>
      %815 = arith.addf %814, %795 : vector<1x128xf32>
      %816 = arith.truncf %815 : vector<1x128xf32> to vector<1x128xbf16>
      %c0_378 = arith.constant 0 : index
      %c0_379 = arith.constant 0 : index
      %817 = vector.load %arg13[%c0_378, %c0_379] : memref<128x256xbf16, #tpu.memory_space<vmem>>, vector<128x256xbf16>
      %cst_380 = arith.constant dense<0.000000e+00> : vector<1x256xf32>
      %818 = tpu.matmul %816, %817, %cst_380 {dimension_numbers = #tpu.dot_dimension_numbers<[1], [0], [0], [1], [0, 0, 1, 1], [], []>} : vector<1x128xbf16>, vector<128x256xbf16>, vector<1x256xf32> -> vector<1x256xf32>
      %cst_381 = arith.constant dense<0xFF800000> : vector<1xf32>
      %819 = vector.multi_reduction <maximumf>, %818, %cst_381 [1] : vector<1x256xf32> to vector<1xf32>
      %820 = vector.shape_cast %819 : vector<1xf32> to vector<1x1xf32>
      %821 = vector.broadcast %820 : vector<1x1xf32> to vector<1x256xf32>
      %822 = arith.cmpf oeq, %818, %821 : vector<1x256xf32>
      %c256_i32_382 = arith.constant 256 : i32
      %823 = vector.broadcast %c256_i32_382 : i32 to vector<1x256xi32>
      %824 = arith.select %822, %0, %823 : vector<1x256xi1>, vector<1x256xi32>
      %cst_383 = arith.constant dense<2147483647> : vector<1xi32>
      %825 = vector.multi_reduction <minsi>, %824, %cst_383 [1] : vector<1x256xi32> to vector<1xi32>
      %826 = vector.shape_cast %825 : vector<1xi32> to vector<1x1xi32>
      %c1_i32_384 = arith.constant 1 : i32
      %827 = arith.addi %arg17, %c1_i32_384 : i32
      %828 = vector.broadcast %827 : i32 to vector<64x1xi32>
      %829 = arith.cmpi eq, %1, %828 : vector<64x1xi32>
      %c0_385 = arith.constant 0 : index
      %c0_386 = arith.constant 0 : index
      %830 = vector.load %arg14[%c0_385, %c0_386] : memref<64x1xi32, #tpu.memory_space<vmem>>, vector<64x1xi32>
      %831 = vector.shape_cast %826 : vector<1x1xi32> to vector<1x1xi32>
      %832 = vector.broadcast %831 : vector<1x1xi32> to vector<64x1xi32>
      %833 = arith.select %829, %832, %830 : vector<64x1xi1>, vector<64x1xi32>
      %c0_387 = arith.constant 0 : index
      %c0_388 = arith.constant 0 : index
      %834 = vector.load %arg14[%c0_387, %c0_388] : memref<64x1xi32, #tpu.memory_space<vmem>>, vector<64x1xi32>
      tpu.vector_store %arg14[%c0_387, %c0_388], %833 {strides = array<i32>} : memref<64x1xi32, #tpu.memory_space<vmem>>, vector<64x1xi32>,
      scf.yield %826 : vector<1x1xi32>
    }
    %c39_i32_204 = arith.constant 39 : i32
    return
  }
}

</mosaic_0001>

<llo_original>
// kernel: generate.1
$region0: #{generate.1}
  #allocation0 [shape = 'u32[]', space=smem, size = 0x4, offset = 0x4, fixed_abs, tag = 'smem constant byte address 0x4 - core index']
  #allocation1 [shape = 'u32[144,128]{1,0:T(1,128)}', space=vmem, size = 0x12000, scoped, tag = 'internal scratch']
  #allocation2 [shape = 'bf16[2,64,128]{2,1,0:T(16,128)(2,1)}', space=vmem, size = 0x8000, scoped, tag = 'scratch operand']
  #allocation3 [shape = 'bf16[2,64,128]{2,1,0:T(16,128)(2,1)}', space=vmem, size = 0x8000, scoped, tag = 'scratch operand']
  %s0 = inlined_call_operand.vmem [shape: s32[64,1], index: 0, kind: input, shape index: {}]
  %s1 = inlined_call_operand.hbm [shape: bf16[256,128], index: 1, kind: input, shape index: {}]
  %s2 = inlined_call_operand.vmem [shape: f32[64,128], index: 2, kind: input, shape index: {}]
  %s3 = inlined_call_operand.vmem [shape: f32[2,1,128], index: 3, kind: input, shape index: {}]
  %s4 = inlined_call_operand.vmem [shape: f32[2,1,128], index: 4, kind: input, shape index: {}]
  %s5 = inlined_call_operand.hbm [shape: bf16[2,128,384], index: 5, kind: input, shape index: {}]
  %s6 = inlined_call_operand.hbm [shape: bf16[2,128,128], index: 6, kind: input, shape index: {}]
  %s7 = inlined_call_operand.vmem [shape: f32[2,1,128], index: 7, kind: input, shape index: {}]
  %s8 = inlined_call_operand.vmem [shape: f32[2,1,128], index: 8, kind: input, shape index: {}]
  %s9 = inlined_call_operand.hbm [shape: bf16[2,128,256], index: 9, kind: input, shape index: {}]
  %s10 = inlined_call_operand.hbm [shape: bf16[2,256,128], index: 10, kind: input, shape index: {}]
  %s11 = inlined_call_operand.vmem [shape: f32[1,128], index: 11, kind: input, shape index: {}]
  %s12 = inlined_call_operand.vmem [shape: f32[1,128], index: 12, kind: input, shape index: {}]
  %s13 = inlined_call_operand.hbm [shape: bf16[128,256], index: 13, kind: input, shape index: {}]
  %s14 = inlined_call_operand.vmem [shape: s32[64,1], index: 14, kind: output, shape index: {}]
  %s15 = sld [smem:[#allocation0]]
  $region97: #{generate.1} parent=0
    _
  %s17 = ssub.s32 1, %s15
  %s18 = scalar_select 0, %s17, %s15
  $region1: #{generate.1} parent=0
    #allocation4 [shape = 'u8[65536]{0}', space=vmem, size = 0x10000, scoped, tag = 'input window, operand 1, single buffered']
    #allocation5 [shape = 's32[1]{0}', space=sflag, size = 0x4, scoped, tag = 'scoped memory for generate.1']
    #allocation6 [shape = 'u8[196608]{0}', space=vmem, size = 0x30000, scoped, tag = 'input window, operand 5, single buffered']
    #allocation7 [shape = 's32[1]{0}', space=sflag, size = 0x4, scoped, tag = 'scoped memory for generate.1']
    #allocation8 [shape = 'u8[65536]{0}', space=vmem, size = 0x10000, scoped, tag = 'input window, operand 6, single buffered']
    #allocation9 [shape = 'u8[131072]{0}', space=vmem, size = 0x20000, scoped, tag = 'input window, operand 9, single buffered']
    #allocation10 [shape = 's32[1]{0}', space=sflag, size = 0x4, scoped, tag = 'scoped memory for generate.1']
    #allocation11 [shape = 'u8[131072]{0}', space=vmem, size = 0x20000, scoped, tag = 'input window, operand 10, single buffered']
    #allocation12 [shape = 'u8[65536]{0}', space=vmem, size = 0x10000, scoped, tag = 'input window, operand 13, single buffered']
    #allocation13 [shape = 's32[1]{0}', space=sflag, size = 0x4, scoped, tag = 'scoped memory for generate.1']
    %19 = vsyncpa [#allocation5], 0
    %20 = vsyncpa [#allocation7], 0
    %21 = vsyncpa [#allocation10], 0
    %22 = vsyncpa [#allocation13], 0
    // Predicated region
    $region2: #{generate.1} parent=1 // pred_check
      _
    $region3: #{generate.1} parent=1 // pred_check_branch
      %24 = sbr.rel (0) target = $region5
    $region4: #{generate.1} parent=1 // pred_region
      _
    $region5: #{generate.1} parent=1 // pred_fallthru
      _
    // Predicated region
    $region6: #{generate.1} parent=1 // pred_check
      _
    $region7: #{generate.1} parent=1 // pred_check_branch
      %26 = sbr.rel (0) target = $region9
    $region8: #{generate.1} parent=1 // pred_region
      %s28 = ssub.s32 2048, 2048
      %29 = vsyncadd [#allocation5], %s28
      %s30 = sshll.u32 [#allocation4], 4
      %s31 = int_to_ptr.vmem [resolvable:$true] %s30
      %36 = dma.hbm_to_vmem [thread:$0]  %s1, 2048, %s31, [#allocation5], 64, 64, 4
    $region9: #{generate.1} parent=1 // pred_fallthru
      _
    // Predicated region
    $region10: #{generate.1} parent=1 // pred_check
      _
    $region11: #{generate.1} parent=1 // pred_check_branch
      %38 = sbr.rel (0) target = $region13
    $region12: #{generate.1} parent=1 // pred_region
      _
    $region13: #{generate.1} parent=1 // pred_fallthru
      _
    // Predicated region
    $region14: #{generate.1} parent=1 // pred_check
      _
    $region15: #{generate.1} parent=1 // pred_check_branch
      %40 = sbr.rel (0) target = $region17
    $region16: #{generate.1} parent=1 // pred_region
      _
    $region17: #{generate.1} parent=1 // pred_fallthru
      _
    // Predicated region
    $region18: #{generate.1} parent=1 // pred_check
      _
    $region19: #{generate.1} parent=1 // pred_check_branch
      %42 = sbr.rel (0) target = $region21
    $region20: #{generate.1} parent=1 // pred_region
      _
    $region21: #{generate.1} parent=1 // pred_fallthru
      _
    // Predicated region
    $region22: #{generate.1} parent=1 // pred_check
      _
    $region23: #{generate.1} parent=1 // pred_check_branch
      %44 = sbr.rel (0) target = $region25
    $region24: #{generate.1} parent=1 // pred_region
      %s46 = ssub.s32 6144, 6144
      %47 = vsyncadd [#allocation7], %s46
      %s48 = sshll.u32 [#allocation6], 4
      %s49 = int_to_ptr.vmem [resolvable:$true] %s48
      %54 = dma.hbm_to_vmem [thread:$0]  %s5, 6144, %s49, [#allocation7], 192, 192, 12
    $region25: #{generate.1} parent=1 // pred_fallthru
      _
    // Predicated region
    $region26: #{generate.1} parent=1 // pred_check
      _
    $region27: #{generate.1} parent=1 // pred_check_branch
      %56 = sbr.rel (0) target = $region29
    $region28: #{generate.1} parent=1 // pred_region
      %s58 = ssub.s32 2048, 2048
      %59 = vsyncadd [#allocation7], %s58
      %s60 = sshll.u32 [#allocation8], 4
      %s61 = int_to_ptr.vmem [resolvable:$true] %s60
      %66 = dma.hbm_to_vmem [thread:$0]  %s6, 2048, %s61, [#allocation7], 64, 64, 4
    $region29: #{generate.1} parent=1 // pred_fallthru
      _
    // Predicated region
    $region30: #{generate.1} parent=1 // pred_check
      _
    $region31: #{generate.1} parent=1 // pred_check_branch
      %68 = sbr.rel (0) target = $region33
    $region32: #{generate.1} parent=1 // pred_region
      _
    $region33: #{generate.1} parent=1 // pred_fallthru
      _
    // Predicated region
    $region34: #{generate.1} parent=1 // pred_check
      _
    $region35: #{generate.1} parent=1 // pred_check_branch
      %70 = sbr.rel (0) target = $region37
    $region36: #{generate.1} parent=1 // pred_region
      _
    $region37: #{generate.1} parent=1 // pred_fallthru
      _
    // Predicated region
    $region38: #{generate.1} parent=1 // pred_check
      _
    $region39: #{generate.1} parent=1 // pred_check_branch
      %72 = sbr.rel (0) target = $region41
    $region40: #{generate.1} parent=1 // pred_region
      %s74 = ssub.s32 4096, 4096
      %75 = vsyncadd [#allocation10], %s74
      %s76 = sshll.u32 [#allocation9], 4
      %s77 = int_to_ptr.vmem [resolvable:$true] %s76
      %82 = dma.hbm_to_vmem [thread:$0]  %s9, 4096, %s77, [#allocation10], 128, 128, 8
    $region41: #{generate.1} parent=1 // pred_fallthru
      _
    // Predicated region
    $region42: #{generate.1} parent=1 // pred_check
      _
    $region43: #{generate.1} parent=1 // pred_check_branch
      %84 = sbr.rel (0) target = $region45
    $region44: #{generate.1} parent=1 // pred_region
      %s86 = ssub.s32 4096, 4096
      %87 = vsyncadd [#allocation10], %s86
      %s88 = sshll.u32 [#allocation11], 4
      %s89 = int_to_ptr.vmem [resolvable:$true] %s88
      %94 = dma.hbm_to_vmem [thread:$0]  %s10, 4096, %s89, [#allocation10], 64, 64, 4
    $region45: #{generate.1} parent=1 // pred_fallthru
      _
    // Predicated region
    $region46: #{generate.1} parent=1 // pred_check
      _
    $region47: #{generate.1} parent=1 // pred_check_branch
      %96 = sbr.rel (0) target = $region49
    $region48: #{generate.1} parent=1 // pred_region
      _
    $region49: #{generate.1} parent=1 // pred_fallthru
      _
    // Predicated region
    $region50: #{generate.1} parent=1 // pred_check
      _
    $region51: #{generate.1} parent=1 // pred_check_branch
      %98 = sbr.rel (0) target = $region53
    $region52: #{generate.1} parent=1 // pred_region
      _
    $region53: #{generate.1} parent=1 // pred_fallthru
      _
    // Predicated region
    $region54: #{generate.1} parent=1 // pred_check
      _
    $region55: #{generate.1} parent=1 // pred_check_branch
      %100 = sbr.rel (0) target = $region57
    $region56: #{generate.1} parent=1 // pred_region
      %s102 = ssub.s32 2048, 2048
      %103 = vsyncadd [#allocation13], %s102
      %s104 = sshll.u32 [#allocation12], 4
      %s105 = int_to_ptr.vmem [resolvable:$true] %s104
      %110 = dma.hbm_to_vmem [thread:$0]  %s13, 2048, %s105, [#allocation13], 128, 128, 8
    $region57: #{generate.1} parent=1 // pred_fallthru
      _
    // Predicated region
    $region58: #{generate.1} parent=1 // pred_check
      _
    $region59: #{generate.1} parent=1 // pred_check_branch
      %112 = sbr.rel (0) target = $region61
    $region60: #{generate.1} parent=1 // pred_region
      %113 = dma.done [#allocation5], 2048
    $region61: #{generate.1} parent=1 // pred_fallthru
      _
    // Predicated region
    $region62: #{generate.1} parent=1 // pred_check
      _
    $region63: #{generate.1} parent=1 // pred_check_branch
      %115 = sbr.rel (0) target = $region65
    $region64: #{generate.1} parent=1 // pred_region
      %116 = dma.done [#allocation7], 6144
    $region65: #{generate.1} parent=1 // pred_fallthru
      _
    // Predicated region
    $region66: #{generate.1} parent=1 // pred_check
      _
    $region67: #{generate.1} parent=1 // pred_check_branch
      %118 = sbr.rel (0) target = $region69
    $region68: #{generate.1} parent=1 // pred_region
      %119 = dma.done [#allocation7], 2048
    $region69: #{generate.1} parent=1 // pred_fallthru
      _
    // Predicated region
    $region70: #{generate.1} parent=1 // pred_check
      _
    $region71: #{generate.1} parent=1 // pred_check_branch
      %121 = sbr.rel (0) target = $region73
    $region72: #{generate.1} parent=1 // pred_region
      %122 = dma.done [#allocation10], 4096
    $region73: #{generate.1} parent=1 // pred_fallthru
      _
    // Predicated region
    $region74: #{generate.1} parent=1 // pred_check
      _
    $region75: #{generate.1} parent=1 // pred_check_branch
      %124 = sbr.rel (0) target = $region77
    $region76: #{generate.1} parent=1 // pred_region
      %125 = dma.done [#allocation10], 4096
    $region77: #{generate.1} parent=1 // pred_fallthru
      _
    // Predicated region
    $region78: #{generate.1} parent=1 // pred_check
      _
    $region79: #{generate.1} parent=1 // pred_check_branch
      %127 = sbr.rel (0) target = $region81
    $region80: #{generate.1} parent=1 // pred_region
      %128 = dma.done [#allocation13], 2048
    $region81: #{generate.1} parent=1 // pred_fallthru
      _
    %v132 = vlaneseq
    %v133 = vand.u32 %v132, 127
    %v134 = vadd.s32 %v133, 128
    %v135 = vlaneseq
    %v136 = vshrl.u32 %v135, 7
    %v137 = vadd.s32 %v136, 8
    %v138 = vadd.s32 %v136, 16
    %v139 = vadd.s32 %v136, 24
    %v140 = vadd.s32 %v136, 32
    %v141 = vadd.s32 %v136, 40
    %v142 = vadd.s32 %v136, 48
    %v143 = vadd.s32 %v136, 56
    %v144 = vld [vmem:[%s0] sm:$0xff]
    %v145 = vld [vmem:[%s0 + $0x8] sm:$0xff]
    %v146 = vld [vmem:[%s0 + $0x10] sm:$0xff]
    %v147 = vld [vmem:[%s0 + $0x18] sm:$0xff]
    %v148 = vld [vmem:[%s0 + $0x20] sm:$0xff]
    %v149 = vld [vmem:[%s0 + $0x28] sm:$0xff]
    %v150 = vld [vmem:[%s0 + $0x30] sm:$0xff]
    %v151 = vld [vmem:[%s0 + $0x38] sm:$0xff]
    %vm152 = vcmask 7168
    %153 = vst.msk [vmem:[%s14] sm:$0xff] %vm152, %v144
    %154 = vst.msk [vmem:[%s14 + $0x8] sm:$0xff] %vm152, %v145
    %155 = vst.msk [vmem:[%s14 + $0x10] sm:$0xff] %vm152, %v146
    %156 = vst.msk [vmem:[%s14 + $0x18] sm:$0xff] %vm152, %v147
    %157 = vst.msk [vmem:[%s14 + $0x20] sm:$0xff] %vm152, %v148
    %158 = vst.msk [vmem:[%s14 + $0x28] sm:$0xff] %vm152, %v149
    %159 = vst.msk [vmem:[%s14 + $0x30] sm:$0xff] %vm152, %v150
    %160 = vst.msk [vmem:[%s14 + $0x38] sm:$0xff] %vm152, %v151
    %161 = vst [vmem:[#allocation2] sm:$0xff] 0
    %162 = vst [vmem:[#allocation2 + $0x8] sm:$0xff] 0
    %163 = vst [vmem:[#allocation2 + $0x10] sm:$0xff] 0
    %164 = vst [vmem:[#allocation2 + $0x18] sm:$0xff] 0
    %165 = vst [vmem:[#allocation2 + $0x20] sm:$0xff] 0
    %166 = vst [vmem:[#allocation2 + $0x28] sm:$0xff] 0
    %167 = vst [vmem:[#allocation2 + $0x30] sm:$0xff] 0
    %168 = vst [vmem:[#allocation2 + $0x38] sm:$0xff] 0
    %169 = vst [vmem:[#allocation3] sm:$0xff] 0
    %170 = vst [vmem:[#allocation3 + $0x8] sm:$0xff] 0
    %171 = vst [vmem:[#allocation3 + $0x10] sm:$0xff] 0
    %172 = vst [vmem:[#allocation3 + $0x18] sm:$0xff] 0
    %173 = vst [vmem:[#allocation3 + $0x20] sm:$0xff] 0
    %174 = vst [vmem:[#allocation3 + $0x28] sm:$0xff] 0
    %175 = vst [vmem:[#allocation3 + $0x30] sm:$0xff] 0
    %176 = vst [vmem:[#allocation3 + $0x38] sm:$0xff] 0
    %v177 = vld [vmem:[%s0] sm:$0xff]
    %v178 = vld [vmem:[%s0 + $0x8] sm:$0xff]
    %179 = vset.pattern.permute.xlu0 0
    %180 = vperm.xlu0 %179, %v177
    %v181 = vpop.permute.xlu0 %180
    %182 = vset.pattern.permute.xlu0 0
    %183 = vperm.xlu0 %182, %v178
    %v184 = vpop.permute.xlu0 %183
    %vm185 = vcmp.eq.s32.totalorder %v133, %v181
    %vm186 = vcmp.eq.s32.totalorder %v134, %v181
    %vm187 = vcmp.eq.s32.totalorder %v133, %v184
    %vm188 = vcmp.eq.s32.totalorder %v134, %v184
    %v189 = vsel %vm185, 1, 0
    %v190 = vsel %vm186, 1, 0
    %v191 = vsel %vm187, 1, 0
    %v192 = vsel %vm188, 1, 0
    %v193 = vcvt.s32.f32 %v189
    %v194 = vcvt.s32.f32 %v190
    %v195 = vcvt.s32.f32 %v191
    %v196 = vcvt.s32.f32 %v192
    %v197 = vpack.c.bf16 %v195, %v193
    %v198 = vpack.c.bf16 %v196, %v194
    %v199 = vld [vmem:[#allocation4] sm:$0xf]
    %v200 = vld [vmem:[#allocation4 + $0x4] sm:$0xf]
    %v201 = vld [vmem:[#allocation4 + $0x8] sm:$0xf]
    %v202 = vld [vmem:[#allocation4 + $0xc] sm:$0xf]
    %v203 = vld [vmem:[#allocation4 + $0x10] sm:$0xf]
    %v204 = vld [vmem:[#allocation4 + $0x14] sm:$0xf]
    %v205 = vld [vmem:[#allocation4 + $0x18] sm:$0xf]
    %v206 = vld [vmem:[#allocation4 + $0x1c] sm:$0xf]
    %v207 = vld [vmem:[#allocation4 + $0x20] sm:$0xf]
    %v208 = vld [vmem:[#allocation4 + $0x24] sm:$0xf]
    %v209 = vld [vmem:[#allocation4 + $0x28] sm:$0xf]
    %v210 = vld [vmem:[#allocation4 + $0x2c] sm:$0xf]
    %v211 = vld [vmem:[#allocation4 + $0x30] sm:$0xf]
    %v212 = vld [vmem:[#allocation4 + $0x34] sm:$0xf]
    %v213 = vld [vmem:[#allocation4 + $0x38] sm:$0xf]
    %v214 = vld [vmem:[#allocation4 + $0x3c] sm:$0xf]
    %v215 = vld [vmem:[#allocation4 + $0x40] sm:$0xf]
    %v216 = vld [vmem:[#allocation4 + $0x44] sm:$0xf]
    %v217 = vld [vmem:[#allocation4 + $0x48] sm:$0xf]
    %v218 = vld [vmem:[#allocation4 + $0x4c] sm:$0xf]
    %v219 = vld [vmem:[#allocation4 + $0x50] sm:$0xf]
    %v220 = vld [vmem:[#allocation4 + $0x54] sm:$0xf]
    %v221 = vld [vmem:[#allocation4 + $0x58] sm:$0xf]
    %v222 = vld [vmem:[#allocation4 + $0x5c] sm:$0xf]
    %v223 = vld [vmem:[#allocation4 + $0x60] sm:$0xf]
    %v224 = vld [vmem:[#allocation4 + $0x64] sm:$0xf]
    %v225 = vld [vmem:[#allocation4 + $0x68] sm:$0xf]
    %v226 = vld [vmem:[#allocation4 + $0x6c] sm:$0xf]
    %v227 = vld [vmem:[#allocation4 + $0x70] sm:$0xf]
    %v228 = vld [vmem:[#allocation4 + $0x74] sm:$0xf]
    %v229 = vld [vmem:[#allocation4 + $0x78] sm:$0xf]
    %v230 = vld [vmem:[#allocation4 + $0x7c] sm:$0xf]
    %v231 = vld [vmem:[%s2] sm:$0xff]
    %v232 = vld [vmem:[%s2 + $0x8] sm:$0xff]
    %v265 = vunpack.c.l.b16 %v199
    %v266 = vunpack.c.l.b16 %v200
    %v267 = vunpack.c.l.b16 %v201
    %v268 = vunpack.c.l.b16 %v202
    %v269 = vunpack.c.l.b16 %v203
    %v270 = vunpack.c.l.b16 %v204
    %v271 = vunpack.c.l.b16 %v205
    %v272 = vunpack.c.l.b16 %v206
    %v273 = vunpack.c.l.b16 %v207
    %v274 = vunpack.c.l.b16 %v208
    %v275 = vunpack.c.l.b16 %v209
    %v276 = vunpack.c.l.b16 %v210
    %v277 = vunpack.c.l.b16 %v211
    %v278 = vunpack.c.l.b16 %v212
    %v279 = vunpack.c.l.b16 %v213
    %v280 = vunpack.c.l.b16 %v214
    %v281 = vunpack.c.l.b16 %v215
    %v282 = vunpack.c.l.b16 %v216
    %v283 = vunpack.c.l.b16 %v217
    %v284 = vunpack.c.l.b16 %v218
    %v285 = vunpack.c.l.b16 %v219
    %v286 = vunpack.c.l.b16 %v220
    %v287 = vunpack.c.l.b16 %v221
    %v288 = vunpack.c.l.b16 %v222
    %v289 = vunpack.c.l.b16 %v223
    %v290 = vunpack.c.l.b16 %v224
    %v291 = vunpack.c.l.b16 %v225
    %v292 = vunpack.c.l.b16 %v226
    %v293 = vunpack.c.l.b16 %v227
    %v294 = vunpack.c.l.b16 %v228
    %v295 = vunpack.c.l.b16 %v229
    %v296 = vunpack.c.l.b16 %v230
    %v297 = vpack.c.b16 %v266, %v265
    %v298 = vpack.c.b16 %v268, %v267
    %v299 = vpack.c.b16 %v270, %v269
    %v300 = vpack.c.b16 %v272, %v271
    %v301 = vpack.c.b16 %v274, %v273
    %v302 = vpack.c.b16 %v276, %v275
    %v303 = vpack.c.b16 %v278, %v277
    %v304 = vpack.c.b16 %v280, %v279
    %v305 = vpack.c.b16 %v282, %v281
    %v306 = vpack.c.b16 %v284, %v283
    %v307 = vpack.c.b16 %v286, %v285
    %v308 = vpack.c.b16 %v288, %v287
    %v309 = vpack.c.b16 %v290, %v289
    %v310 = vpack.c.b16 %v292, %v291
    %v311 = vpack.c.b16 %v294, %v293
    %v312 = vpack.c.b16 %v296, %v295
    %329 = vmatprep.subr.bf16.mxu0 0
    %330 = vmatpush1.bf16.msra.mxu0 %v297
    %331 = vmatprep.subr.bf16.mxu0 0
    %332 = vmatpush1.bf16.msra.mxu0 %v298
    %333 = vmatprep.subr.bf16.mxu0 0
    %334 = vmatpush1.bf16.msra.mxu0 %v299
    %335 = vmatprep.subr.bf16.mxu0 0
    %336 = vmatpush1.bf16.msra.mxu0 %v300
    %337 = vmatprep.subr.bf16.mxu0 0
    %338 = vmatpush1.bf16.msra.mxu0 %v301
    %339 = vmatprep.subr.bf16.mxu0 0
    %340 = vmatpush1.bf16.msra.mxu0 %v302
    %341 = vmatprep.subr.bf16.mxu0 0
    %342 = vmatpush1.bf16.msra.mxu0 %v303
    %343 = vmatprep.subr.bf16.mxu0 0
    %344 = vmatpush1.bf16.msra.mxu0 %v304
    %345 = vmatprep.subr.bf16.mxu0 0
    %346 = vmatpush1.bf16.msra.mxu0 %v305
    %347 = vmatprep.subr.bf16.mxu0 0
    %348 = vmatpush1.bf16.msra.mxu0 %v306
    %349 = vmatprep.subr.bf16.mxu0 0
    %350 = vmatpush1.bf16.msra.mxu0 %v307
    %351 = vmatprep.subr.bf16.mxu0 0
    %352 = vmatpush1.bf16.msra.mxu0 %v308
    %353 = vmatprep.subr.bf16.mxu0 0
    %354 = vmatpush1.bf16.msra.mxu0 %v309
    %355 = vmatprep.subr.bf16.mxu0 0
    %356 = vmatpush1.bf16.msra.mxu0 %v310
    %357 = vmatprep.subr.bf16.mxu0 0
    %358 = vmatpush1.bf16.msra.mxu0 %v311
    %359 = vmatprep.subr.bf16.mxu0 0
    %360 = vmatpush1.bf16.msra.mxu0 %v312
    %361 = vmatprep.mubr.bf16.mxu0 %v198
    %362 = vmatmul.mubr.bf16.gmra.mrb[0].mxu0 %v197
    %v363 = vpop.f32.mrb[0].mxu0
    %v364 = vadd.f32 %v231, %v363
    %v365 = vpop.f32.mrb[0].mxu0
    %v366 = vpop.f32.mrb[0].mxu0
    %v367 = vadd.f32 %v232, %v366
    %v368 = vpop.f32.mrb[0].mxu0
    %369 = vdwg.mxu0
    %vm370 = vcmp.le.s32.totalorder %v133, %v136
    %vm371 = vcmp.le.s32.totalorder %v133, %v137
    %v372 = vld [vmem:[%s3] sm:$0x1]
    %v373 = vld [vmem:[%s4] sm:$0x1]
    %374 = vadd.xlane.f32.xlu0 %v364
    %v375 = vpop.xlane.xlu0 %374
    %376 = vadd.xlane.f32.xlu0 %v367
    %v377 = vpop.xlane.xlu0 %376
    %v378 = vrcp.pop 128.0
    %v379 = vmul.f32 %v375, %v378
    %v380 = vmul.f32 %v377, %v378
    %v381 = vsub.f32 %v364, %v379
    %v382 = vsub.f32 %v367, %v380
    %v383 = vmul.f32 %v381, %v381
    %v384 = vmul.f32 %v382, %v382
    %385 = vadd.xlane.f32.xlu0 %v383
    %v386 = vpop.xlane.xlu0 %385
    %387 = vadd.xlane.f32.xlu0 %v384
    %v388 = vpop.xlane.xlu0 %387
    %v389 = vmul.f32 %v386, %v378
    %v390 = vmul.f32 %v388, %v378
    %v391 = vadd.f32 %v389, 1e-05
    %v392 = vadd.f32 %v390, 1e-05
    %v393 = vrsqrt.pop %v391
    %v394 = vrsqrt.pop %v392
    %v395 = vmul.f32 %v381, %v393
    %v396 = vmul.f32 %v382, %v394
    %v398 = vlaneseq
    %v399 = vshrl.u32 %v398, 7
    %v400 = vsub.s32 0, %v399
    %v401 = vrot.slane %v372, %v400
    %v403 = vmul.f32 %v395, %v401
    %v404 = vmul.f32 %v396, %v401
    %v406 = vlaneseq
    %v407 = vshrl.u32 %v406, 7
    %v408 = vsub.s32 0, %v407
    %v409 = vrot.slane %v373, %v408
    %v411 = vadd.f32 %v403, %v409
    %v412 = vadd.f32 %v404, %v409
    %v413 = vpack.c.bf16 %v412, %v411
    %v414 = vld [vmem:[#allocation6] sm:$0xff]
    %v415 = vld [vmem:[#allocation6 + $0x8] sm:$0xf]
    %v416 = vld [vmem:[#allocation6 + $0xc] sm:$0xff]
    %v417 = vld [vmem:[#allocation6 + $0x14] sm:$0xf]
    %v418 = vld [vmem:[#allocation6 + $0x18] sm:$0xff]
    %v419 = vld [vmem:[#allocation6 + $0x20] sm:$0xf]
    %v420 = vld [vmem:[#allocation6 + $0x24] sm:$0xff]
    %v421 = vld [vmem:[#allocation6 + $0x2c] sm:$0xf]
    %v422 = vld [vmem:[#allocation6 + $0x30] sm:$0xff]
    %v423 = vld [vmem:[#allocation6 + $0x38] sm:$0xf]
    %v424 = vld [vmem:[#allocation6 + $0x3c] sm:$0xff]
    %v425 = vld [vmem:[#allocation6 + $0x44] sm:$0xf]
    %v426 = vld [vmem:[#allocation6 + $0x48] sm:$0xff]
    %v427 = vld [vmem:[#allocation6 + $0x50] sm:$0xf]
    %v428 = vld [vmem:[#allocation6 + $0x54] sm:$0xff]
    %v429 = vld [vmem:[#allocation6 + $0x5c] sm:$0xf]
    %v430 = vld [vmem:[#allocation6 + $0x60] sm:$0xff]
    %v431 = vld [vmem:[#allocation6 + $0x68] sm:$0xf]
    %v432 = vld [vmem:[#allocation6 + $0x6c] sm:$0xff]
    %v433 = vld [vmem:[#allocation6 + $0x74] sm:$0xf]
    %v434 = vld [vmem:[#allocation6 + $0x78] sm:$0xff]
    %v435 = vld [vmem:[#allocation6 + $0x80] sm:$0xf]
    %v436 = vld [vmem:[#allocation6 + $0x84] sm:$0xff]
    %v437 = vld [vmem:[#allocation6 + $0x8c] sm:$0xf]
    %v438 = vld [vmem:[#allocation6 + $0x90] sm:$0xff]
    %v439 = vld [vmem:[#allocation6 + $0x98] sm:$0xf]
    %v440 = vld [vmem:[#allocation6 + $0x9c] sm:$0xff]
    %v441 = vld [vmem:[#allocation6 + $0xa4] sm:$0xf]
    %v442 = vld [vmem:[#allocation6 + $0xa8] sm:$0xff]
    %v443 = vld [vmem:[#allocation6 + $0xb0] sm:$0xf]
    %v444 = vld [vmem:[#allocation6 + $0xb4] sm:$0xff]
    %v445 = vld [vmem:[#allocation6 + $0xbc] sm:$0xf]
    %v478 = vunpack.c.l.b16 %v414
    %v479 = vunpack.c.h.b16 %v414
    %v480 = vunpack.c.l.b16 %v415
    %v481 = vunpack.c.l.b16 %v416
    %v482 = vunpack.c.h.b16 %v416
    %v483 = vunpack.c.l.b16 %v417
    %v484 = vunpack.c.l.b16 %v418
    %v485 = vunpack.c.h.b16 %v418
    %v486 = vunpack.c.l.b16 %v419
    %v487 = vunpack.c.l.b16 %v420
    %v488 = vunpack.c.h.b16 %v420
    %v489 = vunpack.c.l.b16 %v421
    %v490 = vunpack.c.l.b16 %v422
    %v491 = vunpack.c.h.b16 %v422
    %v492 = vunpack.c.l.b16 %v423
    %v493 = vunpack.c.l.b16 %v424
    %v494 = vunpack.c.h.b16 %v424
    %v495 = vunpack.c.l.b16 %v425
    %v496 = vunpack.c.l.b16 %v426
    %v497 = vunpack.c.h.b16 %v426
    %v498 = vunpack.c.l.b16 %v427
    %v499 = vunpack.c.l.b16 %v428
    %v500 = vunpack.c.h.b16 %v428
    %v501 = vunpack.c.l.b16 %v429
    %v502 = vunpack.c.l.b16 %v430
    %v503 = vunpack.c.h.b16 %v430
    %v504 = vunpack.c.l.b16 %v431
    %v505 = vunpack.c.l.b16 %v432
    %v506 = vunpack.c.h.b16 %v432
    %v507 = vunpack.c.l.b16 %v433
    %v508 = vunpack.c.l.b16 %v434
    %v509 = vunpack.c.h.b16 %v434
    %v510 = vunpack.c.l.b16 %v435
    %v511 = vunpack.c.l.b16 %v436
    %v512 = vunpack.c.h.b16 %v436
    %v513 = vunpack.c.l.b16 %v437
    %v514 = vunpack.c.l.b16 %v438
    %v515 = vunpack.c.h.b16 %v438
    %v516 = vunpack.c.l.b16 %v439
    %v517 = vunpack.c.l.b16 %v440
    %v518 = vunpack.c.h.b16 %v440
    %v519 = vunpack.c.l.b16 %v441
    %v520 = vunpack.c.l.b16 %v442
    %v521 = vunpack.c.h.b16 %v442
    %v522 = vunpack.c.l.b16 %v443
    %v523 = vunpack.c.l.b16 %v444
    %v524 = vunpack.c.h.b16 %v444
    %v525 = vunpack.c.l.b16 %v445
    %v526 = vpack.c.b16 %v481, %v478
    %v527 = vpack.c.b16 %v482, %v479
    %v528 = vpack.c.b16 %v483, %v480
    %v529 = vpack.c.b16 %v487, %v484
    %v530 = vpack.c.b16 %v488, %v485
    %v531 = vpack.c.b16 %v489, %v486
    %v532 = vpack.c.b16 %v493, %v490
    %v533 = vpack.c.b16 %v494, %v491
    %v534 = vpack.c.b16 %v495, %v492
    %v535 = vpack.c.b16 %v499, %v496
    %v536 = vpack.c.b16 %v500, %v497
    %v537 = vpack.c.b16 %v501, %v498
    %v538 = vpack.c.b16 %v505, %v502
    %v539 = vpack.c.b16 %v506, %v503
    %v540 = vpack.c.b16 %v507, %v504
    %v541 = vpack.c.b16 %v511, %v508
    %v542 = vpack.c.b16 %v512, %v509
    %v543 = vpack.c.b16 %v513, %v510
    %v544 = vpack.c.b16 %v517, %v514
    %v545 = vpack.c.b16 %v518, %v515
    %v546 = vpack.c.b16 %v519, %v516
    %v547 = vpack.c.b16 %v523, %v520
    %v548 = vpack.c.b16 %v524, %v521
    %v549 = vpack.c.b16 %v525, %v522
    %574 = vmatprep.subr.bf16.mxu0 %v527
    %575 = vmatpush1.bf16.msra.mxu0 %v526
    %576 = vmatprep.subr.bf16.mxu0 %v530
    %577 = vmatpush1.bf16.msra.mxu0 %v529
    %578 = vmatprep.subr.bf16.mxu0 %v533
    %579 = vmatpush1.bf16.msra.mxu0 %v532
    %580 = vmatprep.subr.bf16.mxu0 %v536
    %581 = vmatpush1.bf16.msra.mxu0 %v535
    %582 = vmatprep.subr.bf16.mxu0 %v539
    %583 = vmatpush1.bf16.msra.mxu0 %v538
    %584 = vmatprep.subr.bf16.mxu0 %v542
    %585 = vmatpush1.bf16.msra.mxu0 %v541
    %586 = vmatprep.subr.bf16.mxu0 %v545
    %587 = vmatpush1.bf16.msra.mxu0 %v544
    %588 = vmatprep.subr.bf16.mxu0 %v548
    %589 = vmatpush1.bf16.msra.mxu0 %v547
    %590 = vmatprep.subr.bf16.mxu0 0
    %591 = vmatpush1.bf16.msra.mxu0 0
    %592 = vmatprep.subr.bf16.mxu0 0
    %593 = vmatpush1.bf16.msra.mxu0 0
    %594 = vmatprep.subr.bf16.mxu0 0
    %595 = vmatpush1.bf16.msra.mxu0 0
    %596 = vmatprep.subr.bf16.mxu0 0
    %597 = vmatpush1.bf16.msra.mxu0 0
    %598 = vmatprep.subr.bf16.mxu0 0
    %599 = vmatpush1.bf16.msra.mxu0 0
    %600 = vmatprep.subr.bf16.mxu0 0
    %601 = vmatpush1.bf16.msra.mxu0 0
    %602 = vmatprep.subr.bf16.mxu0 0
    %603 = vmatpush1.bf16.msra.mxu0 0
    %604 = vmatprep.subr.bf16.mxu0 0
    %605 = vmatpush1.bf16.msra.mxu0 0
    %606 = vmatprep.mubr.bf16.mxu0 0
    %607 = vmatmul.mubr.bf16.gmra.mrb[0].mxu0 %v413
    %v608 = vpop.f32.mrb[0].mxu0
    %v609 = vadd.f32 0.0, %v608
    %v610 = vpop.f32.mrb[0].mxu0
    %v611 = vadd.f32 0.0, %v610
    %v612 = vpop.f32.mrb[0].mxu0
    %v613 = vadd.f32 0.0, %v612
    %v614 = vpop.f32.mrb[0].mxu0
    %v615 = vadd.f32 0.0, %v614
    %616 = vdwg.mxu0
    %617 = vmatprep.subr.bf16.mxu0 0
    %618 = vmatpush1.bf16.msra.mxu0 %v528
    %619 = vmatprep.subr.bf16.mxu0 0
    %620 = vmatpush1.bf16.msra.mxu0 %v531
    %621 = vmatprep.subr.bf16.mxu0 0
    %622 = vmatpush1.bf16.msra.mxu0 %v534
    %623 = vmatprep.subr.bf16.mxu0 0
    %624 = vmatpush1.bf16.msra.mxu0 %v537
    %625 = vmatprep.subr.bf16.mxu0 0
    %626 = vmatpush1.bf16.msra.mxu0 %v540
    %627 = vmatprep.subr.bf16.mxu0 0
    %628 = vmatpush1.bf16.msra.mxu0 %v543
    %629 = vmatprep.subr.bf16.mxu0 0
    %630 = vmatpush1.bf16.msra.mxu0 %v546
    %631 = vmatprep.subr.bf16.mxu0 0
    %632 = vmatpush1.bf16.msra.mxu0 %v549
    %633 = vmatprep.subr.bf16.mxu0 0
    %634 = vmatpush1.bf16.msra.mxu0 0
    %635 = vmatprep.subr.bf16.mxu0 0
    %636 = vmatpush1.bf16.msra.mxu0 0
    %637 = vmatprep.subr.bf16.mxu0 0
    %638 = vmatpush1.bf16.msra.mxu0 0
    %639 = vmatprep.subr.bf16.mxu0 0
    %640 = vmatpush1.bf16.msra.mxu0 0
    %641 = vmatprep.subr.bf16.mxu0 0
    %642 = vmatpush1.bf16.msra.mxu0 0
    %643 = vmatprep.subr.bf16.mxu0 0
    %644 = vmatpush1.bf16.msra.mxu0 0
    %645 = vmatprep.subr.bf16.mxu0 0
    %646 = vmatpush1.bf16.msra.mxu0 0
    %647 = vmatprep.subr.bf16.mxu0 0
    %648 = vmatpush1.bf16.msra.mxu0 0
    %649 = vmatprep.mubr.bf16.mxu0 0
    %650 = vmatmul.mubr.bf16.gmra.mrb[0].mxu0 %v413
    %v651 = vpop.f32.mrb[0].mxu0
    %v652 = vadd.f32 0.0, %v651
    %v653 = vpop.f32.mrb[0].mxu0
    %v654 = vpop.f32.mrb[0].mxu0
    %v655 = vadd.f32 0.0, %v654
    %v656 = vpop.f32.mrb[0].mxu0
    %657 = vdwg.mxu0
    %v658 = vmul.f32 %v609, 0.17677669
    %v659 = vmul.f32 %v613, 0.17677669
    %v660 = vpack.c.bf16 %v659, %v658
    %v661 = vpack.c.bf16 %v615, %v611
    %v662 = vpack.c.bf16 %v655, %v652
    %663 = vst [vmem:[#allocation2] sm:$0xff] %v661
    %664 = vst [vmem:[#allocation3] sm:$0xff] %v662
    %vm665 = vcmask 261120
    %v667 = vsel %vm665, %v660, 0
    %v670 = vsel %vm665, %v661, 0
    %672 = vmatprep.subr.bf16.mxu0 0
    %673 = vmatpush1.bf16.xpose.msra.mxu0 %v670
    %674 = vmatprep.subr.bf16.mxu0 0
    %675 = vmatpush1.bf16.xpose.msra.mxu0 0
    %676 = vmatprep.subr.bf16.mxu0 0
    %677 = vmatpush1.bf16.xpose.msra.mxu0 0
    %678 = vmatprep.subr.bf16.mxu0 0
    %679 = vmatpush1.bf16.xpose.msra.mxu0 0
    %680 = vmatprep.subr.bf16.mxu0 0
    %681 = vmatpush1.bf16.xpose.msra.mxu0 0
    %682 = vmatprep.subr.bf16.mxu0 0
    %683 = vmatpush1.bf16.xpose.msra.mxu0 0
    %684 = vmatprep.subr.bf16.mxu0 0
    %685 = vmatpush1.bf16.xpose.msra.mxu0 0
    %686 = vmatprep.subr.bf16.mxu0 0
    %687 = vmatpush1.bf16.xpose.msra.mxu0 0
    %688 = vmatprep.subr.bf16.mxu0 0
    %689 = vmatpush1.bf16.xpose.msra.mxu0 0
    %690 = vmatprep.subr.bf16.mxu0 0
    %691 = vmatpush1.bf16.xpose.msra.mxu0 0
    %692 = vmatprep.subr.bf16.mxu0 0
    %693 = vmatpush1.bf16.xpose.msra.mxu0 0
    %694 = vmatprep.subr.bf16.mxu0 0
    %695 = vmatpush1.bf16.xpose.msra.mxu0 0
    %696 = vmatprep.subr.bf16.mxu0 0
    %697 = vmatpush1.bf16.xpose.msra.mxu0 0
    %698 = vmatprep.subr.bf16.mxu0 0
    %699 = vmatpush1.bf16.xpose.msra.mxu0 0
    %700 = vmatprep.subr.bf16.mxu0 0
    %701 = vmatpush1.bf16.xpose.msra.mxu0 0
    %702 = vmatprep.subr.bf16.mxu0 0
    %703 = vmatpush1.bf16.xpose.msra.mxu0 0
    %704 = vmatprep.mubr.bf16.mxu0 0
    %705 = vmatmul.mubr.bf16.gmra.mrb[0].mxu0 %v667
    %v706 = vpop.f32.mrb[0].mxu0
    %v707 = vadd.f32 0.0, %v706
    %v708 = vpop.f32.mrb[0].mxu0
    %v709 = vpop.f32.mrb[0].mxu0
    %v710 = vadd.f32 0.0, %v709
    %v711 = vpop.f32.mrb[0].mxu0
    %712 = vdwg.mxu0
    %v713 = vsel %vm370, %v707, -1e+30
    %v714 = vsel %vm371, %v710, -1e+30
    %vm715 = vcmask 130048
    %v716 = vsel %vm715, %v713, -inf
    %717 = vmax.xlane.f32.xlu0 %v716
    %v718 = vpop.xlane.xlu0 %717
    %v719 = vsel %vm715, %v714, -inf
    %720 = vmax.xlane.f32.xlu0 %v719
    %v721 = vpop.xlane.xlu0 %720
    %v722 = vsub.f32 %v713, %v718
    %v723 = vsub.f32 %v714, %v721
    %v724 = vmul.f32 %v722, 1.442695
    %v725 = vpow.pop %v724
    %v726 = vmul.f32 %v723, 1.442695
    %v727 = vpow.pop %v726
    %v728 = vsel %vm370, %v725, 0.0
    %v729 = vsel %vm371, %v727, 0.0
    %v730 = vsel %vm715, %v728, 0.0
    %731 = vadd.xlane.f32.xlu0 %v730
    %v732 = vpop.xlane.xlu0 %731
    %v733 = vsel %vm715, %v729, 0.0
    %734 = vadd.xlane.f32.xlu0 %v733
    %v735 = vpop.xlane.xlu0 %734
    %v736 = vrcp.pop %v732
    %v737 = vmul.f32 %v728, %v736
    %v738 = vrcp.pop %v735
    %v739 = vmul.f32 %v729, %v738
    %v740 = vpack.c.bf16 %v739, %v737
    %v742 = vsel %vm715, %v740, 0
    %744 = vmatprep.subr.bf16.mxu0 0
    %745 = vmatpush1.bf16.msra.mxu0 %v662
    %746 = vmatprep.subr.bf16.mxu0 0
    %747 = vmatpush1.bf16.msra.mxu0 0
    %748 = vmatprep.subr.bf16.mxu0 0
    %749 = vmatpush1.bf16.msra.mxu0 0
    %750 = vmatprep.subr.bf16.mxu0 0
    %751 = vmatpush1.bf16.msra.mxu0 0
    %752 = vmatprep.subr.bf16.mxu0 0
    %753 = vmatpush1.bf16.msra.mxu0 0
    %754 = vmatprep.subr.bf16.mxu0 0
    %755 = vmatpush1.bf16.msra.mxu0 0
    %756 = vmatprep.subr.bf16.mxu0 0
    %757 = vmatpush1.bf16.msra.mxu0 0
    %758 = vmatprep.subr.bf16.mxu0 0
    %759 = vmatpush1.bf16.msra.mxu0 0
    %760 = vmatprep.subr.bf16.mxu0 0
    %761 = vmatpush1.bf16.msra.mxu0 0
    %762 = vmatprep.subr.bf16.mxu0 0
    %763 = vmatpush1.bf16.msra.mxu0 0
    %764 = vmatprep.subr.bf16.mxu0 0
    %765 = vmatpush1.bf16.msra.mxu0 0
    %766 = vmatprep.subr.bf16.mxu0 0
    %767 = vmatpush1.bf16.msra.mxu0 0
    %768 = vmatprep.subr.bf16.mxu0 0
    %769 = vmatpush1.bf16.msra.mxu0 0
    %770 = vmatprep.subr.bf16.mxu0 0
    %771 = vmatpush1.bf16.msra.mxu0 0
    %772 = vmatprep.subr.bf16.mxu0 0
    %773 = vmatpush1.bf16.msra.mxu0 0
    %774 = vmatprep.subr.bf16.mxu0 0
    %775 = vmatpush1.bf16.msra.mxu0 0
    %776 = vmatprep.mubr.bf16.mxu0 0
    %777 = vmatmul.mubr.bf16.gmra.mrb[0].mxu0 %v742
    %v778 = vpop.f32.mrb[0].mxu0
    %v779 = vadd.f32 0.0, %v778
    %v780 = vpop.f32.mrb[0].mxu0
    %v781 = vpop.f32.mrb[0].mxu0
    %v782 = vadd.f32 0.0, %v781
    %v783 = vpop.f32.mrb[0].mxu0
    %784 = vdwg.mxu0
    %v785 = vpack.c.bf16 %v782, %v779
    %v786 = vld [vmem:[#allocation8] sm:$0xf]
    %v787 = vld [vmem:[#allocation8 + $0x4] sm:$0xf]
    %v788 = vld [vmem:[#allocation8 + $0x8] sm:$0xf]
    %v789 = vld [vmem:[#allocation8 + $0xc] sm:$0xf]
    %791 = vrot.lane.b32.xlu0 %v660, 96
    %v792 = vpop.permute.xlu0 %791
    %794 = vrot.lane.b32.xlu0 %v661, 96
    %v795 = vpop.permute.xlu0 %794
    %v797 = vsel %vm665, %v792, 0
    %v800 = vsel %vm665, %v795, 0
    %802 = vmatprep.subr.bf16.mxu0 0
    %803 = vmatpush1.bf16.xpose.msra.mxu0 %v800
    %804 = vmatprep.subr.bf16.mxu0 0
    %805 = vmatpush1.bf16.xpose.msra.mxu0 0
    %806 = vmatprep.subr.bf16.mxu0 0
    %807 = vmatpush1.bf16.xpose.msra.mxu0 0
    %808 = vmatprep.subr.bf16.mxu0 0
    %809 = vmatpush1.bf16.xpose.msra.mxu0 0
    %810 = vmatprep.subr.bf16.mxu0 0
    %811 = vmatpush1.bf16.xpose.msra.mxu0 0
    %812 = vmatprep.subr.bf16.mxu0 0
    %813 = vmatpush1.bf16.xpose.msra.mxu0 0
    %814 = vmatprep.subr.bf16.mxu0 0
    %815 = vmatpush1.bf16.xpose.msra.mxu0 0
    %816 = vmatprep.subr.bf16.mxu0 0
    %817 = vmatpush1.bf16.xpose.msra.mxu0 0
    %818 = vmatprep.subr.bf16.mxu0 0
    %819 = vmatpush1.bf16.xpose.msra.mxu0 0
    %820 = vmatprep.subr.bf16.mxu0 0
    %821 = vmatpush1.bf16.xpose.msra.mxu0 0
    %822 = vmatprep.subr.bf16.mxu0 0
    %823 = vmatpush1.bf16.xpose.msra.mxu0 0
    %824 = vmatprep.subr.bf16.mxu0 0
    %825 = vmatpush1.bf16.xpose.msra.mxu0 0
    %826 = vmatprep.subr.bf16.mxu0 0
    %827 = vmatpush1.bf16.xpose.msra.mxu0 0
    %828 = vmatprep.subr.bf16.mxu0 0
    %829 = vmatpush1.bf16.xpose.msra.mxu0 0
    %830 = vmatprep.subr.bf16.mxu0 0
    %831 = vmatpush1.bf16.xpose.msra.mxu0 0
    %832 = vmatprep.subr.bf16.mxu0 0
    %833 = vmatpush1.bf16.xpose.msra.mxu0 0
    %834 = vmatprep.mubr.bf16.mxu0 0
    %835 = vmatmul.mubr.bf16.gmra.mrb[0].mxu0 %v797
    %v836 = vpop.f32.mrb[0].mxu0
    %v837 = vadd.f32 0.0, %v836
    %v838 = vpop.f32.mrb[0].mxu0
    %v839 = vpop.f32.mrb[0].mxu0
    %v840 = vadd.f32 0.0, %v839
    %v841 = vpop.f32.mrb[0].mxu0
    %842 = vdwg.mxu0
    %v843 = vsel %vm370, %v837, -1e+30
    %v844 = vsel %vm371, %v840, -1e+30
    %v845 = vsel %vm715, %v843, -inf
    %846 = vmax.xlane.f32.xlu0 %v845
    %v847 = vpop.xlane.xlu0 %846
    %v848 = vsel %vm715, %v844, -inf
    %849 = vmax.xlane.f32.xlu0 %v848
    %v850 = vpop.xlane.xlu0 %849
    %v851 = vsub.f32 %v843, %v847
    %v852 = vsub.f32 %v844, %v850
    %v853 = vmul.f32 %v851, 1.442695
    %v854 = vpow.pop %v853
    %v855 = vmul.f32 %v852, 1.442695
    %v856 = vpow.pop %v855
    %v857 = vsel %vm370, %v854, 0.0
    %v858 = vsel %vm371, %v856, 0.0
    %v859 = vsel %vm715, %v857, 0.0
    %860 = vadd.xlane.f32.xlu0 %v859
    %v861 = vpop.xlane.xlu0 %860
    %v862 = vsel %vm715, %v858, 0.0
    %863 = vadd.xlane.f32.xlu0 %v862
    %v864 = vpop.xlane.xlu0 %863
    %v865 = vrcp.pop %v861
    %v866 = vmul.f32 %v857, %v865
    %v867 = vrcp.pop %v864
    %v868 = vmul.f32 %v858, %v867
    %v869 = vpack.c.bf16 %v868, %v866
    %871 = vrot.lane.b32.xlu0 %v662, 96
    %v872 = vpop.permute.xlu0 %871
    %v875 = vsel %vm715, %v869, 0
    %877 = vmatprep.subr.bf16.mxu0 0
    %878 = vmatpush1.bf16.msra.mxu0 %v872
    %879 = vmatprep.subr.bf16.mxu0 0
    %880 = vmatpush1.bf16.msra.mxu0 0
    %881 = vmatprep.subr.bf16.mxu0 0
    %882 = vmatpush1.bf16.msra.mxu0 0
    %883 = vmatprep.subr.bf16.mxu0 0
    %884 = vmatpush1.bf16.msra.mxu0 0
    %885 = vmatprep.subr.bf16.mxu0 0
    %886 = vmatpush1.bf16.msra.mxu0 0
    %887 = vmatprep.subr.bf16.mxu0 0
    %888 = vmatpush1.bf16.msra.mxu0 0
    %889 = vmatprep.subr.bf16.mxu0 0
    %890 = vmatpush1.bf16.msra.mxu0 0
    %891 = vmatprep.subr.bf16.mxu0 0
    %892 = vmatpush1.bf16.msra.mxu0 0
    %893 = vmatprep.subr.bf16.mxu0 0
    %894 = vmatpush1.bf16.msra.mxu0 0
    %895 = vmatprep.subr.bf16.mxu0 0
    %896 = vmatpush1.bf16.msra.mxu0 0
    %897 = vmatprep.subr.bf16.mxu0 0
    %898 = vmatpush1.bf16.msra.mxu0 0
    %899 = vmatprep.subr.bf16.mxu0 0
    %900 = vmatpush1.bf16.msra.mxu0 0
    %901 = vmatprep.subr.bf16.mxu0 0
    %902 = vmatpush1.bf16.msra.mxu0 0
    %903 = vmatprep.subr.bf16.mxu0 0
    %904 = vmatpush1.bf16.msra.mxu0 0
    %905 = vmatprep.subr.bf16.mxu0 0
    %906 = vmatpush1.bf16.msra.mxu0 0
    %907 = vmatprep.subr.bf16.mxu0 0
    %908 = vmatpush1.bf16.msra.mxu0 0
    %909 = vmatprep.mubr.bf16.mxu0 0
    %910 = vmatmul.mubr.bf16.gmra.mrb[0].mxu0 %v875
    %v911 = vpop.f32.mrb[0].mxu0
    %v912 = vadd.f32 0.0, %v911
    %v913 = vpop.f32.mrb[0].mxu0
    %v914 = vpop.f32.mrb[0].mxu0
    %v915 = vadd.f32 0.0, %v914
    %v916 = vpop.f32.mrb[0].mxu0
    %917 = vdwg.mxu0
    %v918 = vpack.c.bf16 %v915, %v912
    %v919 = vld [vmem:[#allocation8 + $0x10] sm:$0xf]
    %v920 = vld [vmem:[#allocation8 + $0x14] sm:$0xf]
    %v921 = vld [vmem:[#allocation8 + $0x18] sm:$0xf]
    %v922 = vld [vmem:[#allocation8 + $0x1c] sm:$0xf]
    %v927 = vunpack.c.l.b16 %v919
    %v928 = vunpack.c.l.b16 %v920
    %v929 = vunpack.c.l.b16 %v921
    %v930 = vunpack.c.l.b16 %v922
    %v931 = vpack.c.b16 %v928, %v927
    %v932 = vpack.c.b16 %v930, %v929
    %v936 = vsel %vm665, %v918, 0
    %938 = vmatprep.subr.bf16.mxu0 0
    %939 = vmatpush1.bf16.msra.mxu0 %v931
    %940 = vmatprep.subr.bf16.mxu0 0
    %941 = vmatpush1.bf16.msra.mxu0 %v932
    %942 = vmatprep.subr.bf16.mxu0 0
    %943 = vmatpush1.bf16.msra.mxu0 0
    %944 = vmatprep.subr.bf16.mxu0 0
    %945 = vmatpush1.bf16.msra.mxu0 0
    %946 = vmatprep.subr.bf16.mxu0 0
    %947 = vmatpush1.bf16.msra.mxu0 0
    %948 = vmatprep.subr.bf16.mxu0 0
    %949 = vmatpush1.bf16.msra.mxu0 0
    %950 = vmatprep.subr.bf16.mxu0 0
    %951 = vmatpush1.bf16.msra.mxu0 0
    %952 = vmatprep.subr.bf16.mxu0 0
    %953 = vmatpush1.bf16.msra.mxu0 0
    %954 = vmatprep.subr.bf16.mxu0 0
    %955 = vmatpush1.bf16.msra.mxu0 0
    %956 = vmatprep.subr.bf16.mxu0 0
    %957 = vmatpush1.bf16.msra.mxu0 0
    %958 = vmatprep.subr.bf16.mxu0 0
    %959 = vmatpush1.bf16.msra.mxu0 0
    %960 = vmatprep.subr.bf16.mxu0 0
    %961 = vmatpush1.bf16.msra.mxu0 0
    %962 = vmatprep.subr.bf16.mxu0 0
    %963 = vmatpush1.bf16.msra.mxu0 0
    %964 = vmatprep.subr.bf16.mxu0 0
    %965 = vmatpush1.bf16.msra.mxu0 0
    %966 = vmatprep.subr.bf16.mxu0 0
    %967 = vmatpush1.bf16.msra.mxu0 0
    %968 = vmatprep.subr.bf16.mxu0 0
    %969 = vmatpush1.bf16.msra.mxu0 0
    %970 = vmatprep.mubr.bf16.mxu0 0
    %971 = vmatmul.mubr.bf16.gmra.mrb[0].mxu0 %v936
    %v972 = vpop.f32.mrb[0].mxu0
    %v973 = vadd.f32 0.0, %v972
    %v974 = vpop.f32.mrb[0].mxu0
    %v975 = vpop.f32.mrb[0].mxu0
    %v976 = vadd.f32 0.0, %v975
    %v977 = vpop.f32.mrb[0].mxu0
    %978 = vdwg.mxu0
    %v983 = vunpack.c.l.b16 %v786
    %v984 = vunpack.c.l.b16 %v787
    %v985 = vunpack.c.l.b16 %v788
    %v986 = vunpack.c.l.b16 %v789
    %v987 = vpack.c.b16 %v984, %v983
    %v988 = vpack.c.b16 %v986, %v985
    %v992 = vsel %vm665, %v785, 0
    %994 = vmatprep.subr.bf16.mxu0 0
    %995 = vmatpush1.bf16.msra.mxu0 %v987
    %996 = vmatprep.subr.bf16.mxu0 0
    %997 = vmatpush1.bf16.msra.mxu0 %v988
    %998 = vmatprep.subr.bf16.mxu0 0
    %999 = vmatpush1.bf16.msra.mxu0 0
    %1000 = vmatprep.subr.bf16.mxu0 0
    %1001 = vmatpush1.bf16.msra.mxu0 0
    %1002 = vmatprep.subr.bf16.mxu0 0
    %1003 = vmatpush1.bf16.msra.mxu0 0
    %1004 = vmatprep.subr.bf16.mxu0 0
    %1005 = vmatpush1.bf16.msra.mxu0 0
    %1006 = vmatprep.subr.bf16.mxu0 0
    %1007 = vmatpush1.bf16.msra.mxu0 0
    %1008 = vmatprep.subr.bf16.mxu0 0
    %1009 = vmatpush1.bf16.msra.mxu0 0
    %1010 = vmatprep.subr.bf16.mxu0 0
    %1011 = vmatpush1.bf16.msra.mxu0 0
    %1012 = vmatprep.subr.bf16.mxu0 0
    %1013 = vmatpush1.bf16.msra.mxu0 0
    %1014 = vmatprep.subr.bf16.mxu0 0
    %1015 = vmatpush1.bf16.msra.mxu0 0
    %1016 = vmatprep.subr.bf16.mxu0 0
    %1017 = vmatpush1.bf16.msra.mxu0 0
    %1018 = vmatprep.subr.bf16.mxu0 0
    %1019 = vmatpush1.bf16.msra.mxu0 0
    %1020 = vmatprep.subr.bf16.mxu0 0
    %1021 = vmatpush1.bf16.msra.mxu0 0
    %1022 = vmatprep.subr.bf16.mxu0 0
    %1023 = vmatpush1.bf16.msra.mxu0 0
    %1024 = vmatprep.subr.bf16.mxu0 0
    %1025 = vmatpush1.bf16.msra.mxu0 0
    %1026 = vmatprep.mubr.bf16.mxu0 0
    %1027 = vmatmul.mubr.bf16.gmra.mrb[0].mxu0 %v992
    %v1028 = vpop.f32.mrb[0].mxu0
    %v1029 = vadd.f32 %v973, %v1028
    %v1030 = vpop.f32.mrb[0].mxu0
    %v1031 = vpop.f32.mrb[0].mxu0
    %v1032 = vadd.f32 %v976, %v1031
    %v1033 = vpop.f32.mrb[0].mxu0
    %1034 = vdwg.mxu0
    %1035 = vrot.lane.b32.xlu0 %v660, 64
    %v1036 = vpop.permute.xlu0 %1035
    %1037 = vrot.lane.b32.xlu0 %v661, 64
    %v1038 = vpop.permute.xlu0 %1037
    %v1040 = vsel %vm665, %v1036, 0
    %v1043 = vsel %vm665, %v1038, 0
    %1045 = vmatprep.subr.bf16.mxu0 0
    %1046 = vmatpush1.bf16.xpose.msra.mxu0 %v1043
    %1047 = vmatprep.subr.bf16.mxu0 0
    %1048 = vmatpush1.bf16.xpose.msra.mxu0 0
    %1049 = vmatprep.subr.bf16.mxu0 0
    %1050 = vmatpush1.bf16.xpose.msra.mxu0 0
    %1051 = vmatprep.subr.bf16.mxu0 0
    %1052 = vmatpush1.bf16.xpose.msra.mxu0 0
    %1053 = vmatprep.subr.bf16.mxu0 0
    %1054 = vmatpush1.bf16.xpose.msra.mxu0 0
    %1055 = vmatprep.subr.bf16.mxu0 0
    %1056 = vmatpush1.bf16.xpose.msra.mxu0 0
    %1057 = vmatprep.subr.bf16.mxu0 0
    %1058 = vmatpush1.bf16.xpose.msra.mxu0 0
    %1059 = vmatprep.subr.bf16.mxu0 0
    %1060 = vmatpush1.bf16.xpose.msra.mxu0 0
    %1061 = vmatprep.subr.bf16.mxu0 0
    %1062 = vmatpush1.bf16.xpose.msra.mxu0 0
    %1063 = vmatprep.subr.bf16.mxu0 0
    %1064 = vmatpush1.bf16.xpose.msra.mxu0 0
    %1065 = vmatprep.subr.bf16.mxu0 0
    %1066 = vmatpush1.bf16.xpose.msra.mxu0 0
    %1067 = vmatprep.subr.bf16.mxu0 0
    %1068 = vmatpush1.bf16.xpose.msra.mxu0 0
    %1069 = vmatprep.subr.bf16.mxu0 0
    %1070 = vmatpush1.bf16.xpose.msra.mxu0 0
    %1071 = vmatprep.subr.bf16.mxu0 0
    %1072 = vmatpush1.bf16.xpose.msra.mxu0 0
    %1073 = vmatprep.subr.bf16.mxu0 0
    %1074 = vmatpush1.bf16.xpose.msra.mxu0 0
    %1075 = vmatprep.subr.bf16.mxu0 0
    %1076 = vmatpush1.bf16.xpose.msra.mxu0 0
    %1077 = vmatprep.mubr.bf16.mxu0 0
    %1078 = vmatmul.mubr.bf16.gmra.mrb[0].mxu0 %v1040
    %v1079 = vpop.f32.mrb[0].mxu0
    %v1080 = vadd.f32 0.0, %v1079
    %v1081 = vpop.f32.mrb[0].mxu0
    %v1082 = vpop.f32.mrb[0].mxu0
    %v1083 = vadd.f32 0.0, %v1082
    %v1084 = vpop.f32.mrb[0].mxu0
    %1085 = vdwg.mxu0
    %v1086 = vsel %vm370, %v1080, -1e+30
    %v1087 = vsel %vm371, %v1083, -1e+30
    %v1088 = vsel %vm715, %v1086, -inf
    %1089 = vmax.xlane.f32.xlu0 %v1088
    %v1090 = vpop.xlane.xlu0 %1089
    %v1091 = vsel %vm715, %v1087, -inf
    %1092 = vmax.xlane.f32.xlu0 %v1091
    %v1093 = vpop.xlane.xlu0 %1092
    %v1094 = vsub.f32 %v1086, %v1090
    %v1095 = vsub.f32 %v1087, %v1093
    %v1096 = vmul.f32 %v1094, 1.442695
    %v1097 = vpow.pop %v1096
    %v1098 = vmul.f32 %v1095, 1.442695
    %v1099 = vpow.pop %v1098
    %v1100 = vsel %vm370, %v1097, 0.0
    %v1101 = vsel %vm371, %v1099, 0.0
    %v1102 = vsel %vm715, %v1100, 0.0
    %1103 = vadd.xlane.f32.xlu0 %v1102
    %v1104 = vpop.xlane.xlu0 %1103
    %v1105 = vsel %vm715, %v1101, 0.0
    %1106 = vadd.xlane.f32.xlu0 %v1105
    %v1107 = vpop.xlane.xlu0 %1106
    %v1108 = vrcp.pop %v1104
    %v1109 = vmul.f32 %v1100, %v1108
    %v1110 = vrcp.pop %v1107
    %v1111 = vmul.f32 %v1101, %v1110
    %v1112 = vpack.c.bf16 %v1111, %v1109
    %1113 = vrot.lane.b32.xlu0 %v662, 64
    %v1114 = vpop.permute.xlu0 %1113
    %v1117 = vsel %vm715, %v1112, 0
    %1119 = vmatprep.subr.bf16.mxu0 0
    %1120 = vmatpush1.bf16.msra.mxu0 %v1114
    %1121 = vmatprep.subr.bf16.mxu0 0
    %1122 = vmatpush1.bf16.msra.mxu0 0
    %1123 = vmatprep.subr.bf16.mxu0 0
    %1124 = vmatpush1.bf16.msra.mxu0 0
    %1125 = vmatprep.subr.bf16.mxu0 0
    %1126 = vmatpush1.bf16.msra.mxu0 0
    %1127 = vmatprep.subr.bf16.mxu0 0
    %1128 = vmatpush1.bf16.msra.mxu0 0
    %1129 = vmatprep.subr.bf16.mxu0 0
    %1130 = vmatpush1.bf16.msra.mxu0 0
    %1131 = vmatprep.subr.bf16.mxu0 0
    %1132 = vmatpush1.bf16.msra.mxu0 0
    %1133 = vmatprep.subr.bf16.mxu0 0
    %1134 = vmatpush1.bf16.msra.mxu0 0
    %1135 = vmatprep.subr.bf16.mxu0 0
    %1136 = vmatpush1.bf16.msra.mxu0 0
    %1137 = vmatprep.subr.bf16.mxu0 0
    %1138 = vmatpush1.bf16.msra.mxu0 0
    %1139 = vmatprep.subr.bf16.mxu0 0
    %1140 = vmatpush1.bf16.msra.mxu0 0
    %1141 = vmatprep.subr.bf16.mxu0 0
    %1142 = vmatpush1.bf16.msra.mxu0 0
    %1143 = vmatprep.subr.bf16.mxu0 0
    %1144 = vmatpush1.bf16.msra.mxu0 0
    %1145 = vmatprep.subr.bf16.mxu0 0
    %1146 = vmatpush1.bf16.msra.mxu0 0
    %1147 = vmatprep.subr.bf16.mxu0 0
    %1148 = vmatpush1.bf16.msra.mxu0 0
    %1149 = vmatprep.subr.bf16.mxu0 0
    %1150 = vmatpush1.bf16.msra.mxu0 0
    %1151 = vmatprep.mubr.bf16.mxu0 0
    %1152 = vmatmul.mubr.bf16.gmra.mrb[0].mxu0 %v1117
    %v1153 = vpop.f32.mrb[0].mxu0
    %v1154 = vadd.f32 0.0, %v1153
    %v1155 = vpop.f32.mrb[0].mxu0
    %v1156 = vpop.f32.mrb[0].mxu0
    %v1157 = vadd.f32 0.0, %v1156
    %v1158 = vpop.f32.mrb[0].mxu0
    %1159 = vdwg.mxu0
    %v1160 = vpack.c.bf16 %v1157, %v1154
    %v1161 = vld [vmem:[#allocation8 + $0x20] sm:$0xf]
    %v1162 = vld [vmem:[#allocation8 + $0x24] sm:$0xf]
    %v1163 = vld [vmem:[#allocation8 + $0x28] sm:$0xf]
    %v1164 = vld [vmem:[#allocation8 + $0x2c] sm:$0xf]
    %v1169 = vunpack.c.l.b16 %v1161
    %v1170 = vunpack.c.l.b16 %v1162
    %v1171 = vunpack.c.l.b16 %v1163
    %v1172 = vunpack.c.l.b16 %v1164
    %v1173 = vpack.c.b16 %v1170, %v1169
    %v1174 = vpack.c.b16 %v1172, %v1171
    %v1178 = vsel %vm665, %v1160, 0
    %1180 = vmatprep.subr.bf16.mxu0 0
    %1181 = vmatpush1.bf16.msra.mxu0 %v1173
    %1182 = vmatprep.subr.bf16.mxu0 0
    %1183 = vmatpush1.bf16.msra.mxu0 %v1174
    %1184 = vmatprep.subr.bf16.mxu0 0
    %1185 = vmatpush1.bf16.msra.mxu0 0
    %1186 = vmatprep.subr.bf16.mxu0 0
    %1187 = vmatpush1.bf16.msra.mxu0 0
    %1188 = vmatprep.subr.bf16.mxu0 0
    %1189 = vmatpush1.bf16.msra.mxu0 0
    %1190 = vmatprep.subr.bf16.mxu0 0
    %1191 = vmatpush1.bf16.msra.mxu0 0
    %1192 = vmatprep.subr.bf16.mxu0 0
    %1193 = vmatpush1.bf16.msra.mxu0 0
    %1194 = vmatprep.subr.bf16.mxu0 0
    %1195 = vmatpush1.bf16.msra.mxu0 0
    %1196 = vmatprep.subr.bf16.mxu0 0
    %1197 = vmatpush1.bf16.msra.mxu0 0
    %1198 = vmatprep.subr.bf16.mxu0 0
    %1199 = vmatpush1.bf16.msra.mxu0 0
    %1200 = vmatprep.subr.bf16.mxu0 0
    %1201 = vmatpush1.bf16.msra.mxu0 0
    %1202 = vmatprep.subr.bf16.mxu0 0
    %1203 = vmatpush1.bf16.msra.mxu0 0
    %1204 = vmatprep.subr.bf16.mxu0 0
    %1205 = vmatpush1.bf16.msra.mxu0 0
    %1206 = vmatprep.subr.bf16.mxu0 0
    %1207 = vmatpush1.bf16.msra.mxu0 0
    %1208 = vmatprep.subr.bf16.mxu0 0
    %1209 = vmatpush1.bf16.msra.mxu0 0
    %1210 = vmatprep.subr.bf16.mxu0 0
    %1211 = vmatpush1.bf16.msra.mxu0 0
    %1212 = vmatprep.mubr.bf16.mxu0 0
    %1213 = vmatmul.mubr.bf16.gmra.mrb[0].mxu0 %v1178
    %v1214 = vpop.f32.mrb[0].mxu0
    %v1215 = vadd.f32 0.0, %v1214
    %v1216 = vpop.f32.mrb[0].mxu0
    %v1217 = vpop.f32.mrb[0].mxu0
    %v1218 = vadd.f32 0.0, %v1217
    %v1219 = vpop.f32.mrb[0].mxu0
    %1220 = vdwg.mxu0
    %v1221 = vadd.f32 %v1029, %v1215
    %v1222 = vadd.f32 %v1032, %v1218
    %1223 = vrot.lane.b32.xlu0 %v660, 32
    %v1224 = vpop.permute.xlu0 %1223
    %1225 = vrot.lane.b32.xlu0 %v661, 32
    %v1226 = vpop.permute.xlu0 %1225
    %v1228 = vsel %vm665, %v1224, 0
    %v1231 = vsel %vm665, %v1226, 0
    %1233 = vmatprep.subr.bf16.mxu0 0
    %1234 = vmatpush1.bf16.xpose.msra.mxu0 %v1231
    %1235 = vmatprep.subr.bf16.mxu0 0
    %1236 = vmatpush1.bf16.xpose.msra.mxu0 0
    %1237 = vmatprep.subr.bf16.mxu0 0
    %1238 = vmatpush1.bf16.xpose.msra.mxu0 0
    %1239 = vmatprep.subr.bf16.mxu0 0
    %1240 = vmatpush1.bf16.xpose.msra.mxu0 0
    %1241 = vmatprep.subr.bf16.mxu0 0
    %1242 = vmatpush1.bf16.xpose.msra.mxu0 0
    %1243 = vmatprep.subr.bf16.mxu0 0
    %1244 = vmatpush1.bf16.xpose.msra.mxu0 0
    %1245 = vmatprep.subr.bf16.mxu0 0
    %1246 = vmatpush1.bf16.xpose.msra.mxu0 0
    %1247 = vmatprep.subr.bf16.mxu0 0
    %1248 = vmatpush1.bf16.xpose.msra.mxu0 0
    %1249 = vmatprep.subr.bf16.mxu0 0
    %1250 = vmatpush1.bf16.xpose.msra.mxu0 0
    %1251 = vmatprep.subr.bf16.mxu0 0
    %1252 = vmatpush1.bf16.xpose.msra.mxu0 0
    %1253 = vmatprep.subr.bf16.mxu0 0
    %1254 = vmatpush1.bf16.xpose.msra.mxu0 0
    %1255 = vmatprep.subr.bf16.mxu0 0
    %1256 = vmatpush1.bf16.xpose.msra.mxu0 0
    %1257 = vmatprep.subr.bf16.mxu0 0
    %1258 = vmatpush1.bf16.xpose.msra.mxu0 0
    %1259 = vmatprep.subr.bf16.mxu0 0
    %1260 = vmatpush1.bf16.xpose.msra.mxu0 0
    %1261 = vmatprep.subr.bf16.mxu0 0
    %1262 = vmatpush1.bf16.xpose.msra.mxu0 0
    %1263 = vmatprep.subr.bf16.mxu0 0
    %1264 = vmatpush1.bf16.xpose.msra.mxu0 0
    %1265 = vmatprep.mubr.bf16.mxu0 0
    %1266 = vmatmul.mubr.bf16.gmra.mrb[0].mxu0 %v1228
    %v1267 = vpop.f32.mrb[0].mxu0
    %v1268 = vadd.f32 0.0, %v1267
    %v1269 = vpop.f32.mrb[0].mxu0
    %v1270 = vpop.f32.mrb[0].mxu0
    %v1271 = vadd.f32 0.0, %v1270
    %v1272 = vpop.f32.mrb[0].mxu0
    %1273 = vdwg.mxu0
    %v1274 = vsel %vm370, %v1268, -1e+30
    %v1275 = vsel %vm371, %v1271, -1e+30
    %v1276 = vsel %vm715, %v1274, -inf
    %1277 = vmax.xlane.f32.xlu0 %v1276
    %v1278 = vpop.xlane.xlu0 %1277
    %v1279 = vsel %vm715, %v1275, -inf
    %1280 = vmax.xlane.f32.xlu0 %v1279
    %v1281 = vpop.xlane.xlu0 %1280
    %v1282 = vsub.f32 %v1274, %v1278
    %v1283 = vsub.f32 %v1275, %v1281
    %v1284 = vmul.f32 %v1282, 1.442695
    %v1285 = vpow.pop %v1284
    %v1286 = vmul.f32 %v1283, 1.442695
    %v1287 = vpow.pop %v1286
    %v1288 = vsel %vm370, %v1285, 0.0
    %v1289 = vsel %vm371, %v1287, 0.0
    %v1290 = vsel %vm715, %v1288, 0.0
    %1291 = vadd.xlane.f32.xlu0 %v1290
    %v1292 = vpop.xlane.xlu0 %1291
    %v1293 = vsel %vm715, %v1289, 0.0
    %1294 = vadd.xlane.f32.xlu0 %v1293
    %v1295 = vpop.xlane.xlu0 %1294
    %v1296 = vrcp.pop %v1292
    %v1297 = vmul.f32 %v1288, %v1296
    %v1298 = vrcp.pop %v1295
    %v1299 = vmul.f32 %v1289, %v1298
    %v1300 = vpack.c.bf16 %v1299, %v1297
    %1301 = vrot.lane.b32.xlu0 %v662, 32
    %v1302 = vpop.permute.xlu0 %1301
    %v1305 = vsel %vm715, %v1300, 0
    %1307 = vmatprep.subr.bf16.mxu0 0
    %1308 = vmatpush1.bf16.msra.mxu0 %v1302
    %1309 = vmatprep.subr.bf16.mxu0 0
    %1310 = vmatpush1.bf16.msra.mxu0 0
    %1311 = vmatprep.subr.bf16.mxu0 0
    %1312 = vmatpush1.bf16.msra.mxu0 0
    %1313 = vmatprep.subr.bf16.mxu0 0
    %1314 = vmatpush1.bf16.msra.mxu0 0
    %1315 = vmatprep.subr.bf16.mxu0 0
    %1316 = vmatpush1.bf16.msra.mxu0 0
    %1317 = vmatprep.subr.bf16.mxu0 0
    %1318 = vmatpush1.bf16.msra.mxu0 0
    %1319 = vmatprep.subr.bf16.mxu0 0
    %1320 = vmatpush1.bf16.msra.mxu0 0
    %1321 = vmatprep.subr.bf16.mxu0 0
    %1322 = vmatpush1.bf16.msra.mxu0 0
    %1323 = vmatprep.subr.bf16.mxu0 0
    %1324 = vmatpush1.bf16.msra.mxu0 0
    %1325 = vmatprep.subr.bf16.mxu0 0
    %1326 = vmatpush1.bf16.msra.mxu0 0
    %1327 = vmatprep.subr.bf16.mxu0 0
    %1328 = vmatpush1.bf16.msra.mxu0 0
    %1329 = vmatprep.subr.bf16.mxu0 0
    %1330 = vmatpush1.bf16.msra.mxu0 0
    %1331 = vmatprep.subr.bf16.mxu0 0
    %1332 = vmatpush1.bf16.msra.mxu0 0
    %1333 = vmatprep.subr.bf16.mxu0 0
    %1334 = vmatpush1.bf16.msra.mxu0 0
    %1335 = vmatprep.subr.bf16.mxu0 0
    %1336 = vmatpush1.bf16.msra.mxu0 0
    %1337 = vmatprep.subr.bf16.mxu0 0
    %1338 = vmatpush1.bf16.msra.mxu0 0
    %1339 = vmatprep.mubr.bf16.mxu0 0
    %1340 = vmatmul.mubr.bf16.gmra.mrb[0].mxu0 %v1305
    %v1341 = vpop.f32.mrb[0].mxu0
    %v1342 = vadd.f32 0.0, %v1341
    %v1343 = vpop.f32.mrb[0].mxu0
    %v1344 = vpop.f32.mrb[0].mxu0
    %v1345 = vadd.f32 0.0, %v1344
    %v1346 = vpop.f32.mrb[0].mxu0
    %1347 = vdwg.mxu0
    %v1348 = vpack.c.bf16 %v1345, %v1342
    %v1349 = vld [vmem:[#allocation8 + $0x30] sm:$0xf]
    %v1350 = vld [vmem:[#allocation8 + $0x34] sm:$0xf]
    %v1351 = vld [vmem:[#allocation8 + $0x38] sm:$0xf]
    %v1352 = vld [vmem:[#allocation8 + $0x3c] sm:$0xf]
    %v1357 = vunpack.c.l.b16 %v1349
    %v1358 = vunpack.c.l.b16 %v1350
    %v1359 = vunpack.c.l.b16 %v1351
    %v1360 = vunpack.c.l.b16 %v1352
    %v1361 = vpack.c.b16 %v1358, %v1357
    %v1362 = vpack.c.b16 %v1360, %v1359
    %v1366 = vsel %vm665, %v1348, 0
    %1368 = vmatprep.subr.bf16.mxu0 0
    %1369 = vmatpush1.bf16.msra.mxu0 %v1361
    %1370 = vmatprep.subr.bf16.mxu0 0
    %1371 = vmatpush1.bf16.msra.mxu0 %v1362
    %1372 = vmatprep.subr.bf16.mxu0 0
    %1373 = vmatpush1.bf16.msra.mxu0 0
    %1374 = vmatprep.subr.bf16.mxu0 0
    %1375 = vmatpush1.bf16.msra.mxu0 0
    %1376 = vmatprep.subr.bf16.mxu0 0
    %1377 = vmatpush1.bf16.msra.mxu0 0
    %1378 = vmatprep.subr.bf16.mxu0 0
    %1379 = vmatpush1.bf16.msra.mxu0 0
    %1380 = vmatprep.subr.bf16.mxu0 0
    %1381 = vmatpush1.bf16.msra.mxu0 0
    %1382 = vmatprep.subr.bf16.mxu0 0
    %1383 = vmatpush1.bf16.msra.mxu0 0
    %1384 = vmatprep.subr.bf16.mxu0 0
    %1385 = vmatpush1.bf16.msra.mxu0 0
    %1386 = vmatprep.subr.bf16.mxu0 0
    %1387 = vmatpush1.bf16.msra.mxu0 0
    %1388 = vmatprep.subr.bf16.mxu0 0
    %1389 = vmatpush1.bf16.msra.mxu0 0
    %1390 = vmatprep.subr.bf16.mxu0 0
    %1391 = vmatpush1.bf16.msra.mxu0 0
    %1392 = vmatprep.subr.bf16.mxu0 0
    %1393 = vmatpush1.bf16.msra.mxu0 0
    %1394 = vmatprep.subr.bf16.mxu0 0
    %1395 = vmatpush1.bf16.msra.mxu0 0
    %1396 = vmatprep.subr.bf16.mxu0 0
    %1397 = vmatpush1.bf16.msra.mxu0 0
    %1398 = vmatprep.subr.bf16.mxu0 0
    %1399 = vmatpush1.bf16.msra.mxu0 0
    %1400 = vmatprep.mubr.bf16.mxu0 0
    %1401 = vmatmul.mubr.bf16.gmra.mrb[0].mxu0 %v1366
    %v1402 = vpop.f32.mrb[0].mxu0
    %v1403 = vadd.f32 0.0, %v1402
    %v1404 = vpop.f32.mrb[0].mxu0
    %v1405 = vpop.f32.mrb[0].mxu0
    %v1406 = vadd.f32 0.0, %v1405
    %v1407 = vpop.f32.mrb[0].mxu0
    %1408 = vdwg.mxu0
    %v1409 = vadd.f32 %v1221, %v1403
    %v1410 = vadd.f32 %v1222, %v1406
    %v1411 = vadd.f32 %v364, %v1409
    %v1412 = vadd.f32 %v367, %v1410
    %v1413 = vld [vmem:[%s7] sm:$0x1]
    %v1414 = vld [vmem:[%s8] sm:$0x1]
    %1415 = vadd.xlane.f32.xlu0 %v1411
    %v1416 = vpop.xlane.xlu0 %1415
    %1417 = vadd.xlane.f32.xlu0 %v1412
    %v1418 = vpop.xlane.xlu0 %1417
    %v1419 = vmul.f32 %v1416, %v378
    %v1420 = vmul.f32 %v1418, %v378
    %v1421 = vsub.f32 %v1411, %v1419
    %v1422 = vsub.f32 %v1412, %v1420
    %v1423 = vmul.f32 %v1421, %v1421
    %v1424 = vmul.f32 %v1422, %v1422
    %1425 = vadd.xlane.f32.xlu0 %v1423
    %v1426 = vpop.xlane.xlu0 %1425
    %1427 = vadd.xlane.f32.xlu0 %v1424
    %v1428 = vpop.xlane.xlu0 %1427
    %v1429 = vmul.f32 %v1426, %v378
    %v1430 = vmul.f32 %v1428, %v378
    %v1431 = vadd.f32 %v1429, 1e-05
    %v1432 = vadd.f32 %v1430, 1e-05
    %v1433 = vrsqrt.pop %v1431
    %v1434 = vrsqrt.pop %v1432
    %v1435 = vmul.f32 %v1421, %v1433
    %v1436 = vmul.f32 %v1422, %v1434
    %v1438 = vlaneseq
    %v1439 = vshrl.u32 %v1438, 7
    %v1440 = vsub.s32 0, %v1439
    %v1441 = vrot.slane %v1413, %v1440
    %v1443 = vmul.f32 %v1435, %v1441
    %v1444 = vmul.f32 %v1436, %v1441
    %v1446 = vlaneseq
    %v1447 = vshrl.u32 %v1446, 7
    %v1448 = vsub.s32 0, %v1447
    %v1449 = vrot.slane %v1414, %v1448
    %v1451 = vadd.f32 %v1443, %v1449
    %v1452 = vadd.f32 %v1444, %v1449
    %v1453 = vpack.c.bf16 %v1452, %v1451
    %v1454 = vld [vmem:[#allocation9] sm:$0xff]
    %v1455 = vld [vmem:[#allocation9 + $0x8] sm:$0xff]
    %v1456 = vld [vmem:[#allocation9 + $0x10] sm:$0xff]
    %v1457 = vld [vmem:[#allocation9 + $0x18] sm:$0xff]
    %v1458 = vld [vmem:[#allocation9 + $0x20] sm:$0xff]
    %v1459 = vld [vmem:[#allocation9 + $0x28] sm:$0xff]
    %v1460 = vld [vmem:[#allocation9 + $0x30] sm:$0xff]
    %v1461 = vld [vmem:[#allocation9 + $0x38] sm:$0xff]
    %v1462 = vld [vmem:[#allocation9 + $0x40] sm:$0xff]
    %v1463 = vld [vmem:[#allocation9 + $0x48] sm:$0xff]
    %v1464 = vld [vmem:[#allocation9 + $0x50] sm:$0xff]
    %v1465 = vld [vmem:[#allocation9 + $0x58] sm:$0xff]
    %v1466 = vld [vmem:[#allocation9 + $0x60] sm:$0xff]
    %v1467 = vld [vmem:[#allocation9 + $0x68] sm:$0xff]
    %v1468 = vld [vmem:[#allocation9 + $0x70] sm:$0xff]
    %v1469 = vld [vmem:[#allocation9 + $0x78] sm:$0xff]
    %v1486 = vunpack.c.l.b16 %v1454
    %v1487 = vunpack.c.h.b16 %v1454
    %v1488 = vunpack.c.l.b16 %v1455
    %v1489 = vunpack.c.h.b16 %v1455
    %v1490 = vunpack.c.l.b16 %v1456
    %v1491 = vunpack.c.h.b16 %v1456
    %v1492 = vunpack.c.l.b16 %v1457
    %v1493 = vunpack.c.h.b16 %v1457
    %v1494 = vunpack.c.l.b16 %v1458
    %v1495 = vunpack.c.h.b16 %v1458
    %v1496 = vunpack.c.l.b16 %v1459
    %v1497 = vunpack.c.h.b16 %v1459
    %v1498 = vunpack.c.l.b16 %v1460
    %v1499 = vunpack.c.h.b16 %v1460
    %v1500 = vunpack.c.l.b16 %v1461
    %v1501 = vunpack.c.h.b16 %v1461
    %v1502 = vunpack.c.l.b16 %v1462
    %v1503 = vunpack.c.h.b16 %v1462
    %v1504 = vunpack.c.l.b16 %v1463
    %v1505 = vunpack.c.h.b16 %v1463
    %v1506 = vunpack.c.l.b16 %v1464
    %v1507 = vunpack.c.h.b16 %v1464
    %v1508 = vunpack.c.l.b16 %v1465
    %v1509 = vunpack.c.h.b16 %v1465
    %v1510 = vunpack.c.l.b16 %v1466
    %v1511 = vunpack.c.h.b16 %v1466
    %v1512 = vunpack.c.l.b16 %v1467
    %v1513 = vunpack.c.h.b16 %v1467
    %v1514 = vunpack.c.l.b16 %v1468
    %v1515 = vunpack.c.h.b16 %v1468
    %v1516 = vunpack.c.l.b16 %v1469
    %v1517 = vunpack.c.h.b16 %v1469
    %v1518 = vpack.c.b16 %v1488, %v1486
    %v1519 = vpack.c.b16 %v1489, %v1487
    %v1520 = vpack.c.b16 %v1492, %v1490
    %v1521 = vpack.c.b16 %v1493, %v1491
    %v1522 = vpack.c.b16 %v1496, %v1494
    %v1523 = vpack.c.b16 %v1497, %v1495
    %v1524 = vpack.c.b16 %v1500, %v1498
    %v1525 = vpack.c.b16 %v1501, %v1499
    %v1526 = vpack.c.b16 %v1504, %v1502
    %v1527 = vpack.c.b16 %v1505, %v1503
    %v1528 = vpack.c.b16 %v1508, %v1506
    %v1529 = vpack.c.b16 %v1509, %v1507
    %v1530 = vpack.c.b16 %v1512, %v1510
    %v1531 = vpack.c.b16 %v1513, %v1511
    %v1532 = vpack.c.b16 %v1516, %v1514
    %v1533 = vpack.c.b16 %v1517, %v1515
    %1550 = vmatprep.subr.bf16.mxu0 %v1519
    %1551 = vmatpush1.bf16.msra.mxu0 %v1518
    %1552 = vmatprep.subr.bf16.mxu0 %v1521
    %1553 = vmatpush1.bf16.msra.mxu0 %v1520
    %1554 = vmatprep.subr.bf16.mxu0 %v1523
    %1555 = vmatpush1.bf16.msra.mxu0 %v1522
    %1556 = vmatprep.subr.bf16.mxu0 %v1525
    %1557 = vmatpush1.bf16.msra.mxu0 %v1524
    %1558 = vmatprep.subr.bf16.mxu0 %v1527
    %1559 = vmatpush1.bf16.msra.mxu0 %v1526
    %1560 = vmatprep.subr.bf16.mxu0 %v1529
    %1561 = vmatpush1.bf16.msra.mxu0 %v1528
    %1562 = vmatprep.subr.bf16.mxu0 %v1531
    %1563 = vmatpush1.bf16.msra.mxu0 %v1530
    %1564 = vmatprep.subr.bf16.mxu0 %v1533
    %1565 = vmatpush1.bf16.msra.mxu0 %v1532
    %1566 = vmatprep.subr.bf16.mxu0 0
    %1567 = vmatpush1.bf16.msra.mxu0 0
    %1568 = vmatprep.subr.bf16.mxu0 0
    %1569 = vmatpush1.bf16.msra.mxu0 0
    %1570 = vmatprep.subr.bf16.mxu0 0
    %1571 = vmatpush1.bf16.msra.mxu0 0
    %1572 = vmatprep.subr.bf16.mxu0 0
    %1573 = vmatpush1.bf16.msra.mxu0 0
    %1574 = vmatprep.subr.bf16.mxu0 0
    %1575 = vmatpush1.bf16.msra.mxu0 0
    %1576 = vmatprep.subr.bf16.mxu0 0
    %1577 = vmatpush1.bf16.msra.mxu0 0
    %1578 = vmatprep.subr.bf16.mxu0 0
    %1579 = vmatpush1.bf16.msra.mxu0 0
    %1580 = vmatprep.subr.bf16.mxu0 0
    %1581 = vmatpush1.bf16.msra.mxu0 0
    %1582 = vmatprep.mubr.bf16.mxu0 0
    %1583 = vmatmul.mubr.bf16.gmra.mrb[0].mxu0 %v1453
    %v1584 = vpop.f32.mrb[0].mxu0
    %v1585 = vadd.f32 0.0, %v1584
    %v1586 = vpop.f32.mrb[0].mxu0
    %v1587 = vadd.f32 0.0, %v1586
    %v1588 = vpop.f32.mrb[0].mxu0
    %v1589 = vadd.f32 0.0, %v1588
    %v1590 = vpop.f32.mrb[0].mxu0
    %v1591 = vadd.f32 0.0, %v1590
    %1592 = vdwg.mxu0
    %v1593 = vmul.f32 %v1585, %v1585
    %v1594 = vmul.f32 %v1587, %v1587
    %v1595 = vmul.f32 %v1589, %v1589
    %v1596 = vmul.f32 %v1591, %v1591
    %v1597 = vmul.f32 %v1585, %v1593
    %v1598 = vmul.f32 %v1587, %v1594
    %v1599 = vmul.f32 %v1589, %v1595
    %v1600 = vmul.f32 %v1591, %v1596
    %v1601 = vmul.f32 %v1597, 0.044715
    %v1602 = vmul.f32 %v1598, 0.044715
    %v1603 = vmul.f32 %v1599, 0.044715
    %v1604 = vmul.f32 %v1600, 0.044715
    %v1605 = vadd.f32 %v1585, %v1601
    %v1606 = vadd.f32 %v1587, %v1602
    %v1607 = vadd.f32 %v1589, %v1603
    %v1608 = vadd.f32 %v1591, %v1604
    %v1609 = vmul.f32 %v1605, 0.7978846
    %v1610 = vmul.f32 %v1606, 0.7978846
    %v1611 = vmul.f32 %v1607, 0.7978846
    %v1612 = vmul.f32 %v1608, 0.7978846
    %v1613 = vtanh.pop %v1609
    %v1614 = vtanh.pop %v1610
    %v1615 = vtanh.pop %v1611
    %v1616 = vtanh.pop %v1612
    %v1617 = vadd.f32 %v1613, 1.0
    %v1618 = vadd.f32 %v1614, 1.0
    %v1619 = vadd.f32 %v1615, 1.0
    %v1620 = vadd.f32 %v1616, 1.0
    %v1621 = vmul.f32 %v1617, 0.5
    %v1622 = vmul.f32 %v1618, 0.5
    %v1623 = vmul.f32 %v1619, 0.5
    %v1624 = vmul.f32 %v1620, 0.5
    %v1625 = vmul.f32 %v1585, %v1621
    %v1626 = vmul.f32 %v1587, %v1622
    %v1627 = vmul.f32 %v1589, %v1623
    %v1628 = vmul.f32 %v1591, %v1624
    %v1629 = vpack.c.bf16 %v1627, %v1625
    %v1630 = vpack.c.bf16 %v1628, %v1626
    %v1631 = vld [vmem:[#allocation11] sm:$0xf]
    %v1632 = vld [vmem:[#allocation11 + $0x4] sm:$0xf]
    %v1633 = vld [vmem:[#allocation11 + $0x8] sm:$0xf]
    %v1634 = vld [vmem:[#allocation11 + $0xc] sm:$0xf]
    %v1635 = vld [vmem:[#allocation11 + $0x10] sm:$0xf]
    %v1636 = vld [vmem:[#allocation11 + $0x14] sm:$0xf]
    %v1637 = vld [vmem:[#allocation11 + $0x18] sm:$0xf]
    %v1638 = vld [vmem:[#allocation11 + $0x1c] sm:$0xf]
    %v1639 = vld [vmem:[#allocation11 + $0x20] sm:$0xf]
    %v1640 = vld [vmem:[#allocation11 + $0x24] sm:$0xf]
    %v1641 = vld [vmem:[#allocation11 + $0x28] sm:$0xf]
    %v1642 = vld [vmem:[#allocation11 + $0x2c] sm:$0xf]
    %v1643 = vld [vmem:[#allocation11 + $0x30] sm:$0xf]
    %v1644 = vld [vmem:[#allocation11 + $0x34] sm:$0xf]
    %v1645 = vld [vmem:[#allocation11 + $0x38] sm:$0xf]
    %v1646 = vld [vmem:[#allocation11 + $0x3c] sm:$0xf]
    %v1647 = vld [vmem:[#allocation11 + $0x40] sm:$0xf]
    %v1648 = vld [vmem:[#allocation11 + $0x44] sm:$0xf]
    %v1649 = vld [vmem:[#allocation11 + $0x48] sm:$0xf]
    %v1650 = vld [vmem:[#allocation11 + $0x4c] sm:$0xf]
    %v1651 = vld [vmem:[#allocation11 + $0x50] sm:$0xf]
    %v1652 = vld [vmem:[#allocation11 + $0x54] sm:$0xf]
    %v1653 = vld [vmem:[#allocation11 + $0x58] sm:$0xf]
    %v1654 = vld [vmem:[#allocation11 + $0x5c] sm:$0xf]
    %v1655 = vld [vmem:[#allocation11 + $0x60] sm:$0xf]
    %v1656 = vld [vmem:[#allocation11 + $0x64] sm:$0xf]
    %v1657 = vld [vmem:[#allocation11 + $0x68] sm:$0xf]
    %v1658 = vld [vmem:[#allocation11 + $0x6c] sm:$0xf]
    %v1659 = vld [vmem:[#allocation11 + $0x70] sm:$0xf]
    %v1660 = vld [vmem:[#allocation11 + $0x74] sm:$0xf]
    %v1661 = vld [vmem:[#allocation11 + $0x78] sm:$0xf]
    %v1662 = vld [vmem:[#allocation11 + $0x7c] sm:$0xf]
    %v1695 = vunpack.c.l.b16 %v1631
    %v1696 = vunpack.c.l.b16 %v1632
    %v1697 = vunpack.c.l.b16 %v1633
    %v1698 = vunpack.c.l.b16 %v1634
    %v1699 = vunpack.c.l.b16 %v1635
    %v1700 = vunpack.c.l.b16 %v1636
    %v1701 = vunpack.c.l.b16 %v1637
    %v1702 = vunpack.c.l.b16 %v1638
    %v1703 = vunpack.c.l.b16 %v1639
    %v1704 = vunpack.c.l.b16 %v1640
    %v1705 = vunpack.c.l.b16 %v1641
    %v1706 = vunpack.c.l.b16 %v1642
    %v1707 = vunpack.c.l.b16 %v1643
    %v1708 = vunpack.c.l.b16 %v1644
    %v1709 = vunpack.c.l.b16 %v1645
    %v1710 = vunpack.c.l.b16 %v1646
    %v1711 = vunpack.c.l.b16 %v1647
    %v1712 = vunpack.c.l.b16 %v1648
    %v1713 = vunpack.c.l.b16 %v1649
    %v1714 = vunpack.c.l.b16 %v1650
    %v1715 = vunpack.c.l.b16 %v1651
    %v1716 = vunpack.c.l.b16 %v1652
    %v1717 = vunpack.c.l.b16 %v1653
    %v1718 = vunpack.c.l.b16 %v1654
    %v1719 = vunpack.c.l.b16 %v1655
    %v1720 = vunpack.c.l.b16 %v1656
    %v1721 = vunpack.c.l.b16 %v1657
    %v1722 = vunpack.c.l.b16 %v1658
    %v1723 = vunpack.c.l.b16 %v1659
    %v1724 = vunpack.c.l.b16 %v1660
    %v1725 = vunpack.c.l.b16 %v1661
    %v1726 = vunpack.c.l.b16 %v1662
    %v1727 = vpack.c.b16 %v1696, %v1695
    %v1728 = vpack.c.b16 %v1698, %v1697
    %v1729 = vpack.c.b16 %v1700, %v1699
    %v1730 = vpack.c.b16 %v1702, %v1701
    %v1731 = vpack.c.b16 %v1704, %v1703
    %v1732 = vpack.c.b16 %v1706, %v1705
    %v1733 = vpack.c.b16 %v1708, %v1707
    %v1734 = vpack.c.b16 %v1710, %v1709
    %v1735 = vpack.c.b16 %v1712, %v1711
    %v1736 = vpack.c.b16 %v1714, %v1713
    %v1737 = vpack.c.b16 %v1716, %v1715
    %v1738 = vpack.c.b16 %v1718, %v1717
    %v1739 = vpack.c.b16 %v1720, %v1719
    %v1740 = vpack.c.b16 %v1722, %v1721
    %v1741 = vpack.c.b16 %v1724, %v1723
    %v1742 = vpack.c.b16 %v1726, %v1725
    %1759 = vmatprep.subr.bf16.mxu0 0
    %1760 = vmatpush1.bf16.msra.mxu0 %v1727
    %1761 = vmatprep.subr.bf16.mxu0 0
    %1762 = vmatpush1.bf16.msra.mxu0 %v1728
    %1763 = vmatprep.subr.bf16.mxu0 0
    %1764 = vmatpush1.bf16.msra.mxu0 %v1729
    %1765 = vmatprep.subr.bf16.mxu0 0
    %1766 = vmatpush1.bf16.msra.mxu0 %v1730
    %1767 = vmatprep.subr.bf16.mxu0 0
    %1768 = vmatpush1.bf16.msra.mxu0 %v1731
    %1769 = vmatprep.subr.bf16.mxu0 0
    %1770 = vmatpush1.bf16.msra.mxu0 %v1732
    %1771 = vmatprep.subr.bf16.mxu0 0
    %1772 = vmatpush1.bf16.msra.mxu0 %v1733
    %1773 = vmatprep.subr.bf16.mxu0 0
    %1774 = vmatpush1.bf16.msra.mxu0 %v1734
    %1775 = vmatprep.subr.bf16.mxu0 0
    %1776 = vmatpush1.bf16.msra.mxu0 %v1735
    %1777 = vmatprep.subr.bf16.mxu0 0
    %1778 = vmatpush1.bf16.msra.mxu0 %v1736
    %1779 = vmatprep.subr.bf16.mxu0 0
    %1780 = vmatpush1.bf16.msra.mxu0 %v1737
    %1781 = vmatprep.subr.bf16.mxu0 0
    %1782 = vmatpush1.bf16.msra.mxu0 %v1738
    %1783 = vmatprep.subr.bf16.mxu0 0
    %1784 = vmatpush1.bf16.msra.mxu0 %v1739
    %1785 = vmatprep.subr.bf16.mxu0 0
    %1786 = vmatpush1.bf16.msra.mxu0 %v1740
    %1787 = vmatprep.subr.bf16.mxu0 0
    %1788 = vmatpush1.bf16.msra.mxu0 %v1741
    %1789 = vmatprep.subr.bf16.mxu0 0
    %1790 = vmatpush1.bf16.msra.mxu0 %v1742
    %1791 = vmatprep.mubr.bf16.mxu0 %v1630
    %1792 = vmatmul.mubr.bf16.gmra.mrb[0].mxu0 %v1629
    %v1793 = vpop.f32.mrb[0].mxu0
    %v1794 = vadd.f32 0.0, %v1793
    %v1795 = vpop.f32.mrb[0].mxu0
    %v1796 = vpop.f32.mrb[0].mxu0
    %v1797 = vadd.f32 0.0, %v1796
    %v1798 = vpop.f32.mrb[0].mxu0
    %1799 = vdwg.mxu0
    %v1800 = vadd.f32 %v1411, %v1794
    %v1801 = vadd.f32 %v1412, %v1797
    %s1802 = scalar_lea.vmem %s3, 1
    %v1803 = vld [vmem:[%s1802] sm:$0x1]
    %s1804 = scalar_lea.vmem %s4, 1
    %v1805 = vld [vmem:[%s1804] sm:$0x1]
    %1806 = vadd.xlane.f32.xlu0 %v1800
    %v1807 = vpop.xlane.xlu0 %1806
    %1808 = vadd.xlane.f32.xlu0 %v1801
    %v1809 = vpop.xlane.xlu0 %1808
    %v1810 = vmul.f32 %v1807, %v378
    %v1811 = vmul.f32 %v1809, %v378
    %v1812 = vsub.f32 %v1800, %v1810
    %v1813 = vsub.f32 %v1801, %v1811
    %v1814 = vmul.f32 %v1812, %v1812
    %v1815 = vmul.f32 %v1813, %v1813
    %1816 = vadd.xlane.f32.xlu0 %v1814
    %v1817 = vpop.xlane.xlu0 %1816
    %1818 = vadd.xlane.f32.xlu0 %v1815
    %v1819 = vpop.xlane.xlu0 %1818
    %v1820 = vmul.f32 %v1817, %v378
    %v1821 = vmul.f32 %v1819, %v378
    %v1822 = vadd.f32 %v1820, 1e-05
    %v1823 = vadd.f32 %v1821, 1e-05
    %v1824 = vrsqrt.pop %v1822
    %v1825 = vrsqrt.pop %v1823
    %v1826 = vmul.f32 %v1812, %v1824
    %v1827 = vmul.f32 %v1813, %v1825
    %v1829 = vlaneseq
    %v1830 = vshrl.u32 %v1829, 7
    %v1831 = vsub.s32 0, %v1830
    %v1832 = vrot.slane %v1803, %v1831
    %v1834 = vmul.f32 %v1826, %v1832
    %v1835 = vmul.f32 %v1827, %v1832
    %v1837 = vlaneseq
    %v1838 = vshrl.u32 %v1837, 7
    %v1839 = vsub.s32 0, %v1838
    %v1840 = vrot.slane %v1805, %v1839
    %v1842 = vadd.f32 %v1834, %v1840
    %v1843 = vadd.f32 %v1835, %v1840
    %v1844 = vpack.c.bf16 %v1843, %v1842
    %s1845 = scalar_lea.vmem [#allocation6], 192
    %v1846 = vld [vmem:[%s1845] sm:$0xff]
    %v1847 = vld [vmem:[%s1845 + $0x8] sm:$0xf]
    %v1848 = vld [vmem:[%s1845 + $0xc] sm:$0xff]
    %v1849 = vld [vmem:[%s1845 + $0x14] sm:$0xf]
    %v1850 = vld [vmem:[%s1845 + $0x18] sm:$0xff]
    %v1851 = vld [vmem:[%s1845 + $0x20] sm:$0xf]
    %v1852 = vld [vmem:[%s1845 + $0x24] sm:$0xff]
    %v1853 = vld [vmem:[%s1845 + $0x2c] sm:$0xf]
    %v1854 = vld [vmem:[%s1845 + $0x30] sm:$0xff]
    %v1855 = vld [vmem:[%s1845 + $0x38] sm:$0xf]
    %v1856 = vld [vmem:[%s1845 + $0x3c] sm:$0xff]
    %v1857 = vld [vmem:[%s1845 + $0x44] sm:$0xf]
    %v1858 = vld [vmem:[%s1845 + $0x48] sm:$0xff]
    %v1859 = vld [vmem:[%s1845 + $0x50] sm:$0xf]
    %v1860 = vld [vmem:[%s1845 + $0x54] sm:$0xff]
    %v1861 = vld [vmem:[%s1845 + $0x5c] sm:$0xf]
    %v1862 = vld [vmem:[%s1845 + $0x60] sm:$0xff]
    %v1863 = vld [vmem:[%s1845 + $0x68] sm:$0xf]
    %v1864 = vld [vmem:[%s1845 + $0x6c] sm:$0xff]
    %v1865 = vld [vmem:[%s1845 + $0x74] sm:$0xf]
    %v1866 = vld [vmem:[%s1845 + $0x78] sm:$0xff]
    %v1867 = vld [vmem:[%s1845 + $0x80] sm:$0xf]
    %v1868 = vld [vmem:[%s1845 + $0x84] sm:$0xff]
    %v1869 = vld [vmem:[%s1845 + $0x8c] sm:$0xf]
    %v1870 = vld [vmem:[%s1845 + $0x90] sm:$0xff]
    %v1871 = vld [vmem:[%s1845 + $0x98] sm:$0xf]
    %v1872 = vld [vmem:[%s1845 + $0x9c] sm:$0xff]
    %v1873 = vld [vmem:[%s1845 + $0xa4] sm:$0xf]
    %v1874 = vld [vmem:[%s1845 + $0xa8] sm:$0xff]
    %v1875 = vld [vmem:[%s1845 + $0xb0] sm:$0xf]
    %v1876 = vld [vmem:[%s1845 + $0xb4] sm:$0xff]
    %v1877 = vld [vmem:[%s1845 + $0xbc] sm:$0xf]
    %v1910 = vunpack.c.l.b16 %v1846
    %v1911 = vunpack.c.h.b16 %v1846
    %v1912 = vunpack.c.l.b16 %v1847
    %v1913 = vunpack.c.l.b16 %v1848
    %v1914 = vunpack.c.h.b16 %v1848
    %v1915 = vunpack.c.l.b16 %v1849
    %v1916 = vunpack.c.l.b16 %v1850
    %v1917 = vunpack.c.h.b16 %v1850
    %v1918 = vunpack.c.l.b16 %v1851
    %v1919 = vunpack.c.l.b16 %v1852
    %v1920 = vunpack.c.h.b16 %v1852
    %v1921 = vunpack.c.l.b16 %v1853
    %v1922 = vunpack.c.l.b16 %v1854
    %v1923 = vunpack.c.h.b16 %v1854
    %v1924 = vunpack.c.l.b16 %v1855
    %v1925 = vunpack.c.l.b16 %v1856
    %v1926 = vunpack.c.h.b16 %v1856
    %v1927 = vunpack.c.l.b16 %v1857
    %v1928 = vunpack.c.l.b16 %v1858
    %v1929 = vunpack.c.h.b16 %v1858
    %v1930 = vunpack.c.l.b16 %v1859
    %v1931 = vunpack.c.l.b16 %v1860
    %v1932 = vunpack.c.h.b16 %v1860
    %v1933 = vunpack.c.l.b16 %v1861
    %v1934 = vunpack.c.l.b16 %v1862
    %v1935 = vunpack.c.h.b16 %v1862
    %v1936 = vunpack.c.l.b16 %v1863
    %v1937 = vunpack.c.l.b16 %v1864
    %v1938 = vunpack.c.h.b16 %v1864
    %v1939 = vunpack.c.l.b16 %v1865
    %v1940 = vunpack.c.l.b16 %v1866
    %v1941 = vunpack.c.h.b16 %v1866
    %v1942 = vunpack.c.l.b16 %v1867
    %v1943 = vunpack.c.l.b16 %v1868
    %v1944 = vunpack.c.h.b16 %v1868
    %v1945 = vunpack.c.l.b16 %v1869
    %v1946 = vunpack.c.l.b16 %v1870
    %v1947 = vunpack.c.h.b16 %v1870
    %v1948 = vunpack.c.l.b16 %v1871
    %v1949 = vunpack.c.l.b16 %v1872
    %v1950 = vunpack.c.h.b16 %v1872
    %v1951 = vunpack.c.l.b16 %v1873
    %v1952 = vunpack.c.l.b16 %v1874
    %v1953 = vunpack.c.h.b16 %v1874
    %v1954 = vunpack.c.l.b16 %v1875
    %v1955 = vunpack.c.l.b16 %v1876
    %v1956 = vunpack.c.h.b16 %v1876
    %v1957 = vunpack.c.l.b16 %v1877
    %v1958 = vpack.c.b16 %v1913, %v1910
    %v1959 = vpack.c.b16 %v1914, %v1911
    %v1960 = vpack.c.b16 %v1915, %v1912
    %v1961 = vpack.c.b16 %v1919, %v1916
    %v1962 = vpack.c.b16 %v1920, %v1917
    %v1963 = vpack.c.b16 %v1921, %v1918
    %v1964 = vpack.c.b16 %v1925, %v1922
    %v1965 = vpack.c.b16 %v1926, %v1923
    %v1966 = vpack.c.b16 %v1927, %v1924
    %v1967 = vpack.c.b16 %v1931, %v1928
    %v1968 = vpack.c.b16 %v1932, %v1929
    %v1969 = vpack.c.b16 %v1933, %v1930
    %v1970 = vpack.c.b16 %v1937, %v1934
    %v1971 = vpack.c.b16 %v1938, %v1935
    %v1972 = vpack.c.b16 %v1939, %v1936
    %v1973 = vpack.c.b16 %v1943, %v1940
    %v1974 = vpack.c.b16 %v1944, %v1941
    %v1975 = vpack.c.b16 %v1945, %v1942
    %v1976 = vpack.c.b16 %v1949, %v1946
    %v1977 = vpack.c.b16 %v1950, %v1947
    %v1978 = vpack.c.b16 %v1951, %v1948
    %v1979 = vpack.c.b16 %v1955, %v1952
    %v1980 = vpack.c.b16 %v1956, %v1953
    %v1981 = vpack.c.b16 %v1957, %v1954
    %2006 = vmatprep.subr.bf16.mxu0 %v1959
    %2007 = vmatpush1.bf16.msra.mxu0 %v1958
    %2008 = vmatprep.subr.bf16.mxu0 %v1962
    %2009 = vmatpush1.bf16.msra.mxu0 %v1961
    %2010 = vmatprep.subr.bf16.mxu0 %v1965
    %2011 = vmatpush1.bf16.msra.mxu0 %v1964
    %2012 = vmatprep.subr.bf16.mxu0 %v1968
    %2013 = vmatpush1.bf16.msra.mxu0 %v1967
    %2014 = vmatprep.subr.bf16.mxu0 %v1971
    %2015 = vmatpush1.bf16.msra.mxu0 %v1970
    %2016 = vmatprep.subr.bf16.mxu0 %v1974
    %2017 = vmatpush1.bf16.msra.mxu0 %v1973
    %2018 = vmatprep.subr.bf16.mxu0 %v1977
    %2019 = vmatpush1.bf16.msra.mxu0 %v1976
    %2020 = vmatprep.subr.bf16.mxu0 %v1980
    %2021 = vmatpush1.bf16.msra.mxu0 %v1979
    %2022 = vmatprep.subr.bf16.mxu0 0
    %2023 = vmatpush1.bf16.msra.mxu0 0
    %2024 = vmatprep.subr.bf16.mxu0 0
    %2025 = vmatpush1.bf16.msra.mxu0 0
    %2026 = vmatprep.subr.bf16.mxu0 0
    %2027 = vmatpush1.bf16.msra.mxu0 0
    %2028 = vmatprep.subr.bf16.mxu0 0
    %2029 = vmatpush1.bf16.msra.mxu0 0
    %2030 = vmatprep.subr.bf16.mxu0 0
    %2031 = vmatpush1.bf16.msra.mxu0 0
    %2032 = vmatprep.subr.bf16.mxu0 0
    %2033 = vmatpush1.bf16.msra.mxu0 0
    %2034 = vmatprep.subr.bf16.mxu0 0
    %2035 = vmatpush1.bf16.msra.mxu0 0
    %2036 = vmatprep.subr.bf16.mxu0 0
    %2037 = vmatpush1.bf16.msra.mxu0 0
    %2038 = vmatprep.mubr.bf16.mxu0 0
    %2039 = vmatmul.mubr.bf16.gmra.mrb[0].mxu0 %v1844
    %v2040 = vpop.f32.mrb[0].mxu0
    %v2041 = vadd.f32 0.0, %v2040
    %v2042 = vpop.f32.mrb[0].mxu0
    %v2043 = vadd.f32 0.0, %v2042
    %v2044 = vpop.f32.mrb[0].mxu0
    %v2045 = vadd.f32 0.0, %v2044
    %v2046 = vpop.f32.mrb[0].mxu0
    %v2047 = vadd.f32 0.0, %v2046
    %2048 = vdwg.mxu0
    %2049 = vmatprep.subr.bf16.mxu0 0
    %2050 = vmatpush1.bf16.msra.mxu0 %v1960
    %2051 = vmatprep.subr.bf16.mxu0 0
    %2052 = vmatpush1.bf16.msra.mxu0 %v1963
    %2053 = vmatprep.subr.bf16.mxu0 0
    %2054 = vmatpush1.bf16.msra.mxu0 %v1966
    %2055 = vmatprep.subr.bf16.mxu0 0
    %2056 = vmatpush1.bf16.msra.mxu0 %v1969
    %2057 = vmatprep.subr.bf16.mxu0 0
    %2058 = vmatpush1.bf16.msra.mxu0 %v1972
    %2059 = vmatprep.subr.bf16.mxu0 0
    %2060 = vmatpush1.bf16.msra.mxu0 %v1975
    %2061 = vmatprep.subr.bf16.mxu0 0
    %2062 = vmatpush1.bf16.msra.mxu0 %v1978
    %2063 = vmatprep.subr.bf16.mxu0 0
    %2064 = vmatpush1.bf16.msra.mxu0 %v1981
    %2065 = vmatprep.subr.bf16.mxu0 0
    %2066 = vmatpush1.bf16.msra.mxu0 0
    %2067 = vmatprep.subr.bf16.mxu0 0
    %2068 = vmatpush1.bf16.msra.mxu0 0
    %2069 = vmatprep.subr.bf16.mxu0 0
    %2070 = vmatpush1.bf16.msra.mxu0 0
    %2071 = vmatprep.subr.bf16.mxu0 0
    %2072 = vmatpush1.bf16.msra.mxu0 0
    %2073 = vmatprep.subr.bf16.mxu0 0
    %2074 = vmatpush1.bf16.msra.mxu0 0
    %2075 = vmatprep.subr.bf16.mxu0 0
    %2076 = vmatpush1.bf16.msra.mxu0 0
    %2077 = vmatprep.subr.bf16.mxu0 0
    %2078 = vmatpush1.bf16.msra.mxu0 0
    %2079 = vmatprep.subr.bf16.mxu0 0
    %2080 = vmatpush1.bf16.msra.mxu0 0
    %2081 = vmatprep.mubr.bf16.mxu0 0
    %2082 = vmatmul.mubr.bf16.gmra.mrb[0].mxu0 %v1844
    %v2083 = vpop.f32.mrb[0].mxu0
    %v2084 = vadd.f32 0.0, %v2083
    %v2085 = vpop.f32.mrb[0].mxu0
    %v2086 = vpop.f32.mrb[0].mxu0
    %v2087 = vadd.f32 0.0, %v2086
    %v2088 = vpop.f32.mrb[0].mxu0
    %2089 = vdwg.mxu0
    %v2090 = vmul.f32 %v2041, 0.17677669
    %v2091 = vmul.f32 %v2045, 0.17677669
    %v2092 = vpack.c.bf16 %v2091, %v2090
    %v2093 = vpack.c.bf16 %v2047, %v2043
    %v2094 = vpack.c.bf16 %v2087, %v2084
    %s2095 = scalar_lea.vmem [#allocation2], 32
    %2096 = vst [vmem:[%s2095] sm:$0xff] %v2093
    %s2097 = scalar_lea.vmem [#allocation3], 32
    %2098 = vst [vmem:[%s2097] sm:$0xff] %v2094
    %v2100 = vsel %vm665, %v2092, 0
    %v2103 = vsel %vm665, %v2093, 0
    %2105 = vmatprep.subr.bf16.mxu0 0
    %2106 = vmatpush1.bf16.xpose.msra.mxu0 %v2103
    %2107 = vmatprep.subr.bf16.mxu0 0
    %2108 = vmatpush1.bf16.xpose.msra.mxu0 0
    %2109 = vmatprep.subr.bf16.mxu0 0
    %2110 = vmatpush1.bf16.xpose.msra.mxu0 0
    %2111 = vmatprep.subr.bf16.mxu0 0
    %2112 = vmatpush1.bf16.xpose.msra.mxu0 0
    %2113 = vmatprep.subr.bf16.mxu0 0
    %2114 = vmatpush1.bf16.xpose.msra.mxu0 0
    %2115 = vmatprep.subr.bf16.mxu0 0
    %2116 = vmatpush1.bf16.xpose.msra.mxu0 0
    %2117 = vmatprep.subr.bf16.mxu0 0
    %2118 = vmatpush1.bf16.xpose.msra.mxu0 0
    %2119 = vmatprep.subr.bf16.mxu0 0
    %2120 = vmatpush1.bf16.xpose.msra.mxu0 0
    %2121 = vmatprep.subr.bf16.mxu0 0
    %2122 = vmatpush1.bf16.xpose.msra.mxu0 0
    %2123 = vmatprep.subr.bf16.mxu0 0
    %2124 = vmatpush1.bf16.xpose.msra.mxu0 0
    %2125 = vmatprep.subr.bf16.mxu0 0
    %2126 = vmatpush1.bf16.xpose.msra.mxu0 0
    %2127 = vmatprep.subr.bf16.mxu0 0
    %2128 = vmatpush1.bf16.xpose.msra.mxu0 0
    %2129 = vmatprep.subr.bf16.mxu0 0
    %2130 = vmatpush1.bf16.xpose.msra.mxu0 0
    %2131 = vmatprep.subr.bf16.mxu0 0
    %2132 = vmatpush1.bf16.xpose.msra.mxu0 0
    %2133 = vmatprep.subr.bf16.mxu0 0
    %2134 = vmatpush1.bf16.xpose.msra.mxu0 0
    %2135 = vmatprep.subr.bf16.mxu0 0
    %2136 = vmatpush1.bf16.xpose.msra.mxu0 0
    %2137 = vmatprep.mubr.bf16.mxu0 0
    %2138 = vmatmul.mubr.bf16.gmra.mrb[0].mxu0 %v2100
    %v2139 = vpop.f32.mrb[0].mxu0
    %v2140 = vadd.f32 0.0, %v2139
    %v2141 = vpop.f32.mrb[0].mxu0
    %v2142 = vpop.f32.mrb[0].mxu0
    %v2143 = vadd.f32 0.0, %v2142
    %v2144 = vpop.f32.mrb[0].mxu0
    %2145 = vdwg.mxu0
    %v2146 = vsel %vm370, %v2140, -1e+30
    %v2147 = vsel %vm371, %v2143, -1e+30
    %v2148 = vsel %vm715, %v2146, -inf
    %2149 = vmax.xlane.f32.xlu0 %v2148
    %v2150 = vpop.xlane.xlu0 %2149
    %v2151 = vsel %vm715, %v2147, -inf
    %2152 = vmax.xlane.f32.xlu0 %v2151
    %v2153 = vpop.xlane.xlu0 %2152
    %v2154 = vsub.f32 %v2146, %v2150
    %v2155 = vsub.f32 %v2147, %v2153
    %v2156 = vmul.f32 %v2154, 1.442695
    %v2157 = vpow.pop %v2156
    %v2158 = vmul.f32 %v2155, 1.442695
    %v2159 = vpow.pop %v2158
    %v2160 = vsel %vm370, %v2157, 0.0
    %v2161 = vsel %vm371, %v2159, 0.0
    %v2162 = vsel %vm715, %v2160, 0.0
    %2163 = vadd.xlane.f32.xlu0 %v2162
    %v2164 = vpop.xlane.xlu0 %2163
    %v2165 = vsel %vm715, %v2161, 0.0
    %2166 = vadd.xlane.f32.xlu0 %v2165
    %v2167 = vpop.xlane.xlu0 %2166
    %v2168 = vrcp.pop %v2164
    %v2169 = vmul.f32 %v2160, %v2168
    %v2170 = vrcp.pop %v2167
    %v2171 = vmul.f32 %v2161, %v2170
    %v2172 = vpack.c.bf16 %v2171, %v2169
    %v2174 = vsel %vm715, %v2172, 0
    %2176 = vmatprep.subr.bf16.mxu0 0
    %2177 = vmatpush1.bf16.msra.mxu0 %v2094
    %2178 = vmatprep.subr.bf16.mxu0 0
    %2179 = vmatpush1.bf16.msra.mxu0 0
    %2180 = vmatprep.subr.bf16.mxu0 0
    %2181 = vmatpush1.bf16.msra.mxu0 0
    %2182 = vmatprep.subr.bf16.mxu0 0
    %2183 = vmatpush1.bf16.msra.mxu0 0
    %2184 = vmatprep.subr.bf16.mxu0 0
    %2185 = vmatpush1.bf16.msra.mxu0 0
    %2186 = vmatprep.subr.bf16.mxu0 0
    %2187 = vmatpush1.bf16.msra.mxu0 0
    %2188 = vmatprep.subr.bf16.mxu0 0
    %2189 = vmatpush1.bf16.msra.mxu0 0
    %2190 = vmatprep.subr.bf16.mxu0 0
    %2191 = vmatpush1.bf16.msra.mxu0 0
    %2192 = vmatprep.subr.bf16.mxu0 0
    %2193 = vmatpush1.bf16.msra.mxu0 0
    %2194 = vmatprep.subr.bf16.mxu0 0
    %2195 = vmatpush1.bf16.msra.mxu0 0
    %2196 = vmatprep.subr.bf16.mxu0 0
    %2197 = vmatpush1.bf16.msra.mxu0 0
    %2198 = vmatprep.subr.bf16.mxu0 0
    %2199 = vmatpush1.bf16.msra.mxu0 0
    %2200 = vmatprep.subr.bf16.mxu0 0
    %2201 = vmatpush1.bf16.msra.mxu0 0
    %2202 = vmatprep.subr.bf16.mxu0 0
    %2203 = vmatpush1.bf16.msra.mxu0 0
    %2204 = vmatprep.subr.bf16.mxu0 0
    %2205 = vmatpush1.bf16.msra.mxu0 0
    %2206 = vmatprep.subr.bf16.mxu0 0
    %2207 = vmatpush1.bf16.msra.mxu0 0
    %2208 = vmatprep.mubr.bf16.mxu0 0
    %2209 = vmatmul.mubr.bf16.gmra.mrb[0].mxu0 %v2174
    %v2210 = vpop.f32.mrb[0].mxu0
    %v2211 = vadd.f32 0.0, %v2210
    %v2212 = vpop.f32.mrb[0].mxu0
    %v2213 = vpop.f32.mrb[0].mxu0
    %v2214 = vadd.f32 0.0, %v2213
    %v2215 = vpop.f32.mrb[0].mxu0
    %2216 = vdwg.mxu0
    %v2217 = vpack.c.bf16 %v2214, %v2211
    %s2218 = scalar_lea.vmem [#allocation8], 64
    %v2219 = vld [vmem:[%s2218] sm:$0xf]
    %v2220 = vld [vmem:[%s2218 + $0x4] sm:$0xf]
    %v2221 = vld [vmem:[%s2218 + $0x8] sm:$0xf]
    %v2222 = vld [vmem:[%s2218 + $0xc] sm:$0xf]
    %2224 = vrot.lane.b32.xlu0 %v2092, 96
    %v2225 = vpop.permute.xlu0 %2224
    %2227 = vrot.lane.b32.xlu0 %v2093, 96
    %v2228 = vpop.permute.xlu0 %2227
    %v2230 = vsel %vm665, %v2225, 0
    %v2233 = vsel %vm665, %v2228, 0
    %2235 = vmatprep.subr.bf16.mxu0 0
    %2236 = vmatpush1.bf16.xpose.msra.mxu0 %v2233
    %2237 = vmatprep.subr.bf16.mxu0 0
    %2238 = vmatpush1.bf16.xpose.msra.mxu0 0
    %2239 = vmatprep.subr.bf16.mxu0 0
    %2240 = vmatpush1.bf16.xpose.msra.mxu0 0
    %2241 = vmatprep.subr.bf16.mxu0 0
    %2242 = vmatpush1.bf16.xpose.msra.mxu0 0
    %2243 = vmatprep.subr.bf16.mxu0 0
    %2244 = vmatpush1.bf16.xpose.msra.mxu0 0
    %2245 = vmatprep.subr.bf16.mxu0 0
    %2246 = vmatpush1.bf16.xpose.msra.mxu0 0
    %2247 = vmatprep.subr.bf16.mxu0 0
    %2248 = vmatpush1.bf16.xpose.msra.mxu0 0
    %2249 = vmatprep.subr.bf16.mxu0 0
    %2250 = vmatpush1.bf16.xpose.msra.mxu0 0
    %2251 = vmatprep.subr.bf16.mxu0 0
    %2252 = vmatpush1.bf16.xpose.msra.mxu0 0
    %2253 = vmatprep.subr.bf16.mxu0 0
    %2254 = vmatpush1.bf16.xpose.msra.mxu0 0
    %2255 = vmatprep.subr.bf16.mxu0 0
    %2256 = vmatpush1.bf16.xpose.msra.mxu0 0
    %2257 = vmatprep.subr.bf16.mxu0 0
    %2258 = vmatpush1.bf16.xpose.msra.mxu0 0
    %2259 = vmatprep.subr.bf16.mxu0 0
    %2260 = vmatpush1.bf16.xpose.msra.mxu0 0
    %2261 = vmatprep.subr.bf16.mxu0 0
    %2262 = vmatpush1.bf16.xpose.msra.mxu0 0
    %2263 = vmatprep.subr.bf16.mxu0 0
    %2264 = vmatpush1.bf16.xpose.msra.mxu0 0
    %2265 = vmatprep.subr.bf16.mxu0 0
    %2266 = vmatpush1.bf16.xpose.msra.mxu0 0
    %2267 = vmatprep.mubr.bf16.mxu0 0
    %2268 = vmatmul.mubr.bf16.gmra.mrb[0].mxu0 %v2230
    %v2269 = vpop.f32.mrb[0].mxu0
    %v2270 = vadd.f32 0.0, %v2269
    %v2271 = vpop.f32.mrb[0].mxu0
    %v2272 = vpop.f32.mrb[0].mxu0
    %v2273 = vadd.f32 0.0, %v2272
    %v2274 = vpop.f32.mrb[0].mxu0
    %2275 = vdwg.mxu0
    %v2276 = vsel %vm370, %v2270, -1e+30
    %v2277 = vsel %vm371, %v2273, -1e+30
    %v2278 = vsel %vm715, %v2276, -inf
    %2279 = vmax.xlane.f32.xlu0 %v2278
    %v2280 = vpop.xlane.xlu0 %2279
    %v2281 = vsel %vm715, %v2277, -inf
    %2282 = vmax.xlane.f32.xlu0 %v2281
    %v2283 = vpop.xlane.xlu0 %2282
    %v2284 = vsub.f32 %v2276, %v2280
    %v2285 = vsub.f32 %v2277, %v2283
    %v2286 = vmul.f32 %v2284, 1.442695
    %v2287 = vpow.pop %v2286
    %v2288 = vmul.f32 %v2285, 1.442695
    %v2289 = vpow.pop %v2288
    %v2290 = vsel %vm370, %v2287, 0.0
    %v2291 = vsel %vm371, %v2289, 0.0
    %v2292 = vsel %vm715, %v2290, 0.0
    %2293 = vadd.xlane.f32.xlu0 %v2292
    %v2294 = vpop.xlane.xlu0 %2293
    %v2295 = vsel %vm715, %v2291, 0.0
    %2296 = vadd.xlane.f32.xlu0 %v2295
    %v2297 = vpop.xlane.xlu0 %2296
    %v2298 = vrcp.pop %v2294
    %v2299 = vmul.f32 %v2290, %v2298
    %v2300 = vrcp.pop %v2297
    %v2301 = vmul.f32 %v2291, %v2300
    %v2302 = vpack.c.bf16 %v2301, %v2299
    %2304 = vrot.lane.b32.xlu0 %v2094, 96
    %v2305 = vpop.permute.xlu0 %2304
    %v2308 = vsel %vm715, %v2302, 0
    %2310 = vmatprep.subr.bf16.mxu0 0
    %2311 = vmatpush1.bf16.msra.mxu0 %v2305
    %2312 = vmatprep.subr.bf16.mxu0 0
    %2313 = vmatpush1.bf16.msra.mxu0 0
    %2314 = vmatprep.subr.bf16.mxu0 0
    %2315 = vmatpush1.bf16.msra.mxu0 0
    %2316 = vmatprep.subr.bf16.mxu0 0
    %2317 = vmatpush1.bf16.msra.mxu0 0
    %2318 = vmatprep.subr.bf16.mxu0 0
    %2319 = vmatpush1.bf16.msra.mxu0 0
    %2320 = vmatprep.subr.bf16.mxu0 0
    %2321 = vmatpush1.bf16.msra.mxu0 0
    %2322 = vmatprep.subr.bf16.mxu0 0
    %2323 = vmatpush1.bf16.msra.mxu0 0
    %2324 = vmatprep.subr.bf16.mxu0 0
    %2325 = vmatpush1.bf16.msra.mxu0 0
    %2326 = vmatprep.subr.bf16.mxu0 0
    %2327 = vmatpush1.bf16.msra.mxu0 0
    %2328 = vmatprep.subr.bf16.mxu0 0
    %2329 = vmatpush1.bf16.msra.mxu0 0
    %2330 = vmatprep.subr.bf16.mxu0 0
    %2331 = vmatpush1.bf16.msra.mxu0 0
    %2332 = vmatprep.subr.bf16.mxu0 0
    %2333 = vmatpush1.bf16.msra.mxu0 0
    %2334 = vmatprep.subr.bf16.mxu0 0
    %2335 = vmatpush1.bf16.msra.mxu0 0
    %2336 = vmatprep.subr.bf16.mxu0 0
    %2337 = vmatpush1.bf16.msra.mxu0 0
    %2338 = vmatprep.subr.bf16.mxu0 0
    %2339 = vmatpush1.bf16.msra.mxu0 0
    %2340 = vmatprep.subr.bf16.mxu0 0
    %2341 = vmatpush1.bf16.msra.mxu0 0
    %2342 = vmatprep.mubr.bf16.mxu0 0
    %2343 = vmatmul.mubr.bf16.gmra.mrb[0].mxu0 %v2308
    %v2344 = vpop.f32.mrb[0].mxu0
    %v2345 = vadd.f32 0.0, %v2344
    %v2346 = vpop.f32.mrb[0].mxu0
    %v2347 = vpop.f32.mrb[0].mxu0
    %v2348 = vadd.f32 0.0, %v2347
    %v2349 = vpop.f32.mrb[0].mxu0
    %2350 = vdwg.mxu0
    %v2351 = vpack.c.bf16 %v2348, %v2345
    %v2352 = vld [vmem:[%s2218 + $0x10] sm:$0xf]
    %v2353 = vld [vmem:[%s2218 + $0x14] sm:$0xf]
    %v2354 = vld [vmem:[%s2218 + $0x18] sm:$0xf]
    %v2355 = vld [vmem:[%s2218 + $0x1c] sm:$0xf]
    %v2360 = vunpack.c.l.b16 %v2352
    %v2361 = vunpack.c.l.b16 %v2353
    %v2362 = vunpack.c.l.b16 %v2354
    %v2363 = vunpack.c.l.b16 %v2355
    %v2364 = vpack.c.b16 %v2361, %v2360
    %v2365 = vpack.c.b16 %v2363, %v2362
    %v2369 = vsel %vm665, %v2351, 0
    %2371 = vmatprep.subr.bf16.mxu0 0
    %2372 = vmatpush1.bf16.msra.mxu0 %v2364
    %2373 = vmatprep.subr.bf16.mxu0 0
    %2374 = vmatpush1.bf16.msra.mxu0 %v2365
    %2375 = vmatprep.subr.bf16.mxu0 0
    %2376 = vmatpush1.bf16.msra.mxu0 0
    %2377 = vmatprep.subr.bf16.mxu0 0
    %2378 = vmatpush1.bf16.msra.mxu0 0
    %2379 = vmatprep.subr.bf16.mxu0 0
    %2380 = vmatpush1.bf16.msra.mxu0 0
    %2381 = vmatprep.subr.bf16.mxu0 0
    %2382 = vmatpush1.bf16.msra.mxu0 0
    %2383 = vmatprep.subr.bf16.mxu0 0
    %2384 = vmatpush1.bf16.msra.mxu0 0
    %2385 = vmatprep.subr.bf16.mxu0 0
    %2386 = vmatpush1.bf16.msra.mxu0 0
    %2387 = vmatprep.subr.bf16.mxu0 0
    %2388 = vmatpush1.bf16.msra.mxu0 0
    %2389 = vmatprep.subr.bf16.mxu0 0
    %2390 = vmatpush1.bf16.msra.mxu0 0
    %2391 = vmatprep.subr.bf16.mxu0 0
    %2392 = vmatpush1.bf16.msra.mxu0 0
    %2393 = vmatprep.subr.bf16.mxu0 0
    %2394 = vmatpush1.bf16.msra.mxu0 0
    %2395 = vmatprep.subr.bf16.mxu0 0
    %2396 = vmatpush1.bf16.msra.mxu0 0
    %2397 = vmatprep.subr.bf16.mxu0 0
    %2398 = vmatpush1.bf16.msra.mxu0 0
    %2399 = vmatprep.subr.bf16.mxu0 0
    %2400 = vmatpush1.bf16.msra.mxu0 0
    %2401 = vmatprep.subr.bf16.mxu0 0
    %2402 = vmatpush1.bf16.msra.mxu0 0
    %2403 = vmatprep.mubr.bf16.mxu0 0
    %2404 = vmatmul.mubr.bf16.gmra.mrb[0].mxu0 %v2369
    %v2405 = vpop.f32.mrb[0].mxu0
    %v2406 = vadd.f32 0.0, %v2405
    %v2407 = vpop.f32.mrb[0].mxu0
    %v2408 = vpop.f32.mrb[0].mxu0
    %v2409 = vadd.f32 0.0, %v2408
    %v2410 = vpop.f32.mrb[0].mxu0
    %2411 = vdwg.mxu0
    %v2416 = vunpack.c.l.b16 %v2219
    %v2417 = vunpack.c.l.b16 %v2220
    %v2418 = vunpack.c.l.b16 %v2221
    %v2419 = vunpack.c.l.b16 %v2222
    %v2420 = vpack.c.b16 %v2417, %v2416
    %v2421 = vpack.c.b16 %v2419, %v2418
    %v2425 = vsel %vm665, %v2217, 0
    %2427 = vmatprep.subr.bf16.mxu0 0
    %2428 = vmatpush1.bf16.msra.mxu0 %v2420
    %2429 = vmatprep.subr.bf16.mxu0 0
    %2430 = vmatpush1.bf16.msra.mxu0 %v2421
    %2431 = vmatprep.subr.bf16.mxu0 0
    %2432 = vmatpush1.bf16.msra.mxu0 0
    %2433 = vmatprep.subr.bf16.mxu0 0
    %2434 = vmatpush1.bf16.msra.mxu0 0
    %2435 = vmatprep.subr.bf16.mxu0 0
    %2436 = vmatpush1.bf16.msra.mxu0 0
    %2437 = vmatprep.subr.bf16.mxu0 0
    %2438 = vmatpush1.bf16.msra.mxu0 0
    %2439 = vmatprep.subr.bf16.mxu0 0
    %2440 = vmatpush1.bf16.msra.mxu0 0
    %2441 = vmatprep.subr.bf16.mxu0 0
    %2442 = vmatpush1.bf16.msra.mxu0 0
    %2443 = vmatprep.subr.bf16.mxu0 0
    %2444 = vmatpush1.bf16.msra.mxu0 0
    %2445 = vmatprep.subr.bf16.mxu0 0
    %2446 = vmatpush1.bf16.msra.mxu0 0
    %2447 = vmatprep.subr.bf16.mxu0 0
    %2448 = vmatpush1.bf16.msra.mxu0 0
    %2449 = vmatprep.subr.bf16.mxu0 0
    %2450 = vmatpush1.bf16.msra.mxu0 0
    %2451 = vmatprep.subr.bf16.mxu0 0
    %2452 = vmatpush1.bf16.msra.mxu0 0
    %2453 = vmatprep.subr.bf16.mxu0 0
    %2454 = vmatpush1.bf16.msra.mxu0 0
    %2455 = vmatprep.subr.bf16.mxu0 0
    %2456 = vmatpush1.bf16.msra.mxu0 0
    %2457 = vmatprep.subr.bf16.mxu0 0
    %2458 = vmatpush1.bf16.msra.mxu0 0
    %2459 = vmatprep.mubr.bf16.mxu0 0
    %2460 = vmatmul.mubr.bf16.gmra.mrb[0].mxu0 %v2425
    %v2461 = vpop.f32.mrb[0].mxu0
    %v2462 = vadd.f32 %v2406, %v2461
    %v2463 = vpop.f32.mrb[0].mxu0
    %v2464 = vpop.f32.mrb[0].mxu0
    %v2465 = vadd.f32 %v2409, %v2464
    %v2466 = vpop.f32.mrb[0].mxu0
    %2467 = vdwg.mxu0
    %2468 = vrot.lane.b32.xlu0 %v2092, 64
    %v2469 = vpop.permute.xlu0 %2468
    %2470 = vrot.lane.b32.xlu0 %v2093, 64
    %v2471 = vpop.permute.xlu0 %2470
    %v2473 = vsel %vm665, %v2469, 0
    %v2476 = vsel %vm665, %v2471, 0
    %2478 = vmatprep.subr.bf16.mxu0 0
    %2479 = vmatpush1.bf16.xpose.msra.mxu0 %v2476
    %2480 = vmatprep.subr.bf16.mxu0 0
    %2481 = vmatpush1.bf16.xpose.msra.mxu0 0
    %2482 = vmatprep.subr.bf16.mxu0 0
    %2483 = vmatpush1.bf16.xpose.msra.mxu0 0
    %2484 = vmatprep.subr.bf16.mxu0 0
    %2485 = vmatpush1.bf16.xpose.msra.mxu0 0
    %2486 = vmatprep.subr.bf16.mxu0 0
    %2487 = vmatpush1.bf16.xpose.msra.mxu0 0
    %2488 = vmatprep.subr.bf16.mxu0 0
    %2489 = vmatpush1.bf16.xpose.msra.mxu0 0
    %2490 = vmatprep.subr.bf16.mxu0 0
    %2491 = vmatpush1.bf16.xpose.msra.mxu0 0
    %2492 = vmatprep.subr.bf16.mxu0 0
    %2493 = vmatpush1.bf16.xpose.msra.mxu0 0
    %2494 = vmatprep.subr.bf16.mxu0 0
    %2495 = vmatpush1.bf16.xpose.msra.mxu0 0
    %2496 = vmatprep.subr.bf16.mxu0 0
    %2497 = vmatpush1.bf16.xpose.msra.mxu0 0
    %2498 = vmatprep.subr.bf16.mxu0 0
    %2499 = vmatpush1.bf16.xpose.msra.mxu0 0
    %2500 = vmatprep.subr.bf16.mxu0 0
    %2501 = vmatpush1.bf16.xpose.msra.mxu0 0
    %2502 = vmatprep.subr.bf16.mxu0 0
    %2503 = vmatpush1.bf16.xpose.msra.mxu0 0
    %2504 = vmatprep.subr.bf16.mxu0 0
    %2505 = vmatpush1.bf16.xpose.msra.mxu0 0
    %2506 = vmatprep.subr.bf16.mxu0 0
    %2507 = vmatpush1.bf16.xpose.msra.mxu0 0
    %2508 = vmatprep.subr.bf16.mxu0 0
    %2509 = vmatpush1.bf16.xpose.msra.mxu0 0
    %2510 = vmatprep.mubr.bf16.mxu0 0
    %2511 = vmatmul.mubr.bf16.gmra.mrb[0].mxu0 %v2473
    %v2512 = vpop.f32.mrb[0].mxu0
    %v2513 = vadd.f32 0.0, %v2512
    %v2514 = vpop.f32.mrb[0].mxu0
    %v2515 = vpop.f32.mrb[0].mxu0
    %v2516 = vadd.f32 0.0, %v2515
    %v2517 = vpop.f32.mrb[0].mxu0
    %2518 = vdwg.mxu0
    %v2519 = vsel %vm370, %v2513, -1e+30
    %v2520 = vsel %vm371, %v2516, -1e+30
    %v2521 = vsel %vm715, %v2519, -inf
    %2522 = vmax.xlane.f32.xlu0 %v2521
    %v2523 = vpop.xlane.xlu0 %2522
    %v2524 = vsel %vm715, %v2520, -inf
    %2525 = vmax.xlane.f32.xlu0 %v2524
    %v2526 = vpop.xlane.xlu0 %2525
    %v2527 = vsub.f32 %v2519, %v2523
    %v2528 = vsub.f32 %v2520, %v2526
    %v2529 = vmul.f32 %v2527, 1.442695
    %v2530 = vpow.pop %v2529
    %v2531 = vmul.f32 %v2528, 1.442695
    %v2532 = vpow.pop %v2531
    %v2533 = vsel %vm370, %v2530, 0.0
    %v2534 = vsel %vm371, %v2532, 0.0
    %v2535 = vsel %vm715, %v2533, 0.0
    %2536 = vadd.xlane.f32.xlu0 %v2535
    %v2537 = vpop.xlane.xlu0 %2536
    %v2538 = vsel %vm715, %v2534, 0.0
    %2539 = vadd.xlane.f32.xlu0 %v2538
    %v2540 = vpop.xlane.xlu0 %2539
    %v2541 = vrcp.pop %v2537
    %v2542 = vmul.f32 %v2533, %v2541
    %v2543 = vrcp.pop %v2540
    %v2544 = vmul.f32 %v2534, %v2543
    %v2545 = vpack.c.bf16 %v2544, %v2542
    %2546 = vrot.lane.b32.xlu0 %v2094, 64
    %v2547 = vpop.permute.xlu0 %2546
    %v2550 = vsel %vm715, %v2545, 0
    %2552 = vmatprep.subr.bf16.mxu0 0
    %2553 = vmatpush1.bf16.msra.mxu0 %v2547
    %2554 = vmatprep.subr.bf16.mxu0 0
    %2555 = vmatpush1.bf16.msra.mxu0 0
    %2556 = vmatprep.subr.bf16.mxu0 0
    %2557 = vmatpush1.bf16.msra.mxu0 0
    %2558 = vmatprep.subr.bf16.mxu0 0
    %2559 = vmatpush1.bf16.msra.mxu0 0
    %2560 = vmatprep.subr.bf16.mxu0 0
    %2561 = vmatpush1.bf16.msra.mxu0 0
    %2562 = vmatprep.subr.bf16.mxu0 0
    %2563 = vmatpush1.bf16.msra.mxu0 0
    %2564 = vmatprep.subr.bf16.mxu0 0
    %2565 = vmatpush1.bf16.msra.mxu0 0
    %2566 = vmatprep.subr.bf16.mxu0 0
    %2567 = vmatpush1.bf16.msra.mxu0 0
    %2568 = vmatprep.subr.bf16.mxu0 0
    %2569 = vmatpush1.bf16.msra.mxu0 0
    %2570 = vmatprep.subr.bf16.mxu0 0
    %2571 = vmatpush1.bf16.msra.mxu0 0
    %2572 = vmatprep.subr.bf16.mxu0 0
    %2573 = vmatpush1.bf16.msra.mxu0 0
    %2574 = vmatprep.subr.bf16.mxu0 0
    %2575 = vmatpush1.bf16.msra.mxu0 0
    %2576 = vmatprep.subr.bf16.mxu0 0
    %2577 = vmatpush1.bf16.msra.mxu0 0
    %2578 = vmatprep.subr.bf16.mxu0 0
    %2579 = vmatpush1.bf16.msra.mxu0 0
    %2580 = vmatprep.subr.bf16.mxu0 0
    %2581 = vmatpush1.bf16.msra.mxu0 0
    %2582 = vmatprep.subr.bf16.mxu0 0
    %2583 = vmatpush1.bf16.msra.mxu0 0
    %2584 = vmatprep.mubr.bf16.mxu0 0
    %2585 = vmatmul.mubr.bf16.gmra.mrb[0].mxu0 %v2550
    %v2586 = vpop.f32.mrb[0].mxu0
    %v2587 = vadd.f32 0.0, %v2586
    %v2588 = vpop.f32.mrb[0].mxu0
    %v2589 = vpop.f32.mrb[0].mxu0
    %v2590 = vadd.f32 0.0, %v2589
    %v2591 = vpop.f32.mrb[0].mxu0
    %2592 = vdwg.mxu0
    %v2593 = vpack.c.bf16 %v2590, %v2587
    %v2594 = vld [vmem:[%s2218 + $0x20] sm:$0xf]
    %v2595 = vld [vmem:[%s2218 + $0x24] sm:$0xf]
    %v2596 = vld [vmem:[%s2218 + $0x28] sm:$0xf]
    %v2597 = vld [vmem:[%s2218 + $0x2c] sm:$0xf]
    %v2602 = vunpack.c.l.b16 %v2594
    %v2603 = vunpack.c.l.b16 %v2595
    %v2604 = vunpack.c.l.b16 %v2596
    %v2605 = vunpack.c.l.b16 %v2597
    %v2606 = vpack.c.b16 %v2603, %v2602
    %v2607 = vpack.c.b16 %v2605, %v2604
    %v2611 = vsel %vm665, %v2593, 0
    %2613 = vmatprep.subr.bf16.mxu0 0
    %2614 = vmatpush1.bf16.msra.mxu0 %v2606
    %2615 = vmatprep.subr.bf16.mxu0 0
    %2616 = vmatpush1.bf16.msra.mxu0 %v2607
    %2617 = vmatprep.subr.bf16.mxu0 0
    %2618 = vmatpush1.bf16.msra.mxu0 0
    %2619 = vmatprep.subr.bf16.mxu0 0
    %2620 = vmatpush1.bf16.msra.mxu0 0
    %2621 = vmatprep.subr.bf16.mxu0 0
    %2622 = vmatpush1.bf16.msra.mxu0 0
    %2623 = vmatprep.subr.bf16.mxu0 0
    %2624 = vmatpush1.bf16.msra.mxu0 0
    %2625 = vmatprep.subr.bf16.mxu0 0
    %2626 = vmatpush1.bf16.msra.mxu0 0
    %2627 = vmatprep.subr.bf16.mxu0 0
    %2628 = vmatpush1.bf16.msra.mxu0 0
    %2629 = vmatprep.subr.bf16.mxu0 0
    %2630 = vmatpush1.bf16.msra.mxu0 0
    %2631 = vmatprep.subr.bf16.mxu0 0
    %2632 = vmatpush1.bf16.msra.mxu0 0
    %2633 = vmatprep.subr.bf16.mxu0 0
    %2634 = vmatpush1.bf16.msra.mxu0 0
    %2635 = vmatprep.subr.bf16.mxu0 0
    %2636 = vmatpush1.bf16.msra.mxu0 0
    %2637 = vmatprep.subr.bf16.mxu0 0
    %2638 = vmatpush1.bf16.msra.mxu0 0
    %2639 = vmatprep.subr.bf16.mxu0 0
    %2640 = vmatpush1.bf16.msra.mxu0 0
    %2641 = vmatprep.subr.bf16.mxu0 0
    %2642 = vmatpush1.bf16.msra.mxu0 0
    %2643 = vmatprep.subr.bf16.mxu0 0
    %2644 = vmatpush1.bf16.msra.mxu0 0
    %2645 = vmatprep.mubr.bf16.mxu0 0
    %2646 = vmatmul.mubr.bf16.gmra.mrb[0].mxu0 %v2611
    %v2647 = vpop.f32.mrb[0].mxu0
    %v2648 = vadd.f32 0.0, %v2647
    %v2649 = vpop.f32.mrb[0].mxu0
    %v2650 = vpop.f32.mrb[0].mxu0
    %v2651 = vadd.f32 0.0, %v2650
    %v2652 = vpop.f32.mrb[0].mxu0
    %2653 = vdwg.mxu0
    %v2654 = vadd.f32 %v2462, %v2648
    %v2655 = vadd.f32 %v2465, %v2651
    %2656 = vrot.lane.b32.xlu0 %v2092, 32
    %v2657 = vpop.permute.xlu0 %2656
    %2658 = vrot.lane.b32.xlu0 %v2093, 32
    %v2659 = vpop.permute.xlu0 %2658
    %v2661 = vsel %vm665, %v2657, 0
    %v2664 = vsel %vm665, %v2659, 0
    %2666 = vmatprep.subr.bf16.mxu0 0
    %2667 = vmatpush1.bf16.xpose.msra.mxu0 %v2664
    %2668 = vmatprep.subr.bf16.mxu0 0
    %2669 = vmatpush1.bf16.xpose.msra.mxu0 0
    %2670 = vmatprep.subr.bf16.mxu0 0
    %2671 = vmatpush1.bf16.xpose.msra.mxu0 0
    %2672 = vmatprep.subr.bf16.mxu0 0
    %2673 = vmatpush1.bf16.xpose.msra.mxu0 0
    %2674 = vmatprep.subr.bf16.mxu0 0
    %2675 = vmatpush1.bf16.xpose.msra.mxu0 0
    %2676 = vmatprep.subr.bf16.mxu0 0
    %2677 = vmatpush1.bf16.xpose.msra.mxu0 0
    %2678 = vmatprep.subr.bf16.mxu0 0
    %2679 = vmatpush1.bf16.xpose.msra.mxu0 0
    %2680 = vmatprep.subr.bf16.mxu0 0
    %2681 = vmatpush1.bf16.xpose.msra.mxu0 0
    %2682 = vmatprep.subr.bf16.mxu0 0
    %2683 = vmatpush1.bf16.xpose.msra.mxu0 0
    %2684 = vmatprep.subr.bf16.mxu0 0
    %2685 = vmatpush1.bf16.xpose.msra.mxu0 0
    %2686 = vmatprep.subr.bf16.mxu0 0
    %2687 = vmatpush1.bf16.xpose.msra.mxu0 0
    %2688 = vmatprep.subr.bf16.mxu0 0
    %2689 = vmatpush1.bf16.xpose.msra.mxu0 0
    %2690 = vmatprep.subr.bf16.mxu0 0
    %2691 = vmatpush1.bf16.xpose.msra.mxu0 0
    %2692 = vmatprep.subr.bf16.mxu0 0
    %2693 = vmatpush1.bf16.xpose.msra.mxu0 0
    %2694 = vmatprep.subr.bf16.mxu0 0
    %2695 = vmatpush1.bf16.xpose.msra.mxu0 0
    %2696 = vmatprep.subr.bf16.mxu0 0
    %2697 = vmatpush1.bf16.xpose.msra.mxu0 0
    %2698 = vmatprep.mubr.bf16.mxu0 0
    %2699 = vmatmul.mubr.bf16.gmra.mrb[0].mxu0 %v2661
    %v2700 = vpop.f32.mrb[0].mxu0
    %v2701 = vadd.f32 0.0, %v2700
    %v2702 = vpop.f32.mrb[0].mxu0
    %v2703 = vpop.f32.mrb[0].mxu0
    %v2704 = vadd.f32 0.0, %v2703
    %v2705 = vpop.f32.mrb[0].mxu0
    %2706 = vdwg.mxu0
    %v2707 = vsel %vm370, %v2701, -1e+30
    %v2708 = vsel %vm371, %v2704, -1e+30
    %v2709 = vsel %vm715, %v2707, -inf
    %2710 = vmax.xlane.f32.xlu0 %v2709
    %v2711 = vpop.xlane.xlu0 %2710
    %v2712 = vsel %vm715, %v2708, -inf
    %2713 = vmax.xlane.f32.xlu0 %v2712
    %v2714 = vpop.xlane.xlu0 %2713
    %v2715 = vsub.f32 %v2707, %v2711
    %v2716 = vsub.f32 %v2708, %v2714
    %v2717 = vmul.f32 %v2715, 1.442695
    %v2718 = vpow.pop %v2717
    %v2719 = vmul.f32 %v2716, 1.442695
    %v2720 = vpow.pop %v2719
    %v2721 = vsel %vm370, %v2718, 0.0
    %v2722 = vsel %vm371, %v2720, 0.0
    %v2723 = vsel %vm715, %v2721, 0.0
    %2724 = vadd.xlane.f32.xlu0 %v2723
    %v2725 = vpop.xlane.xlu0 %2724
    %v2726 = vsel %vm715, %v2722, 0.0
    %2727 = vadd.xlane.f32.xlu0 %v2726
    %v2728 = vpop.xlane.xlu0 %2727
    %v2729 = vrcp.pop %v2725
    %v2730 = vmul.f32 %v2721, %v2729
    %v2731 = vrcp.pop %v2728
    %v2732 = vmul.f32 %v2722, %v2731
    %v2733 = vpack.c.bf16 %v2732, %v2730
    %2734 = vrot.lane.b32.xlu0 %v2094, 32
    %v2735 = vpop.permute.xlu0 %2734
    %v2738 = vsel %vm715, %v2733, 0
    %2740 = vmatprep.subr.bf16.mxu0 0
    %2741 = vmatpush1.bf16.msra.mxu0 %v2735
    %2742 = vmatprep.subr.bf16.mxu0 0
    %2743 = vmatpush1.bf16.msra.mxu0 0
    %2744 = vmatprep.subr.bf16.mxu0 0
    %2745 = vmatpush1.bf16.msra.mxu0 0
    %2746 = vmatprep.subr.bf16.mxu0 0
    %2747 = vmatpush1.bf16.msra.mxu0 0
    %2748 = vmatprep.subr.bf16.mxu0 0
    %2749 = vmatpush1.bf16.msra.mxu0 0
    %2750 = vmatprep.subr.bf16.mxu0 0
    %2751 = vmatpush1.bf16.msra.mxu0 0
    %2752 = vmatprep.subr.bf16.mxu0 0
    %2753 = vmatpush1.bf16.msra.mxu0 0
    %2754 = vmatprep.subr.bf16.mxu0 0
    %2755 = vmatpush1.bf16.msra.mxu0 0
    %2756 = vmatprep.subr.bf16.mxu0 0
    %2757 = vmatpush1.bf16.msra.mxu0 0
    %2758 = vmatprep.subr.bf16.mxu0 0
    %2759 = vmatpush1.bf16.msra.mxu0 0
    %2760 = vmatprep.subr.bf16.mxu0 0
    %2761 = vmatpush1.bf16.msra.mxu0 0
    %2762 = vmatprep.subr.bf16.mxu0 0
    %2763 = vmatpush1.bf16.msra.mxu0 0
    %2764 = vmatprep.subr.bf16.mxu0 0
    %2765 = vmatpush1.bf16.msra.mxu0 0
    %2766 = vmatprep.subr.bf16.mxu0 0
    %2767 = vmatpush1.bf16.msra.mxu0 0
    %2768 = vmatprep.subr.bf16.mxu0 0
    %2769 = vmatpush1.bf16.msra.mxu0 0
    %2770 = vmatprep.subr.bf16.mxu0 0
    %2771 = vmatpush1.bf16.msra.mxu0 0
    %2772 = vmatprep.mubr.bf16.mxu0 0
    %2773 = vmatmul.mubr.bf16.gmra.mrb[0].mxu0 %v2738
    %v2774 = vpop.f32.mrb[0].mxu0
    %v2775 = vadd.f32 0.0, %v2774
    %v2776 = vpop.f32.mrb[0].mxu0
    %v2777 = vpop.f32.mrb[0].mxu0
    %v2778 = vadd.f32 0.0, %v2777
    %v2779 = vpop.f32.mrb[0].mxu0
    %2780 = vdwg.mxu0
    %v2781 = vpack.c.bf16 %v2778, %v2775
    %v2782 = vld [vmem:[%s2218 + $0x30] sm:$0xf]
    %v2783 = vld [vmem:[%s2218 + $0x34] sm:$0xf]
    %v2784 = vld [vmem:[%s2218 + $0x38] sm:$0xf]
    %v2785 = vld [vmem:[%s2218 + $0x3c] sm:$0xf]
    %v2790 = vunpack.c.l.b16 %v2782
    %v2791 = vunpack.c.l.b16 %v2783
    %v2792 = vunpack.c.l.b16 %v2784
    %v2793 = vunpack.c.l.b16 %v2785
    %v2794 = vpack.c.b16 %v2791, %v2790
    %v2795 = vpack.c.b16 %v2793, %v2792
    %v2799 = vsel %vm665, %v2781, 0
    %2801 = vmatprep.subr.bf16.mxu0 0
    %2802 = vmatpush1.bf16.msra.mxu0 %v2794
    %2803 = vmatprep.subr.bf16.mxu0 0
    %2804 = vmatpush1.bf16.msra.mxu0 %v2795
    %2805 = vmatprep.subr.bf16.mxu0 0
    %2806 = vmatpush1.bf16.msra.mxu0 0
    %2807 = vmatprep.subr.bf16.mxu0 0
    %2808 = vmatpush1.bf16.msra.mxu0 0
    %2809 = vmatprep.subr.bf16.mxu0 0
    %2810 = vmatpush1.bf16.msra.mxu0 0
    %2811 = vmatprep.subr.bf16.mxu0 0
    %2812 = vmatpush1.bf16.msra.mxu0 0
    %2813 = vmatprep.subr.bf16.mxu0 0
    %2814 = vmatpush1.bf16.msra.mxu0 0
    %2815 = vmatprep.subr.bf16.mxu0 0
    %2816 = vmatpush1.bf16.msra.mxu0 0
    %2817 = vmatprep.subr.bf16.mxu0 0
    %2818 = vmatpush1.bf16.msra.mxu0 0
    %2819 = vmatprep.subr.bf16.mxu0 0
    %2820 = vmatpush1.bf16.msra.mxu0 0
    %2821 = vmatprep.subr.bf16.mxu0 0
    %2822 = vmatpush1.bf16.msra.mxu0 0
    %2823 = vmatprep.subr.bf16.mxu0 0
    %2824 = vmatpush1.bf16.msra.mxu0 0
    %2825 = vmatprep.subr.bf16.mxu0 0
    %2826 = vmatpush1.bf16.msra.mxu0 0
    %2827 = vmatprep.subr.bf16.mxu0 0
    %2828 = vmatpush1.bf16.msra.mxu0 0
    %2829 = vmatprep.subr.bf16.mxu0 0
    %2830 = vmatpush1.bf16.msra.mxu0 0
    %2831 = vmatprep.subr.bf16.mxu0 0
    %2832 = vmatpush1.bf16.msra.mxu0 0
    %2833 = vmatprep.mubr.bf16.mxu0 0
    %2834 = vmatmul.mubr.bf16.gmra.mrb[0].mxu0 %v2799
    %v2835 = vpop.f32.mrb[0].mxu0
    %v2836 = vadd.f32 0.0, %v2835
    %v2837 = vpop.f32.mrb[0].mxu0
    %v2838 = vpop.f32.mrb[0].mxu0
    %v2839 = vadd.f32 0.0, %v2838
    %v2840 = vpop.f32.mrb[0].mxu0
    %2841 = vdwg.mxu0
    %v2842 = vadd.f32 %v2654, %v2836
    %v2843 = vadd.f32 %v2655, %v2839
    %v2844 = vadd.f32 %v1800, %v2842
    %v2845 = vadd.f32 %v1801, %v2843
    %s2846 = scalar_lea.vmem %s7, 1
    %v2847 = vld [vmem:[%s2846] sm:$0x1]
    %s2848 = scalar_lea.vmem %s8, 1
    %v2849 = vld [vmem:[%s2848] sm:$0x1]
    %2850 = vadd.xlane.f32.xlu0 %v2844
    %v2851 = vpop.xlane.xlu0 %2850
    %2852 = vadd.xlane.f32.xlu0 %v2845
    %v2853 = vpop.xlane.xlu0 %2852
    %v2854 = vmul.f32 %v2851, %v378
    %v2855 = vmul.f32 %v2853, %v378
    %v2856 = vsub.f32 %v2844, %v2854
    %v2857 = vsub.f32 %v2845, %v2855
    %v2858 = vmul.f32 %v2856, %v2856
    %v2859 = vmul.f32 %v2857, %v2857
    %2860 = vadd.xlane.f32.xlu0 %v2858
    %v2861 = vpop.xlane.xlu0 %2860
    %2862 = vadd.xlane.f32.xlu0 %v2859
    %v2863 = vpop.xlane.xlu0 %2862
    %v2864 = vmul.f32 %v2861, %v378
    %v2865 = vmul.f32 %v2863, %v378
    %v2866 = vadd.f32 %v2864, 1e-05
    %v2867 = vadd.f32 %v2865, 1e-05
    %v2868 = vrsqrt.pop %v2866
    %v2869 = vrsqrt.pop %v2867
    %v2870 = vmul.f32 %v2856, %v2868
    %v2871 = vmul.f32 %v2857, %v2869
    %v2873 = vlaneseq
    %v2874 = vshrl.u32 %v2873, 7
    %v2875 = vsub.s32 0, %v2874
    %v2876 = vrot.slane %v2847, %v2875
    %v2878 = vmul.f32 %v2870, %v2876
    %v2879 = vmul.f32 %v2871, %v2876
    %v2881 = vlaneseq
    %v2882 = vshrl.u32 %v2881, 7
    %v2883 = vsub.s32 0, %v2882
    %v2884 = vrot.slane %v2849, %v2883
    %v2886 = vadd.f32 %v2878, %v2884
    %v2887 = vadd.f32 %v2879, %v2884
    %v2888 = vpack.c.bf16 %v2887, %v2886
    %s2889 = scalar_lea.vmem [#allocation9], 128
    %v2890 = vld [vmem:[%s2889] sm:$0xff]
    %v2891 = vld [vmem:[%s2889 + $0x8] sm:$0xff]
    %v2892 = vld [vmem:[%s2889 + $0x10] sm:$0xff]
    %v2893 = vld [vmem:[%s2889 + $0x18] sm:$0xff]
    %v2894 = vld [vmem:[%s2889 + $0x20] sm:$0xff]
    %v2895 = vld [vmem:[%s2889 + $0x28] sm:$0xff]
    %v2896 = vld [vmem:[%s2889 + $0x30] sm:$0xff]
    %v2897 = vld [vmem:[%s2889 + $0x38] sm:$0xff]
    %v2898 = vld [vmem:[%s2889 + $0x40] sm:$0xff]
    %v2899 = vld [vmem:[%s2889 + $0x48] sm:$0xff]
    %v2900 = vld [vmem:[%s2889 + $0x50] sm:$0xff]
    %v2901 = vld [vmem:[%s2889 + $0x58] sm:$0xff]
    %v2902 = vld [vmem:[%s2889 + $0x60] sm:$0xff]
    %v2903 = vld [vmem:[%s2889 + $0x68] sm:$0xff]
    %v2904 = vld [vmem:[%s2889 + $0x70] sm:$0xff]
    %v2905 = vld [vmem:[%s2889 + $0x78] sm:$0xff]
    %v2922 = vunpack.c.l.b16 %v2890
    %v2923 = vunpack.c.h.b16 %v2890
    %v2924 = vunpack.c.l.b16 %v2891
    %v2925 = vunpack.c.h.b16 %v2891
    %v2926 = vunpack.c.l.b16 %v2892
    %v2927 = vunpack.c.h.b16 %v2892
    %v2928 = vunpack.c.l.b16 %v2893
    %v2929 = vunpack.c.h.b16 %v2893
    %v2930 = vunpack.c.l.b16 %v2894
    %v2931 = vunpack.c.h.b16 %v2894
    %v2932 = vunpack.c.l.b16 %v2895
    %v2933 = vunpack.c.h.b16 %v2895
    %v2934 = vunpack.c.l.b16 %v2896
    %v2935 = vunpack.c.h.b16 %v2896
    %v2936 = vunpack.c.l.b16 %v2897
    %v2937 = vunpack.c.h.b16 %v2897
    %v2938 = vunpack.c.l.b16 %v2898
    %v2939 = vunpack.c.h.b16 %v2898
    %v2940 = vunpack.c.l.b16 %v2899
    %v2941 = vunpack.c.h.b16 %v2899
    %v2942 = vunpack.c.l.b16 %v2900
    %v2943 = vunpack.c.h.b16 %v2900
    %v2944 = vunpack.c.l.b16 %v2901
    %v2945 = vunpack.c.h.b16 %v2901
    %v2946 = vunpack.c.l.b16 %v2902
    %v2947 = vunpack.c.h.b16 %v2902
    %v2948 = vunpack.c.l.b16 %v2903
    %v2949 = vunpack.c.h.b16 %v2903
    %v2950 = vunpack.c.l.b16 %v2904
    %v2951 = vunpack.c.h.b16 %v2904
    %v2952 = vunpack.c.l.b16 %v2905
    %v2953 = vunpack.c.h.b16 %v2905
    %v2954 = vpack.c.b16 %v2924, %v2922
    %v2955 = vpack.c.b16 %v2925, %v2923
    %v2956 = vpack.c.b16 %v2928, %v2926
    %v2957 = vpack.c.b16 %v2929, %v2927
    %v2958 = vpack.c.b16 %v2932, %v2930
    %v2959 = vpack.c.b16 %v2933, %v2931
    %v2960 = vpack.c.b16 %v2936, %v2934
    %v2961 = vpack.c.b16 %v2937, %v2935
    %v2962 = vpack.c.b16 %v2940, %v2938
    %v2963 = vpack.c.b16 %v2941, %v2939
    %v2964 = vpack.c.b16 %v2944, %v2942
    %v2965 = vpack.c.b16 %v2945, %v2943
    %v2966 = vpack.c.b16 %v2948, %v2946
    %v2967 = vpack.c.b16 %v2949, %v2947
    %v2968 = vpack.c.b16 %v2952, %v2950
    %v2969 = vpack.c.b16 %v2953, %v2951
    %2986 = vmatprep.subr.bf16.mxu0 %v2955
    %2987 = vmatpush1.bf16.msra.mxu0 %v2954
    %2988 = vmatprep.subr.bf16.mxu0 %v2957
    %2989 = vmatpush1.bf16.msra.mxu0 %v2956
    %2990 = vmatprep.subr.bf16.mxu0 %v2959
    %2991 = vmatpush1.bf16.msra.mxu0 %v2958
    %2992 = vmatprep.subr.bf16.mxu0 %v2961
    %2993 = vmatpush1.bf16.msra.mxu0 %v2960
    %2994 = vmatprep.subr.bf16.mxu0 %v2963
    %2995 = vmatpush1.bf16.msra.mxu0 %v2962
    %2996 = vmatprep.subr.bf16.mxu0 %v2965
    %2997 = vmatpush1.bf16.msra.mxu0 %v2964
    %2998 = vmatprep.subr.bf16.mxu0 %v2967
    %2999 = vmatpush1.bf16.msra.mxu0 %v2966
    %3000 = vmatprep.subr.bf16.mxu0 %v2969
    %3001 = vmatpush1.bf16.msra.mxu0 %v2968
    %3002 = vmatprep.subr.bf16.mxu0 0
    %3003 = vmatpush1.bf16.msra.mxu0 0
    %3004 = vmatprep.subr.bf16.mxu0 0
    %3005 = vmatpush1.bf16.msra.mxu0 0
    %3006 = vmatprep.subr.bf16.mxu0 0
    %3007 = vmatpush1.bf16.msra.mxu0 0
    %3008 = vmatprep.subr.bf16.mxu0 0
    %3009 = vmatpush1.bf16.msra.mxu0 0
    %3010 = vmatprep.subr.bf16.mxu0 0
    %3011 = vmatpush1.bf16.msra.mxu0 0
    %3012 = vmatprep.subr.bf16.mxu0 0
    %3013 = vmatpush1.bf16.msra.mxu0 0
    %3014 = vmatprep.subr.bf16.mxu0 0
    %3015 = vmatpush1.bf16.msra.mxu0 0
    %3016 = vmatprep.subr.bf16.mxu0 0
    %3017 = vmatpush1.bf16.msra.mxu0 0
    %3018 = vmatprep.mubr.bf16.mxu0 0
    %3019 = vmatmul.mubr.bf16.gmra.mrb[0].mxu0 %v2888
    %v3020 = vpop.f32.mrb[0].mxu0
    %v3021 = vadd.f32 0.0, %v3020
    %v3022 = vpop.f32.mrb[0].mxu0
    %v3023 = vadd.f32 0.0, %v3022
    %v3024 = vpop.f32.mrb[0].mxu0
    %v3025 = vadd.f32 0.0, %v3024
    %v3026 = vpop.f32.mrb[0].mxu0
    %v3027 = vadd.f32 0.0, %v3026
    %3028 = vdwg.mxu0
    %v3029 = vmul.f32 %v3021, %v3021
    %v3030 = vmul.f32 %v3023, %v3023
    %v3031 = vmul.f32 %v3025, %v3025
    %v3032 = vmul.f32 %v3027, %v3027
    %v3033 = vmul.f32 %v3021, %v3029
    %v3034 = vmul.f32 %v3023, %v3030
    %v3035 = vmul.f32 %v3025, %v3031
    %v3036 = vmul.f32 %v3027, %v3032
    %v3037 = vmul.f32 %v3033, 0.044715
    %v3038 = vmul.f32 %v3034, 0.044715
    %v3039 = vmul.f32 %v3035, 0.044715
    %v3040 = vmul.f32 %v3036, 0.044715
    %v3041 = vadd.f32 %v3021, %v3037
    %v3042 = vadd.f32 %v3023, %v3038
    %v3043 = vadd.f32 %v3025, %v3039
    %v3044 = vadd.f32 %v3027, %v3040
    %v3045 = vmul.f32 %v3041, 0.7978846
    %v3046 = vmul.f32 %v3042, 0.7978846
    %v3047 = vmul.f32 %v3043, 0.7978846
    %v3048 = vmul.f32 %v3044, 0.7978846
    %v3049 = vtanh.pop %v3045
    %v3050 = vtanh.pop %v3046
    %v3051 = vtanh.pop %v3047
    %v3052 = vtanh.pop %v3048
    %v3053 = vadd.f32 %v3049, 1.0
    %v3054 = vadd.f32 %v3050, 1.0
    %v3055 = vadd.f32 %v3051, 1.0
    %v3056 = vadd.f32 %v3052, 1.0
    %v3057 = vmul.f32 %v3053, 0.5
    %v3058 = vmul.f32 %v3054, 0.5
    %v3059 = vmul.f32 %v3055, 0.5
    %v3060 = vmul.f32 %v3056, 0.5
    %v3061 = vmul.f32 %v3021, %v3057
    %v3062 = vmul.f32 %v3023, %v3058
    %v3063 = vmul.f32 %v3025, %v3059
    %v3064 = vmul.f32 %v3027, %v3060
    %v3065 = vpack.c.bf16 %v3063, %v3061
    %v3066 = vpack.c.bf16 %v3064, %v3062
    %s3067 = scalar_lea.vmem [#allocation11], 128
    %v3068 = vld [vmem:[%s3067] sm:$0xf]
    %v3069 = vld [vmem:[%s3067 + $0x4] sm:$0xf]
    %v3070 = vld [vmem:[%s3067 + $0x8] sm:$0xf]
    %v3071 = vld [vmem:[%s3067 + $0xc] sm:$0xf]
    %v3072 = vld [vmem:[%s3067 + $0x10] sm:$0xf]
    %v3073 = vld [vmem:[%s3067 + $0x14] sm:$0xf]
    %v3074 = vld [vmem:[%s3067 + $0x18] sm:$0xf]
    %v3075 = vld [vmem:[%s3067 + $0x1c] sm:$0xf]
    %v3076 = vld [vmem:[%s3067 + $0x20] sm:$0xf]
    %v3077 = vld [vmem:[%s3067 + $0x24] sm:$0xf]
    %v3078 = vld [vmem:[%s3067 + $0x28] sm:$0xf]
    %v3079 = vld [vmem:[%s3067 + $0x2c] sm:$0xf]
    %v3080 = vld [vmem:[%s3067 + $0x30] sm:$0xf]
    %v3081 = vld [vmem:[%s3067 + $0x34] sm:$0xf]
    %v3082 = vld [vmem:[%s3067 + $0x38] sm:$0xf]
    %v3083 = vld [vmem:[%s3067 + $0x3c] sm:$0xf]
    %v3084 = vld [vmem:[%s3067 + $0x40] sm:$0xf]
    %v3085 = vld [vmem:[%s3067 + $0x44] sm:$0xf]
    %v3086 = vld [vmem:[%s3067 + $0x48] sm:$0xf]
    %v3087 = vld [vmem:[%s3067 + $0x4c] sm:$0xf]
    %v3088 = vld [vmem:[%s3067 + $0x50] sm:$0xf]
    %v3089 = vld [vmem:[%s3067 + $0x54] sm:$0xf]
    %v3090 = vld [vmem:[%s3067 + $0x58] sm:$0xf]
    %v3091 = vld [vmem:[%s3067 + $0x5c] sm:$0xf]
    %v3092 = vld [vmem:[%s3067 + $0x60] sm:$0xf]
    %v3093 = vld [vmem:[%s3067 + $0x64] sm:$0xf]
    %v3094 = vld [vmem:[%s3067 + $0x68] sm:$0xf]
    %v3095 = vld [vmem:[%s3067 + $0x6c] sm:$0xf]
    %v3096 = vld [vmem:[%s3067 + $0x70] sm:$0xf]
    %v3097 = vld [vmem:[%s3067 + $0x74] sm:$0xf]
    %v3098 = vld [vmem:[%s3067 + $0x78] sm:$0xf]
    %v3099 = vld [vmem:[%s3067 + $0x7c] sm:$0xf]
    %v3132 = vunpack.c.l.b16 %v3068
    %v3133 = vunpack.c.l.b16 %v3069
    %v3134 = vunpack.c.l.b16 %v3070
    %v3135 = vunpack.c.l.b16 %v3071
    %v3136 = vunpack.c.l.b16 %v3072
    %v3137 = vunpack.c.l.b16 %v3073
    %v3138 = vunpack.c.l.b16 %v3074
    %v3139 = vunpack.c.l.b16 %v3075
    %v3140 = vunpack.c.l.b16 %v3076
    %v3141 = vunpack.c.l.b16 %v3077
    %v3142 = vunpack.c.l.b16 %v3078
    %v3143 = vunpack.c.l.b16 %v3079
    %v3144 = vunpack.c.l.b16 %v3080
    %v3145 = vunpack.c.l.b16 %v3081
    %v3146 = vunpack.c.l.b16 %v3082
    %v3147 = vunpack.c.l.b16 %v3083
    %v3148 = vunpack.c.l.b16 %v3084
    %v3149 = vunpack.c.l.b16 %v3085
    %v3150 = vunpack.c.l.b16 %v3086
    %v3151 = vunpack.c.l.b16 %v3087
    %v3152 = vunpack.c.l.b16 %v3088
    %v3153 = vunpack.c.l.b16 %v3089
    %v3154 = vunpack.c.l.b16 %v3090
    %v3155 = vunpack.c.l.b16 %v3091
    %v3156 = vunpack.c.l.b16 %v3092
    %v3157 = vunpack.c.l.b16 %v3093
    %v3158 = vunpack.c.l.b16 %v3094
    %v3159 = vunpack.c.l.b16 %v3095
    %v3160 = vunpack.c.l.b16 %v3096
    %v3161 = vunpack.c.l.b16 %v3097
    %v3162 = vunpack.c.l.b16 %v3098
    %v3163 = vunpack.c.l.b16 %v3099
    %v3164 = vpack.c.b16 %v3133, %v3132
    %v3165 = vpack.c.b16 %v3135, %v3134
    %v3166 = vpack.c.b16 %v3137, %v3136
    %v3167 = vpack.c.b16 %v3139, %v3138
    %v3168 = vpack.c.b16 %v3141, %v3140
    %v3169 = vpack.c.b16 %v3143, %v3142
    %v3170 = vpack.c.b16 %v3145, %v3144
    %v3171 = vpack.c.b16 %v3147, %v3146
    %v3172 = vpack.c.b16 %v3149, %v3148
    %v3173 = vpack.c.b16 %v3151, %v3150
    %v3174 = vpack.c.b16 %v3153, %v3152
    %v3175 = vpack.c.b16 %v3155, %v3154
    %v3176 = vpack.c.b16 %v3157, %v3156
    %v3177 = vpack.c.b16 %v3159, %v3158
    %v3178 = vpack.c.b16 %v3161, %v3160
    %v3179 = vpack.c.b16 %v3163, %v3162
    %3196 = vmatprep.subr.bf16.mxu0 0
    %3197 = vmatpush1.bf16.msra.mxu0 %v3164
    %3198 = vmatprep.subr.bf16.mxu0 0
    %3199 = vmatpush1.bf16.msra.mxu0 %v3165
    %3200 = vmatprep.subr.bf16.mxu0 0
    %3201 = vmatpush1.bf16.msra.mxu0 %v3166
    %3202 = vmatprep.subr.bf16.mxu0 0
    %3203 = vmatpush1.bf16.msra.mxu0 %v3167
    %3204 = vmatprep.subr.bf16.mxu0 0
    %3205 = vmatpush1.bf16.msra.mxu0 %v3168
    %3206 = vmatprep.subr.bf16.mxu0 0
    %3207 = vmatpush1.bf16.msra.mxu0 %v3169
    %3208 = vmatprep.subr.bf16.mxu0 0
    %3209 = vmatpush1.bf16.msra.mxu0 %v3170
    %3210 = vmatprep.subr.bf16.mxu0 0
    %3211 = vmatpush1.bf16.msra.mxu0 %v3171
    %3212 = vmatprep.subr.bf16.mxu0 0
    %3213 = vmatpush1.bf16.msra.mxu0 %v3172
    %3214 = vmatprep.subr.bf16.mxu0 0
    %3215 = vmatpush1.bf16.msra.mxu0 %v3173
    %3216 = vmatprep.subr.bf16.mxu0 0
    %3217 = vmatpush1.bf16.msra.mxu0 %v3174
    %3218 = vmatprep.subr.bf16.mxu0 0
    %3219 = vmatpush1.bf16.msra.mxu0 %v3175
    %3220 = vmatprep.subr.bf16.mxu0 0
    %3221 = vmatpush1.bf16.msra.mxu0 %v3176
    %3222 = vmatprep.subr.bf16.mxu0 0
    %3223 = vmatpush1.bf16.msra.mxu0 %v3177
    %3224 = vmatprep.subr.bf16.mxu0 0
    %3225 = vmatpush1.bf16.msra.mxu0 %v3178
    %3226 = vmatprep.subr.bf16.mxu0 0
    %3227 = vmatpush1.bf16.msra.mxu0 %v3179
    %3228 = vmatprep.mubr.bf16.mxu0 %v3066
    %3229 = vmatmul.mubr.bf16.gmra.mrb[0].mxu0 %v3065
    %v3230 = vpop.f32.mrb[0].mxu0
    %v3231 = vpop.f32.mrb[0].mxu0
    %v3232 = vpop.f32.mrb[0].mxu0
    %v3233 = vadd.f32 0.0, %v3232
    %v3234 = vpop.f32.mrb[0].mxu0
    %3235 = vdwg.mxu0
    %v3236 = vadd.f32 %v2845, %v3233
    %v3237 = vld [vmem:[%s11] sm:$0x1]
    %v3238 = vld [vmem:[%s12] sm:$0x1]
    %vm3239 = vcmask 1040384
    %v3240 = vsel %vm3239, %v3236, 0.0
    %3241 = vadd.xlane.f32.xlu0 %v3240
    %v3242 = vpop.xlane.xlu0 %3241
    %v3243 = vmul.f32 %v3242, %v378
    %v3244 = vsub.f32 %v3236, %v3243
    %v3245 = vmul.f32 %v3244, %v3244
    %v3246 = vsel %vm3239, %v3245, 0.0
    %3247 = vadd.xlane.f32.xlu0 %v3246
    %v3248 = vpop.xlane.xlu0 %3247
    %v3249 = vmul.f32 %v3248, %v378
    %v3250 = vadd.f32 %v3249, 1e-05
    %v3251 = vrsqrt.pop %v3250
    %v3252 = vmul.f32 %v3244, %v3251
    %v3253 = vmul.f32 %v3252, %v3237
    %v3254 = vadd.f32 %v3253, %v3238
    %v3255 = vpack.c.bf16 %v3254, %v3254
    %v3256 = vld [vmem:[#allocation12] sm:$0xff]
    %v3257 = vld [vmem:[#allocation12 + $0x8] sm:$0xff]
    %v3258 = vld [vmem:[#allocation12 + $0x10] sm:$0xff]
    %v3259 = vld [vmem:[#allocation12 + $0x18] sm:$0xff]
    %v3260 = vld [vmem:[#allocation12 + $0x20] sm:$0xff]
    %v3261 = vld [vmem:[#allocation12 + $0x28] sm:$0xff]
    %v3262 = vld [vmem:[#allocation12 + $0x30] sm:$0xff]
    %v3263 = vld [vmem:[#allocation12 + $0x38] sm:$0xff]
    %v3264 = vld [vmem:[#allocation12 + $0x40] sm:$0xff]
    %v3265 = vld [vmem:[#allocation12 + $0x48] sm:$0xff]
    %v3266 = vld [vmem:[#allocation12 + $0x50] sm:$0xff]
    %v3267 = vld [vmem:[#allocation12 + $0x58] sm:$0xff]
    %v3268 = vld [vmem:[#allocation12 + $0x60] sm:$0xff]
    %v3269 = vld [vmem:[#allocation12 + $0x68] sm:$0xff]
    %v3270 = vld [vmem:[#allocation12 + $0x70] sm:$0xff]
    %v3271 = vld [vmem:[#allocation12 + $0x78] sm:$0xff]
    %v3288 = vunpack.c.l.b16 %v3256
    %v3289 = vunpack.c.h.b16 %v3256
    %v3290 = vunpack.c.l.b16 %v3257
    %v3291 = vunpack.c.h.b16 %v3257
    %v3292 = vunpack.c.l.b16 %v3258
    %v3293 = vunpack.c.h.b16 %v3258
    %v3294 = vunpack.c.l.b16 %v3259
    %v3295 = vunpack.c.h.b16 %v3259
    %v3296 = vunpack.c.l.b16 %v3260
    %v3297 = vunpack.c.h.b16 %v3260
    %v3298 = vunpack.c.l.b16 %v3261
    %v3299 = vunpack.c.h.b16 %v3261
    %v3300 = vunpack.c.l.b16 %v3262
    %v3301 = vunpack.c.h.b16 %v3262
    %v3302 = vunpack.c.l.b16 %v3263
    %v3303 = vunpack.c.h.b16 %v3263
    %v3304 = vunpack.c.l.b16 %v3264
    %v3305 = vunpack.c.h.b16 %v3264
    %v3306 = vunpack.c.l.b16 %v3265
    %v3307 = vunpack.c.h.b16 %v3265
    %v3308 = vunpack.c.l.b16 %v3266
    %v3309 = vunpack.c.h.b16 %v3266
    %v3310 = vunpack.c.l.b16 %v3267
    %v3311 = vunpack.c.h.b16 %v3267
    %v3312 = vunpack.c.l.b16 %v3268
    %v3313 = vunpack.c.h.b16 %v3268
    %v3314 = vunpack.c.l.b16 %v3269
    %v3315 = vunpack.c.h.b16 %v3269
    %v3316 = vunpack.c.l.b16 %v3270
    %v3317 = vunpack.c.h.b16 %v3270
    %v3318 = vunpack.c.l.b16 %v3271
    %v3319 = vunpack.c.h.b16 %v3271
    %v3320 = vpack.c.b16 %v3290, %v3288
    %v3321 = vpack.c.b16 %v3291, %v3289
    %v3322 = vpack.c.b16 %v3294, %v3292
    %v3323 = vpack.c.b16 %v3295, %v3293
    %v3324 = vpack.c.b16 %v3298, %v3296
    %v3325 = vpack.c.b16 %v3299, %v3297
    %v3326 = vpack.c.b16 %v3302, %v3300
    %v3327 = vpack.c.b16 %v3303, %v3301
    %v3328 = vpack.c.b16 %v3306, %v3304
    %v3329 = vpack.c.b16 %v3307, %v3305
    %v3330 = vpack.c.b16 %v3310, %v3308
    %v3331 = vpack.c.b16 %v3311, %v3309
    %v3332 = vpack.c.b16 %v3314, %v3312
    %v3333 = vpack.c.b16 %v3315, %v3313
    %v3334 = vpack.c.b16 %v3318, %v3316
    %v3335 = vpack.c.b16 %v3319, %v3317
    %3352 = vmatprep.subr.bf16.mxu0 %v3321
    %3353 = vmatpush1.bf16.msra.mxu0 %v3320
    %3354 = vmatprep.subr.bf16.mxu0 %v3323
    %3355 = vmatpush1.bf16.msra.mxu0 %v3322
    %3356 = vmatprep.subr.bf16.mxu0 %v3325
    %3357 = vmatpush1.bf16.msra.mxu0 %v3324
    %3358 = vmatprep.subr.bf16.mxu0 %v3327
    %3359 = vmatpush1.bf16.msra.mxu0 %v3326
    %3360 = vmatprep.subr.bf16.mxu0 %v3329
    %3361 = vmatpush1.bf16.msra.mxu0 %v3328
    %3362 = vmatprep.subr.bf16.mxu0 %v3331
    %3363 = vmatpush1.bf16.msra.mxu0 %v3330
    %3364 = vmatprep.subr.bf16.mxu0 %v3333
    %3365 = vmatpush1.bf16.msra.mxu0 %v3332
    %3366 = vmatprep.subr.bf16.mxu0 %v3335
    %3367 = vmatpush1.bf16.msra.mxu0 %v3334
    %3368 = vmatprep.subr.bf16.mxu0 0
    %3369 = vmatpush1.bf16.msra.mxu0 0
    %3370 = vmatprep.subr.bf16.mxu0 0
    %3371 = vmatpush1.bf16.msra.mxu0 0
    %3372 = vmatprep.subr.bf16.mxu0 0
    %3373 = vmatpush1.bf16.msra.mxu0 0
    %3374 = vmatprep.subr.bf16.mxu0 0
    %3375 = vmatpush1.bf16.msra.mxu0 0
    %3376 = vmatprep.subr.bf16.mxu0 0
    %3377 = vmatpush1.bf16.msra.mxu0 0
    %3378 = vmatprep.subr.bf16.mxu0 0
    %3379 = vmatpush1.bf16.msra.mxu0 0
    %3380 = vmatprep.subr.bf16.mxu0 0
    %3381 = vmatpush1.bf16.msra.mxu0 0
    %3382 = vmatprep.subr.bf16.mxu0 0
    %3383 = vmatpush1.bf16.msra.mxu0 0
    %3384 = vmatprep.mubr.bf16.mxu0 0
    %3385 = vmatmul.mubr.bf16.gmra.mrb[0].mxu0 %v3255
    %v3386 = vpop.f32.mrb[0].mxu0
    %v3387 = vadd.f32 0.0, %v3386
    %v3388 = vpop.f32.mrb[0].mxu0
    %v3389 = vadd.f32 0.0, %v3388
    %v3390 = vpop.f32.mrb[0].mxu0
    %v3391 = vpop.f32.mrb[0].mxu0
    %3392 = vdwg.mxu0
    %v3393 = vsel %vm3239, %v3387, -inf
    %v3394 = vsel %vm3239, %v3389, -inf
    %v3395 = vmax.f32 %v3393, %v3394
    %3396 = vmax.xlane.f32.xlu0 %v3395
    %v3397 = vpop.xlane.xlu0 %3396
    %vm3398 = vcmp.eq.f32.partialorder %v3387, %v3397
    %vm3399 = vcmp.eq.f32.partialorder %v3389, %v3397
    %v3400 = vsel %vm3398, %v133, 256
    %v3401 = vsel %vm3399, %v134, 256
    %v3402 = vsel %vm3239, %v3400, 2147483647
    %v3403 = vsel %vm3239, %v3401, 2147483647
    %vm3404 = vcmp.lt.s32.totalorder %v3402, %v3403
    %v3405 = vsel %vm3404, %v3402, %v3403
    %v3406 = vand.u32 %v3405, 65535
    %v3407 = vshra.s32 %v3405, 16
    %v3408 = vcvt.s32.f32 %v3406
    %v3409 = vcvt.s32.f32 %v3407
    %3410 = vmin.xlane.f32.xlu0 %v3409
    %v3411 = vpop.xlane.xlu0 %3410
    %vm3412 = vcmp.eq.f32.partialorder %v3409, %v3411
    %v3413 = vsel %vm3412, %v3408, inf
    %3414 = vmin.xlane.f32.xlu0 %v3413
    %v3415 = vpop.xlane.xlu0 %3414
    %v3416 = vcvt.f32.s32 %v3415
    %v3417 = vcvt.f32.s32 %v3411
    %v3418 = vshll.u32 %v3417, 16
    %v3419 = vadd.s32 %v3418, %v3416
    %vm3420 = vcmp.eq.s32.totalorder %v136, 9
    %vm3421 = vcmp.eq.s32.totalorder %v137, 9
    %vm3422 = vcmp.eq.s32.totalorder %v138, 9
    %vm3423 = vcmp.eq.s32.totalorder %v139, 9
    %vm3424 = vcmp.eq.s32.totalorder %v140, 9
    %vm3425 = vcmp.eq.s32.totalorder %v141, 9
    %vm3426 = vcmp.eq.s32.totalorder %v142, 9
    %vm3427 = vcmp.eq.s32.totalorder %v143, 9
    %v3428 = vld [vmem:[%s14] sm:$0xff]
    %v3429 = vld [vmem:[%s14 + $0x8] sm:$0xff]
    %v3430 = vld [vmem:[%s14 + $0x10] sm:$0xff]
    %v3431 = vld [vmem:[%s14 + $0x18] sm:$0xff]
    %v3432 = vld [vmem:[%s14 + $0x20] sm:$0xff]
    %v3433 = vld [vmem:[%s14 + $0x28] sm:$0xff]
    %v3434 = vld [vmem:[%s14 + $0x30] sm:$0xff]
    %v3435 = vld [vmem:[%s14 + $0x38] sm:$0xff]
    %v3436 = vlaneseq
    %v3437 = vshrl.u32 %v3436, 7
    %v3438 = vsub.s32 0, %v3437
    %v3439 = vrot.slane %v3419, %v3438
    %v3440 = vsel %vm3420, %v3439, %v3428
    %v3441 = vsel %vm3421, %v3439, %v3429
    %v3442 = vsel %vm3422, %v3439, %v3430
    %v3443 = vsel %vm3423, %v3439, %v3431
    %v3444 = vsel %vm3424, %v3439, %v3432
    %v3445 = vsel %vm3425, %v3439, %v3433
    %v3446 = vsel %vm3426, %v3439, %v3434
    %v3447 = vsel %vm3427, %v3439, %v3435
    %3448 = vst.msk [vmem:[%s14] sm:$0xff] %vm152, %v3440
    %3449 = vst.msk [vmem:[%s14 + $0x8] sm:$0xff] %vm152, %v3441
    %3450 = vst.msk [vmem:[%s14 + $0x10] sm:$0xff] %vm152, %v3442
    %3451 = vst.msk [vmem:[%s14 + $0x18] sm:$0xff] %vm152, %v3443
    %3452 = vst.msk [vmem:[%s14 + $0x20] sm:$0xff] %vm152, %v3444
    %3453 = vst.msk [vmem:[%s14 + $0x28] sm:$0xff] %vm152, %v3445
    %3454 = vst.msk [vmem:[%s14 + $0x30] sm:$0xff] %vm152, %v3446
    %3455 = vst.msk [vmem:[%s14 + $0x38] sm:$0xff] %vm152, %v3447
    loop: start=9, step=1, limit=48
    $region82: #{generate.1} parent=1 // loop_pre_header
      _
    $region83: #{generate.1} parent=1 // loop_header
      %s3457 = sphi 9, %s3461
      %p3458 = scmp.ge.s32.totalorder %s3457, 48
      %v3462 = vphi %v3419, %v6658
    $region84: #{generate.1} parent=1 // loop_header_branch
      %3460 = sbr.rel (%p3458) target = $region88
    $region85: #{generate.1} parent=1 // loop_body
      %vm3463 = vcmp.eq.s32.totalorder %v133, %v3462
      %vm3464 = vcmp.eq.s32.totalorder %v134, %v3462
      %v3465 = vsel %vm3463, 1, 0
      %v3466 = vsel %vm3464, 1, 0
      %v3467 = vcvt.s32.f32 %v3465
      %v3468 = vcvt.s32.f32 %v3466
      %v3469 = vpack.c.bf16 %v3467, %v3467
      %v3470 = vpack.c.bf16 %v3468, %v3468
      %v3471 = vld [vmem:[#allocation4] sm:$0xf]
      %v3472 = vld [vmem:[#allocation4 + $0x4] sm:$0xf]
      %v3473 = vld [vmem:[#allocation4 + $0x8] sm:$0xf]
      %v3474 = vld [vmem:[#allocation4 + $0xc] sm:$0xf]
      %v3475 = vld [vmem:[#allocation4 + $0x10] sm:$0xf]
      %v3476 = vld [vmem:[#allocation4 + $0x14] sm:$0xf]
      %v3477 = vld [vmem:[#allocation4 + $0x18] sm:$0xf]
      %v3478 = vld [vmem:[#allocation4 + $0x1c] sm:$0xf]
      %v3479 = vld [vmem:[#allocation4 + $0x20] sm:$0xf]
      %v3480 = vld [vmem:[#allocation4 + $0x24] sm:$0xf]
      %v3481 = vld [vmem:[#allocation4 + $0x28] sm:$0xf]
      %v3482 = vld [vmem:[#allocation4 + $0x2c] sm:$0xf]
      %v3483 = vld [vmem:[#allocation4 + $0x30] sm:$0xf]
      %v3484 = vld [vmem:[#allocation4 + $0x34] sm:$0xf]
      %v3485 = vld [vmem:[#allocation4 + $0x38] sm:$0xf]
      %v3486 = vld [vmem:[#allocation4 + $0x3c] sm:$0xf]
      %v3487 = vld [vmem:[#allocation4 + $0x40] sm:$0xf]
      %v3488 = vld [vmem:[#allocation4 + $0x44] sm:$0xf]
      %v3489 = vld [vmem:[#allocation4 + $0x48] sm:$0xf]
      %v3490 = vld [vmem:[#allocation4 + $0x4c] sm:$0xf]
      %v3491 = vld [vmem:[#allocation4 + $0x50] sm:$0xf]
      %v3492 = vld [vmem:[#allocation4 + $0x54] sm:$0xf]
      %v3493 = vld [vmem:[#allocation4 + $0x58] sm:$0xf]
      %v3494 = vld [vmem:[#allocation4 + $0x5c] sm:$0xf]
      %v3495 = vld [vmem:[#allocation4 + $0x60] sm:$0xf]
      %v3496 = vld [vmem:[#allocation4 + $0x64] sm:$0xf]
      %v3497 = vld [vmem:[#allocation4 + $0x68] sm:$0xf]
      %v3498 = vld [vmem:[#allocation4 + $0x6c] sm:$0xf]
      %v3499 = vld [vmem:[#allocation4 + $0x70] sm:$0xf]
      %v3500 = vld [vmem:[#allocation4 + $0x74] sm:$0xf]
      %v3501 = vld [vmem:[#allocation4 + $0x78] sm:$0xf]
      %v3502 = vld [vmem:[#allocation4 + $0x7c] sm:$0xf]
      %s3503 = scalar_lea.vmem %s2, %s3457
      %v3504 = vld [vmem:[%s3503] sm:$0x1]
      %v3537 = vunpack.c.l.b16 %v3471
      %v3538 = vunpack.c.l.b16 %v3472
      %v3539 = vunpack.c.l.b16 %v3473
      %v3540 = vunpack.c.l.b16 %v3474
      %v3541 = vunpack.c.l.b16 %v3475
      %v3542 = vunpack.c.l.b16 %v3476
      %v3543 = vunpack.c.l.b16 %v3477
      %v3544 = vunpack.c.l.b16 %v3478
      %v3545 = vunpack.c.l.b16 %v3479
      %v3546 = vunpack.c.l.b16 %v3480
      %v3547 = vunpack.c.l.b16 %v3481
      %v3548 = vunpack.c.l.b16 %v3482
      %v3549 = vunpack.c.l.b16 %v3483
      %v3550 = vunpack.c.l.b16 %v3484
      %v3551 = vunpack.c.l.b16 %v3485
      %v3552 = vunpack.c.l.b16 %v3486
      %v3553 = vunpack.c.l.b16 %v3487
      %v3554 = vunpack.c.l.b16 %v3488
      %v3555 = vunpack.c.l.b16 %v3489
      %v3556 = vunpack.c.l.b16 %v3490
      %v3557 = vunpack.c.l.b16 %v3491
      %v3558 = vunpack.c.l.b16 %v3492
      %v3559 = vunpack.c.l.b16 %v3493
      %v3560 = vunpack.c.l.b16 %v3494
      %v3561 = vunpack.c.l.b16 %v3495
      %v3562 = vunpack.c.l.b16 %v3496
      %v3563 = vunpack.c.l.b16 %v3497
      %v3564 = vunpack.c.l.b16 %v3498
      %v3565 = vunpack.c.l.b16 %v3499
      %v3566 = vunpack.c.l.b16 %v3500
      %v3567 = vunpack.c.l.b16 %v3501
      %v3568 = vunpack.c.l.b16 %v3502
      %v3569 = vpack.c.b16 %v3538, %v3537
      %v3570 = vpack.c.b16 %v3540, %v3539
      %v3571 = vpack.c.b16 %v3542, %v3541
      %v3572 = vpack.c.b16 %v3544, %v3543
      %v3573 = vpack.c.b16 %v3546, %v3545
      %v3574 = vpack.c.b16 %v3548, %v3547
      %v3575 = vpack.c.b16 %v3550, %v3549
      %v3576 = vpack.c.b16 %v3552, %v3551
      %v3577 = vpack.c.b16 %v3554, %v3553
      %v3578 = vpack.c.b16 %v3556, %v3555
      %v3579 = vpack.c.b16 %v3558, %v3557
      %v3580 = vpack.c.b16 %v3560, %v3559
      %v3581 = vpack.c.b16 %v3562, %v3561
      %v3582 = vpack.c.b16 %v3564, %v3563
      %v3583 = vpack.c.b16 %v3566, %v3565
      %v3584 = vpack.c.b16 %v3568, %v3567
      %3601 = vmatprep.subr.bf16.mxu0 0
      %3602 = vmatpush1.bf16.msra.mxu0 %v3569
      %3603 = vmatprep.subr.bf16.mxu0 0
      %3604 = vmatpush1.bf16.msra.mxu0 %v3570
      %3605 = vmatprep.subr.bf16.mxu0 0
      %3606 = vmatpush1.bf16.msra.mxu0 %v3571
      %3607 = vmatprep.subr.bf16.mxu0 0
      %3608 = vmatpush1.bf16.msra.mxu0 %v3572
      %3609 = vmatprep.subr.bf16.mxu0 0
      %3610 = vmatpush1.bf16.msra.mxu0 %v3573
      %3611 = vmatprep.subr.bf16.mxu0 0
      %3612 = vmatpush1.bf16.msra.mxu0 %v3574
      %3613 = vmatprep.subr.bf16.mxu0 0
      %3614 = vmatpush1.bf16.msra.mxu0 %v3575
      %3615 = vmatprep.subr.bf16.mxu0 0
      %3616 = vmatpush1.bf16.msra.mxu0 %v3576
      %3617 = vmatprep.subr.bf16.mxu0 0
      %3618 = vmatpush1.bf16.msra.mxu0 %v3577
      %3619 = vmatprep.subr.bf16.mxu0 0
      %3620 = vmatpush1.bf16.msra.mxu0 %v3578
      %3621 = vmatprep.subr.bf16.mxu0 0
      %3622 = vmatpush1.bf16.msra.mxu0 %v3579
      %3623 = vmatprep.subr.bf16.mxu0 0
      %3624 = vmatpush1.bf16.msra.mxu0 %v3580
      %3625 = vmatprep.subr.bf16.mxu0 0
      %3626 = vmatpush1.bf16.msra.mxu0 %v3581
      %3627 = vmatprep.subr.bf16.mxu0 0
      %3628 = vmatpush1.bf16.msra.mxu0 %v3582
      %3629 = vmatprep.subr.bf16.mxu0 0
      %3630 = vmatpush1.bf16.msra.mxu0 %v3583
      %3631 = vmatprep.subr.bf16.mxu0 0
      %3632 = vmatpush1.bf16.msra.mxu0 %v3584
      %3633 = vmatprep.mubr.bf16.mxu0 %v3470
      %3634 = vmatmul.mubr.bf16.gmra.mrb[0].mxu0 %v3469
      %v3635 = vpop.f32.mrb[0].mxu0
      %v3636 = vadd.f32 %v3504, %v3635
      %v3637 = vpop.f32.mrb[0].mxu0
      %v3638 = vpop.f32.mrb[0].mxu0
      %v3639 = vpop.f32.mrb[0].mxu0
      %3640 = vdwg.mxu0
      %v3641 = vstv %s3457
      %vm3642 = vcmp.le.s32.totalorder %v133, %v3641
      %vm3643 = vcmp.eq.s32.totalorder %v136, %v3641
      %vm3644 = vcmp.eq.s32.totalorder %v137, %v3641
      %vm3645 = vcmp.eq.s32.totalorder %v138, %v3641
      %vm3646 = vcmp.eq.s32.totalorder %v139, %v3641
      %vm3647 = vcmp.eq.s32.totalorder %v140, %v3641
      %vm3648 = vcmp.eq.s32.totalorder %v141, %v3641
      %vm3649 = vcmp.eq.s32.totalorder %v142, %v3641
      %vm3650 = vcmp.eq.s32.totalorder %v143, %v3641
      %v3651 = vld [vmem:[%s3] sm:$0x1]
      %v3652 = vld [vmem:[%s4] sm:$0x1]
      %v3653 = vsel %vm3239, %v3636, 0.0
      %3654 = vadd.xlane.f32.xlu0 %v3653
      %v3655 = vpop.xlane.xlu0 %3654
      %v3656 = vmul.f32 %v3655, %v378
      %v3657 = vsub.f32 %v3636, %v3656
      %v3658 = vmul.f32 %v3657, %v3657
      %v3659 = vsel %vm3239, %v3658, 0.0
      %3660 = vadd.xlane.f32.xlu0 %v3659
      %v3661 = vpop.xlane.xlu0 %3660
      %v3662 = vmul.f32 %v3661, %v378
      %v3663 = vadd.f32 %v3662, 1e-05
      %v3664 = vrsqrt.pop %v3663
      %v3665 = vmul.f32 %v3657, %v3664
      %v3666 = vmul.f32 %v3665, %v3651
      %v3667 = vadd.f32 %v3666, %v3652
      %v3668 = vpack.c.bf16 %v3667, %v3667
      %v3669 = vld [vmem:[#allocation6] sm:$0xff]
      %v3670 = vld [vmem:[#allocation6 + $0x8] sm:$0xf]
      %v3671 = vld [vmem:[#allocation6 + $0xc] sm:$0xff]
      %v3672 = vld [vmem:[#allocation6 + $0x14] sm:$0xf]
      %v3673 = vld [vmem:[#allocation6 + $0x18] sm:$0xff]
      %v3674 = vld [vmem:[#allocation6 + $0x20] sm:$0xf]
      %v3675 = vld [vmem:[#allocation6 + $0x24] sm:$0xff]
      %v3676 = vld [vmem:[#allocation6 + $0x2c] sm:$0xf]
      %v3677 = vld [vmem:[#allocation6 + $0x30] sm:$0xff]
      %v3678 = vld [vmem:[#allocation6 + $0x38] sm:$0xf]
      %v3679 = vld [vmem:[#allocation6 + $0x3c] sm:$0xff]
      %v3680 = vld [vmem:[#allocation6 + $0x44] sm:$0xf]
      %v3681 = vld [vmem:[#allocation6 + $0x48] sm:$0xff]
      %v3682 = vld [vmem:[#allocation6 + $0x50] sm:$0xf]
      %v3683 = vld [vmem:[#allocation6 + $0x54] sm:$0xff]
      %v3684 = vld [vmem:[#allocation6 + $0x5c] sm:$0xf]
      %v3685 = vld [vmem:[#allocation6 + $0x60] sm:$0xff]
      %v3686 = vld [vmem:[#allocation6 + $0x68] sm:$0xf]
      %v3687 = vld [vmem:[#allocation6 + $0x6c] sm:$0xff]
      %v3688 = vld [vmem:[#allocation6 + $0x74] sm:$0xf]
      %v3689 = vld [vmem:[#allocation6 + $0x78] sm:$0xff]
      %v3690 = vld [vmem:[#allocation6 + $0x80] sm:$0xf]
      %v3691 = vld [vmem:[#allocation6 + $0x84] sm:$0xff]
      %v3692 = vld [vmem:[#allocation6 + $0x8c] sm:$0xf]
      %v3693 = vld [vmem:[#allocation6 + $0x90] sm:$0xff]
      %v3694 = vld [vmem:[#allocation6 + $0x98] sm:$0xf]
      %v3695 = vld [vmem:[#allocation6 + $0x9c] sm:$0xff]
      %v3696 = vld [vmem:[#allocation6 + $0xa4] sm:$0xf]
      %v3697 = vld [vmem:[#allocation6 + $0xa8] sm:$0xff]
      %v3698 = vld [vmem:[#allocation6 + $0xb0] sm:$0xf]
      %v3699 = vld [vmem:[#allocation6 + $0xb4] sm:$0xff]
      %v3700 = vld [vmem:[#allocation6 + $0xbc] sm:$0xf]
      %v3733 = vunpack.c.l.b16 %v3669
      %v3734 = vunpack.c.h.b16 %v3669
      %v3735 = vunpack.c.l.b16 %v3670
      %v3736 = vunpack.c.l.b16 %v3671
      %v3737 = vunpack.c.h.b16 %v3671
      %v3738 = vunpack.c.l.b16 %v3672
      %v3739 = vunpack.c.l.b16 %v3673
      %v3740 = vunpack.c.h.b16 %v3673
      %v3741 = vunpack.c.l.b16 %v3674
      %v3742 = vunpack.c.l.b16 %v3675
      %v3743 = vunpack.c.h.b16 %v3675
      %v3744 = vunpack.c.l.b16 %v3676
      %v3745 = vunpack.c.l.b16 %v3677
      %v3746 = vunpack.c.h.b16 %v3677
      %v3747 = vunpack.c.l.b16 %v3678
      %v3748 = vunpack.c.l.b16 %v3679
      %v3749 = vunpack.c.h.b16 %v3679
      %v3750 = vunpack.c.l.b16 %v3680
      %v3751 = vunpack.c.l.b16 %v3681
      %v3752 = vunpack.c.h.b16 %v3681
      %v3753 = vunpack.c.l.b16 %v3682
      %v3754 = vunpack.c.l.b16 %v3683
      %v3755 = vunpack.c.h.b16 %v3683
      %v3756 = vunpack.c.l.b16 %v3684
      %v3757 = vunpack.c.l.b16 %v3685
      %v3758 = vunpack.c.h.b16 %v3685
      %v3759 = vunpack.c.l.b16 %v3686
      %v3760 = vunpack.c.l.b16 %v3687
      %v3761 = vunpack.c.h.b16 %v3687
      %v3762 = vunpack.c.l.b16 %v3688
      %v3763 = vunpack.c.l.b16 %v3689
      %v3764 = vunpack.c.h.b16 %v3689
      %v3765 = vunpack.c.l.b16 %v3690
      %v3766 = vunpack.c.l.b16 %v3691
      %v3767 = vunpack.c.h.b16 %v3691
      %v3768 = vunpack.c.l.b16 %v3692
      %v3769 = vunpack.c.l.b16 %v3693
      %v3770 = vunpack.c.h.b16 %v3693
      %v3771 = vunpack.c.l.b16 %v3694
      %v3772 = vunpack.c.l.b16 %v3695
      %v3773 = vunpack.c.h.b16 %v3695
      %v3774 = vunpack.c.l.b16 %v3696
      %v3775 = vunpack.c.l.b16 %v3697
      %v3776 = vunpack.c.h.b16 %v3697
      %v3777 = vunpack.c.l.b16 %v3698
      %v3778 = vunpack.c.l.b16 %v3699
      %v3779 = vunpack.c.h.b16 %v3699
      %v3780 = vunpack.c.l.b16 %v3700
      %v3781 = vpack.c.b16 %v3736, %v3733
      %v3782 = vpack.c.b16 %v3737, %v3734
      %v3783 = vpack.c.b16 %v3738, %v3735
      %v3784 = vpack.c.b16 %v3742, %v3739
      %v3785 = vpack.c.b16 %v3743, %v3740
      %v3786 = vpack.c.b16 %v3744, %v3741
      %v3787 = vpack.c.b16 %v3748, %v3745
      %v3788 = vpack.c.b16 %v3749, %v3746
      %v3789 = vpack.c.b16 %v3750, %v3747
      %v3790 = vpack.c.b16 %v3754, %v3751
      %v3791 = vpack.c.b16 %v3755, %v3752
      %v3792 = vpack.c.b16 %v3756, %v3753
      %v3793 = vpack.c.b16 %v3760, %v3757
      %v3794 = vpack.c.b16 %v3761, %v3758
      %v3795 = vpack.c.b16 %v3762, %v3759
      %v3796 = vpack.c.b16 %v3766, %v3763
      %v3797 = vpack.c.b16 %v3767, %v3764
      %v3798 = vpack.c.b16 %v3768, %v3765
      %v3799 = vpack.c.b16 %v3772, %v3769
      %v3800 = vpack.c.b16 %v3773, %v3770
      %v3801 = vpack.c.b16 %v3774, %v3771
      %v3802 = vpack.c.b16 %v3778, %v3775
      %v3803 = vpack.c.b16 %v3779, %v3776
      %v3804 = vpack.c.b16 %v3780, %v3777
      %3829 = vmatprep.subr.bf16.mxu0 %v3782
      %3830 = vmatpush1.bf16.msra.mxu0 %v3781
      %3831 = vmatprep.subr.bf16.mxu0 %v3785
      %3832 = vmatpush1.bf16.msra.mxu0 %v3784
      %3833 = vmatprep.subr.bf16.mxu0 %v3788
      %3834 = vmatpush1.bf16.msra.mxu0 %v3787
      %3835 = vmatprep.subr.bf16.mxu0 %v3791
      %3836 = vmatpush1.bf16.msra.mxu0 %v3790
      %3837 = vmatprep.subr.bf16.mxu0 %v3794
      %3838 = vmatpush1.bf16.msra.mxu0 %v3793
      %3839 = vmatprep.subr.bf16.mxu0 %v3797
      %3840 = vmatpush1.bf16.msra.mxu0 %v3796
      %3841 = vmatprep.subr.bf16.mxu0 %v3800
      %3842 = vmatpush1.bf16.msra.mxu0 %v3799
      %3843 = vmatprep.subr.bf16.mxu0 %v3803
      %3844 = vmatpush1.bf16.msra.mxu0 %v3802
      %3845 = vmatprep.subr.bf16.mxu0 0
      %3846 = vmatpush1.bf16.msra.mxu0 0
      %3847 = vmatprep.subr.bf16.mxu0 0
      %3848 = vmatpush1.bf16.msra.mxu0 0
      %3849 = vmatprep.subr.bf16.mxu0 0
      %3850 = vmatpush1.bf16.msra.mxu0 0
      %3851 = vmatprep.subr.bf16.mxu0 0
      %3852 = vmatpush1.bf16.msra.mxu0 0
      %3853 = vmatprep.subr.bf16.mxu0 0
      %3854 = vmatpush1.bf16.msra.mxu0 0
      %3855 = vmatprep.subr.bf16.mxu0 0
      %3856 = vmatpush1.bf16.msra.mxu0 0
      %3857 = vmatprep.subr.bf16.mxu0 0
      %3858 = vmatpush1.bf16.msra.mxu0 0
      %3859 = vmatprep.subr.bf16.mxu0 0
      %3860 = vmatpush1.bf16.msra.mxu0 0
      %3861 = vmatprep.mubr.bf16.mxu0 0
      %3862 = vmatmul.mubr.bf16.gmra.mrb[0].mxu0 %v3668
      %v3863 = vpop.f32.mrb[0].mxu0
      %v3864 = vadd.f32 0.0, %v3863
      %v3865 = vpop.f32.mrb[0].mxu0
      %v3866 = vadd.f32 0.0, %v3865
      %v3867 = vpop.f32.mrb[0].mxu0
      %v3868 = vpop.f32.mrb[0].mxu0
      %3869 = vdwg.mxu0
      %3870 = vmatprep.subr.bf16.mxu0 0
      %3871 = vmatpush1.bf16.msra.mxu0 %v3783
      %3872 = vmatprep.subr.bf16.mxu0 0
      %3873 = vmatpush1.bf16.msra.mxu0 %v3786
      %3874 = vmatprep.subr.bf16.mxu0 0
      %3875 = vmatpush1.bf16.msra.mxu0 %v3789
      %3876 = vmatprep.subr.bf16.mxu0 0
      %3877 = vmatpush1.bf16.msra.mxu0 %v3792
      %3878 = vmatprep.subr.bf16.mxu0 0
      %3879 = vmatpush1.bf16.msra.mxu0 %v3795
      %3880 = vmatprep.subr.bf16.mxu0 0
      %3881 = vmatpush1.bf16.msra.mxu0 %v3798
      %3882 = vmatprep.subr.bf16.mxu0 0
      %3883 = vmatpush1.bf16.msra.mxu0 %v3801
      %3884 = vmatprep.subr.bf16.mxu0 0
      %3885 = vmatpush1.bf16.msra.mxu0 %v3804
      %3886 = vmatprep.subr.bf16.mxu0 0
      %3887 = vmatpush1.bf16.msra.mxu0 0
      %3888 = vmatprep.subr.bf16.mxu0 0
      %3889 = vmatpush1.bf16.msra.mxu0 0
      %3890 = vmatprep.subr.bf16.mxu0 0
      %3891 = vmatpush1.bf16.msra.mxu0 0
      %3892 = vmatprep.subr.bf16.mxu0 0
      %3893 = vmatpush1.bf16.msra.mxu0 0
      %3894 = vmatprep.subr.bf16.mxu0 0
      %3895 = vmatpush1.bf16.msra.mxu0 0
      %3896 = vmatprep.subr.bf16.mxu0 0
      %3897 = vmatpush1.bf16.msra.mxu0 0
      %3898 = vmatprep.subr.bf16.mxu0 0
      %3899 = vmatpush1.bf16.msra.mxu0 0
      %3900 = vmatprep.subr.bf16.mxu0 0
      %3901 = vmatpush1.bf16.msra.mxu0 0
      %3902 = vmatprep.mubr.bf16.mxu0 0
      %3903 = vmatmul.mubr.bf16.gmra.mrb[0].mxu0 %v3668
      %v3904 = vpop.f32.mrb[0].mxu0
      %v3905 = vadd.f32 0.0, %v3904
      %v3906 = vpop.f32.mrb[0].mxu0
      %v3907 = vpop.f32.mrb[0].mxu0
      %v3908 = vpop.f32.mrb[0].mxu0
      %3909 = vdwg.mxu0
      %v3910 = vmul.f32 %v3864, 0.17677669
      %v3911 = vpack.c.bf16 %v3910, %v3910
      %v3912 = vpack.c.bf16 %v3866, %v3866
      %v3913 = vpack.c.bf16 %v3905, %v3905
      %v3914 = vld [vmem:[#allocation2] sm:$0xff]
      %v3915 = vld [vmem:[#allocation2 + $0x8] sm:$0xff]
      %v3916 = vld [vmem:[#allocation2 + $0x10] sm:$0xff]
      %v3917 = vld [vmem:[#allocation2 + $0x18] sm:$0xff]
      %v3918 = vsel %vm3643, 1, 0
      %v3919 = vsel %vm3644, 1, 0
      %v3920 = vsel %vm3645, 1, 0
      %v3921 = vsel %vm3646, 1, 0
      %v3922 = vsel %vm3647, 1, 0
      %v3923 = vsel %vm3648, 1, 0
      %v3924 = vsel %vm3649, 1, 0
      %v3925 = vsel %vm3650, 1, 0
      %vm3926 = vcmp.eq.s32.totalorder %v3918, 1
      %vm3927 = vcmp.eq.s32.totalorder %v3919, 1
      %vm3928 = vcmp.eq.s32.totalorder %v3920, 1
      %vm3929 = vcmp.eq.s32.totalorder %v3921, 1
      %vm3930 = vcmp.eq.s32.totalorder %v3922, 1
      %vm3931 = vcmp.eq.s32.totalorder %v3923, 1
      %vm3932 = vcmp.eq.s32.totalorder %v3924, 1
      %vm3933 = vcmp.eq.s32.totalorder %v3925, 1
      %v3935 = vpack.i.b16 %v3912, %v3912
      %v3937 = vlaneseq
      %v3938 = vshrl.u32 %v3937, 7
      %v3939 = vsub.s32 0, %v3938
      %v3940 = vrot.slane %v3935, %v3939
      %vm3941 = vmpackc.low %vm3926, %vm3926
      %vm3942 = vmpackc.low %vm3927, %vm3927
      %vm3943 = vmpackc.low %vm3928, %vm3928
      %vm3944 = vmpackc.low %vm3929, %vm3929
      %vm3945 = vmpackc.low %vm3930, %vm3930
      %vm3946 = vmpackc.low %vm3931, %vm3931
      %vm3947 = vmpackc.low %vm3932, %vm3932
      %vm3948 = vmpackc.low %vm3933, %vm3933
      %v3949 = vsel %vm3941, 65537, 0
      %v3950 = vsel %vm3942, 65537, 0
      %v3951 = vsel %vm3943, 65537, 0
      %v3952 = vsel %vm3944, 65537, 0
      %v3953 = vsel %vm3945, 65537, 0
      %v3954 = vsel %vm3946, 65537, 0
      %v3955 = vsel %vm3947, 65537, 0
      %v3956 = vsel %vm3948, 65537, 0
      %v3957 = vunpack.c.l.b16 %v3949
      %v3958 = vunpack.c.l.b16 %v3950
      %v3959 = vunpack.c.l.b16 %v3951
      %v3960 = vunpack.c.l.b16 %v3952
      %v3961 = vunpack.c.l.b16 %v3953
      %v3962 = vunpack.c.l.b16 %v3954
      %v3963 = vunpack.c.l.b16 %v3955
      %v3964 = vunpack.c.l.b16 %v3956
      %v3965 = vpack.c.b16 %v3958, %v3957
      %v3966 = vpack.c.b16 %v3960, %v3959
      %v3967 = vpack.c.b16 %v3962, %v3961
      %v3968 = vpack.c.b16 %v3964, %v3963
      %vm3969 = vcmp.ne.s16.totalorder %v3965, 0
      %vm3970 = vcmp.ne.s16.totalorder %v3966, 0
      %vm3971 = vcmp.ne.s16.totalorder %v3967, 0
      %vm3972 = vcmp.ne.s16.totalorder %v3968, 0
      %v3973 = vsel %vm3969, %v3940, %v3914
      %v3974 = vsel %vm3970, %v3940, %v3915
      %v3975 = vsel %vm3971, %v3940, %v3916
      %v3976 = vsel %vm3972, %v3940, %v3917
      %v3977 = vld [vmem:[#allocation3] sm:$0xff]
      %v3978 = vld [vmem:[#allocation3 + $0x8] sm:$0xff]
      %v3979 = vld [vmem:[#allocation3 + $0x10] sm:$0xff]
      %v3980 = vld [vmem:[#allocation3 + $0x18] sm:$0xff]
      %v3982 = vpack.i.b16 %v3913, %v3913
      %v3984 = vlaneseq
      %v3985 = vshrl.u32 %v3984, 7
      %v3986 = vsub.s32 0, %v3985
      %v3987 = vrot.slane %v3982, %v3986
      %v3988 = vsel %vm3969, %v3987, %v3977
      %v3989 = vsel %vm3970, %v3987, %v3978
      %v3990 = vsel %vm3971, %v3987, %v3979
      %v3991 = vsel %vm3972, %v3987, %v3980
      %3992 = vst [vmem:[#allocation2] sm:$0xff] %v3973
      %3993 = vst [vmem:[#allocation2 + $0x8] sm:$0xff] %v3974
      %3994 = vst [vmem:[#allocation2 + $0x10] sm:$0xff] %v3975
      %3995 = vst [vmem:[#allocation2 + $0x18] sm:$0xff] %v3976
      %3996 = vst [vmem:[#allocation3] sm:$0xff] %v3988
      %3997 = vst [vmem:[#allocation3 + $0x8] sm:$0xff] %v3989
      %3998 = vst [vmem:[#allocation3 + $0x10] sm:$0xff] %v3990
      %3999 = vst [vmem:[#allocation3 + $0x18] sm:$0xff] %v3991
      %v4001 = vsel %vm665, %v3911, 0
      %v4004 = vsel %vm665, %v3973, 0
      %v4007 = vsel %vm665, %v3974, 0
      %v4010 = vsel %vm665, %v3975, 0
      %v4013 = vsel %vm665, %v3976, 0
      %4015 = vmatprep.subr.bf16.mxu0 0
      %4016 = vmatpush1.bf16.xpose.msra.mxu0 %v4004
      %4017 = vmatprep.subr.bf16.mxu0 0
      %4018 = vmatpush1.bf16.xpose.msra.mxu0 %v4007
      %4019 = vmatprep.subr.bf16.mxu0 0
      %4020 = vmatpush1.bf16.xpose.msra.mxu0 %v4010
      %4021 = vmatprep.subr.bf16.mxu0 0
      %4022 = vmatpush1.bf16.xpose.msra.mxu0 %v4013
      %4023 = vmatprep.subr.bf16.mxu0 0
      %4024 = vmatpush1.bf16.xpose.msra.mxu0 0
      %4025 = vmatprep.subr.bf16.mxu0 0
      %4026 = vmatpush1.bf16.xpose.msra.mxu0 0
      %4027 = vmatprep.subr.bf16.mxu0 0
      %4028 = vmatpush1.bf16.xpose.msra.mxu0 0
      %4029 = vmatprep.subr.bf16.mxu0 0
      %4030 = vmatpush1.bf16.xpose.msra.mxu0 0
      %4031 = vmatprep.subr.bf16.mxu0 0
      %4032 = vmatpush1.bf16.xpose.msra.mxu0 0
      %4033 = vmatprep.subr.bf16.mxu0 0
      %4034 = vmatpush1.bf16.xpose.msra.mxu0 0
      %4035 = vmatprep.subr.bf16.mxu0 0
      %4036 = vmatpush1.bf16.xpose.msra.mxu0 0
      %4037 = vmatprep.subr.bf16.mxu0 0
      %4038 = vmatpush1.bf16.xpose.msra.mxu0 0
      %4039 = vmatprep.subr.bf16.mxu0 0
      %4040 = vmatpush1.bf16.xpose.msra.mxu0 0
      %4041 = vmatprep.subr.bf16.mxu0 0
      %4042 = vmatpush1.bf16.xpose.msra.mxu0 0
      %4043 = vmatprep.subr.bf16.mxu0 0
      %4044 = vmatpush1.bf16.xpose.msra.mxu0 0
      %4045 = vmatprep.subr.bf16.mxu0 0
      %4046 = vmatpush1.bf16.xpose.msra.mxu0 0
      %4047 = vmatprep.mubr.bf16.mxu0 0
      %4048 = vmatmul.mubr.bf16.gmra.mrb[0].mxu0 %v4001
      %v4049 = vpop.f32.mrb[0].mxu0
      %v4050 = vadd.f32 0.0, %v4049
      %v4051 = vpop.f32.mrb[0].mxu0
      %v4052 = vpop.f32.mrb[0].mxu0
      %v4053 = vpop.f32.mrb[0].mxu0
      %4054 = vdwg.mxu0
      %4056 = vrot.lane.b32.xlu0 %v3911, 96
      %v4057 = vpop.permute.xlu0 %4056
      %4062 = vrot.lane.b32.xlu0 %v3973, 96
      %v4063 = vpop.permute.xlu0 %4062
      %4064 = vrot.lane.b32.xlu0 %v3974, 96
      %v4065 = vpop.permute.xlu0 %4064
      %4066 = vrot.lane.b32.xlu0 %v3975, 96
      %v4067 = vpop.permute.xlu0 %4066
      %4068 = vrot.lane.b32.xlu0 %v3976, 96
      %v4069 = vpop.permute.xlu0 %4068
      %v4071 = vsel %vm665, %v4057, 0
      %v4074 = vsel %vm665, %v4063, 0
      %v4077 = vsel %vm665, %v4065, 0
      %v4080 = vsel %vm665, %v4067, 0
      %v4083 = vsel %vm665, %v4069, 0
      %4085 = vmatprep.subr.bf16.mxu0 0
      %4086 = vmatpush1.bf16.xpose.msra.mxu0 %v4074
      %4087 = vmatprep.subr.bf16.mxu0 0
      %4088 = vmatpush1.bf16.xpose.msra.mxu0 %v4077
      %4089 = vmatprep.subr.bf16.mxu0 0
      %4090 = vmatpush1.bf16.xpose.msra.mxu0 %v4080
      %4091 = vmatprep.subr.bf16.mxu0 0
      %4092 = vmatpush1.bf16.xpose.msra.mxu0 %v4083
      %4093 = vmatprep.subr.bf16.mxu0 0
      %4094 = vmatpush1.bf16.xpose.msra.mxu0 0
      %4095 = vmatprep.subr.bf16.mxu0 0
      %4096 = vmatpush1.bf16.xpose.msra.mxu0 0
      %4097 = vmatprep.subr.bf16.mxu0 0
      %4098 = vmatpush1.bf16.xpose.msra.mxu0 0
      %4099 = vmatprep.subr.bf16.mxu0 0
      %4100 = vmatpush1.bf16.xpose.msra.mxu0 0
      %4101 = vmatprep.subr.bf16.mxu0 0
      %4102 = vmatpush1.bf16.xpose.msra.mxu0 0
      %4103 = vmatprep.subr.bf16.mxu0 0
      %4104 = vmatpush1.bf16.xpose.msra.mxu0 0
      %4105 = vmatprep.subr.bf16.mxu0 0
      %4106 = vmatpush1.bf16.xpose.msra.mxu0 0
      %4107 = vmatprep.subr.bf16.mxu0 0
      %4108 = vmatpush1.bf16.xpose.msra.mxu0 0
      %4109 = vmatprep.subr.bf16.mxu0 0
      %4110 = vmatpush1.bf16.xpose.msra.mxu0 0
      %4111 = vmatprep.subr.bf16.mxu0 0
      %4112 = vmatpush1.bf16.xpose.msra.mxu0 0
      %4113 = vmatprep.subr.bf16.mxu0 0
      %4114 = vmatpush1.bf16.xpose.msra.mxu0 0
      %4115 = vmatprep.subr.bf16.mxu0 0
      %4116 = vmatpush1.bf16.xpose.msra.mxu0 0
      %4117 = vmatprep.mubr.bf16.mxu0 0
      %4118 = vmatmul.mubr.bf16.gmra.mrb[0].mxu0 %v4071
      %v4119 = vpop.f32.mrb[0].mxu0
      %v4120 = vadd.f32 0.0, %v4119
      %v4121 = vpop.f32.mrb[0].mxu0
      %v4122 = vpop.f32.mrb[0].mxu0
      %v4123 = vpop.f32.mrb[0].mxu0
      %4124 = vdwg.mxu0
      %4125 = vrot.lane.b32.xlu0 %v3911, 64
      %v4126 = vpop.permute.xlu0 %4125
      %4127 = vrot.lane.b32.xlu0 %v3973, 64
      %v4128 = vpop.permute.xlu0 %4127
      %4129 = vrot.lane.b32.xlu0 %v3974, 64
      %v4130 = vpop.permute.xlu0 %4129
      %4131 = vrot.lane.b32.xlu0 %v3975, 64
      %v4132 = vpop.permute.xlu0 %4131
      %4133 = vrot.lane.b32.xlu0 %v3976, 64
      %v4134 = vpop.permute.xlu0 %4133
      %v4136 = vsel %vm665, %v4126, 0
      %v4139 = vsel %vm665, %v4128, 0
      %v4142 = vsel %vm665, %v4130, 0
      %v4145 = vsel %vm665, %v4132, 0
      %v4148 = vsel %vm665, %v4134, 0
      %4150 = vmatprep.subr.bf16.mxu0 0
      %4151 = vmatpush1.bf16.xpose.msra.mxu0 %v4139
      %4152 = vmatprep.subr.bf16.mxu0 0
      %4153 = vmatpush1.bf16.xpose.msra.mxu0 %v4142
      %4154 = vmatprep.subr.bf16.mxu0 0
      %4155 = vmatpush1.bf16.xpose.msra.mxu0 %v4145
      %4156 = vmatprep.subr.bf16.mxu0 0
      %4157 = vmatpush1.bf16.xpose.msra.mxu0 %v4148
      %4158 = vmatprep.subr.bf16.mxu0 0
      %4159 = vmatpush1.bf16.xpose.msra.mxu0 0
      %4160 = vmatprep.subr.bf16.mxu0 0
      %4161 = vmatpush1.bf16.xpose.msra.mxu0 0
      %4162 = vmatprep.subr.bf16.mxu0 0
      %4163 = vmatpush1.bf16.xpose.msra.mxu0 0
      %4164 = vmatprep.subr.bf16.mxu0 0
      %4165 = vmatpush1.bf16.xpose.msra.mxu0 0
      %4166 = vmatprep.subr.bf16.mxu0 0
      %4167 = vmatpush1.bf16.xpose.msra.mxu0 0
      %4168 = vmatprep.subr.bf16.mxu0 0
      %4169 = vmatpush1.bf16.xpose.msra.mxu0 0
      %4170 = vmatprep.subr.bf16.mxu0 0
      %4171 = vmatpush1.bf16.xpose.msra.mxu0 0
      %4172 = vmatprep.subr.bf16.mxu0 0
      %4173 = vmatpush1.bf16.xpose.msra.mxu0 0
      %4174 = vmatprep.subr.bf16.mxu0 0
      %4175 = vmatpush1.bf16.xpose.msra.mxu0 0
      %4176 = vmatprep.subr.bf16.mxu0 0
      %4177 = vmatpush1.bf16.xpose.msra.mxu0 0
      %4178 = vmatprep.subr.bf16.mxu0 0
      %4179 = vmatpush1.bf16.xpose.msra.mxu0 0
      %4180 = vmatprep.subr.bf16.mxu0 0
      %4181 = vmatpush1.bf16.xpose.msra.mxu0 0
      %4182 = vmatprep.mubr.bf16.mxu0 0
      %4183 = vmatmul.mubr.bf16.gmra.mrb[0].mxu0 %v4136
      %v4184 = vpop.f32.mrb[0].mxu0
      %v4185 = vadd.f32 0.0, %v4184
      %v4186 = vpop.f32.mrb[0].mxu0
      %v4187 = vpop.f32.mrb[0].mxu0
      %v4188 = vpop.f32.mrb[0].mxu0
      %4189 = vdwg.mxu0
      %4190 = vrot.lane.b32.xlu0 %v3911, 32
      %v4191 = vpop.permute.xlu0 %4190
      %4192 = vrot.lane.b32.xlu0 %v3973, 32
      %v4193 = vpop.permute.xlu0 %4192
      %4194 = vrot.lane.b32.xlu0 %v3974, 32
      %v4195 = vpop.permute.xlu0 %4194
      %4196 = vrot.lane.b32.xlu0 %v3975, 32
      %v4197 = vpop.permute.xlu0 %4196
      %4198 = vrot.lane.b32.xlu0 %v3976, 32
      %v4199 = vpop.permute.xlu0 %4198
      %v4201 = vsel %vm665, %v4191, 0
      %v4204 = vsel %vm665, %v4193, 0
      %v4207 = vsel %vm665, %v4195, 0
      %v4210 = vsel %vm665, %v4197, 0
      %v4213 = vsel %vm665, %v4199, 0
      %4215 = vmatprep.subr.bf16.mxu0 0
      %4216 = vmatpush1.bf16.xpose.msra.mxu0 %v4204
      %4217 = vmatprep.subr.bf16.mxu0 0
      %4218 = vmatpush1.bf16.xpose.msra.mxu0 %v4207
      %4219 = vmatprep.subr.bf16.mxu0 0
      %4220 = vmatpush1.bf16.xpose.msra.mxu0 %v4210
      %4221 = vmatprep.subr.bf16.mxu0 0
      %4222 = vmatpush1.bf16.xpose.msra.mxu0 %v4213
      %4223 = vmatprep.subr.bf16.mxu0 0
      %4224 = vmatpush1.bf16.xpose.msra.mxu0 0
      %4225 = vmatprep.subr.bf16.mxu0 0
      %4226 = vmatpush1.bf16.xpose.msra.mxu0 0
      %4227 = vmatprep.subr.bf16.mxu0 0
      %4228 = vmatpush1.bf16.xpose.msra.mxu0 0
      %4229 = vmatprep.subr.bf16.mxu0 0
      %4230 = vmatpush1.bf16.xpose.msra.mxu0 0
      %4231 = vmatprep.subr.bf16.mxu0 0
      %4232 = vmatpush1.bf16.xpose.msra.mxu0 0
      %4233 = vmatprep.subr.bf16.mxu0 0
      %4234 = vmatpush1.bf16.xpose.msra.mxu0 0
      %4235 = vmatprep.subr.bf16.mxu0 0
      %4236 = vmatpush1.bf16.xpose.msra.mxu0 0
      %4237 = vmatprep.subr.bf16.mxu0 0
      %4238 = vmatpush1.bf16.xpose.msra.mxu0 0
      %4239 = vmatprep.subr.bf16.mxu0 0
      %4240 = vmatpush1.bf16.xpose.msra.mxu0 0
      %4241 = vmatprep.subr.bf16.mxu0 0
      %4242 = vmatpush1.bf16.xpose.msra.mxu0 0
      %4243 = vmatprep.subr.bf16.mxu0 0
      %4244 = vmatpush1.bf16.xpose.msra.mxu0 0
      %4245 = vmatprep.subr.bf16.mxu0 0
      %4246 = vmatpush1.bf16.xpose.msra.mxu0 0
      %4247 = vmatprep.mubr.bf16.mxu0 0
      %4248 = vmatmul.mubr.bf16.gmra.mrb[0].mxu0 %v4201
      %v4249 = vpop.f32.mrb[0].mxu0
      %v4250 = vadd.f32 0.0, %v4249
      %v4251 = vpop.f32.mrb[0].mxu0
      %v4252 = vpop.f32.mrb[0].mxu0
      %v4253 = vpop.f32.mrb[0].mxu0
      %4254 = vdwg.mxu0
      %v4256 = vrot.slane %v4120, 7
      %v4259 = vrot.slane %v4185, 6
      %v4262 = vrot.slane %v4250, 5
      %v4264 = vsel %vm3239, %v4050, %v4256
      %vm4265 = vcmask 1041408
      %v4266 = vsel %vm4265, %v4264, %v4259
      %vm4267 = vcmask 1042432
      %v4268 = vsel %vm4267, %v4266, %v4262
      %v4269 = vsel %vm3642, 1, 0
      %vm4270 = vcmp.eq.s32.totalorder %v4269, 1
      %v4271 = vsel %vm4270, %v4268, -1e+30
      %vm4272 = vcmask 519168
      %v4273 = vsel %vm4272, %v4271, -inf
      %4274 = vmax.xlane.f32.xlu0 %v4273
      %v4275 = vpop.xlane.xlu0 %4274
      %v4276 = vsub.f32 %v4271, %v4275
      %v4277 = vmul.f32 %v4276, 1.442695
      %v4278 = vpow.pop %v4277
      %v4279 = vsel %vm4270, %v4278, 0.0
      %v4280 = vsel %vm4272, %v4279, 0.0
      %4281 = vadd.xlane.f32.xlu0 %v4280
      %v4282 = vpop.xlane.xlu0 %4281
      %v4283 = vrcp.pop %v4282
      %v4284 = vmul.f32 %v4279, %v4283
      %v4285 = vpack.c.bf16 %v4284, %v4284
      %vm4286 = vcmask 523264
      %v4288 = vsel %vm4286, %v4285, 0
      %4290 = vmatprep.subr.bf16.mxu0 0
      %4291 = vmatpush1.bf16.msra.mxu0 %v3988
      %4292 = vmatprep.subr.bf16.mxu0 0
      %4293 = vmatpush1.bf16.msra.mxu0 %v3989
      %4294 = vmatprep.subr.bf16.mxu0 0
      %4295 = vmatpush1.bf16.msra.mxu0 %v3990
      %4296 = vmatprep.subr.bf16.mxu0 0
      %4297 = vmatpush1.bf16.msra.mxu0 %v3991
      %4298 = vmatprep.subr.bf16.mxu0 0
      %4299 = vmatpush1.bf16.msra.mxu0 0
      %4300 = vmatprep.subr.bf16.mxu0 0
      %4301 = vmatpush1.bf16.msra.mxu0 0
      %4302 = vmatprep.subr.bf16.mxu0 0
      %4303 = vmatpush1.bf16.msra.mxu0 0
      %4304 = vmatprep.subr.bf16.mxu0 0
      %4305 = vmatpush1.bf16.msra.mxu0 0
      %4306 = vmatprep.subr.bf16.mxu0 0
      %4307 = vmatpush1.bf16.msra.mxu0 0
      %4308 = vmatprep.subr.bf16.mxu0 0
      %4309 = vmatpush1.bf16.msra.mxu0 0
      %4310 = vmatprep.subr.bf16.mxu0 0
      %4311 = vmatpush1.bf16.msra.mxu0 0
      %4312 = vmatprep.subr.bf16.mxu0 0
      %4313 = vmatpush1.bf16.msra.mxu0 0
      %4314 = vmatprep.subr.bf16.mxu0 0
      %4315 = vmatpush1.bf16.msra.mxu0 0
      %4316 = vmatprep.subr.bf16.mxu0 0
      %4317 = vmatpush1.bf16.msra.mxu0 0
      %4318 = vmatprep.subr.bf16.mxu0 0
      %4319 = vmatpush1.bf16.msra.mxu0 0
      %4320 = vmatprep.subr.bf16.mxu0 0
      %4321 = vmatpush1.bf16.msra.mxu0 0
      %4322 = vmatprep.mubr.bf16.mxu0 0
      %4323 = vmatmul.mubr.bf16.gmra.mrb[0].mxu0 %v4288
      %v4324 = vpop.f32.mrb[0].mxu0
      %v4325 = vadd.f32 0.0, %v4324
      %v4326 = vpop.f32.mrb[0].mxu0
      %v4327 = vpop.f32.mrb[0].mxu0
      %v4328 = vpop.f32.mrb[0].mxu0
      %4329 = vdwg.mxu0
      %v4330 = vpack.c.bf16 %v4325, %v4325
      %v4331 = vld [vmem:[#allocation8] sm:$0xf]
      %v4332 = vld [vmem:[#allocation8 + $0x4] sm:$0xf]
      %v4333 = vld [vmem:[#allocation8 + $0x8] sm:$0xf]
      %v4334 = vld [vmem:[#allocation8 + $0xc] sm:$0xf]
      %v4335 = vshrl.u32 %v4285, 16
      %4341 = vrot.lane.b32.xlu0 %v3988, 96
      %v4342 = vpop.permute.xlu0 %4341
      %4343 = vrot.lane.b32.xlu0 %v3989, 96
      %v4344 = vpop.permute.xlu0 %4343
      %4345 = vrot.lane.b32.xlu0 %v3990, 96
      %v4346 = vpop.permute.xlu0 %4345
      %4347 = vrot.lane.b32.xlu0 %v3991, 96
      %v4348 = vpop.permute.xlu0 %4347
      %v4354 = vsel %vm4286, %v4335, 0
      %4356 = vmatprep.subr.bf16.mxu0 0
      %4357 = vmatpush1.bf16.msra.mxu0 %v4342
      %4358 = vmatprep.subr.bf16.mxu0 0
      %4359 = vmatpush1.bf16.msra.mxu0 %v4344
      %4360 = vmatprep.subr.bf16.mxu0 0
      %4361 = vmatpush1.bf16.msra.mxu0 %v4346
      %4362 = vmatprep.subr.bf16.mxu0 0
      %4363 = vmatpush1.bf16.msra.mxu0 %v4348
      %4364 = vmatprep.subr.bf16.mxu0 0
      %4365 = vmatpush1.bf16.msra.mxu0 0
      %4366 = vmatprep.subr.bf16.mxu0 0
      %4367 = vmatpush1.bf16.msra.mxu0 0
      %4368 = vmatprep.subr.bf16.mxu0 0
      %4369 = vmatpush1.bf16.msra.mxu0 0
      %4370 = vmatprep.subr.bf16.mxu0 0
      %4371 = vmatpush1.bf16.msra.mxu0 0
      %4372 = vmatprep.subr.bf16.mxu0 0
      %4373 = vmatpush1.bf16.msra.mxu0 0
      %4374 = vmatprep.subr.bf16.mxu0 0
      %4375 = vmatpush1.bf16.msra.mxu0 0
      %4376 = vmatprep.subr.bf16.mxu0 0
      %4377 = vmatpush1.bf16.msra.mxu0 0
      %4378 = vmatprep.subr.bf16.mxu0 0
      %4379 = vmatpush1.bf16.msra.mxu0 0
      %4380 = vmatprep.subr.bf16.mxu0 0
      %4381 = vmatpush1.bf16.msra.mxu0 0
      %4382 = vmatprep.subr.bf16.mxu0 0
      %4383 = vmatpush1.bf16.msra.mxu0 0
      %4384 = vmatprep.subr.bf16.mxu0 0
      %4385 = vmatpush1.bf16.msra.mxu0 0
      %4386 = vmatprep.subr.bf16.mxu0 0
      %4387 = vmatpush1.bf16.msra.mxu0 0
      %4388 = vmatprep.mubr.bf16.mxu0 0
      %4389 = vmatmul.mubr.bf16.gmra.mrb[0].mxu0 %v4354
      %v4390 = vpop.f32.mrb[0].mxu0
      %v4391 = vadd.f32 0.0, %v4390
      %v4392 = vpop.f32.mrb[0].mxu0
      %v4393 = vpop.f32.mrb[0].mxu0
      %v4394 = vpop.f32.mrb[0].mxu0
      %4395 = vdwg.mxu0
      %v4396 = vpack.c.bf16 %v4391, %v4391
      %v4397 = vld [vmem:[#allocation8 + $0x10] sm:$0xf]
      %v4398 = vld [vmem:[#allocation8 + $0x14] sm:$0xf]
      %v4399 = vld [vmem:[#allocation8 + $0x18] sm:$0xf]
      %v4400 = vld [vmem:[#allocation8 + $0x1c] sm:$0xf]
      %v4405 = vunpack.c.l.b16 %v4397
      %v4406 = vunpack.c.l.b16 %v4398
      %v4407 = vunpack.c.l.b16 %v4399
      %v4408 = vunpack.c.l.b16 %v4400
      %v4409 = vpack.c.b16 %v4406, %v4405
      %v4410 = vpack.c.b16 %v4408, %v4407
      %v4414 = vsel %vm665, %v4396, 0
      %4416 = vmatprep.subr.bf16.mxu0 0
      %4417 = vmatpush1.bf16.msra.mxu0 %v4409
      %4418 = vmatprep.subr.bf16.mxu0 0
      %4419 = vmatpush1.bf16.msra.mxu0 %v4410
      %4420 = vmatprep.subr.bf16.mxu0 0
      %4421 = vmatpush1.bf16.msra.mxu0 0
      %4422 = vmatprep.subr.bf16.mxu0 0
      %4423 = vmatpush1.bf16.msra.mxu0 0
      %4424 = vmatprep.subr.bf16.mxu0 0
      %4425 = vmatpush1.bf16.msra.mxu0 0
      %4426 = vmatprep.subr.bf16.mxu0 0
      %4427 = vmatpush1.bf16.msra.mxu0 0
      %4428 = vmatprep.subr.bf16.mxu0 0
      %4429 = vmatpush1.bf16.msra.mxu0 0
      %4430 = vmatprep.subr.bf16.mxu0 0
      %4431 = vmatpush1.bf16.msra.mxu0 0
      %4432 = vmatprep.subr.bf16.mxu0 0
      %4433 = vmatpush1.bf16.msra.mxu0 0
      %4434 = vmatprep.subr.bf16.mxu0 0
      %4435 = vmatpush1.bf16.msra.mxu0 0
      %4436 = vmatprep.subr.bf16.mxu0 0
      %4437 = vmatpush1.bf16.msra.mxu0 0
      %4438 = vmatprep.subr.bf16.mxu0 0
      %4439 = vmatpush1.bf16.msra.mxu0 0
      %4440 = vmatprep.subr.bf16.mxu0 0
      %4441 = vmatpush1.bf16.msra.mxu0 0
      %4442 = vmatprep.subr.bf16.mxu0 0
      %4443 = vmatpush1.bf16.msra.mxu0 0
      %4444 = vmatprep.subr.bf16.mxu0 0
      %4445 = vmatpush1.bf16.msra.mxu0 0
      %4446 = vmatprep.subr.bf16.mxu0 0
      %4447 = vmatpush1.bf16.msra.mxu0 0
      %4448 = vmatprep.mubr.bf16.mxu0 0
      %4449 = vmatmul.mubr.bf16.gmra.mrb[0].mxu0 %v4414
      %v4450 = vpop.f32.mrb[0].mxu0
      %v4451 = vadd.f32 0.0, %v4450
      %v4452 = vpop.f32.mrb[0].mxu0
      %v4453 = vpop.f32.mrb[0].mxu0
      %v4454 = vpop.f32.mrb[0].mxu0
      %4455 = vdwg.mxu0
      %v4460 = vunpack.c.l.b16 %v4331
      %v4461 = vunpack.c.l.b16 %v4332
      %v4462 = vunpack.c.l.b16 %v4333
      %v4463 = vunpack.c.l.b16 %v4334
      %v4464 = vpack.c.b16 %v4461, %v4460
      %v4465 = vpack.c.b16 %v4463, %v4462
      %v4469 = vsel %vm665, %v4330, 0
      %4471 = vmatprep.subr.bf16.mxu0 0
      %4472 = vmatpush1.bf16.msra.mxu0 %v4464
      %4473 = vmatprep.subr.bf16.mxu0 0
      %4474 = vmatpush1.bf16.msra.mxu0 %v4465
      %4475 = vmatprep.subr.bf16.mxu0 0
      %4476 = vmatpush1.bf16.msra.mxu0 0
      %4477 = vmatprep.subr.bf16.mxu0 0
      %4478 = vmatpush1.bf16.msra.mxu0 0
      %4479 = vmatprep.subr.bf16.mxu0 0
      %4480 = vmatpush1.bf16.msra.mxu0 0
      %4481 = vmatprep.subr.bf16.mxu0 0
      %4482 = vmatpush1.bf16.msra.mxu0 0
      %4483 = vmatprep.subr.bf16.mxu0 0
      %4484 = vmatpush1.bf16.msra.mxu0 0
      %4485 = vmatprep.subr.bf16.mxu0 0
      %4486 = vmatpush1.bf16.msra.mxu0 0
      %4487 = vmatprep.subr.bf16.mxu0 0
      %4488 = vmatpush1.bf16.msra.mxu0 0
      %4489 = vmatprep.subr.bf16.mxu0 0
      %4490 = vmatpush1.bf16.msra.mxu0 0
      %4491 = vmatprep.subr.bf16.mxu0 0
      %4492 = vmatpush1.bf16.msra.mxu0 0
      %4493 = vmatprep.subr.bf16.mxu0 0
      %4494 = vmatpush1.bf16.msra.mxu0 0
      %4495 = vmatprep.subr.bf16.mxu0 0
      %4496 = vmatpush1.bf16.msra.mxu0 0
      %4497 = vmatprep.subr.bf16.mxu0 0
      %4498 = vmatpush1.bf16.msra.mxu0 0
      %4499 = vmatprep.subr.bf16.mxu0 0
      %4500 = vmatpush1.bf16.msra.mxu0 0
      %4501 = vmatprep.subr.bf16.mxu0 0
      %4502 = vmatpush1.bf16.msra.mxu0 0
      %4503 = vmatprep.mubr.bf16.mxu0 0
      %4504 = vmatmul.mubr.bf16.gmra.mrb[0].mxu0 %v4469
      %v4505 = vpop.f32.mrb[0].mxu0
      %v4506 = vadd.f32 %v4451, %v4505
      %v4507 = vpop.f32.mrb[0].mxu0
      %v4508 = vpop.f32.mrb[0].mxu0
      %v4509 = vpop.f32.mrb[0].mxu0
      %4510 = vdwg.mxu0
      %v4512 = vrot.slane %v4285, 1
      %4513 = vrot.lane.b32.xlu0 %v3988, 64
      %v4514 = vpop.permute.xlu0 %4513
      %4515 = vrot.lane.b32.xlu0 %v3989, 64
      %v4516 = vpop.permute.xlu0 %4515
      %4517 = vrot.lane.b32.xlu0 %v3990, 64
      %v4518 = vpop.permute.xlu0 %4517
      %4519 = vrot.lane.b32.xlu0 %v3991, 64
      %v4520 = vpop.permute.xlu0 %4519
      %v4526 = vsel %vm4286, %v4512, 0
      %4528 = vmatprep.subr.bf16.mxu0 0
      %4529 = vmatpush1.bf16.msra.mxu0 %v4514
      %4530 = vmatprep.subr.bf16.mxu0 0
      %4531 = vmatpush1.bf16.msra.mxu0 %v4516
      %4532 = vmatprep.subr.bf16.mxu0 0
      %4533 = vmatpush1.bf16.msra.mxu0 %v4518
      %4534 = vmatprep.subr.bf16.mxu0 0
      %4535 = vmatpush1.bf16.msra.mxu0 %v4520
      %4536 = vmatprep.subr.bf16.mxu0 0
      %4537 = vmatpush1.bf16.msra.mxu0 0
      %4538 = vmatprep.subr.bf16.mxu0 0
      %4539 = vmatpush1.bf16.msra.mxu0 0
      %4540 = vmatprep.subr.bf16.mxu0 0
      %4541 = vmatpush1.bf16.msra.mxu0 0
      %4542 = vmatprep.subr.bf16.mxu0 0
      %4543 = vmatpush1.bf16.msra.mxu0 0
      %4544 = vmatprep.subr.bf16.mxu0 0
      %4545 = vmatpush1.bf16.msra.mxu0 0
      %4546 = vmatprep.subr.bf16.mxu0 0
      %4547 = vmatpush1.bf16.msra.mxu0 0
      %4548 = vmatprep.subr.bf16.mxu0 0
      %4549 = vmatpush1.bf16.msra.mxu0 0
      %4550 = vmatprep.subr.bf16.mxu0 0
      %4551 = vmatpush1.bf16.msra.mxu0 0
      %4552 = vmatprep.subr.bf16.mxu0 0
      %4553 = vmatpush1.bf16.msra.mxu0 0
      %4554 = vmatprep.subr.bf16.mxu0 0
      %4555 = vmatpush1.bf16.msra.mxu0 0
      %4556 = vmatprep.subr.bf16.mxu0 0
      %4557 = vmatpush1.bf16.msra.mxu0 0
      %4558 = vmatprep.subr.bf16.mxu0 0
      %4559 = vmatpush1.bf16.msra.mxu0 0
      %4560 = vmatprep.mubr.bf16.mxu0 0
      %4561 = vmatmul.mubr.bf16.gmra.mrb[0].mxu0 %v4526
      %v4562 = vpop.f32.mrb[0].mxu0
      %v4563 = vadd.f32 0.0, %v4562
      %v4564 = vpop.f32.mrb[0].mxu0
      %v4565 = vpop.f32.mrb[0].mxu0
      %v4566 = vpop.f32.mrb[0].mxu0
      %4567 = vdwg.mxu0
      %v4568 = vpack.c.bf16 %v4563, %v4563
      %v4569 = vld [vmem:[#allocation8 + $0x20] sm:$0xf]
      %v4570 = vld [vmem:[#allocation8 + $0x24] sm:$0xf]
      %v4571 = vld [vmem:[#allocation8 + $0x28] sm:$0xf]
      %v4572 = vld [vmem:[#allocation8 + $0x2c] sm:$0xf]
      %v4577 = vunpack.c.l.b16 %v4569
      %v4578 = vunpack.c.l.b16 %v4570
      %v4579 = vunpack.c.l.b16 %v4571
      %v4580 = vunpack.c.l.b16 %v4572
      %v4581 = vpack.c.b16 %v4578, %v4577
      %v4582 = vpack.c.b16 %v4580, %v4579
      %v4586 = vsel %vm665, %v4568, 0
      %4588 = vmatprep.subr.bf16.mxu0 0
      %4589 = vmatpush1.bf16.msra.mxu0 %v4581
      %4590 = vmatprep.subr.bf16.mxu0 0
      %4591 = vmatpush1.bf16.msra.mxu0 %v4582
      %4592 = vmatprep.subr.bf16.mxu0 0
      %4593 = vmatpush1.bf16.msra.mxu0 0
      %4594 = vmatprep.subr.bf16.mxu0 0
      %4595 = vmatpush1.bf16.msra.mxu0 0
      %4596 = vmatprep.subr.bf16.mxu0 0
      %4597 = vmatpush1.bf16.msra.mxu0 0
      %4598 = vmatprep.subr.bf16.mxu0 0
      %4599 = vmatpush1.bf16.msra.mxu0 0
      %4600 = vmatprep.subr.bf16.mxu0 0
      %4601 = vmatpush1.bf16.msra.mxu0 0
      %4602 = vmatprep.subr.bf16.mxu0 0
      %4603 = vmatpush1.bf16.msra.mxu0 0
      %4604 = vmatprep.subr.bf16.mxu0 0
      %4605 = vmatpush1.bf16.msra.mxu0 0
      %4606 = vmatprep.subr.bf16.mxu0 0
      %4607 = vmatpush1.bf16.msra.mxu0 0
      %4608 = vmatprep.subr.bf16.mxu0 0
      %4609 = vmatpush1.bf16.msra.mxu0 0
      %4610 = vmatprep.subr.bf16.mxu0 0
      %4611 = vmatpush1.bf16.msra.mxu0 0
      %4612 = vmatprep.subr.bf16.mxu0 0
      %4613 = vmatpush1.bf16.msra.mxu0 0
      %4614 = vmatprep.subr.bf16.mxu0 0
      %4615 = vmatpush1.bf16.msra.mxu0 0
      %4616 = vmatprep.subr.bf16.mxu0 0
      %4617 = vmatpush1.bf16.msra.mxu0 0
      %4618 = vmatprep.subr.bf16.mxu0 0
      %4619 = vmatpush1.bf16.msra.mxu0 0
      %4620 = vmatprep.mubr.bf16.mxu0 0
      %4621 = vmatmul.mubr.bf16.gmra.mrb[0].mxu0 %v4586
      %v4622 = vpop.f32.mrb[0].mxu0
      %v4623 = vadd.f32 0.0, %v4622
      %v4624 = vpop.f32.mrb[0].mxu0
      %v4625 = vpop.f32.mrb[0].mxu0
      %v4626 = vpop.f32.mrb[0].mxu0
      %4627 = vdwg.mxu0
      %v4628 = vadd.f32 %v4506, %v4623
      %v4629 = vrot.slane %v4335, 1
      %4630 = vrot.lane.b32.xlu0 %v3988, 32
      %v4631 = vpop.permute.xlu0 %4630
      %4632 = vrot.lane.b32.xlu0 %v3989, 32
      %v4633 = vpop.permute.xlu0 %4632
      %4634 = vrot.lane.b32.xlu0 %v3990, 32
      %v4635 = vpop.permute.xlu0 %4634
      %4636 = vrot.lane.b32.xlu0 %v3991, 32
      %v4637 = vpop.permute.xlu0 %4636
      %v4643 = vsel %vm4286, %v4629, 0
      %4645 = vmatprep.subr.bf16.mxu0 0
      %4646 = vmatpush1.bf16.msra.mxu0 %v4631
      %4647 = vmatprep.subr.bf16.mxu0 0
      %4648 = vmatpush1.bf16.msra.mxu0 %v4633
      %4649 = vmatprep.subr.bf16.mxu0 0
      %4650 = vmatpush1.bf16.msra.mxu0 %v4635
      %4651 = vmatprep.subr.bf16.mxu0 0
      %4652 = vmatpush1.bf16.msra.mxu0 %v4637
      %4653 = vmatprep.subr.bf16.mxu0 0
      %4654 = vmatpush1.bf16.msra.mxu0 0
      %4655 = vmatprep.subr.bf16.mxu0 0
      %4656 = vmatpush1.bf16.msra.mxu0 0
      %4657 = vmatprep.subr.bf16.mxu0 0
      %4658 = vmatpush1.bf16.msra.mxu0 0
      %4659 = vmatprep.subr.bf16.mxu0 0
      %4660 = vmatpush1.bf16.msra.mxu0 0
      %4661 = vmatprep.subr.bf16.mxu0 0
      %4662 = vmatpush1.bf16.msra.mxu0 0
      %4663 = vmatprep.subr.bf16.mxu0 0
      %4664 = vmatpush1.bf16.msra.mxu0 0
      %4665 = vmatprep.subr.bf16.mxu0 0
      %4666 = vmatpush1.bf16.msra.mxu0 0
      %4667 = vmatprep.subr.bf16.mxu0 0
      %4668 = vmatpush1.bf16.msra.mxu0 0
      %4669 = vmatprep.subr.bf16.mxu0 0
      %4670 = vmatpush1.bf16.msra.mxu0 0
      %4671 = vmatprep.subr.bf16.mxu0 0
      %4672 = vmatpush1.bf16.msra.mxu0 0
      %4673 = vmatprep.subr.bf16.mxu0 0
      %4674 = vmatpush1.bf16.msra.mxu0 0
      %4675 = vmatprep.subr.bf16.mxu0 0
      %4676 = vmatpush1.bf16.msra.mxu0 0
      %4677 = vmatprep.mubr.bf16.mxu0 0
      %4678 = vmatmul.mubr.bf16.gmra.mrb[0].mxu0 %v4643
      %v4679 = vpop.f32.mrb[0].mxu0
      %v4680 = vadd.f32 0.0, %v4679
      %v4681 = vpop.f32.mrb[0].mxu0
      %v4682 = vpop.f32.mrb[0].mxu0
      %v4683 = vpop.f32.mrb[0].mxu0
      %4684 = vdwg.mxu0
      %v4685 = vpack.c.bf16 %v4680, %v4680
      %v4686 = vld [vmem:[#allocation8 + $0x30] sm:$0xf]
      %v4687 = vld [vmem:[#allocation8 + $0x34] sm:$0xf]
      %v4688 = vld [vmem:[#allocation8 + $0x38] sm:$0xf]
      %v4689 = vld [vmem:[#allocation8 + $0x3c] sm:$0xf]
      %v4694 = vunpack.c.l.b16 %v4686
      %v4695 = vunpack.c.l.b16 %v4687
      %v4696 = vunpack.c.l.b16 %v4688
      %v4697 = vunpack.c.l.b16 %v4689
      %v4698 = vpack.c.b16 %v4695, %v4694
      %v4699 = vpack.c.b16 %v4697, %v4696
      %v4703 = vsel %vm665, %v4685, 0
      %4705 = vmatprep.subr.bf16.mxu0 0
      %4706 = vmatpush1.bf16.msra.mxu0 %v4698
      %4707 = vmatprep.subr.bf16.mxu0 0
      %4708 = vmatpush1.bf16.msra.mxu0 %v4699
      %4709 = vmatprep.subr.bf16.mxu0 0
      %4710 = vmatpush1.bf16.msra.mxu0 0
      %4711 = vmatprep.subr.bf16.mxu0 0
      %4712 = vmatpush1.bf16.msra.mxu0 0
      %4713 = vmatprep.subr.bf16.mxu0 0
      %4714 = vmatpush1.bf16.msra.mxu0 0
      %4715 = vmatprep.subr.bf16.mxu0 0
      %4716 = vmatpush1.bf16.msra.mxu0 0
      %4717 = vmatprep.subr.bf16.mxu0 0
      %4718 = vmatpush1.bf16.msra.mxu0 0
      %4719 = vmatprep.subr.bf16.mxu0 0
      %4720 = vmatpush1.bf16.msra.mxu0 0
      %4721 = vmatprep.subr.bf16.mxu0 0
      %4722 = vmatpush1.bf16.msra.mxu0 0
      %4723 = vmatprep.subr.bf16.mxu0 0
      %4724 = vmatpush1.bf16.msra.mxu0 0
      %4725 = vmatprep.subr.bf16.mxu0 0
      %4726 = vmatpush1.bf16.msra.mxu0 0
      %4727 = vmatprep.subr.bf16.mxu0 0
      %4728 = vmatpush1.bf16.msra.mxu0 0
      %4729 = vmatprep.subr.bf16.mxu0 0
      %4730 = vmatpush1.bf16.msra.mxu0 0
      %4731 = vmatprep.subr.bf16.mxu0 0
      %4732 = vmatpush1.bf16.msra.mxu0 0
      %4733 = vmatprep.subr.bf16.mxu0 0
      %4734 = vmatpush1.bf16.msra.mxu0 0
      %4735 = vmatprep.subr.bf16.mxu0 0
      %4736 = vmatpush1.bf16.msra.mxu0 0
      %4737 = vmatprep.mubr.bf16.mxu0 0
      %4738 = vmatmul.mubr.bf16.gmra.mrb[0].mxu0 %v4703
      %v4739 = vpop.f32.mrb[0].mxu0
      %v4740 = vadd.f32 0.0, %v4739
      %v4741 = vpop.f32.mrb[0].mxu0
      %v4742 = vpop.f32.mrb[0].mxu0
      %v4743 = vpop.f32.mrb[0].mxu0
      %4744 = vdwg.mxu0
      %v4745 = vadd.f32 %v4628, %v4740
      %v4746 = vadd.f32 %v3636, %v4745
      %v4747 = vld [vmem:[%s7] sm:$0x1]
      %v4748 = vld [vmem:[%s8] sm:$0x1]
      %v4749 = vsel %vm3239, %v4746, 0.0
      %4750 = vadd.xlane.f32.xlu0 %v4749
      %v4751 = vpop.xlane.xlu0 %4750
      %v4752 = vmul.f32 %v4751, %v378
      %v4753 = vsub.f32 %v4746, %v4752
      %v4754 = vmul.f32 %v4753, %v4753
      %v4755 = vsel %vm3239, %v4754, 0.0
      %4756 = vadd.xlane.f32.xlu0 %v4755
      %v4757 = vpop.xlane.xlu0 %4756
      %v4758 = vmul.f32 %v4757, %v378
      %v4759 = vadd.f32 %v4758, 1e-05
      %v4760 = vrsqrt.pop %v4759
      %v4761 = vmul.f32 %v4753, %v4760
      %v4762 = vmul.f32 %v4761, %v4747
      %v4763 = vadd.f32 %v4762, %v4748
      %v4764 = vpack.c.bf16 %v4763, %v4763
      %v4765 = vld [vmem:[#allocation9] sm:$0xff]
      %v4766 = vld [vmem:[#allocation9 + $0x8] sm:$0xff]
      %v4767 = vld [vmem:[#allocation9 + $0x10] sm:$0xff]
      %v4768 = vld [vmem:[#allocation9 + $0x18] sm:$0xff]
      %v4769 = vld [vmem:[#allocation9 + $0x20] sm:$0xff]
      %v4770 = vld [vmem:[#allocation9 + $0x28] sm:$0xff]
      %v4771 = vld [vmem:[#allocation9 + $0x30] sm:$0xff]
      %v4772 = vld [vmem:[#allocation9 + $0x38] sm:$0xff]
      %v4773 = vld [vmem:[#allocation9 + $0x40] sm:$0xff]
      %v4774 = vld [vmem:[#allocation9 + $0x48] sm:$0xff]
      %v4775 = vld [vmem:[#allocation9 + $0x50] sm:$0xff]
      %v4776 = vld [vmem:[#allocation9 + $0x58] sm:$0xff]
      %v4777 = vld [vmem:[#allocation9 + $0x60] sm:$0xff]
      %v4778 = vld [vmem:[#allocation9 + $0x68] sm:$0xff]
      %v4779 = vld [vmem:[#allocation9 + $0x70] sm:$0xff]
      %v4780 = vld [vmem:[#allocation9 + $0x78] sm:$0xff]
      %v4797 = vunpack.c.l.b16 %v4765
      %v4798 = vunpack.c.h.b16 %v4765
      %v4799 = vunpack.c.l.b16 %v4766
      %v4800 = vunpack.c.h.b16 %v4766
      %v4801 = vunpack.c.l.b16 %v4767
      %v4802 = vunpack.c.h.b16 %v4767
      %v4803 = vunpack.c.l.b16 %v4768
      %v4804 = vunpack.c.h.b16 %v4768
      %v4805 = vunpack.c.l.b16 %v4769
      %v4806 = vunpack.c.h.b16 %v4769
      %v4807 = vunpack.c.l.b16 %v4770
      %v4808 = vunpack.c.h.b16 %v4770
      %v4809 = vunpack.c.l.b16 %v4771
      %v4810 = vunpack.c.h.b16 %v4771
      %v4811 = vunpack.c.l.b16 %v4772
      %v4812 = vunpack.c.h.b16 %v4772
      %v4813 = vunpack.c.l.b16 %v4773
      %v4814 = vunpack.c.h.b16 %v4773
      %v4815 = vunpack.c.l.b16 %v4774
      %v4816 = vunpack.c.h.b16 %v4774
      %v4817 = vunpack.c.l.b16 %v4775
      %v4818 = vunpack.c.h.b16 %v4775
      %v4819 = vunpack.c.l.b16 %v4776
      %v4820 = vunpack.c.h.b16 %v4776
      %v4821 = vunpack.c.l.b16 %v4777
      %v4822 = vunpack.c.h.b16 %v4777
      %v4823 = vunpack.c.l.b16 %v4778
      %v4824 = vunpack.c.h.b16 %v4778
      %v4825 = vunpack.c.l.b16 %v4779
      %v4826 = vunpack.c.h.b16 %v4779
      %v4827 = vunpack.c.l.b16 %v4780
      %v4828 = vunpack.c.h.b16 %v4780
      %v4829 = vpack.c.b16 %v4799, %v4797
      %v4830 = vpack.c.b16 %v4800, %v4798
      %v4831 = vpack.c.b16 %v4803, %v4801
      %v4832 = vpack.c.b16 %v4804, %v4802
      %v4833 = vpack.c.b16 %v4807, %v4805
      %v4834 = vpack.c.b16 %v4808, %v4806
      %v4835 = vpack.c.b16 %v4811, %v4809
      %v4836 = vpack.c.b16 %v4812, %v4810
      %v4837 = vpack.c.b16 %v4815, %v4813
      %v4838 = vpack.c.b16 %v4816, %v4814
      %v4839 = vpack.c.b16 %v4819, %v4817
      %v4840 = vpack.c.b16 %v4820, %v4818
      %v4841 = vpack.c.b16 %v4823, %v4821
      %v4842 = vpack.c.b16 %v4824, %v4822
      %v4843 = vpack.c.b16 %v4827, %v4825
      %v4844 = vpack.c.b16 %v4828, %v4826
      %4861 = vmatprep.subr.bf16.mxu0 %v4830
      %4862 = vmatpush1.bf16.msra.mxu0 %v4829
      %4863 = vmatprep.subr.bf16.mxu0 %v4832
      %4864 = vmatpush1.bf16.msra.mxu0 %v4831
      %4865 = vmatprep.subr.bf16.mxu0 %v4834
      %4866 = vmatpush1.bf16.msra.mxu0 %v4833
      %4867 = vmatprep.subr.bf16.mxu0 %v4836
      %4868 = vmatpush1.bf16.msra.mxu0 %v4835
      %4869 = vmatprep.subr.bf16.mxu0 %v4838
      %4870 = vmatpush1.bf16.msra.mxu0 %v4837
      %4871 = vmatprep.subr.bf16.mxu0 %v4840
      %4872 = vmatpush1.bf16.msra.mxu0 %v4839
      %4873 = vmatprep.subr.bf16.mxu0 %v4842
      %4874 = vmatpush1.bf16.msra.mxu0 %v4841
      %4875 = vmatprep.subr.bf16.mxu0 %v4844
      %4876 = vmatpush1.bf16.msra.mxu0 %v4843
      %4877 = vmatprep.subr.bf16.mxu0 0
      %4878 = vmatpush1.bf16.msra.mxu0 0
      %4879 = vmatprep.subr.bf16.mxu0 0
      %4880 = vmatpush1.bf16.msra.mxu0 0
      %4881 = vmatprep.subr.bf16.mxu0 0
      %4882 = vmatpush1.bf16.msra.mxu0 0
      %4883 = vmatprep.subr.bf16.mxu0 0
      %4884 = vmatpush1.bf16.msra.mxu0 0
      %4885 = vmatprep.subr.bf16.mxu0 0
      %4886 = vmatpush1.bf16.msra.mxu0 0
      %4887 = vmatprep.subr.bf16.mxu0 0
      %4888 = vmatpush1.bf16.msra.mxu0 0
      %4889 = vmatprep.subr.bf16.mxu0 0
      %4890 = vmatpush1.bf16.msra.mxu0 0
      %4891 = vmatprep.subr.bf16.mxu0 0
      %4892 = vmatpush1.bf16.msra.mxu0 0
      %4893 = vmatprep.mubr.bf16.mxu0 0
      %4894 = vmatmul.mubr.bf16.gmra.mrb[0].mxu0 %v4764
      %v4895 = vpop.f32.mrb[0].mxu0
      %v4896 = vadd.f32 0.0, %v4895
      %v4897 = vpop.f32.mrb[0].mxu0
      %v4898 = vadd.f32 0.0, %v4897
      %v4899 = vpop.f32.mrb[0].mxu0
      %v4900 = vpop.f32.mrb[0].mxu0
      %4901 = vdwg.mxu0
      %v4902 = vmul.f32 %v4896, %v4896
      %v4903 = vmul.f32 %v4898, %v4898
      %v4904 = vmul.f32 %v4896, %v4902
      %v4905 = vmul.f32 %v4898, %v4903
      %v4906 = vmul.f32 %v4904, 0.044715
      %v4907 = vmul.f32 %v4905, 0.044715
      %v4908 = vadd.f32 %v4896, %v4906
      %v4909 = vadd.f32 %v4898, %v4907
      %v4910 = vmul.f32 %v4908, 0.7978846
      %v4911 = vmul.f32 %v4909, 0.7978846
      %v4912 = vtanh.pop %v4910
      %v4913 = vtanh.pop %v4911
      %v4914 = vadd.f32 %v4912, 1.0
      %v4915 = vadd.f32 %v4913, 1.0
      %v4916 = vmul.f32 %v4914, 0.5
      %v4917 = vmul.f32 %v4915, 0.5
      %v4918 = vmul.f32 %v4896, %v4916
      %v4919 = vmul.f32 %v4898, %v4917
      %v4920 = vpack.c.bf16 %v4918, %v4918
      %v4921 = vpack.c.bf16 %v4919, %v4919
      %v4922 = vld [vmem:[#allocation11] sm:$0xf]
      %v4923 = vld [vmem:[#allocation11 + $0x4] sm:$0xf]
      %v4924 = vld [vmem:[#allocation11 + $0x8] sm:$0xf]
      %v4925 = vld [vmem:[#allocation11 + $0xc] sm:$0xf]
      %v4926 = vld [vmem:[#allocation11 + $0x10] sm:$0xf]
      %v4927 = vld [vmem:[#allocation11 + $0x14] sm:$0xf]
      %v4928 = vld [vmem:[#allocation11 + $0x18] sm:$0xf]
      %v4929 = vld [vmem:[#allocation11 + $0x1c] sm:$0xf]
      %v4930 = vld [vmem:[#allocation11 + $0x20] sm:$0xf]
      %v4931 = vld [vmem:[#allocation11 + $0x24] sm:$0xf]
      %v4932 = vld [vmem:[#allocation11 + $0x28] sm:$0xf]
      %v4933 = vld [vmem:[#allocation11 + $0x2c] sm:$0xf]
      %v4934 = vld [vmem:[#allocation11 + $0x30] sm:$0xf]
      %v4935 = vld [vmem:[#allocation11 + $0x34] sm:$0xf]
      %v4936 = vld [vmem:[#allocation11 + $0x38] sm:$0xf]
      %v4937 = vld [vmem:[#allocation11 + $0x3c] sm:$0xf]
      %v4938 = vld [vmem:[#allocation11 + $0x40] sm:$0xf]
      %v4939 = vld [vmem:[#allocation11 + $0x44] sm:$0xf]
      %v4940 = vld [vmem:[#allocation11 + $0x48] sm:$0xf]
      %v4941 = vld [vmem:[#allocation11 + $0x4c] sm:$0xf]
      %v4942 = vld [vmem:[#allocation11 + $0x50] sm:$0xf]
      %v4943 = vld [vmem:[#allocation11 + $0x54] sm:$0xf]
      %v4944 = vld [vmem:[#allocation11 + $0x58] sm:$0xf]
      %v4945 = vld [vmem:[#allocation11 + $0x5c] sm:$0xf]
      %v4946 = vld [vmem:[#allocation11 + $0x60] sm:$0xf]
      %v4947 = vld [vmem:[#allocation11 + $0x64] sm:$0xf]
      %v4948 = vld [vmem:[#allocation11 + $0x68] sm:$0xf]
      %v4949 = vld [vmem:[#allocation11 + $0x6c] sm:$0xf]
      %v4950 = vld [vmem:[#allocation11 + $0x70] sm:$0xf]
      %v4951 = vld [vmem:[#allocation11 + $0x74] sm:$0xf]
      %v4952 = vld [vmem:[#allocation11 + $0x78] sm:$0xf]
      %v4953 = vld [vmem:[#allocation11 + $0x7c] sm:$0xf]
      %v4986 = vunpack.c.l.b16 %v4922
      %v4987 = vunpack.c.l.b16 %v4923
      %v4988 = vunpack.c.l.b16 %v4924
      %v4989 = vunpack.c.l.b16 %v4925
      %v4990 = vunpack.c.l.b16 %v4926
      %v4991 = vunpack.c.l.b16 %v4927
      %v4992 = vunpack.c.l.b16 %v4928
      %v4993 = vunpack.c.l.b16 %v4929
      %v4994 = vunpack.c.l.b16 %v4930
      %v4995 = vunpack.c.l.b16 %v4931
      %v4996 = vunpack.c.l.b16 %v4932
      %v4997 = vunpack.c.l.b16 %v4933
      %v4998 = vunpack.c.l.b16 %v4934
      %v4999 = vunpack.c.l.b16 %v4935
      %v5000 = vunpack.c.l.b16 %v4936
      %v5001 = vunpack.c.l.b16 %v4937
      %v5002 = vunpack.c.l.b16 %v4938
      %v5003 = vunpack.c.l.b16 %v4939
      %v5004 = vunpack.c.l.b16 %v4940
      %v5005 = vunpack.c.l.b16 %v4941
      %v5006 = vunpack.c.l.b16 %v4942
      %v5007 = vunpack.c.l.b16 %v4943
      %v5008 = vunpack.c.l.b16 %v4944
      %v5009 = vunpack.c.l.b16 %v4945
      %v5010 = vunpack.c.l.b16 %v4946
      %v5011 = vunpack.c.l.b16 %v4947
      %v5012 = vunpack.c.l.b16 %v4948
      %v5013 = vunpack.c.l.b16 %v4949
      %v5014 = vunpack.c.l.b16 %v4950
      %v5015 = vunpack.c.l.b16 %v4951
      %v5016 = vunpack.c.l.b16 %v4952
      %v5017 = vunpack.c.l.b16 %v4953
      %v5018 = vpack.c.b16 %v4987, %v4986
      %v5019 = vpack.c.b16 %v4989, %v4988
      %v5020 = vpack.c.b16 %v4991, %v4990
      %v5021 = vpack.c.b16 %v4993, %v4992
      %v5022 = vpack.c.b16 %v4995, %v4994
      %v5023 = vpack.c.b16 %v4997, %v4996
      %v5024 = vpack.c.b16 %v4999, %v4998
      %v5025 = vpack.c.b16 %v5001, %v5000
      %v5026 = vpack.c.b16 %v5003, %v5002
      %v5027 = vpack.c.b16 %v5005, %v5004
      %v5028 = vpack.c.b16 %v5007, %v5006
      %v5029 = vpack.c.b16 %v5009, %v5008
      %v5030 = vpack.c.b16 %v5011, %v5010
      %v5031 = vpack.c.b16 %v5013, %v5012
      %v5032 = vpack.c.b16 %v5015, %v5014
      %v5033 = vpack.c.b16 %v5017, %v5016
      %5050 = vmatprep.subr.bf16.mxu0 0
      %5051 = vmatpush1.bf16.msra.mxu0 %v5018
      %5052 = vmatprep.subr.bf16.mxu0 0
      %5053 = vmatpush1.bf16.msra.mxu0 %v5019
      %5054 = vmatprep.subr.bf16.mxu0 0
      %5055 = vmatpush1.bf16.msra.mxu0 %v5020
      %5056 = vmatprep.subr.bf16.mxu0 0
      %5057 = vmatpush1.bf16.msra.mxu0 %v5021
      %5058 = vmatprep.subr.bf16.mxu0 0
      %5059 = vmatpush1.bf16.msra.mxu0 %v5022
      %5060 = vmatprep.subr.bf16.mxu0 0
      %5061 = vmatpush1.bf16.msra.mxu0 %v5023
      %5062 = vmatprep.subr.bf16.mxu0 0
      %5063 = vmatpush1.bf16.msra.mxu0 %v5024
      %5064 = vmatprep.subr.bf16.mxu0 0
      %5065 = vmatpush1.bf16.msra.mxu0 %v5025
      %5066 = vmatprep.subr.bf16.mxu0 0
      %5067 = vmatpush1.bf16.msra.mxu0 %v5026
      %5068 = vmatprep.subr.bf16.mxu0 0
      %5069 = vmatpush1.bf16.msra.mxu0 %v5027
      %5070 = vmatprep.subr.bf16.mxu0 0
      %5071 = vmatpush1.bf16.msra.mxu0 %v5028
      %5072 = vmatprep.subr.bf16.mxu0 0
      %5073 = vmatpush1.bf16.msra.mxu0 %v5029
      %5074 = vmatprep.subr.bf16.mxu0 0
      %5075 = vmatpush1.bf16.msra.mxu0 %v5030
      %5076 = vmatprep.subr.bf16.mxu0 0
      %5077 = vmatpush1.bf16.msra.mxu0 %v5031
      %5078 = vmatprep.subr.bf16.mxu0 0
      %5079 = vmatpush1.bf16.msra.mxu0 %v5032
      %5080 = vmatprep.subr.bf16.mxu0 0
      %5081 = vmatpush1.bf16.msra.mxu0 %v5033
      %5082 = vmatprep.mubr.bf16.mxu0 %v4921
      %5083 = vmatmul.mubr.bf16.gmra.mrb[0].mxu0 %v4920
      %v5084 = vpop.f32.mrb[0].mxu0
      %v5085 = vadd.f32 0.0, %v5084
      %v5086 = vpop.f32.mrb[0].mxu0
      %v5087 = vpop.f32.mrb[0].mxu0
      %v5088 = vpop.f32.mrb[0].mxu0
      %5089 = vdwg.mxu0
      %v5090 = vadd.f32 %v4746, %v5085
      %v5091 = vld [vmem:[%s1802] sm:$0x1]
      %v5092 = vld [vmem:[%s1804] sm:$0x1]
      %v5093 = vsel %vm3239, %v5090, 0.0
      %5094 = vadd.xlane.f32.xlu0 %v5093
      %v5095 = vpop.xlane.xlu0 %5094
      %v5096 = vmul.f32 %v5095, %v378
      %v5097 = vsub.f32 %v5090, %v5096
      %v5098 = vmul.f32 %v5097, %v5097
      %v5099 = vsel %vm3239, %v5098, 0.0
      %5100 = vadd.xlane.f32.xlu0 %v5099
      %v5101 = vpop.xlane.xlu0 %5100
      %v5102 = vmul.f32 %v5101, %v378
      %v5103 = vadd.f32 %v5102, 1e-05
      %v5104 = vrsqrt.pop %v5103
      %v5105 = vmul.f32 %v5097, %v5104
      %v5106 = vmul.f32 %v5105, %v5091
      %v5107 = vadd.f32 %v5106, %v5092
      %v5108 = vpack.c.bf16 %v5107, %v5107
      %v5109 = vld [vmem:[%s1845] sm:$0xff]
      %v5110 = vld [vmem:[%s1845 + $0x8] sm:$0xf]
      %v5111 = vld [vmem:[%s1845 + $0xc] sm:$0xff]
      %v5112 = vld [vmem:[%s1845 + $0x14] sm:$0xf]
      %v5113 = vld [vmem:[%s1845 + $0x18] sm:$0xff]
      %v5114 = vld [vmem:[%s1845 + $0x20] sm:$0xf]
      %v5115 = vld [vmem:[%s1845 + $0x24] sm:$0xff]
      %v5116 = vld [vmem:[%s1845 + $0x2c] sm:$0xf]
      %v5117 = vld [vmem:[%s1845 + $0x30] sm:$0xff]
      %v5118 = vld [vmem:[%s1845 + $0x38] sm:$0xf]
      %v5119 = vld [vmem:[%s1845 + $0x3c] sm:$0xff]
      %v5120 = vld [vmem:[%s1845 + $0x44] sm:$0xf]
      %v5121 = vld [vmem:[%s1845 + $0x48] sm:$0xff]
      %v5122 = vld [vmem:[%s1845 + $0x50] sm:$0xf]
      %v5123 = vld [vmem:[%s1845 + $0x54] sm:$0xff]
      %v5124 = vld [vmem:[%s1845 + $0x5c] sm:$0xf]
      %v5125 = vld [vmem:[%s1845 + $0x60] sm:$0xff]
      %v5126 = vld [vmem:[%s1845 + $0x68] sm:$0xf]
      %v5127 = vld [vmem:[%s1845 + $0x6c] sm:$0xff]
      %v5128 = vld [vmem:[%s1845 + $0x74] sm:$0xf]
      %v5129 = vld [vmem:[%s1845 + $0x78] sm:$0xff]
      %v5130 = vld [vmem:[%s1845 + $0x80] sm:$0xf]
      %v5131 = vld [vmem:[%s1845 + $0x84] sm:$0xff]
      %v5132 = vld [vmem:[%s1845 + $0x8c] sm:$0xf]
      %v5133 = vld [vmem:[%s1845 + $0x90] sm:$0xff]
      %v5134 = vld [vmem:[%s1845 + $0x98] sm:$0xf]
      %v5135 = vld [vmem:[%s1845 + $0x9c] sm:$0xff]
      %v5136 = vld [vmem:[%s1845 + $0xa4] sm:$0xf]
      %v5137 = vld [vmem:[%s1845 + $0xa8] sm:$0xff]
      %v5138 = vld [vmem:[%s1845 + $0xb0] sm:$0xf]
      %v5139 = vld [vmem:[%s1845 + $0xb4] sm:$0xff]
      %v5140 = vld [vmem:[%s1845 + $0xbc] sm:$0xf]
      %v5173 = vunpack.c.l.b16 %v5109
      %v5174 = vunpack.c.h.b16 %v5109
      %v5175 = vunpack.c.l.b16 %v5110
      %v5176 = vunpack.c.l.b16 %v5111
      %v5177 = vunpack.c.h.b16 %v5111
      %v5178 = vunpack.c.l.b16 %v5112
      %v5179 = vunpack.c.l.b16 %v5113
      %v5180 = vunpack.c.h.b16 %v5113
      %v5181 = vunpack.c.l.b16 %v5114
      %v5182 = vunpack.c.l.b16 %v5115
      %v5183 = vunpack.c.h.b16 %v5115
      %v5184 = vunpack.c.l.b16 %v5116
      %v5185 = vunpack.c.l.b16 %v5117
      %v5186 = vunpack.c.h.b16 %v5117
      %v5187 = vunpack.c.l.b16 %v5118
      %v5188 = vunpack.c.l.b16 %v5119
      %v5189 = vunpack.c.h.b16 %v5119
      %v5190 = vunpack.c.l.b16 %v5120
      %v5191 = vunpack.c.l.b16 %v5121
      %v5192 = vunpack.c.h.b16 %v5121
      %v5193 = vunpack.c.l.b16 %v5122
      %v5194 = vunpack.c.l.b16 %v5123
      %v5195 = vunpack.c.h.b16 %v5123
      %v5196 = vunpack.c.l.b16 %v5124
      %v5197 = vunpack.c.l.b16 %v5125
      %v5198 = vunpack.c.h.b16 %v5125
      %v5199 = vunpack.c.l.b16 %v5126
      %v5200 = vunpack.c.l.b16 %v5127
      %v5201 = vunpack.c.h.b16 %v5127
      %v5202 = vunpack.c.l.b16 %v5128
      %v5203 = vunpack.c.l.b16 %v5129
      %v5204 = vunpack.c.h.b16 %v5129
      %v5205 = vunpack.c.l.b16 %v5130
      %v5206 = vunpack.c.l.b16 %v5131
      %v5207 = vunpack.c.h.b16 %v5131
      %v5208 = vunpack.c.l.b16 %v5132
      %v5209 = vunpack.c.l.b16 %v5133
      %v5210 = vunpack.c.h.b16 %v5133
      %v5211 = vunpack.c.l.b16 %v5134
      %v5212 = vunpack.c.l.b16 %v5135
      %v5213 = vunpack.c.h.b16 %v5135
      %v5214 = vunpack.c.l.b16 %v5136
      %v5215 = vunpack.c.l.b16 %v5137
      %v5216 = vunpack.c.h.b16 %v5137
      %v5217 = vunpack.c.l.b16 %v5138
      %v5218 = vunpack.c.l.b16 %v5139
      %v5219 = vunpack.c.h.b16 %v5139
      %v5220 = vunpack.c.l.b16 %v5140
      %v5221 = vpack.c.b16 %v5176, %v5173
      %v5222 = vpack.c.b16 %v5177, %v5174
      %v5223 = vpack.c.b16 %v5178, %v5175
      %v5224 = vpack.c.b16 %v5182, %v5179
      %v5225 = vpack.c.b16 %v5183, %v5180
      %v5226 = vpack.c.b16 %v5184, %v5181
      %v5227 = vpack.c.b16 %v5188, %v5185
      %v5228 = vpack.c.b16 %v5189, %v5186
      %v5229 = vpack.c.b16 %v5190, %v5187
      %v5230 = vpack.c.b16 %v5194, %v5191
      %v5231 = vpack.c.b16 %v5195, %v5192
      %v5232 = vpack.c.b16 %v5196, %v5193
      %v5233 = vpack.c.b16 %v5200, %v5197
      %v5234 = vpack.c.b16 %v5201, %v5198
      %v5235 = vpack.c.b16 %v5202, %v5199
      %v5236 = vpack.c.b16 %v5206, %v5203
      %v5237 = vpack.c.b16 %v5207, %v5204
      %v5238 = vpack.c.b16 %v5208, %v5205
      %v5239 = vpack.c.b16 %v5212, %v5209
      %v5240 = vpack.c.b16 %v5213, %v5210
      %v5241 = vpack.c.b16 %v5214, %v5211
      %v5242 = vpack.c.b16 %v5218, %v5215
      %v5243 = vpack.c.b16 %v5219, %v5216
      %v5244 = vpack.c.b16 %v5220, %v5217
      %5269 = vmatprep.subr.bf16.mxu0 %v5222
      %5270 = vmatpush1.bf16.msra.mxu0 %v5221
      %5271 = vmatprep.subr.bf16.mxu0 %v5225
      %5272 = vmatpush1.bf16.msra.mxu0 %v5224
      %5273 = vmatprep.subr.bf16.mxu0 %v5228
      %5274 = vmatpush1.bf16.msra.mxu0 %v5227
      %5275 = vmatprep.subr.bf16.mxu0 %v5231
      %5276 = vmatpush1.bf16.msra.mxu0 %v5230
      %5277 = vmatprep.subr.bf16.mxu0 %v5234
      %5278 = vmatpush1.bf16.msra.mxu0 %v5233
      %5279 = vmatprep.subr.bf16.mxu0 %v5237
      %5280 = vmatpush1.bf16.msra.mxu0 %v5236
      %5281 = vmatprep.subr.bf16.mxu0 %v5240
      %5282 = vmatpush1.bf16.msra.mxu0 %v5239
      %5283 = vmatprep.subr.bf16.mxu0 %v5243
      %5284 = vmatpush1.bf16.msra.mxu0 %v5242
      %5285 = vmatprep.subr.bf16.mxu0 0
      %5286 = vmatpush1.bf16.msra.mxu0 0
      %5287 = vmatprep.subr.bf16.mxu0 0
      %5288 = vmatpush1.bf16.msra.mxu0 0
      %5289 = vmatprep.subr.bf16.mxu0 0
      %5290 = vmatpush1.bf16.msra.mxu0 0
      %5291 = vmatprep.subr.bf16.mxu0 0
      %5292 = vmatpush1.bf16.msra.mxu0 0
      %5293 = vmatprep.subr.bf16.mxu0 0
      %5294 = vmatpush1.bf16.msra.mxu0 0
      %5295 = vmatprep.subr.bf16.mxu0 0
      %5296 = vmatpush1.bf16.msra.mxu0 0
      %5297 = vmatprep.subr.bf16.mxu0 0
      %5298 = vmatpush1.bf16.msra.mxu0 0
      %5299 = vmatprep.subr.bf16.mxu0 0
      %5300 = vmatpush1.bf16.msra.mxu0 0
      %5301 = vmatprep.mubr.bf16.mxu0 0
      %5302 = vmatmul.mubr.bf16.gmra.mrb[0].mxu0 %v5108
      %v5303 = vpop.f32.mrb[0].mxu0
      %v5304 = vadd.f32 0.0, %v5303
      %v5305 = vpop.f32.mrb[0].mxu0
      %v5306 = vadd.f32 0.0, %v5305
      %v5307 = vpop.f32.mrb[0].mxu0
      %v5308 = vpop.f32.mrb[0].mxu0
      %5309 = vdwg.mxu0
      %5310 = vmatprep.subr.bf16.mxu0 0
      %5311 = vmatpush1.bf16.msra.mxu0 %v5223
      %5312 = vmatprep.subr.bf16.mxu0 0
      %5313 = vmatpush1.bf16.msra.mxu0 %v5226
      %5314 = vmatprep.subr.bf16.mxu0 0
      %5315 = vmatpush1.bf16.msra.mxu0 %v5229
      %5316 = vmatprep.subr.bf16.mxu0 0
      %5317 = vmatpush1.bf16.msra.mxu0 %v5232
      %5318 = vmatprep.subr.bf16.mxu0 0
      %5319 = vmatpush1.bf16.msra.mxu0 %v5235
      %5320 = vmatprep.subr.bf16.mxu0 0
      %5321 = vmatpush1.bf16.msra.mxu0 %v5238
      %5322 = vmatprep.subr.bf16.mxu0 0
      %5323 = vmatpush1.bf16.msra.mxu0 %v5241
      %5324 = vmatprep.subr.bf16.mxu0 0
      %5325 = vmatpush1.bf16.msra.mxu0 %v5244
      %5326 = vmatprep.subr.bf16.mxu0 0
      %5327 = vmatpush1.bf16.msra.mxu0 0
      %5328 = vmatprep.subr.bf16.mxu0 0
      %5329 = vmatpush1.bf16.msra.mxu0 0
      %5330 = vmatprep.subr.bf16.mxu0 0
      %5331 = vmatpush1.bf16.msra.mxu0 0
      %5332 = vmatprep.subr.bf16.mxu0 0
      %5333 = vmatpush1.bf16.msra.mxu0 0
      %5334 = vmatprep.subr.bf16.mxu0 0
      %5335 = vmatpush1.bf16.msra.mxu0 0
      %5336 = vmatprep.subr.bf16.mxu0 0
      %5337 = vmatpush1.bf16.msra.mxu0 0
      %5338 = vmatprep.subr.bf16.mxu0 0
      %5339 = vmatpush1.bf16.msra.mxu0 0
      %5340 = vmatprep.subr.bf16.mxu0 0
      %5341 = vmatpush1.bf16.msra.mxu0 0
      %5342 = vmatprep.mubr.bf16.mxu0 0
      %5343 = vmatmul.mubr.bf16.gmra.mrb[0].mxu0 %v5108
      %v5344 = vpop.f32.mrb[0].mxu0
      %v5345 = vadd.f32 0.0, %v5344
      %v5346 = vpop.f32.mrb[0].mxu0
      %v5347 = vpop.f32.mrb[0].mxu0
      %v5348 = vpop.f32.mrb[0].mxu0
      %5349 = vdwg.mxu0
      %v5350 = vmul.f32 %v5304, 0.17677669
      %v5351 = vpack.c.bf16 %v5350, %v5350
      %v5352 = vpack.c.bf16 %v5306, %v5306
      %v5353 = vpack.c.bf16 %v5345, %v5345
      %v5354 = vld [vmem:[%s2095] sm:$0xff]
      %v5355 = vld [vmem:[%s2095 + $0x8] sm:$0xff]
      %v5356 = vld [vmem:[%s2095 + $0x10] sm:$0xff]
      %v5357 = vld [vmem:[%s2095 + $0x18] sm:$0xff]
      %v5359 = vpack.i.b16 %v5352, %v5352
      %v5361 = vlaneseq
      %v5362 = vshrl.u32 %v5361, 7
      %v5363 = vsub.s32 0, %v5362
      %v5364 = vrot.slane %v5359, %v5363
      %v5365 = vsel %vm3969, %v5364, %v5354
      %v5366 = vsel %vm3970, %v5364, %v5355
      %v5367 = vsel %vm3971, %v5364, %v5356
      %v5368 = vsel %vm3972, %v5364, %v5357
      %v5369 = vld [vmem:[%s2097] sm:$0xff]
      %v5370 = vld [vmem:[%s2097 + $0x8] sm:$0xff]
      %v5371 = vld [vmem:[%s2097 + $0x10] sm:$0xff]
      %v5372 = vld [vmem:[%s2097 + $0x18] sm:$0xff]
      %v5374 = vpack.i.b16 %v5353, %v5353
      %v5376 = vlaneseq
      %v5377 = vshrl.u32 %v5376, 7
      %v5378 = vsub.s32 0, %v5377
      %v5379 = vrot.slane %v5374, %v5378
      %v5380 = vsel %vm3969, %v5379, %v5369
      %v5381 = vsel %vm3970, %v5379, %v5370
      %v5382 = vsel %vm3971, %v5379, %v5371
      %v5383 = vsel %vm3972, %v5379, %v5372
      %5384 = vst [vmem:[%s2095] sm:$0xff] %v5365
      %5385 = vst [vmem:[%s2095 + $0x8] sm:$0xff] %v5366
      %5386 = vst [vmem:[%s2095 + $0x10] sm:$0xff] %v5367
      %5387 = vst [vmem:[%s2095 + $0x18] sm:$0xff] %v5368
      %5388 = vst [vmem:[%s2097] sm:$0xff] %v5380
      %5389 = vst [vmem:[%s2097 + $0x8] sm:$0xff] %v5381
      %5390 = vst [vmem:[%s2097 + $0x10] sm:$0xff] %v5382
      %5391 = vst [vmem:[%s2097 + $0x18] sm:$0xff] %v5383
      %v5393 = vsel %vm665, %v5351, 0
      %v5396 = vsel %vm665, %v5365, 0
      %v5399 = vsel %vm665, %v5366, 0
      %v5402 = vsel %vm665, %v5367, 0
      %v5405 = vsel %vm665, %v5368, 0
      %5407 = vmatprep.subr.bf16.mxu0 0
      %5408 = vmatpush1.bf16.xpose.msra.mxu0 %v5396
      %5409 = vmatprep.subr.bf16.mxu0 0
      %5410 = vmatpush1.bf16.xpose.msra.mxu0 %v5399
      %5411 = vmatprep.subr.bf16.mxu0 0
      %5412 = vmatpush1.bf16.xpose.msra.mxu0 %v5402
      %5413 = vmatprep.subr.bf16.mxu0 0
      %5414 = vmatpush1.bf16.xpose.msra.mxu0 %v5405
      %5415 = vmatprep.subr.bf16.mxu0 0
      %5416 = vmatpush1.bf16.xpose.msra.mxu0 0
      %5417 = vmatprep.subr.bf16.mxu0 0
      %5418 = vmatpush1.bf16.xpose.msra.mxu0 0
      %5419 = vmatprep.subr.bf16.mxu0 0
      %5420 = vmatpush1.bf16.xpose.msra.mxu0 0
      %5421 = vmatprep.subr.bf16.mxu0 0
      %5422 = vmatpush1.bf16.xpose.msra.mxu0 0
      %5423 = vmatprep.subr.bf16.mxu0 0
      %5424 = vmatpush1.bf16.xpose.msra.mxu0 0
      %5425 = vmatprep.subr.bf16.mxu0 0
      %5426 = vmatpush1.bf16.xpose.msra.mxu0 0
      %5427 = vmatprep.subr.bf16.mxu0 0
      %5428 = vmatpush1.bf16.xpose.msra.mxu0 0
      %5429 = vmatprep.subr.bf16.mxu0 0
      %5430 = vmatpush1.bf16.xpose.msra.mxu0 0
      %5431 = vmatprep.subr.bf16.mxu0 0
      %5432 = vmatpush1.bf16.xpose.msra.mxu0 0
      %5433 = vmatprep.subr.bf16.mxu0 0
      %5434 = vmatpush1.bf16.xpose.msra.mxu0 0
      %5435 = vmatprep.subr.bf16.mxu0 0
      %5436 = vmatpush1.bf16.xpose.msra.mxu0 0
      %5437 = vmatprep.subr.bf16.mxu0 0
      %5438 = vmatpush1.bf16.xpose.msra.mxu0 0
      %5439 = vmatprep.mubr.bf16.mxu0 0
      %5440 = vmatmul.mubr.bf16.gmra.mrb[0].mxu0 %v5393
      %v5441 = vpop.f32.mrb[0].mxu0
      %v5442 = vadd.f32 0.0, %v5441
      %v5443 = vpop.f32.mrb[0].mxu0
      %v5444 = vpop.f32.mrb[0].mxu0
      %v5445 = vpop.f32.mrb[0].mxu0
      %5446 = vdwg.mxu0
      %5448 = vrot.lane.b32.xlu0 %v5351, 96
      %v5449 = vpop.permute.xlu0 %5448
      %5454 = vrot.lane.b32.xlu0 %v5365, 96
      %v5455 = vpop.permute.xlu0 %5454
      %5456 = vrot.lane.b32.xlu0 %v5366, 96
      %v5457 = vpop.permute.xlu0 %5456
      %5458 = vrot.lane.b32.xlu0 %v5367, 96
      %v5459 = vpop.permute.xlu0 %5458
      %5460 = vrot.lane.b32.xlu0 %v5368, 96
      %v5461 = vpop.permute.xlu0 %5460
      %v5463 = vsel %vm665, %v5449, 0
      %v5466 = vsel %vm665, %v5455, 0
      %v5469 = vsel %vm665, %v5457, 0
      %v5472 = vsel %vm665, %v5459, 0
      %v5475 = vsel %vm665, %v5461, 0
      %5477 = vmatprep.subr.bf16.mxu0 0
      %5478 = vmatpush1.bf16.xpose.msra.mxu0 %v5466
      %5479 = vmatprep.subr.bf16.mxu0 0
      %5480 = vmatpush1.bf16.xpose.msra.mxu0 %v5469
      %5481 = vmatprep.subr.bf16.mxu0 0
      %5482 = vmatpush1.bf16.xpose.msra.mxu0 %v5472
      %5483 = vmatprep.subr.bf16.mxu0 0
      %5484 = vmatpush1.bf16.xpose.msra.mxu0 %v5475
      %5485 = vmatprep.subr.bf16.mxu0 0
      %5486 = vmatpush1.bf16.xpose.msra.mxu0 0
      %5487 = vmatprep.subr.bf16.mxu0 0
      %5488 = vmatpush1.bf16.xpose.msra.mxu0 0
      %5489 = vmatprep.subr.bf16.mxu0 0
      %5490 = vmatpush1.bf16.xpose.msra.mxu0 0
      %5491 = vmatprep.subr.bf16.mxu0 0
      %5492 = vmatpush1.bf16.xpose.msra.mxu0 0
      %5493 = vmatprep.subr.bf16.mxu0 0
      %5494 = vmatpush1.bf16.xpose.msra.mxu0 0
      %5495 = vmatprep.subr.bf16.mxu0 0
      %5496 = vmatpush1.bf16.xpose.msra.mxu0 0
      %5497 = vmatprep.subr.bf16.mxu0 0
      %5498 = vmatpush1.bf16.xpose.msra.mxu0 0
      %5499 = vmatprep.subr.bf16.mxu0 0
      %5500 = vmatpush1.bf16.xpose.msra.mxu0 0
      %5501 = vmatprep.subr.bf16.mxu0 0
      %5502 = vmatpush1.bf16.xpose.msra.mxu0 0
      %5503 = vmatprep.subr.bf16.mxu0 0
      %5504 = vmatpush1.bf16.xpose.msra.mxu0 0
      %5505 = vmatprep.subr.bf16.mxu0 0
      %5506 = vmatpush1.bf16.xpose.msra.mxu0 0
      %5507 = vmatprep.subr.bf16.mxu0 0
      %5508 = vmatpush1.bf16.xpose.msra.mxu0 0
      %5509 = vmatprep.mubr.bf16.mxu0 0
      %5510 = vmatmul.mubr.bf16.gmra.mrb[0].mxu0 %v5463
      %v5511 = vpop.f32.mrb[0].mxu0
      %v5512 = vadd.f32 0.0, %v5511
      %v5513 = vpop.f32.mrb[0].mxu0
      %v5514 = vpop.f32.mrb[0].mxu0
      %v5515 = vpop.f32.mrb[0].mxu0
      %5516 = vdwg.mxu0
      %5517 = vrot.lane.b32.xlu0 %v5351, 64
      %v5518 = vpop.permute.xlu0 %5517
      %5519 = vrot.lane.b32.xlu0 %v5365, 64
      %v5520 = vpop.permute.xlu0 %5519
      %5521 = vrot.lane.b32.xlu0 %v5366, 64
      %v5522 = vpop.permute.xlu0 %5521
      %5523 = vrot.lane.b32.xlu0 %v5367, 64
      %v5524 = vpop.permute.xlu0 %5523
      %5525 = vrot.lane.b32.xlu0 %v5368, 64
      %v5526 = vpop.permute.xlu0 %5525
      %v5528 = vsel %vm665, %v5518, 0
      %v5531 = vsel %vm665, %v5520, 0
      %v5534 = vsel %vm665, %v5522, 0
      %v5537 = vsel %vm665, %v5524, 0
      %v5540 = vsel %vm665, %v5526, 0
      %5542 = vmatprep.subr.bf16.mxu0 0
      %5543 = vmatpush1.bf16.xpose.msra.mxu0 %v5531
      %5544 = vmatprep.subr.bf16.mxu0 0
      %5545 = vmatpush1.bf16.xpose.msra.mxu0 %v5534
      %5546 = vmatprep.subr.bf16.mxu0 0
      %5547 = vmatpush1.bf16.xpose.msra.mxu0 %v5537
      %5548 = vmatprep.subr.bf16.mxu0 0
      %5549 = vmatpush1.bf16.xpose.msra.mxu0 %v5540
      %5550 = vmatprep.subr.bf16.mxu0 0
      %5551 = vmatpush1.bf16.xpose.msra.mxu0 0
      %5552 = vmatprep.subr.bf16.mxu0 0
      %5553 = vmatpush1.bf16.xpose.msra.mxu0 0
      %5554 = vmatprep.subr.bf16.mxu0 0
      %5555 = vmatpush1.bf16.xpose.msra.mxu0 0
      %5556 = vmatprep.subr.bf16.mxu0 0
      %5557 = vmatpush1.bf16.xpose.msra.mxu0 0
      %5558 = vmatprep.subr.bf16.mxu0 0
      %5559 = vmatpush1.bf16.xpose.msra.mxu0 0
      %5560 = vmatprep.subr.bf16.mxu0 0
      %5561 = vmatpush1.bf16.xpose.msra.mxu0 0
      %5562 = vmatprep.subr.bf16.mxu0 0
      %5563 = vmatpush1.bf16.xpose.msra.mxu0 0
      %5564 = vmatprep.subr.bf16.mxu0 0
      %5565 = vmatpush1.bf16.xpose.msra.mxu0 0
      %5566 = vmatprep.subr.bf16.mxu0 0
      %5567 = vmatpush1.bf16.xpose.msra.mxu0 0
      %5568 = vmatprep.subr.bf16.mxu0 0
      %5569 = vmatpush1.bf16.xpose.msra.mxu0 0
      %5570 = vmatprep.subr.bf16.mxu0 0
      %5571 = vmatpush1.bf16.xpose.msra.mxu0 0
      %5572 = vmatprep.subr.bf16.mxu0 0
      %5573 = vmatpush1.bf16.xpose.msra.mxu0 0
      %5574 = vmatprep.mubr.bf16.mxu0 0
      %5575 = vmatmul.mubr.bf16.gmra.mrb[0].mxu0 %v5528
      %v5576 = vpop.f32.mrb[0].mxu0
      %v5577 = vadd.f32 0.0, %v5576
      %v5578 = vpop.f32.mrb[0].mxu0
      %v5579 = vpop.f32.mrb[0].mxu0
      %v5580 = vpop.f32.mrb[0].mxu0
      %5581 = vdwg.mxu0
      %5582 = vrot.lane.b32.xlu0 %v5351, 32
      %v5583 = vpop.permute.xlu0 %5582
      %5584 = vrot.lane.b32.xlu0 %v5365, 32
      %v5585 = vpop.permute.xlu0 %5584
      %5586 = vrot.lane.b32.xlu0 %v5366, 32
      %v5587 = vpop.permute.xlu0 %5586
      %5588 = vrot.lane.b32.xlu0 %v5367, 32
      %v5589 = vpop.permute.xlu0 %5588
      %5590 = vrot.lane.b32.xlu0 %v5368, 32
      %v5591 = vpop.permute.xlu0 %5590
      %v5593 = vsel %vm665, %v5583, 0
      %v5596 = vsel %vm665, %v5585, 0
      %v5599 = vsel %vm665, %v5587, 0
      %v5602 = vsel %vm665, %v5589, 0
      %v5605 = vsel %vm665, %v5591, 0
      %5607 = vmatprep.subr.bf16.mxu0 0
      %5608 = vmatpush1.bf16.xpose.msra.mxu0 %v5596
      %5609 = vmatprep.subr.bf16.mxu0 0
      %5610 = vmatpush1.bf16.xpose.msra.mxu0 %v5599
      %5611 = vmatprep.subr.bf16.mxu0 0
      %5612 = vmatpush1.bf16.xpose.msra.mxu0 %v5602
      %5613 = vmatprep.subr.bf16.mxu0 0
      %5614 = vmatpush1.bf16.xpose.msra.mxu0 %v5605
      %5615 = vmatprep.subr.bf16.mxu0 0
      %5616 = vmatpush1.bf16.xpose.msra.mxu0 0
      %5617 = vmatprep.subr.bf16.mxu0 0
      %5618 = vmatpush1.bf16.xpose.msra.mxu0 0
      %5619 = vmatprep.subr.bf16.mxu0 0
      %5620 = vmatpush1.bf16.xpose.msra.mxu0 0
      %5621 = vmatprep.subr.bf16.mxu0 0
      %5622 = vmatpush1.bf16.xpose.msra.mxu0 0
      %5623 = vmatprep.subr.bf16.mxu0 0
      %5624 = vmatpush1.bf16.xpose.msra.mxu0 0
      %5625 = vmatprep.subr.bf16.mxu0 0
      %5626 = vmatpush1.bf16.xpose.msra.mxu0 0
      %5627 = vmatprep.subr.bf16.mxu0 0
      %5628 = vmatpush1.bf16.xpose.msra.mxu0 0
      %5629 = vmatprep.subr.bf16.mxu0 0
      %5630 = vmatpush1.bf16.xpose.msra.mxu0 0
      %5631 = vmatprep.subr.bf16.mxu0 0
      %5632 = vmatpush1.bf16.xpose.msra.mxu0 0
      %5633 = vmatprep.subr.bf16.mxu0 0
      %5634 = vmatpush1.bf16.xpose.msra.mxu0 0
      %5635 = vmatprep.subr.bf16.mxu0 0
      %5636 = vmatpush1.bf16.xpose.msra.mxu0 0
      %5637 = vmatprep.subr.bf16.mxu0 0
      %5638 = vmatpush1.bf16.xpose.msra.mxu0 0
      %5639 = vmatprep.mubr.bf16.mxu0 0
      %5640 = vmatmul.mubr.bf16.gmra.mrb[0].mxu0 %v5593
      %v5641 = vpop.f32.mrb[0].mxu0
      %v5642 = vadd.f32 0.0, %v5641
      %v5643 = vpop.f32.mrb[0].mxu0
      %v5644 = vpop.f32.mrb[0].mxu0
      %v5645 = vpop.f32.mrb[0].mxu0
      %5646 = vdwg.mxu0
      %v5648 = vrot.slane %v5512, 7
      %v5651 = vrot.slane %v5577, 6
      %v5654 = vrot.slane %v5642, 5
      %v5656 = vsel %vm3239, %v5442, %v5648
      %v5657 = vsel %vm4265, %v5656, %v5651
      %v5658 = vsel %vm4267, %v5657, %v5654
      %v5659 = vsel %vm4270, %v5658, -1e+30
      %v5660 = vsel %vm4272, %v5659, -inf
      %5661 = vmax.xlane.f32.xlu0 %v5660
      %v5662 = vpop.xlane.xlu0 %5661
      %v5663 = vsub.f32 %v5659, %v5662
      %v5664 = vmul.f32 %v5663, 1.442695
      %v5665 = vpow.pop %v5664
      %v5666 = vsel %vm4270, %v5665, 0.0
      %v5667 = vsel %vm4272, %v5666, 0.0
      %5668 = vadd.xlane.f32.xlu0 %v5667
      %v5669 = vpop.xlane.xlu0 %5668
      %v5670 = vrcp.pop %v5669
      %v5671 = vmul.f32 %v5666, %v5670
      %v5672 = vpack.c.bf16 %v5671, %v5671
      %v5674 = vsel %vm4286, %v5672, 0
      %5676 = vmatprep.subr.bf16.mxu0 0
      %5677 = vmatpush1.bf16.msra.mxu0 %v5380
      %5678 = vmatprep.subr.bf16.mxu0 0
      %5679 = vmatpush1.bf16.msra.mxu0 %v5381
      %5680 = vmatprep.subr.bf16.mxu0 0
      %5681 = vmatpush1.bf16.msra.mxu0 %v5382
      %5682 = vmatprep.subr.bf16.mxu0 0
      %5683 = vmatpush1.bf16.msra.mxu0 %v5383
      %5684 = vmatprep.subr.bf16.mxu0 0
      %5685 = vmatpush1.bf16.msra.mxu0 0
      %5686 = vmatprep.subr.bf16.mxu0 0
      %5687 = vmatpush1.bf16.msra.mxu0 0
      %5688 = vmatprep.subr.bf16.mxu0 0
      %5689 = vmatpush1.bf16.msra.mxu0 0
      %5690 = vmatprep.subr.bf16.mxu0 0
      %5691 = vmatpush1.bf16.msra.mxu0 0
      %5692 = vmatprep.subr.bf16.mxu0 0
      %5693 = vmatpush1.bf16.msra.mxu0 0
      %5694 = vmatprep.subr.bf16.mxu0 0
      %5695 = vmatpush1.bf16.msra.mxu0 0
      %5696 = vmatprep.subr.bf16.mxu0 0
      %5697 = vmatpush1.bf16.msra.mxu0 0
      %5698 = vmatprep.subr.bf16.mxu0 0
      %5699 = vmatpush1.bf16.msra.mxu0 0
      %5700 = vmatprep.subr.bf16.mxu0 0
      %5701 = vmatpush1.bf16.msra.mxu0 0
      %5702 = vmatprep.subr.bf16.mxu0 0
      %5703 = vmatpush1.bf16.msra.mxu0 0
      %5704 = vmatprep.subr.bf16.mxu0 0
      %5705 = vmatpush1.bf16.msra.mxu0 0
      %5706 = vmatprep.subr.bf16.mxu0 0
      %5707 = vmatpush1.bf16.msra.mxu0 0
      %5708 = vmatprep.mubr.bf16.mxu0 0
      %5709 = vmatmul.mubr.bf16.gmra.mrb[0].mxu0 %v5674
      %v5710 = vpop.f32.mrb[0].mxu0
      %v5711 = vadd.f32 0.0, %v5710
      %v5712 = vpop.f32.mrb[0].mxu0
      %v5713 = vpop.f32.mrb[0].mxu0
      %v5714 = vpop.f32.mrb[0].mxu0
      %5715 = vdwg.mxu0
      %v5716 = vpack.c.bf16 %v5711, %v5711
      %v5717 = vld [vmem:[%s2218] sm:$0xf]
      %v5718 = vld [vmem:[%s2218 + $0x4] sm:$0xf]
      %v5719 = vld [vmem:[%s2218 + $0x8] sm:$0xf]
      %v5720 = vld [vmem:[%s2218 + $0xc] sm:$0xf]
      %v5721 = vshrl.u32 %v5672, 16
      %5727 = vrot.lane.b32.xlu0 %v5380, 96
      %v5728 = vpop.permute.xlu0 %5727
      %5729 = vrot.lane.b32.xlu0 %v5381, 96
      %v5730 = vpop.permute.xlu0 %5729
      %5731 = vrot.lane.b32.xlu0 %v5382, 96
      %v5732 = vpop.permute.xlu0 %5731
      %5733 = vrot.lane.b32.xlu0 %v5383, 96
      %v5734 = vpop.permute.xlu0 %5733
      %v5740 = vsel %vm4286, %v5721, 0
      %5742 = vmatprep.subr.bf16.mxu0 0
      %5743 = vmatpush1.bf16.msra.mxu0 %v5728
      %5744 = vmatprep.subr.bf16.mxu0 0
      %5745 = vmatpush1.bf16.msra.mxu0 %v5730
      %5746 = vmatprep.subr.bf16.mxu0 0
      %5747 = vmatpush1.bf16.msra.mxu0 %v5732
      %5748 = vmatprep.subr.bf16.mxu0 0
      %5749 = vmatpush1.bf16.msra.mxu0 %v5734
      %5750 = vmatprep.subr.bf16.mxu0 0
      %5751 = vmatpush1.bf16.msra.mxu0 0
      %5752 = vmatprep.subr.bf16.mxu0 0
      %5753 = vmatpush1.bf16.msra.mxu0 0
      %5754 = vmatprep.subr.bf16.mxu0 0
      %5755 = vmatpush1.bf16.msra.mxu0 0
      %5756 = vmatprep.subr.bf16.mxu0 0
      %5757 = vmatpush1.bf16.msra.mxu0 0
      %5758 = vmatprep.subr.bf16.mxu0 0
      %5759 = vmatpush1.bf16.msra.mxu0 0
      %5760 = vmatprep.subr.bf16.mxu0 0
      %5761 = vmatpush1.bf16.msra.mxu0 0
      %5762 = vmatprep.subr.bf16.mxu0 0
      %5763 = vmatpush1.bf16.msra.mxu0 0
      %5764 = vmatprep.subr.bf16.mxu0 0
      %5765 = vmatpush1.bf16.msra.mxu0 0
      %5766 = vmatprep.subr.bf16.mxu0 0
      %5767 = vmatpush1.bf16.msra.mxu0 0
      %5768 = vmatprep.subr.bf16.mxu0 0
      %5769 = vmatpush1.bf16.msra.mxu0 0
      %5770 = vmatprep.subr.bf16.mxu0 0
      %5771 = vmatpush1.bf16.msra.mxu0 0
      %5772 = vmatprep.subr.bf16.mxu0 0
      %5773 = vmatpush1.bf16.msra.mxu0 0
      %5774 = vmatprep.mubr.bf16.mxu0 0
      %5775 = vmatmul.mubr.bf16.gmra.mrb[0].mxu0 %v5740
      %v5776 = vpop.f32.mrb[0].mxu0
      %v5777 = vadd.f32 0.0, %v5776
      %v5778 = vpop.f32.mrb[0].mxu0
      %v5779 = vpop.f32.mrb[0].mxu0
      %v5780 = vpop.f32.mrb[0].mxu0
      %5781 = vdwg.mxu0
      %v5782 = vpack.c.bf16 %v5777, %v5777
      %v5783 = vld [vmem:[%s2218 + $0x10] sm:$0xf]
      %v5784 = vld [vmem:[%s2218 + $0x14] sm:$0xf]
      %v5785 = vld [vmem:[%s2218 + $0x18] sm:$0xf]
      %v5786 = vld [vmem:[%s2218 + $0x1c] sm:$0xf]
      %v5791 = vunpack.c.l.b16 %v5783
      %v5792 = vunpack.c.l.b16 %v5784
      %v5793 = vunpack.c.l.b16 %v5785
      %v5794 = vunpack.c.l.b16 %v5786
      %v5795 = vpack.c.b16 %v5792, %v5791
      %v5796 = vpack.c.b16 %v5794, %v5793
      %v5800 = vsel %vm665, %v5782, 0
      %5802 = vmatprep.subr.bf16.mxu0 0
      %5803 = vmatpush1.bf16.msra.mxu0 %v5795
      %5804 = vmatprep.subr.bf16.mxu0 0
      %5805 = vmatpush1.bf16.msra.mxu0 %v5796
      %5806 = vmatprep.subr.bf16.mxu0 0
      %5807 = vmatpush1.bf16.msra.mxu0 0
      %5808 = vmatprep.subr.bf16.mxu0 0
      %5809 = vmatpush1.bf16.msra.mxu0 0
      %5810 = vmatprep.subr.bf16.mxu0 0
      %5811 = vmatpush1.bf16.msra.mxu0 0
      %5812 = vmatprep.subr.bf16.mxu0 0
      %5813 = vmatpush1.bf16.msra.mxu0 0
      %5814 = vmatprep.subr.bf16.mxu0 0
      %5815 = vmatpush1.bf16.msra.mxu0 0
      %5816 = vmatprep.subr.bf16.mxu0 0
      %5817 = vmatpush1.bf16.msra.mxu0 0
      %5818 = vmatprep.subr.bf16.mxu0 0
      %5819 = vmatpush1.bf16.msra.mxu0 0
      %5820 = vmatprep.subr.bf16.mxu0 0
      %5821 = vmatpush1.bf16.msra.mxu0 0
      %5822 = vmatprep.subr.bf16.mxu0 0
      %5823 = vmatpush1.bf16.msra.mxu0 0
      %5824 = vmatprep.subr.bf16.mxu0 0
      %5825 = vmatpush1.bf16.msra.mxu0 0
      %5826 = vmatprep.subr.bf16.mxu0 0
      %5827 = vmatpush1.bf16.msra.mxu0 0
      %5828 = vmatprep.subr.bf16.mxu0 0
      %5829 = vmatpush1.bf16.msra.mxu0 0
      %5830 = vmatprep.subr.bf16.mxu0 0
      %5831 = vmatpush1.bf16.msra.mxu0 0
      %5832 = vmatprep.subr.bf16.mxu0 0
      %5833 = vmatpush1.bf16.msra.mxu0 0
      %5834 = vmatprep.mubr.bf16.mxu0 0
      %5835 = vmatmul.mubr.bf16.gmra.mrb[0].mxu0 %v5800
      %v5836 = vpop.f32.mrb[0].mxu0
      %v5837 = vadd.f32 0.0, %v5836
      %v5838 = vpop.f32.mrb[0].mxu0
      %v5839 = vpop.f32.mrb[0].mxu0
      %v5840 = vpop.f32.mrb[0].mxu0
      %5841 = vdwg.mxu0
      %v5846 = vunpack.c.l.b16 %v5717
      %v5847 = vunpack.c.l.b16 %v5718
      %v5848 = vunpack.c.l.b16 %v5719
      %v5849 = vunpack.c.l.b16 %v5720
      %v5850 = vpack.c.b16 %v5847, %v5846
      %v5851 = vpack.c.b16 %v5849, %v5848
      %v5855 = vsel %vm665, %v5716, 0
      %5857 = vmatprep.subr.bf16.mxu0 0
      %5858 = vmatpush1.bf16.msra.mxu0 %v5850
      %5859 = vmatprep.subr.bf16.mxu0 0
      %5860 = vmatpush1.bf16.msra.mxu0 %v5851
      %5861 = vmatprep.subr.bf16.mxu0 0
      %5862 = vmatpush1.bf16.msra.mxu0 0
      %5863 = vmatprep.subr.bf16.mxu0 0
      %5864 = vmatpush1.bf16.msra.mxu0 0
      %5865 = vmatprep.subr.bf16.mxu0 0
      %5866 = vmatpush1.bf16.msra.mxu0 0
      %5867 = vmatprep.subr.bf16.mxu0 0
      %5868 = vmatpush1.bf16.msra.mxu0 0
      %5869 = vmatprep.subr.bf16.mxu0 0
      %5870 = vmatpush1.bf16.msra.mxu0 0
      %5871 = vmatprep.subr.bf16.mxu0 0
      %5872 = vmatpush1.bf16.msra.mxu0 0
      %5873 = vmatprep.subr.bf16.mxu0 0
      %5874 = vmatpush1.bf16.msra.mxu0 0
      %5875 = vmatprep.subr.bf16.mxu0 0
      %5876 = vmatpush1.bf16.msra.mxu0 0
      %5877 = vmatprep.subr.bf16.mxu0 0
      %5878 = vmatpush1.bf16.msra.mxu0 0
      %5879 = vmatprep.subr.bf16.mxu0 0
      %5880 = vmatpush1.bf16.msra.mxu0 0
      %5881 = vmatprep.subr.bf16.mxu0 0
      %5882 = vmatpush1.bf16.msra.mxu0 0
      %5883 = vmatprep.subr.bf16.mxu0 0
      %5884 = vmatpush1.bf16.msra.mxu0 0
      %5885 = vmatprep.subr.bf16.mxu0 0
      %5886 = vmatpush1.bf16.msra.mxu0 0
      %5887 = vmatprep.subr.bf16.mxu0 0
      %5888 = vmatpush1.bf16.msra.mxu0 0
      %5889 = vmatprep.mubr.bf16.mxu0 0
      %5890 = vmatmul.mubr.bf16.gmra.mrb[0].mxu0 %v5855
      %v5891 = vpop.f32.mrb[0].mxu0
      %v5892 = vadd.f32 %v5837, %v5891
      %v5893 = vpop.f32.mrb[0].mxu0
      %v5894 = vpop.f32.mrb[0].mxu0
      %v5895 = vpop.f32.mrb[0].mxu0
      %5896 = vdwg.mxu0
      %v5898 = vrot.slane %v5672, 1
      %5899 = vrot.lane.b32.xlu0 %v5380, 64
      %v5900 = vpop.permute.xlu0 %5899
      %5901 = vrot.lane.b32.xlu0 %v5381, 64
      %v5902 = vpop.permute.xlu0 %5901
      %5903 = vrot.lane.b32.xlu0 %v5382, 64
      %v5904 = vpop.permute.xlu0 %5903
      %5905 = vrot.lane.b32.xlu0 %v5383, 64
      %v5906 = vpop.permute.xlu0 %5905
      %v5912 = vsel %vm4286, %v5898, 0
      %5914 = vmatprep.subr.bf16.mxu0 0
      %5915 = vmatpush1.bf16.msra.mxu0 %v5900
      %5916 = vmatprep.subr.bf16.mxu0 0
      %5917 = vmatpush1.bf16.msra.mxu0 %v5902
      %5918 = vmatprep.subr.bf16.mxu0 0
      %5919 = vmatpush1.bf16.msra.mxu0 %v5904
      %5920 = vmatprep.subr.bf16.mxu0 0
      %5921 = vmatpush1.bf16.msra.mxu0 %v5906
      %5922 = vmatprep.subr.bf16.mxu0 0
      %5923 = vmatpush1.bf16.msra.mxu0 0
      %5924 = vmatprep.subr.bf16.mxu0 0
      %5925 = vmatpush1.bf16.msra.mxu0 0
      %5926 = vmatprep.subr.bf16.mxu0 0
      %5927 = vmatpush1.bf16.msra.mxu0 0
      %5928 = vmatprep.subr.bf16.mxu0 0
      %5929 = vmatpush1.bf16.msra.mxu0 0
      %5930 = vmatprep.subr.bf16.mxu0 0
      %5931 = vmatpush1.bf16.msra.mxu0 0
      %5932 = vmatprep.subr.bf16.mxu0 0
      %5933 = vmatpush1.bf16.msra.mxu0 0
      %5934 = vmatprep.subr.bf16.mxu0 0
      %5935 = vmatpush1.bf16.msra.mxu0 0
      %5936 = vmatprep.subr.bf16.mxu0 0
      %5937 = vmatpush1.bf16.msra.mxu0 0
      %5938 = vmatprep.subr.bf16.mxu0 0
      %5939 = vmatpush1.bf16.msra.mxu0 0
      %5940 = vmatprep.subr.bf16.mxu0 0
      %5941 = vmatpush1.bf16.msra.mxu0 0
      %5942 = vmatprep.subr.bf16.mxu0 0
      %5943 = vmatpush1.bf16.msra.mxu0 0
      %5944 = vmatprep.subr.bf16.mxu0 0
      %5945 = vmatpush1.bf16.msra.mxu0 0
      %5946 = vmatprep.mubr.bf16.mxu0 0
      %5947 = vmatmul.mubr.bf16.gmra.mrb[0].mxu0 %v5912
      %v5948 = vpop.f32.mrb[0].mxu0
      %v5949 = vadd.f32 0.0, %v5948
      %v5950 = vpop.f32.mrb[0].mxu0
      %v5951 = vpop.f32.mrb[0].mxu0
      %v5952 = vpop.f32.mrb[0].mxu0
      %5953 = vdwg.mxu0
      %v5954 = vpack.c.bf16 %v5949, %v5949
      %v5955 = vld [vmem:[%s2218 + $0x20] sm:$0xf]
      %v5956 = vld [vmem:[%s2218 + $0x24] sm:$0xf]
      %v5957 = vld [vmem:[%s2218 + $0x28] sm:$0xf]
      %v5958 = vld [vmem:[%s2218 + $0x2c] sm:$0xf]
      %v5963 = vunpack.c.l.b16 %v5955
      %v5964 = vunpack.c.l.b16 %v5956
      %v5965 = vunpack.c.l.b16 %v5957
      %v5966 = vunpack.c.l.b16 %v5958
      %v5967 = vpack.c.b16 %v5964, %v5963
      %v5968 = vpack.c.b16 %v5966, %v5965
      %v5972 = vsel %vm665, %v5954, 0
      %5974 = vmatprep.subr.bf16.mxu0 0
      %5975 = vmatpush1.bf16.msra.mxu0 %v5967
      %5976 = vmatprep.subr.bf16.mxu0 0
      %5977 = vmatpush1.bf16.msra.mxu0 %v5968
      %5978 = vmatprep.subr.bf16.mxu0 0
      %5979 = vmatpush1.bf16.msra.mxu0 0
      %5980 = vmatprep.subr.bf16.mxu0 0
      %5981 = vmatpush1.bf16.msra.mxu0 0
      %5982 = vmatprep.subr.bf16.mxu0 0
      %5983 = vmatpush1.bf16.msra.mxu0 0
      %5984 = vmatprep.subr.bf16.mxu0 0
      %5985 = vmatpush1.bf16.msra.mxu0 0
      %5986 = vmatprep.subr.bf16.mxu0 0
      %5987 = vmatpush1.bf16.msra.mxu0 0
      %5988 = vmatprep.subr.bf16.mxu0 0
      %5989 = vmatpush1.bf16.msra.mxu0 0
      %5990 = vmatprep.subr.bf16.mxu0 0
      %5991 = vmatpush1.bf16.msra.mxu0 0
      %5992 = vmatprep.subr.bf16.mxu0 0
      %5993 = vmatpush1.bf16.msra.mxu0 0
      %5994 = vmatprep.subr.bf16.mxu0 0
      %5995 = vmatpush1.bf16.msra.mxu0 0
      %5996 = vmatprep.subr.bf16.mxu0 0
      %5997 = vmatpush1.bf16.msra.mxu0 0
      %5998 = vmatprep.subr.bf16.mxu0 0
      %5999 = vmatpush1.bf16.msra.mxu0 0
      %6000 = vmatprep.subr.bf16.mxu0 0
      %6001 = vmatpush1.bf16.msra.mxu0 0
      %6002 = vmatprep.subr.bf16.mxu0 0
      %6003 = vmatpush1.bf16.msra.mxu0 0
      %6004 = vmatprep.subr.bf16.mxu0 0
      %6005 = vmatpush1.bf16.msra.mxu0 0
      %6006 = vmatprep.mubr.bf16.mxu0 0
      %6007 = vmatmul.mubr.bf16.gmra.mrb[0].mxu0 %v5972
      %v6008 = vpop.f32.mrb[0].mxu0
      %v6009 = vadd.f32 0.0, %v6008
      %v6010 = vpop.f32.mrb[0].mxu0
      %v6011 = vpop.f32.mrb[0].mxu0
      %v6012 = vpop.f32.mrb[0].mxu0
      %6013 = vdwg.mxu0
      %v6014 = vadd.f32 %v5892, %v6009
      %v6015 = vrot.slane %v5721, 1
      %6016 = vrot.lane.b32.xlu0 %v5380, 32
      %v6017 = vpop.permute.xlu0 %6016
      %6018 = vrot.lane.b32.xlu0 %v5381, 32
      %v6019 = vpop.permute.xlu0 %6018
      %6020 = vrot.lane.b32.xlu0 %v5382, 32
      %v6021 = vpop.permute.xlu0 %6020
      %6022 = vrot.lane.b32.xlu0 %v5383, 32
      %v6023 = vpop.permute.xlu0 %6022
      %v6029 = vsel %vm4286, %v6015, 0
      %6031 = vmatprep.subr.bf16.mxu0 0
      %6032 = vmatpush1.bf16.msra.mxu0 %v6017
      %6033 = vmatprep.subr.bf16.mxu0 0
      %6034 = vmatpush1.bf16.msra.mxu0 %v6019
      %6035 = vmatprep.subr.bf16.mxu0 0
      %6036 = vmatpush1.bf16.msra.mxu0 %v6021
      %6037 = vmatprep.subr.bf16.mxu0 0
      %6038 = vmatpush1.bf16.msra.mxu0 %v6023
      %6039 = vmatprep.subr.bf16.mxu0 0
      %6040 = vmatpush1.bf16.msra.mxu0 0
      %6041 = vmatprep.subr.bf16.mxu0 0
      %6042 = vmatpush1.bf16.msra.mxu0 0
      %6043 = vmatprep.subr.bf16.mxu0 0
      %6044 = vmatpush1.bf16.msra.mxu0 0
      %6045 = vmatprep.subr.bf16.mxu0 0
      %6046 = vmatpush1.bf16.msra.mxu0 0
      %6047 = vmatprep.subr.bf16.mxu0 0
      %6048 = vmatpush1.bf16.msra.mxu0 0
      %6049 = vmatprep.subr.bf16.mxu0 0
      %6050 = vmatpush1.bf16.msra.mxu0 0
      %6051 = vmatprep.subr.bf16.mxu0 0
      %6052 = vmatpush1.bf16.msra.mxu0 0
      %6053 = vmatprep.subr.bf16.mxu0 0
      %6054 = vmatpush1.bf16.msra.mxu0 0
      %6055 = vmatprep.subr.bf16.mxu0 0
      %6056 = vmatpush1.bf16.msra.mxu0 0
      %6057 = vmatprep.subr.bf16.mxu0 0
      %6058 = vmatpush1.bf16.msra.mxu0 0
      %6059 = vmatprep.subr.bf16.mxu0 0
      %6060 = vmatpush1.bf16.msra.mxu0 0
      %6061 = vmatprep.subr.bf16.mxu0 0
      %6062 = vmatpush1.bf16.msra.mxu0 0
      %6063 = vmatprep.mubr.bf16.mxu0 0
      %6064 = vmatmul.mubr.bf16.gmra.mrb[0].mxu0 %v6029
      %v6065 = vpop.f32.mrb[0].mxu0
      %v6066 = vadd.f32 0.0, %v6065
      %v6067 = vpop.f32.mrb[0].mxu0
      %v6068 = vpop.f32.mrb[0].mxu0
      %v6069 = vpop.f32.mrb[0].mxu0
      %6070 = vdwg.mxu0
      %v6071 = vpack.c.bf16 %v6066, %v6066
      %v6072 = vld [vmem:[%s2218 + $0x30] sm:$0xf]
      %v6073 = vld [vmem:[%s2218 + $0x34] sm:$0xf]
      %v6074 = vld [vmem:[%s2218 + $0x38] sm:$0xf]
      %v6075 = vld [vmem:[%s2218 + $0x3c] sm:$0xf]
      %v6080 = vunpack.c.l.b16 %v6072
      %v6081 = vunpack.c.l.b16 %v6073
      %v6082 = vunpack.c.l.b16 %v6074
      %v6083 = vunpack.c.l.b16 %v6075
      %v6084 = vpack.c.b16 %v6081, %v6080
      %v6085 = vpack.c.b16 %v6083, %v6082
      %v6089 = vsel %vm665, %v6071, 0
      %6091 = vmatprep.subr.bf16.mxu0 0
      %6092 = vmatpush1.bf16.msra.mxu0 %v6084
      %6093 = vmatprep.subr.bf16.mxu0 0
      %6094 = vmatpush1.bf16.msra.mxu0 %v6085
      %6095 = vmatprep.subr.bf16.mxu0 0
      %6096 = vmatpush1.bf16.msra.mxu0 0
      %6097 = vmatprep.subr.bf16.mxu0 0
      %6098 = vmatpush1.bf16.msra.mxu0 0
      %6099 = vmatprep.subr.bf16.mxu0 0
      %6100 = vmatpush1.bf16.msra.mxu0 0
      %6101 = vmatprep.subr.bf16.mxu0 0
      %6102 = vmatpush1.bf16.msra.mxu0 0
      %6103 = vmatprep.subr.bf16.mxu0 0
      %6104 = vmatpush1.bf16.msra.mxu0 0
      %6105 = vmatprep.subr.bf16.mxu0 0
      %6106 = vmatpush1.bf16.msra.mxu0 0
      %6107 = vmatprep.subr.bf16.mxu0 0
      %6108 = vmatpush1.bf16.msra.mxu0 0
      %6109 = vmatprep.subr.bf16.mxu0 0
      %6110 = vmatpush1.bf16.msra.mxu0 0
      %6111 = vmatprep.subr.bf16.mxu0 0
      %6112 = vmatpush1.bf16.msra.mxu0 0
      %6113 = vmatprep.subr.bf16.mxu0 0
      %6114 = vmatpush1.bf16.msra.mxu0 0
      %6115 = vmatprep.subr.bf16.mxu0 0
      %6116 = vmatpush1.bf16.msra.mxu0 0
      %6117 = vmatprep.subr.bf16.mxu0 0
      %6118 = vmatpush1.bf16.msra.mxu0 0
      %6119 = vmatprep.subr.bf16.mxu0 0
      %6120 = vmatpush1.bf16.msra.mxu0 0
      %6121 = vmatprep.subr.bf16.mxu0 0
      %6122 = vmatpush1.bf16.msra.mxu0 0
      %6123 = vmatprep.mubr.bf16.mxu0 0
      %6124 = vmatmul.mubr.bf16.gmra.mrb[0].mxu0 %v6089
      %v6125 = vpop.f32.mrb[0].mxu0
      %v6126 = vadd.f32 0.0, %v6125
      %v6127 = vpop.f32.mrb[0].mxu0
      %v6128 = vpop.f32.mrb[0].mxu0
      %v6129 = vpop.f32.mrb[0].mxu0
      %6130 = vdwg.mxu0
      %v6131 = vadd.f32 %v6014, %v6126
      %v6132 = vadd.f32 %v5090, %v6131
      %v6133 = vld [vmem:[%s2846] sm:$0x1]
      %v6134 = vld [vmem:[%s2848] sm:$0x1]
      %v6135 = vsel %vm3239, %v6132, 0.0
      %6136 = vadd.xlane.f32.xlu0 %v6135
      %v6137 = vpop.xlane.xlu0 %6136
      %v6138 = vmul.f32 %v6137, %v378
      %v6139 = vsub.f32 %v6132, %v6138
      %v6140 = vmul.f32 %v6139, %v6139
      %v6141 = vsel %vm3239, %v6140, 0.0
      %6142 = vadd.xlane.f32.xlu0 %v6141
      %v6143 = vpop.xlane.xlu0 %6142
      %v6144 = vmul.f32 %v6143, %v378
      %v6145 = vadd.f32 %v6144, 1e-05
      %v6146 = vrsqrt.pop %v6145
      %v6147 = vmul.f32 %v6139, %v6146
      %v6148 = vmul.f32 %v6147, %v6133
      %v6149 = vadd.f32 %v6148, %v6134
      %v6150 = vpack.c.bf16 %v6149, %v6149
      %v6151 = vld [vmem:[%s2889] sm:$0xff]
      %v6152 = vld [vmem:[%s2889 + $0x8] sm:$0xff]
      %v6153 = vld [vmem:[%s2889 + $0x10] sm:$0xff]
      %v6154 = vld [vmem:[%s2889 + $0x18] sm:$0xff]
      %v6155 = vld [vmem:[%s2889 + $0x20] sm:$0xff]
      %v6156 = vld [vmem:[%s2889 + $0x28] sm:$0xff]
      %v6157 = vld [vmem:[%s2889 + $0x30] sm:$0xff]
      %v6158 = vld [vmem:[%s2889 + $0x38] sm:$0xff]
      %v6159 = vld [vmem:[%s2889 + $0x40] sm:$0xff]
      %v6160 = vld [vmem:[%s2889 + $0x48] sm:$0xff]
      %v6161 = vld [vmem:[%s2889 + $0x50] sm:$0xff]
      %v6162 = vld [vmem:[%s2889 + $0x58] sm:$0xff]
      %v6163 = vld [vmem:[%s2889 + $0x60] sm:$0xff]
      %v6164 = vld [vmem:[%s2889 + $0x68] sm:$0xff]
      %v6165 = vld [vmem:[%s2889 + $0x70] sm:$0xff]
      %v6166 = vld [vmem:[%s2889 + $0x78] sm:$0xff]
      %v6183 = vunpack.c.l.b16 %v6151
      %v6184 = vunpack.c.h.b16 %v6151
      %v6185 = vunpack.c.l.b16 %v6152
      %v6186 = vunpack.c.h.b16 %v6152
      %v6187 = vunpack.c.l.b16 %v6153
      %v6188 = vunpack.c.h.b16 %v6153
      %v6189 = vunpack.c.l.b16 %v6154
      %v6190 = vunpack.c.h.b16 %v6154
      %v6191 = vunpack.c.l.b16 %v6155
      %v6192 = vunpack.c.h.b16 %v6155
      %v6193 = vunpack.c.l.b16 %v6156
      %v6194 = vunpack.c.h.b16 %v6156
      %v6195 = vunpack.c.l.b16 %v6157
      %v6196 = vunpack.c.h.b16 %v6157
      %v6197 = vunpack.c.l.b16 %v6158
      %v6198 = vunpack.c.h.b16 %v6158
      %v6199 = vunpack.c.l.b16 %v6159
      %v6200 = vunpack.c.h.b16 %v6159
      %v6201 = vunpack.c.l.b16 %v6160
      %v6202 = vunpack.c.h.b16 %v6160
      %v6203 = vunpack.c.l.b16 %v6161
      %v6204 = vunpack.c.h.b16 %v6161
      %v6205 = vunpack.c.l.b16 %v6162
      %v6206 = vunpack.c.h.b16 %v6162
      %v6207 = vunpack.c.l.b16 %v6163
      %v6208 = vunpack.c.h.b16 %v6163
      %v6209 = vunpack.c.l.b16 %v6164
      %v6210 = vunpack.c.h.b16 %v6164
      %v6211 = vunpack.c.l.b16 %v6165
      %v6212 = vunpack.c.h.b16 %v6165
      %v6213 = vunpack.c.l.b16 %v6166
      %v6214 = vunpack.c.h.b16 %v6166
      %v6215 = vpack.c.b16 %v6185, %v6183
      %v6216 = vpack.c.b16 %v6186, %v6184
      %v6217 = vpack.c.b16 %v6189, %v6187
      %v6218 = vpack.c.b16 %v6190, %v6188
      %v6219 = vpack.c.b16 %v6193, %v6191
      %v6220 = vpack.c.b16 %v6194, %v6192
      %v6221 = vpack.c.b16 %v6197, %v6195
      %v6222 = vpack.c.b16 %v6198, %v6196
      %v6223 = vpack.c.b16 %v6201, %v6199
      %v6224 = vpack.c.b16 %v6202, %v6200
      %v6225 = vpack.c.b16 %v6205, %v6203
      %v6226 = vpack.c.b16 %v6206, %v6204
      %v6227 = vpack.c.b16 %v6209, %v6207
      %v6228 = vpack.c.b16 %v6210, %v6208
      %v6229 = vpack.c.b16 %v6213, %v6211
      %v6230 = vpack.c.b16 %v6214, %v6212
      %6247 = vmatprep.subr.bf16.mxu0 %v6216
      %6248 = vmatpush1.bf16.msra.mxu0 %v6215
      %6249 = vmatprep.subr.bf16.mxu0 %v6218
      %6250 = vmatpush1.bf16.msra.mxu0 %v6217
      %6251 = vmatprep.subr.bf16.mxu0 %v6220
      %6252 = vmatpush1.bf16.msra.mxu0 %v6219
      %6253 = vmatprep.subr.bf16.mxu0 %v6222
      %6254 = vmatpush1.bf16.msra.mxu0 %v6221
      %6255 = vmatprep.subr.bf16.mxu0 %v6224
      %6256 = vmatpush1.bf16.msra.mxu0 %v6223
      %6257 = vmatprep.subr.bf16.mxu0 %v6226
      %6258 = vmatpush1.bf16.msra.mxu0 %v6225
      %6259 = vmatprep.subr.bf16.mxu0 %v6228
      %6260 = vmatpush1.bf16.msra.mxu0 %v6227
      %6261 = vmatprep.subr.bf16.mxu0 %v6230
      %6262 = vmatpush1.bf16.msra.mxu0 %v6229
      %6263 = vmatprep.subr.bf16.mxu0 0
      %6264 = vmatpush1.bf16.msra.mxu0 0
      %6265 = vmatprep.subr.bf16.mxu0 0
      %6266 = vmatpush1.bf16.msra.mxu0 0
      %6267 = vmatprep.subr.bf16.mxu0 0
      %6268 = vmatpush1.bf16.msra.mxu0 0
      %6269 = vmatprep.subr.bf16.mxu0 0
      %6270 = vmatpush1.bf16.msra.mxu0 0
      %6271 = vmatprep.subr.bf16.mxu0 0
      %6272 = vmatpush1.bf16.msra.mxu0 0
      %6273 = vmatprep.subr.bf16.mxu0 0
      %6274 = vmatpush1.bf16.msra.mxu0 0
      %6275 = vmatprep.subr.bf16.mxu0 0
      %6276 = vmatpush1.bf16.msra.mxu0 0
      %6277 = vmatprep.subr.bf16.mxu0 0
      %6278 = vmatpush1.bf16.msra.mxu0 0
      %6279 = vmatprep.mubr.bf16.mxu0 0
      %6280 = vmatmul.mubr.bf16.gmra.mrb[0].mxu0 %v6150
      %v6281 = vpop.f32.mrb[0].mxu0
      %v6282 = vadd.f32 0.0, %v6281
      %v6283 = vpop.f32.mrb[0].mxu0
      %v6284 = vadd.f32 0.0, %v6283
      %v6285 = vpop.f32.mrb[0].mxu0
      %v6286 = vpop.f32.mrb[0].mxu0
      %6287 = vdwg.mxu0
      %v6288 = vmul.f32 %v6282, %v6282
      %v6289 = vmul.f32 %v6284, %v6284
      %v6290 = vmul.f32 %v6282, %v6288
      %v6291 = vmul.f32 %v6284, %v6289
      %v6292 = vmul.f32 %v6290, 0.044715
      %v6293 = vmul.f32 %v6291, 0.044715
      %v6294 = vadd.f32 %v6282, %v6292
      %v6295 = vadd.f32 %v6284, %v6293
      %v6296 = vmul.f32 %v6294, 0.7978846
      %v6297 = vmul.f32 %v6295, 0.7978846
      %v6298 = vtanh.pop %v6296
      %v6299 = vtanh.pop %v6297
      %v6300 = vadd.f32 %v6298, 1.0
      %v6301 = vadd.f32 %v6299, 1.0
      %v6302 = vmul.f32 %v6300, 0.5
      %v6303 = vmul.f32 %v6301, 0.5
      %v6304 = vmul.f32 %v6282, %v6302
      %v6305 = vmul.f32 %v6284, %v6303
      %v6306 = vpack.c.bf16 %v6304, %v6304
      %v6307 = vpack.c.bf16 %v6305, %v6305
      %v6308 = vld [vmem:[%s3067] sm:$0xf]
      %v6309 = vld [vmem:[%s3067 + $0x4] sm:$0xf]
      %v6310 = vld [vmem:[%s3067 + $0x8] sm:$0xf]
      %v6311 = vld [vmem:[%s3067 + $0xc] sm:$0xf]
      %v6312 = vld [vmem:[%s3067 + $0x10] sm:$0xf]
      %v6313 = vld [vmem:[%s3067 + $0x14] sm:$0xf]
      %v6314 = vld [vmem:[%s3067 + $0x18] sm:$0xf]
      %v6315 = vld [vmem:[%s3067 + $0x1c] sm:$0xf]
      %v6316 = vld [vmem:[%s3067 + $0x20] sm:$0xf]
      %v6317 = vld [vmem:[%s3067 + $0x24] sm:$0xf]
      %v6318 = vld [vmem:[%s3067 + $0x28] sm:$0xf]
      %v6319 = vld [vmem:[%s3067 + $0x2c] sm:$0xf]
      %v6320 = vld [vmem:[%s3067 + $0x30] sm:$0xf]
      %v6321 = vld [vmem:[%s3067 + $0x34] sm:$0xf]
      %v6322 = vld [vmem:[%s3067 + $0x38] sm:$0xf]
      %v6323 = vld [vmem:[%s3067 + $0x3c] sm:$0xf]
      %v6324 = vld [vmem:[%s3067 + $0x40] sm:$0xf]
      %v6325 = vld [vmem:[%s3067 + $0x44] sm:$0xf]
      %v6326 = vld [vmem:[%s3067 + $0x48] sm:$0xf]
      %v6327 = vld [vmem:[%s3067 + $0x4c] sm:$0xf]
      %v6328 = vld [vmem:[%s3067 + $0x50] sm:$0xf]
      %v6329 = vld [vmem:[%s3067 + $0x54] sm:$0xf]
      %v6330 = vld [vmem:[%s3067 + $0x58] sm:$0xf]
      %v6331 = vld [vmem:[%s3067 + $0x5c] sm:$0xf]
      %v6332 = vld [vmem:[%s3067 + $0x60] sm:$0xf]
      %v6333 = vld [vmem:[%s3067 + $0x64] sm:$0xf]
      %v6334 = vld [vmem:[%s3067 + $0x68] sm:$0xf]
      %v6335 = vld [vmem:[%s3067 + $0x6c] sm:$0xf]
      %v6336 = vld [vmem:[%s3067 + $0x70] sm:$0xf]
      %v6337 = vld [vmem:[%s3067 + $0x74] sm:$0xf]
      %v6338 = vld [vmem:[%s3067 + $0x78] sm:$0xf]
      %v6339 = vld [vmem:[%s3067 + $0x7c] sm:$0xf]
      %v6372 = vunpack.c.l.b16 %v6308
      %v6373 = vunpack.c.l.b16 %v6309
      %v6374 = vunpack.c.l.b16 %v6310
      %v6375 = vunpack.c.l.b16 %v6311
      %v6376 = vunpack.c.l.b16 %v6312
      %v6377 = vunpack.c.l.b16 %v6313
      %v6378 = vunpack.c.l.b16 %v6314
      %v6379 = vunpack.c.l.b16 %v6315
      %v6380 = vunpack.c.l.b16 %v6316
      %v6381 = vunpack.c.l.b16 %v6317
      %v6382 = vunpack.c.l.b16 %v6318
      %v6383 = vunpack.c.l.b16 %v6319
      %v6384 = vunpack.c.l.b16 %v6320
      %v6385 = vunpack.c.l.b16 %v6321
      %v6386 = vunpack.c.l.b16 %v6322
      %v6387 = vunpack.c.l.b16 %v6323
      %v6388 = vunpack.c.l.b16 %v6324
      %v6389 = vunpack.c.l.b16 %v6325
      %v6390 = vunpack.c.l.b16 %v6326
      %v6391 = vunpack.c.l.b16 %v6327
      %v6392 = vunpack.c.l.b16 %v6328
      %v6393 = vunpack.c.l.b16 %v6329
      %v6394 = vunpack.c.l.b16 %v6330
      %v6395 = vunpack.c.l.b16 %v6331
      %v6396 = vunpack.c.l.b16 %v6332
      %v6397 = vunpack.c.l.b16 %v6333
      %v6398 = vunpack.c.l.b16 %v6334
      %v6399 = vunpack.c.l.b16 %v6335
      %v6400 = vunpack.c.l.b16 %v6336
      %v6401 = vunpack.c.l.b16 %v6337
      %v6402 = vunpack.c.l.b16 %v6338
      %v6403 = vunpack.c.l.b16 %v6339
      %v6404 = vpack.c.b16 %v6373, %v6372
      %v6405 = vpack.c.b16 %v6375, %v6374
      %v6406 = vpack.c.b16 %v6377, %v6376
      %v6407 = vpack.c.b16 %v6379, %v6378
      %v6408 = vpack.c.b16 %v6381, %v6380
      %v6409 = vpack.c.b16 %v6383, %v6382
      %v6410 = vpack.c.b16 %v6385, %v6384
      %v6411 = vpack.c.b16 %v6387, %v6386
      %v6412 = vpack.c.b16 %v6389, %v6388
      %v6413 = vpack.c.b16 %v6391, %v6390
      %v6414 = vpack.c.b16 %v6393, %v6392
      %v6415 = vpack.c.b16 %v6395, %v6394
      %v6416 = vpack.c.b16 %v6397, %v6396
      %v6417 = vpack.c.b16 %v6399, %v6398
      %v6418 = vpack.c.b16 %v6401, %v6400
      %v6419 = vpack.c.b16 %v6403, %v6402
      %6436 = vmatprep.subr.bf16.mxu0 0
      %6437 = vmatpush1.bf16.msra.mxu0 %v6404
      %6438 = vmatprep.subr.bf16.mxu0 0
      %6439 = vmatpush1.bf16.msra.mxu0 %v6405
      %6440 = vmatprep.subr.bf16.mxu0 0
      %6441 = vmatpush1.bf16.msra.mxu0 %v6406
      %6442 = vmatprep.subr.bf16.mxu0 0
      %6443 = vmatpush1.bf16.msra.mxu0 %v6407
      %6444 = vmatprep.subr.bf16.mxu0 0
      %6445 = vmatpush1.bf16.msra.mxu0 %v6408
      %6446 = vmatprep.subr.bf16.mxu0 0
      %6447 = vmatpush1.bf16.msra.mxu0 %v6409
      %6448 = vmatprep.subr.bf16.mxu0 0
      %6449 = vmatpush1.bf16.msra.mxu0 %v6410
      %6450 = vmatprep.subr.bf16.mxu0 0
      %6451 = vmatpush1.bf16.msra.mxu0 %v6411
      %6452 = vmatprep.subr.bf16.mxu0 0
      %6453 = vmatpush1.bf16.msra.mxu0 %v6412
      %6454 = vmatprep.subr.bf16.mxu0 0
      %6455 = vmatpush1.bf16.msra.mxu0 %v6413
      %6456 = vmatprep.subr.bf16.mxu0 0
      %6457 = vmatpush1.bf16.msra.mxu0 %v6414
      %6458 = vmatprep.subr.bf16.mxu0 0
      %6459 = vmatpush1.bf16.msra.mxu0 %v6415
      %6460 = vmatprep.subr.bf16.mxu0 0
      %6461 = vmatpush1.bf16.msra.mxu0 %v6416
      %6462 = vmatprep.subr.bf16.mxu0 0
      %6463 = vmatpush1.bf16.msra.mxu0 %v6417
      %6464 = vmatprep.subr.bf16.mxu0 0
      %6465 = vmatpush1.bf16.msra.mxu0 %v6418
      %6466 = vmatprep.subr.bf16.mxu0 0
      %6467 = vmatpush1.bf16.msra.mxu0 %v6419
      %6468 = vmatprep.mubr.bf16.mxu0 %v6307
      %6469 = vmatmul.mubr.bf16.gmra.mrb[0].mxu0 %v6306
      %v6470 = vpop.f32.mrb[0].mxu0
      %v6471 = vadd.f32 0.0, %v6470
      %v6472 = vpop.f32.mrb[0].mxu0
      %v6473 = vpop.f32.mrb[0].mxu0
      %v6474 = vpop.f32.mrb[0].mxu0
      %6475 = vdwg.mxu0
      %v6476 = vadd.f32 %v6132, %v6471
      %v6477 = vld [vmem:[%s11] sm:$0x1]
      %v6478 = vld [vmem:[%s12] sm:$0x1]
      %v6479 = vsel %vm3239, %v6476, 0.0
      %6480 = vadd.xlane.f32.xlu0 %v6479
      %v6481 = vpop.xlane.xlu0 %6480
      %v6482 = vmul.f32 %v6481, %v378
      %v6483 = vsub.f32 %v6476, %v6482
      %v6484 = vmul.f32 %v6483, %v6483
      %v6485 = vsel %vm3239, %v6484, 0.0
      %6486 = vadd.xlane.f32.xlu0 %v6485
      %v6487 = vpop.xlane.xlu0 %6486
      %v6488 = vmul.f32 %v6487, %v378
      %v6489 = vadd.f32 %v6488, 1e-05
      %v6490 = vrsqrt.pop %v6489
      %v6491 = vmul.f32 %v6483, %v6490
      %v6492 = vmul.f32 %v6491, %v6477
      %v6493 = vadd.f32 %v6492, %v6478
      %v6494 = vpack.c.bf16 %v6493, %v6493
      %v6495 = vld [vmem:[#allocation12] sm:$0xff]
      %v6496 = vld [vmem:[#allocation12 + $0x8] sm:$0xff]
      %v6497 = vld [vmem:[#allocation12 + $0x10] sm:$0xff]
      %v6498 = vld [vmem:[#allocation12 + $0x18] sm:$0xff]
      %v6499 = vld [vmem:[#allocation12 + $0x20] sm:$0xff]
      %v6500 = vld [vmem:[#allocation12 + $0x28] sm:$0xff]
      %v6501 = vld [vmem:[#allocation12 + $0x30] sm:$0xff]
      %v6502 = vld [vmem:[#allocation12 + $0x38] sm:$0xff]
      %v6503 = vld [vmem:[#allocation12 + $0x40] sm:$0xff]
      %v6504 = vld [vmem:[#allocation12 + $0x48] sm:$0xff]
      %v6505 = vld [vmem:[#allocation12 + $0x50] sm:$0xff]
      %v6506 = vld [vmem:[#allocation12 + $0x58] sm:$0xff]
      %v6507 = vld [vmem:[#allocation12 + $0x60] sm:$0xff]
      %v6508 = vld [vmem:[#allocation12 + $0x68] sm:$0xff]
      %v6509 = vld [vmem:[#allocation12 + $0x70] sm:$0xff]
      %v6510 = vld [vmem:[#allocation12 + $0x78] sm:$0xff]
      %v6527 = vunpack.c.l.b16 %v6495
      %v6528 = vunpack.c.h.b16 %v6495
      %v6529 = vunpack.c.l.b16 %v6496
      %v6530 = vunpack.c.h.b16 %v6496
      %v6531 = vunpack.c.l.b16 %v6497
      %v6532 = vunpack.c.h.b16 %v6497
      %v6533 = vunpack.c.l.b16 %v6498
      %v6534 = vunpack.c.h.b16 %v6498
      %v6535 = vunpack.c.l.b16 %v6499
      %v6536 = vunpack.c.h.b16 %v6499
      %v6537 = vunpack.c.l.b16 %v6500
      %v6538 = vunpack.c.h.b16 %v6500
      %v6539 = vunpack.c.l.b16 %v6501
      %v6540 = vunpack.c.h.b16 %v6501
      %v6541 = vunpack.c.l.b16 %v6502
      %v6542 = vunpack.c.h.b16 %v6502
      %v6543 = vunpack.c.l.b16 %v6503
      %v6544 = vunpack.c.h.b16 %v6503
      %v6545 = vunpack.c.l.b16 %v6504
      %v6546 = vunpack.c.h.b16 %v6504
      %v6547 = vunpack.c.l.b16 %v6505
      %v6548 = vunpack.c.h.b16 %v6505
      %v6549 = vunpack.c.l.b16 %v6506
      %v6550 = vunpack.c.h.b16 %v6506
      %v6551 = vunpack.c.l.b16 %v6507
      %v6552 = vunpack.c.h.b16 %v6507
      %v6553 = vunpack.c.l.b16 %v6508
      %v6554 = vunpack.c.h.b16 %v6508
      %v6555 = vunpack.c.l.b16 %v6509
      %v6556 = vunpack.c.h.b16 %v6509
      %v6557 = vunpack.c.l.b16 %v6510
      %v6558 = vunpack.c.h.b16 %v6510
      %v6559 = vpack.c.b16 %v6529, %v6527
      %v6560 = vpack.c.b16 %v6530, %v6528
      %v6561 = vpack.c.b16 %v6533, %v6531
      %v6562 = vpack.c.b16 %v6534, %v6532
      %v6563 = vpack.c.b16 %v6537, %v6535
      %v6564 = vpack.c.b16 %v6538, %v6536
      %v6565 = vpack.c.b16 %v6541, %v6539
      %v6566 = vpack.c.b16 %v6542, %v6540
      %v6567 = vpack.c.b16 %v6545, %v6543
      %v6568 = vpack.c.b16 %v6546, %v6544
      %v6569 = vpack.c.b16 %v6549, %v6547
      %v6570 = vpack.c.b16 %v6550, %v6548
      %v6571 = vpack.c.b16 %v6553, %v6551
      %v6572 = vpack.c.b16 %v6554, %v6552
      %v6573 = vpack.c.b16 %v6557, %v6555
      %v6574 = vpack.c.b16 %v6558, %v6556
      %6591 = vmatprep.subr.bf16.mxu0 %v6560
      %6592 = vmatpush1.bf16.msra.mxu0 %v6559
      %6593 = vmatprep.subr.bf16.mxu0 %v6562
      %6594 = vmatpush1.bf16.msra.mxu0 %v6561
      %6595 = vmatprep.subr.bf16.mxu0 %v6564
      %6596 = vmatpush1.bf16.msra.mxu0 %v6563
      %6597 = vmatprep.subr.bf16.mxu0 %v6566
      %6598 = vmatpush1.bf16.msra.mxu0 %v6565
      %6599 = vmatprep.subr.bf16.mxu0 %v6568
      %6600 = vmatpush1.bf16.msra.mxu0 %v6567
      %6601 = vmatprep.subr.bf16.mxu0 %v6570
      %6602 = vmatpush1.bf16.msra.mxu0 %v6569
      %6603 = vmatprep.subr.bf16.mxu0 %v6572
      %6604 = vmatpush1.bf16.msra.mxu0 %v6571
      %6605 = vmatprep.subr.bf16.mxu0 %v6574
      %6606 = vmatpush1.bf16.msra.mxu0 %v6573
      %6607 = vmatprep.subr.bf16.mxu0 0
      %6608 = vmatpush1.bf16.msra.mxu0 0
      %6609 = vmatprep.subr.bf16.mxu0 0
      %6610 = vmatpush1.bf16.msra.mxu0 0
      %6611 = vmatprep.subr.bf16.mxu0 0
      %6612 = vmatpush1.bf16.msra.mxu0 0
      %6613 = vmatprep.subr.bf16.mxu0 0
      %6614 = vmatpush1.bf16.msra.mxu0 0
      %6615 = vmatprep.subr.bf16.mxu0 0
      %6616 = vmatpush1.bf16.msra.mxu0 0
      %6617 = vmatprep.subr.bf16.mxu0 0
      %6618 = vmatpush1.bf16.msra.mxu0 0
      %6619 = vmatprep.subr.bf16.mxu0 0
      %6620 = vmatpush1.bf16.msra.mxu0 0
      %6621 = vmatprep.subr.bf16.mxu0 0
      %6622 = vmatpush1.bf16.msra.mxu0 0
      %6623 = vmatprep.mubr.bf16.mxu0 0
      %6624 = vmatmul.mubr.bf16.gmra.mrb[0].mxu0 %v6494
      %v6625 = vpop.f32.mrb[0].mxu0
      %v6626 = vadd.f32 0.0, %v6625
      %v6627 = vpop.f32.mrb[0].mxu0
      %v6628 = vadd.f32 0.0, %v6627
      %v6629 = vpop.f32.mrb[0].mxu0
      %v6630 = vpop.f32.mrb[0].mxu0
      %6631 = vdwg.mxu0
      %v6632 = vsel %vm3239, %v6626, -inf
      %v6633 = vsel %vm3239, %v6628, -inf
      %v6634 = vmax.f32 %v6632, %v6633
      %6635 = vmax.xlane.f32.xlu0 %v6634
      %v6636 = vpop.xlane.xlu0 %6635
      %vm6637 = vcmp.eq.f32.partialorder %v6626, %v6636
      %vm6638 = vcmp.eq.f32.partialorder %v6628, %v6636
      %v6639 = vsel %vm6637, %v133, 256
      %v6640 = vsel %vm6638, %v134, 256
      %v6641 = vsel %vm3239, %v6639, 2147483647
      %v6642 = vsel %vm3239, %v6640, 2147483647
      %vm6643 = vcmp.lt.s32.totalorder %v6641, %v6642
      %v6644 = vsel %vm6643, %v6641, %v6642
      %v6645 = vand.u32 %v6644, 65535
      %v6646 = vshra.s32 %v6644, 16
      %v6647 = vcvt.s32.f32 %v6645
      %v6648 = vcvt.s32.f32 %v6646
      %6649 = vmin.xlane.f32.xlu0 %v6648
      %v6650 = vpop.xlane.xlu0 %6649
      %vm6651 = vcmp.eq.f32.partialorder %v6648, %v6650
      %v6652 = vsel %vm6651, %v6647, inf
      %6653 = vmin.xlane.f32.xlu0 %v6652
      %v6654 = vpop.xlane.xlu0 %6653
      %v6655 = vcvt.f32.s32 %v6654
      %v6656 = vcvt.f32.s32 %v6650
      %v6657 = vshll.u32 %v6656, 16
      %v6658 = vadd.s32 %v6657, %v6655
      %s6659 = sadd.s32 %s3457, 1
      %v6660 = vstv %s6659
      %vm6661 = vcmp.eq.s32.totalorder %v136, %v6660
      %vm6662 = vcmp.eq.s32.totalorder %v137, %v6660
      %vm6663 = vcmp.eq.s32.totalorder %v138, %v6660
      %vm6664 = vcmp.eq.s32.totalorder %v139, %v6660
      %vm6665 = vcmp.eq.s32.totalorder %v140, %v6660
      %vm6666 = vcmp.eq.s32.totalorder %v141, %v6660
      %vm6667 = vcmp.eq.s32.totalorder %v142, %v6660
      %vm6668 = vcmp.eq.s32.totalorder %v143, %v6660
      %v6669 = vld [vmem:[%s14] sm:$0xff]
      %v6670 = vld [vmem:[%s14 + $0x8] sm:$0xff]
      %v6671 = vld [vmem:[%s14 + $0x10] sm:$0xff]
      %v6672 = vld [vmem:[%s14 + $0x18] sm:$0xff]
      %v6673 = vld [vmem:[%s14 + $0x20] sm:$0xff]
      %v6674 = vld [vmem:[%s14 + $0x28] sm:$0xff]
      %v6675 = vld [vmem:[%s14 + $0x30] sm:$0xff]
      %v6676 = vld [vmem:[%s14 + $0x38] sm:$0xff]
      %v6677 = vlaneseq
      %v6678 = vshrl.u32 %v6677, 7
      %v6679 = vsub.s32 0, %v6678
      %v6680 = vrot.slane %v6658, %v6679
      %v6681 = vsel %vm6661, %v6680, %v6669
      %v6682 = vsel %vm6662, %v6680, %v6670
      %v6683 = vsel %vm6663, %v6680, %v6671
      %v6684 = vsel %vm6664, %v6680, %v6672
      %v6685 = vsel %vm6665, %v6680, %v6673
      %v6686 = vsel %vm6666, %v6680, %v6674
      %v6687 = vsel %vm6667, %v6680, %v6675
      %v6688 = vsel %vm6668, %v6680, %v6676
      %6689 = vst.msk [vmem:[%s14] sm:$0xff] %vm152, %v6681
      %6690 = vst.msk [vmem:[%s14 + $0x8] sm:$0xff] %vm152, %v6682
      %6691 = vst.msk [vmem:[%s14 + $0x10] sm:$0xff] %vm152, %v6683
      %6692 = vst.msk [vmem:[%s14 + $0x18] sm:$0xff] %vm152, %v6684
      %6693 = vst.msk [vmem:[%s14 + $0x20] sm:$0xff] %vm152, %v6685
      %6694 = vst.msk [vmem:[%s14 + $0x28] sm:$0xff] %vm152, %v6686
      %6695 = vst.msk [vmem:[%s14 + $0x30] sm:$0xff] %vm152, %v6687
      %6696 = vst.msk [vmem:[%s14 + $0x38] sm:$0xff] %vm152, %v6688
    $region86: #{generate.1} parent=1 // loop_footer
      %s3461 = sadd.s32 1, %s3457
    $region87: #{generate.1} parent=1 // loop_footer_branch
      %3456 = sbr.rel target = $region83
    $region88: #{generate.1} parent=1 // loop_exit
      _
    // Predicated region
    $region89: #{generate.1} parent=1 // pred_check
      _
    $region90: #{generate.1} parent=1 // pred_check_branch
      %6698 = sbr.rel (0) target = $region92
    $region91: #{generate.1} parent=1 // pred_region
      _
    $region92: #{generate.1} parent=1 // pred_fallthru
      _
    // Predicated region
    $region93: #{generate.1} parent=1 // pred_check
      _
    $region94: #{generate.1} parent=1 // pred_check_branch
      %6700 = sbr.rel (0) target = $region96
    $region95: #{generate.1} parent=1 // pred_region
      _
    $region96: #{generate.1} parent=1 // pred_fallthru
      _
    %6701 = vsyncpa [#allocation5], 1
    %6702 = vsyncpa [#allocation7], 1
    %6703 = vsyncpa [#allocation10], 1
    %6704 = vsyncpa [#allocation13], 1

</llo_original>
